<compile_context>
chip_gen: v7x
topology: tpu7x:2x2x1
jax: 0.10.0
libtpu: 0.0.40
codegen_flags: <defaults>
</compile_context>

<pallas_src>
import jax
import jax.numpy as jnp
from jax.experimental import pallas as pl
from jax.experimental.pallas import tpu as pltpu

VMEM = pltpu.MemorySpace.VMEM
F32 = jnp.float32


# ------------------------------ fused kernel ---------------------------------
def _densenet_kernel(
        p0_ref, w0_ref, n0s_ref, n0b_ref,                              # stem
        b1s1_ref, b1b1_ref, b1w1_ref, b1s2_ref, b1b2_ref, b1w2_ref,    # block 1
        trs_ref, trb_ref, trw_ref,                                     # transition 1
        b2s1_ref, b2b1_ref, b2w1_ref, b2s2_ref, b2b2_ref, b2w2_ref,    # block 2
        n5s_ref, n5b_ref, cw_ref, cb_ref,                              # head
        o_ref,                                                         # (B, 10)
        slab1_ref, slab2_ref):                                         # VMEM scratch
    B = o_ref.shape[0]
    c_init = n0s_ref.shape[1]          # 64
    growth = b1w2_ref.shape[2]         # 32
    bottleneck = b1s2_ref.shape[1]     # 128

    # ------------- stem: conv0 (7x7 s2 p3) as matmul + norm0 + relu ---------
    # p0: (B*16, 147) im2col patches of the 8x8 input, rows = b*16 + oh*4 + ow.
    y0 = jnp.dot(p0_ref[...], w0_ref[...], preferred_element_type=F32)
    y0 = jnp.maximum(y0 * n0s_ref[...] + n0b_ref[...], 0.0)            # (B*16, 64)

    # ------------- pool0: maxpool 3x3 s2 p1, 4x4 -> 2x2 ---------------------
    # Windows are clipped to valid positions, so padding never participates.
    pooled_rows = []
    for oh in range(2):
        rset = (0, 1) if oh == 0 else (1, 2, 3)
        for ow in range(2):
            cset = (0, 1) if ow == 0 else (1, 2, 3)
            for b in range(B):
                acc = None
                for r in rset:
                    for c in cset:
                        i = b * 16 + r * 4 + c
                        v = y0[i:i + 1, :]
                        acc = v if acc is None else jnp.maximum(acc, v)
                pooled_rows.append(acc)
    # (4*B, 64), rows ordered position-major: (oh*2+ow)*B + b
    pooled = jnp.concatenate(pooled_rows, axis=0)

    # ------------- dense block 1 (6 layers, 2x2 spatial) --------------------
    # Slab (4*B, 256): layer l reads cols [0, 64+32*l); the rest stays zero to
    # match the zero-padded stacked weights / bn params.
    slab1_ref[...] = jnp.zeros(slab1_ref.shape, F32)
    slab1_ref[:, 0:c_init] = pooled
    zero_tap = jnp.zeros((B, bottleneck), F32)
    for l in range(b1w1_ref.shape[0]):
        a = slab1_ref[...]
        h = jnp.maximum(a * b1s1_ref[l:l + 1, :] + b1b1_ref[l:l + 1, :], 0.0)
        z = jnp.dot(h, b1w1_ref[l], preferred_element_type=F32)        # (4B, 128)
        z = jnp.maximum(z * b1s2_ref[l:l + 1, :] + b1b2_ref[l:l + 1, :], 0.0)
        # 3x3 conv (pad=1) on the 2x2 grid via in-register im2col.
        pos_rows = []
        for oh in range(2):
            for ow in range(2):
                taps = []
                for dy in (-1, 0, 1):
                    for dx in (-1, 0, 1):
                        r, c = oh + dy, ow + dx
                        if 0 <= r < 2 and 0 <= c < 2:
                            q = r * 2 + c
                            taps.append(z[q * B:(q + 1) * B, :])
                        else:
                            taps.append(zero_tap)
                pos_rows.append(jnp.concatenate(taps, axis=1))         # (B, 1152)
        patches = jnp.concatenate(pos_rows, axis=0)                    # (4B, 1152)
        new = jnp.dot(patches, b1w2_ref[l], preferred_element_type=F32)  # (4B, 32)
        c0 = c_init + growth * l
        slab1_ref[:, c0:c0 + growth] = new

    # -------- transition 1: BN + ReLU + 1x1 conv + avgpool 2x2 s2 -----------
    a = slab1_ref[...]
    h = jnp.maximum(a * trs_ref[...] + trb_ref[...], 0.0)
    t = jnp.dot(h, trw_ref[...], preferred_element_type=F32)           # (4B, 128)
    t_avg = (t[0 * B:1 * B, :] + t[1 * B:2 * B, :] +
             t[2 * B:3 * B, :] + t[3 * B:4 * B, :]) * 0.25             # (B, 128)

    # ------------- dense block 2 (12 layers, 1x1 spatial) -------------------
    # A 3x3 conv with pad=1 on a 1x1 input only ever uses its center tap.
    c_tr = trw_ref.shape[1]            # 128
    slab2_ref[...] = jnp.zeros(slab2_ref.shape, F32)
    slab2_ref[:, 0:c_tr] = t_avg
    for l in range(b2w1_ref.shape[0]):
        a = slab2_ref[...]
        h = jnp.maximum(a * b2s1_ref[l:l + 1, :] + b2b1_ref[l:l + 1, :], 0.0)
        z = jnp.dot(h, b2w1_ref[l], preferred_element_type=F32)        # (B, 128)
        z = jnp.maximum(z * b2s2_ref[l:l + 1, :] + b2b2_ref[l:l + 1, :], 0.0)
        new = jnp.dot(z, b2w2_ref[l], preferred_element_type=F32)      # (B, 32)
        c0 = c_tr + growth * l
        slab2_ref[:, c0:c0 + growth] = new

    # -------- norm5 + relu + avg_pool2d(k=1,s=1) [identity] + classifier ----
    # Spatial size is 1x1, so flatten == channels and the per-channel affine
    # is exact here.
    y = slab2_ref[...]
    h = jnp.maximum(y * n5s_ref[...] + n5b_ref[...], 0.0)
    o_ref[...] = (jnp.dot(h, cw_ref[...], preferred_element_type=F32)
                  + cb_ref[...])


# ------------------------------ wrapper ---------------------------------------
def forward(x, P):
    """x: NHWC (B, 8, 8, 3)."""
    B, H, W, C = x.shape
    assert (H, W, C) == (8, 8, 3), "kernel is specialised to TestNetwork's 8x8x3 input"
    # One-time im2col for conv0 (7x7, stride 2, pad 3) on the tiny input:
    # (B*16, 147), rows ordered b*16 + oh*4 + ow.
    xp = jnp.pad(x, ((0, 0), (3, 3), (3, 3), (0, 0)))
    wins = []
    for oh in range(4):
        for ow in range(4):
            win = xp[:, 2 * oh:2 * oh + 7, 2 * ow:2 * ow + 7, :]
            wins.append(win.reshape(B, 7 * 7 * C))
    patches = jnp.stack(wins, axis=1).reshape(B * 16, 7 * 7 * C)

    args = (patches, P["conv0_w"], P["norm0_s"], P["norm0_b"],
            P["b1_bn1_s"], P["b1_bn1_b"], P["b1_w1"],
            P["b1_bn2_s"], P["b1_bn2_b"], P["b1_w2"],
            P["tr_bn_s"], P["tr_bn_b"], P["tr_w"],
            P["b2_bn1_s"], P["b2_bn1_b"], P["b2_w1"],
            P["b2_bn2_s"], P["b2_bn2_b"], P["b2_w2c"],
            P["norm5_s"], P["norm5_b"], P["cls_w"], P["cls_b"])
    c_blk1 = P["b1_bn1_s"].shape[1]    # 256
    c_blk2 = P["b2_bn1_s"].shape[1]    # 512
    n_cls = P["cls_w"].shape[1]
    return pl.pallas_call(
        _densenet_kernel,
        out_shape=jax.ShapeDtypeStruct((B, n_cls), F32),
        in_specs=[pl.BlockSpec(memory_space=VMEM)] * len(args),
        out_specs=pl.BlockSpec(memory_space=VMEM),
        scratch_shapes=[pltpu.VMEM((4 * B, c_blk1), F32),   # block-1 slab (2x2 spatial)
                        pltpu.VMEM((B, c_blk2), F32)],      # block-2 slab (1x1 spatial)
        compiler_params=pltpu.CompilerParams(vmem_limit_bytes=32 * 1024 * 1024),
    )(*args)


# ------------------------------ parameter init --------------------------------
class KeyGen:
    def __init__(self, seed):
        self.key = jax.random.PRNGKey(seed)

    def __call__(self):
        self.key, sub = jax.random.split(self.key)
        return sub


def conv_w(kg, kh, kw, cin, cout):
    fan_in = kh * kw * cin
    w = jax.random.normal(kg(), (kh, kw, cin, cout), F32) * (2.0 / fan_in) ** 0.5
    return w.reshape(kh * kw * cin, cout)     # im2col matrix (HWIO flattened)


def make_bn(kg, c, eps=1e-5):
    # TODO(synk): eval-mode folded BN with randomised running stats; PyTorch's
    # fresh module would use train-mode batch statistics.
    gamma = jax.random.uniform(kg(), (c,), F32, 0.8, 1.2)
    beta = 0.1 * jax.random.normal(kg(), (c,), F32)
    mean = 0.1 * jax.random.normal(kg(), (c,), F32)
    var = jax.random.uniform(kg(), (c,), F32, 0.5, 1.5)
    scale = gamma * jax.lax.rsqrt(var + eps)
    shift = beta - mean * scale
    return scale, shift


def build_params(seed=0):
    kg = KeyGen(seed)
    num_init_features, growth_rate, bn_size = 64, 32, 4
    block_config = (6, 12)
    num_classes = 10
    P = {}
    P["conv0_w"] = conv_w(kg, 7, 7, 3, num_init_features)              # (147, 64)
    s, b = make_bn(kg, num_init_features)
    P["norm0_s"], P["norm0_b"] = s[None, :], b[None, :]

    num_features = num_init_features
    for bi, num_layers in enumerate(block_config):
        pad_to = num_features + num_layers * growth_rate   # final slab width
        bw = bn_size * growth_rate                         # bottleneck = 128
        bn1s, bn1b, w1s, bn2s, bn2b, w2s, w2cs = [], [], [], [], [], [], []
        nf = num_features
        for _ in range(num_layers):
            s1, b1 = make_bn(kg, nf)
            bn1s.append(jnp.pad(s1, (0, pad_to - nf)))
            bn1b.append(jnp.pad(b1, (0, pad_to - nf)))
            w1 = conv_w(kg, 1, 1, nf, bw)                  # (nf, 128)
            w1s.append(jnp.pad(w1, ((0, pad_to - nf), (0, 0))))
            s2, b2 = make_bn(kg, bw)
            bn2s.append(s2)
            bn2b.append(b2)
            w2 = conv_w(kg, 3, 3, bw, growth_rate)         # (1152, 32)
            w2s.append(w2)
            w2cs.append(w2[4 * bw:5 * bw, :])              # center tap (kh=kw=1)
            nf += growth_rate
        tag = "b%d" % (bi + 1)
        P[tag + "_bn1_s"] = jnp.stack(bn1s)
        P[tag + "_bn1_b"] = jnp.stack(bn1b)
        P[tag + "_w1"] = jnp.stack(w1s)
        P[tag + "_bn2_s"] = jnp.stack(bn2s)
        P[tag + "_bn2_b"] = jnp.stack(bn2b)
        if bi == 0:
            P[tag + "_w2"] = jnp.stack(w2s)                # full 3x3 (2x2 spatial)
        else:
            P[tag + "_w2c"] = jnp.stack(w2cs)              # center tap (1x1 spatial)
        num_features = nf
        if bi != len(block_config) - 1:
            ts, tb = make_bn(kg, num_features)
            P["tr_bn_s"], P["tr_bn_b"] = ts[None, :], tb[None, :]
            P["tr_w"] = conv_w(kg, 1, 1, num_features, num_features // 2)
            num_features //= 2

    s5, b5 = make_bn(kg, num_features)                     # 512
    P["norm5_s"], P["norm5_b"] = s5[None, :], b5[None, :]
    P["cls_w"] = 0.05 * jax.random.normal(kg(), (num_features, num_classes), F32)
    P["cls_b"] = jnp.zeros((1, num_classes), F32)
    return P


# --------------------------------- main ---------------------------------------
if __name__ == "__main__":
    params = build_params(0)
    # PyTorch input would be NCHW (2, 3, 8, 8); kernel layout is NHWC (2, 8, 8, 3).
    x = jax.random.normal(jax.random.PRNGKey(0), (2, 8, 8, 3), F32)
    run = jax.jit(forward)
    out = jax.block_until_ready(run(x, params))
    assert out.shape == (2, 10), out.shape
    assert bool(jnp.all(jnp.isfinite(out)))
    print("KERNEL_OK")
</pallas_src>

<mosaic_0001>
module attributes {stable_mosaic.version = 11 : i64} {
  func.func @_densenet_kernel(%arg0: memref<32x147xf32, #tpu.memory_space<vmem>>, %arg1: memref<147x64xf32, #tpu.memory_space<vmem>>, %arg2: memref<1x64xf32, #tpu.memory_space<vmem>>, %arg3: memref<1x64xf32, #tpu.memory_space<vmem>>, %arg4: memref<6x256xf32, #tpu.memory_space<vmem>>, %arg5: memref<6x256xf32, #tpu.memory_space<vmem>>, %arg6: memref<6x256x128xf32, #tpu.memory_space<vmem>>, %arg7: memref<6x128xf32, #tpu.memory_space<vmem>>, %arg8: memref<6x128xf32, #tpu.memory_space<vmem>>, %arg9: memref<6x1152x32xf32, #tpu.memory_space<vmem>>, %arg10: memref<1x256xf32, #tpu.memory_space<vmem>>, %arg11: memref<1x256xf32, #tpu.memory_space<vmem>>, %arg12: memref<256x128xf32, #tpu.memory_space<vmem>>, %arg13: memref<12x512xf32, #tpu.memory_space<vmem>>, %arg14: memref<12x512xf32, #tpu.memory_space<vmem>>, %arg15: memref<12x512x128xf32, #tpu.memory_space<vmem>>, %arg16: memref<12x128xf32, #tpu.memory_space<vmem>>, %arg17: memref<12x128xf32, #tpu.memory_space<vmem>>, %arg18: memref<12x128x32xf32, #tpu.memory_space<vmem>>, %arg19: memref<1x512xf32, #tpu.memory_space<vmem>>, %arg20: memref<1x512xf32, #tpu.memory_space<vmem>>, %arg21: memref<512x10xf32, #tpu.memory_space<vmem>>, %arg22: memref<1x10xf32, #tpu.memory_space<vmem>>, %arg23: memref<2x10xf32, #tpu.memory_space<vmem>>, %arg24: memref<8x256xf32, #tpu.memory_space<vmem>>, %arg25: memref<2x512xf32, #tpu.memory_space<vmem>>) attributes {dimension_semantics = [], scalar_prefetch = 0 : i64, scratch_operands = 2 : i64, tpu.core_type = #tpu.core_type<tc>} {
    %c0 = arith.constant 0 : index
    %c0_0 = arith.constant 0 : index
    %0 = vector.load %arg0[%c0, %c0_0] : memref<32x147xf32, #tpu.memory_space<vmem>>, vector<32x147xf32>
    %c0_1 = arith.constant 0 : index
    %c0_2 = arith.constant 0 : index
    %1 = vector.load %arg1[%c0_1, %c0_2] : memref<147x64xf32, #tpu.memory_space<vmem>>, vector<147x64xf32>
    %cst = arith.constant dense<0.000000e+00> : vector<32x64xf32>
    %2 = tpu.matmul %0, %1, %cst {dimension_numbers = #tpu.dot_dimension_numbers<[1], [0], [0], [1], [0, 0, 1, 1], [], []>} : vector<32x147xf32>, vector<147x64xf32>, vector<32x64xf32> -> vector<32x64xf32>
    %c0_3 = arith.constant 0 : index
    %c0_4 = arith.constant 0 : index
    %3 = vector.load %arg2[%c0_3, %c0_4] : memref<1x64xf32, #tpu.memory_space<vmem>>, vector<1x64xf32>
    %4 = vector.broadcast %3 : vector<1x64xf32> to vector<32x64xf32>
    %5 = arith.mulf %2, %4 : vector<32x64xf32>
    %c0_5 = arith.constant 0 : index
    %c0_6 = arith.constant 0 : index
    %6 = vector.load %arg3[%c0_5, %c0_6] : memref<1x64xf32, #tpu.memory_space<vmem>>, vector<1x64xf32>
    %7 = vector.broadcast %6 : vector<1x64xf32> to vector<32x64xf32>
    %8 = arith.addf %5, %7 : vector<32x64xf32>
    %cst_7 = arith.constant 0.000000e+00 : f32
    %9 = vector.broadcast %cst_7 : f32 to vector<32x64xf32>
    %10 = arith.maximumf %8, %9 : vector<32x64xf32>
    %11 = vector.extract_strided_slice %10 {offsets = [0, 0], sizes = [1, 64], strides = [1, 1]} : vector<32x64xf32> to vector<1x64xf32>
    %12 = vector.extract_strided_slice %10 {offsets = [1, 0], sizes = [1, 64], strides = [1, 1]} : vector<32x64xf32> to vector<1x64xf32>
    %13 = arith.maximumf %11, %12 : vector<1x64xf32>
    %14 = vector.extract_strided_slice %10 {offsets = [4, 0], sizes = [1, 64], strides = [1, 1]} : vector<32x64xf32> to vector<1x64xf32>
    %15 = arith.maximumf %13, %14 : vector<1x64xf32>
    %16 = vector.extract_strided_slice %10 {offsets = [5, 0], sizes = [1, 64], strides = [1, 1]} : vector<32x64xf32> to vector<1x64xf32>
    %17 = arith.maximumf %15, %16 : vector<1x64xf32>
    %18 = vector.extract_strided_slice %10 {offsets = [16, 0], sizes = [1, 64], strides = [1, 1]} : vector<32x64xf32> to vector<1x64xf32>
    %19 = vector.extract_strided_slice %10 {offsets = [17, 0], sizes = [1, 64], strides = [1, 1]} : vector<32x64xf32> to vector<1x64xf32>
    %20 = arith.maximumf %18, %19 : vector<1x64xf32>
    %21 = vector.extract_strided_slice %10 {offsets = [20, 0], sizes = [1, 64], strides = [1, 1]} : vector<32x64xf32> to vector<1x64xf32>
    %22 = arith.maximumf %20, %21 : vector<1x64xf32>
    %23 = vector.extract_strided_slice %10 {offsets = [21, 0], sizes = [1, 64], strides = [1, 1]} : vector<32x64xf32> to vector<1x64xf32>
    %24 = arith.maximumf %22, %23 : vector<1x64xf32>
    %25 = vector.extract_strided_slice %10 {offsets = [1, 0], sizes = [1, 64], strides = [1, 1]} : vector<32x64xf32> to vector<1x64xf32>
    %26 = vector.extract_strided_slice %10 {offsets = [2, 0], sizes = [1, 64], strides = [1, 1]} : vector<32x64xf32> to vector<1x64xf32>
    %27 = arith.maximumf %25, %26 : vector<1x64xf32>
    %28 = vector.extract_strided_slice %10 {offsets = [3, 0], sizes = [1, 64], strides = [1, 1]} : vector<32x64xf32> to vector<1x64xf32>
    %29 = arith.maximumf %27, %28 : vector<1x64xf32>
    %30 = vector.extract_strided_slice %10 {offsets = [5, 0], sizes = [1, 64], strides = [1, 1]} : vector<32x64xf32> to vector<1x64xf32>
    %31 = arith.maximumf %29, %30 : vector<1x64xf32>
    %32 = vector.extract_strided_slice %10 {offsets = [6, 0], sizes = [1, 64], strides = [1, 1]} : vector<32x64xf32> to vector<1x64xf32>
    %33 = arith.maximumf %31, %32 : vector<1x64xf32>
    %34 = vector.extract_strided_slice %10 {offsets = [7, 0], sizes = [1, 64], strides = [1, 1]} : vector<32x64xf32> to vector<1x64xf32>
    %35 = arith.maximumf %33, %34 : vector<1x64xf32>
    %36 = vector.extract_strided_slice %10 {offsets = [17, 0], sizes = [1, 64], strides = [1, 1]} : vector<32x64xf32> to vector<1x64xf32>
    %37 = vector.extract_strided_slice %10 {offsets = [18, 0], sizes = [1, 64], strides = [1, 1]} : vector<32x64xf32> to vector<1x64xf32>
    %38 = arith.maximumf %36, %37 : vector<1x64xf32>
    %39 = vector.extract_strided_slice %10 {offsets = [19, 0], sizes = [1, 64], strides = [1, 1]} : vector<32x64xf32> to vector<1x64xf32>
    %40 = arith.maximumf %38, %39 : vector<1x64xf32>
    %41 = vector.extract_strided_slice %10 {offsets = [21, 0], sizes = [1, 64], strides = [1, 1]} : vector<32x64xf32> to vector<1x64xf32>
    %42 = arith.maximumf %40, %41 : vector<1x64xf32>
    %43 = vector.extract_strided_slice %10 {offsets = [22, 0], sizes = [1, 64], strides = [1, 1]} : vector<32x64xf32> to vector<1x64xf32>
    %44 = arith.maximumf %42, %43 : vector<1x64xf32>
    %45 = vector.extract_strided_slice %10 {offsets = [23, 0], sizes = [1, 64], strides = [1, 1]} : vector<32x64xf32> to vector<1x64xf32>
    %46 = arith.maximumf %44, %45 : vector<1x64xf32>
    %47 = vector.extract_strided_slice %10 {offsets = [4, 0], sizes = [1, 64], strides = [1, 1]} : vector<32x64xf32> to vector<1x64xf32>
    %48 = vector.extract_strided_slice %10 {offsets = [5, 0], sizes = [1, 64], strides = [1, 1]} : vector<32x64xf32> to vector<1x64xf32>
    %49 = arith.maximumf %47, %48 : vector<1x64xf32>
    %50 = vector.extract_strided_slice %10 {offsets = [8, 0], sizes = [1, 64], strides = [1, 1]} : vector<32x64xf32> to vector<1x64xf32>
    %51 = arith.maximumf %49, %50 : vector<1x64xf32>
    %52 = vector.extract_strided_slice %10 {offsets = [9, 0], sizes = [1, 64], strides = [1, 1]} : vector<32x64xf32> to vector<1x64xf32>
    %53 = arith.maximumf %51, %52 : vector<1x64xf32>
    %54 = vector.extract_strided_slice %10 {offsets = [12, 0], sizes = [1, 64], strides = [1, 1]} : vector<32x64xf32> to vector<1x64xf32>
    %55 = arith.maximumf %53, %54 : vector<1x64xf32>
    %56 = vector.extract_strided_slice %10 {offsets = [13, 0], sizes = [1, 64], strides = [1, 1]} : vector<32x64xf32> to vector<1x64xf32>
    %57 = arith.maximumf %55, %56 : vector<1x64xf32>
    %58 = vector.extract_strided_slice %10 {offsets = [20, 0], sizes = [1, 64], strides = [1, 1]} : vector<32x64xf32> to vector<1x64xf32>
    %59 = vector.extract_strided_slice %10 {offsets = [21, 0], sizes = [1, 64], strides = [1, 1]} : vector<32x64xf32> to vector<1x64xf32>
    %60 = arith.maximumf %58, %59 : vector<1x64xf32>
    %61 = vector.extract_strided_slice %10 {offsets = [24, 0], sizes = [1, 64], strides = [1, 1]} : vector<32x64xf32> to vector<1x64xf32>
    %62 = arith.maximumf %60, %61 : vector<1x64xf32>
    %63 = vector.extract_strided_slice %10 {offsets = [25, 0], sizes = [1, 64], strides = [1, 1]} : vector<32x64xf32> to vector<1x64xf32>
    %64 = arith.maximumf %62, %63 : vector<1x64xf32>
    %65 = vector.extract_strided_slice %10 {offsets = [28, 0], sizes = [1, 64], strides = [1, 1]} : vector<32x64xf32> to vector<1x64xf32>
    %66 = arith.maximumf %64, %65 : vector<1x64xf32>
    %67 = vector.extract_strided_slice %10 {offsets = [29, 0], sizes = [1, 64], strides = [1, 1]} : vector<32x64xf32> to vector<1x64xf32>
    %68 = arith.maximumf %66, %67 : vector<1x64xf32>
    %69 = vector.extract_strided_slice %10 {offsets = [5, 0], sizes = [1, 64], strides = [1, 1]} : vector<32x64xf32> to vector<1x64xf32>
    %70 = vector.extract_strided_slice %10 {offsets = [6, 0], sizes = [1, 64], strides = [1, 1]} : vector<32x64xf32> to vector<1x64xf32>
    %71 = arith.maximumf %69, %70 : vector<1x64xf32>
    %72 = vector.extract_strided_slice %10 {offsets = [7, 0], sizes = [1, 64], strides = [1, 1]} : vector<32x64xf32> to vector<1x64xf32>
    %73 = arith.maximumf %71, %72 : vector<1x64xf32>
    %74 = vector.extract_strided_slice %10 {offsets = [9, 0], sizes = [1, 64], strides = [1, 1]} : vector<32x64xf32> to vector<1x64xf32>
    %75 = arith.maximumf %73, %74 : vector<1x64xf32>
    %76 = vector.extract_strided_slice %10 {offsets = [10, 0], sizes = [1, 64], strides = [1, 1]} : vector<32x64xf32> to vector<1x64xf32>
    %77 = arith.maximumf %75, %76 : vector<1x64xf32>
    %78 = vector.extract_strided_slice %10 {offsets = [11, 0], sizes = [1, 64], strides = [1, 1]} : vector<32x64xf32> to vector<1x64xf32>
    %79 = arith.maximumf %77, %78 : vector<1x64xf32>
    %80 = vector.extract_strided_slice %10 {offsets = [13, 0], sizes = [1, 64], strides = [1, 1]} : vector<32x64xf32> to vector<1x64xf32>
    %81 = arith.maximumf %79, %80 : vector<1x64xf32>
    %82 = vector.extract_strided_slice %10 {offsets = [14, 0], sizes = [1, 64], strides = [1, 1]} : vector<32x64xf32> to vector<1x64xf32>
    %83 = arith.maximumf %81, %82 : vector<1x64xf32>
    %84 = vector.extract_strided_slice %10 {offsets = [15, 0], sizes = [1, 64], strides = [1, 1]} : vector<32x64xf32> to vector<1x64xf32>
    %85 = arith.maximumf %83, %84 : vector<1x64xf32>
    %86 = vector.extract_strided_slice %10 {offsets = [21, 0], sizes = [1, 64], strides = [1, 1]} : vector<32x64xf32> to vector<1x64xf32>
    %87 = vector.extract_strided_slice %10 {offsets = [22, 0], sizes = [1, 64], strides = [1, 1]} : vector<32x64xf32> to vector<1x64xf32>
    %88 = arith.maximumf %86, %87 : vector<1x64xf32>
    %89 = vector.extract_strided_slice %10 {offsets = [23, 0], sizes = [1, 64], strides = [1, 1]} : vector<32x64xf32> to vector<1x64xf32>
    %90 = arith.maximumf %88, %89 : vector<1x64xf32>
    %91 = vector.extract_strided_slice %10 {offsets = [25, 0], sizes = [1, 64], strides = [1, 1]} : vector<32x64xf32> to vector<1x64xf32>
    %92 = arith.maximumf %90, %91 : vector<1x64xf32>
    %93 = vector.extract_strided_slice %10 {offsets = [26, 0], sizes = [1, 64], strides = [1, 1]} : vector<32x64xf32> to vector<1x64xf32>
    %94 = arith.maximumf %92, %93 : vector<1x64xf32>
    %95 = vector.extract_strided_slice %10 {offsets = [27, 0], sizes = [1, 64], strides = [1, 1]} : vector<32x64xf32> to vector<1x64xf32>
    %96 = arith.maximumf %94, %95 : vector<1x64xf32>
    %97 = vector.extract_strided_slice %10 {offsets = [29, 0], sizes = [1, 64], strides = [1, 1]} : vector<32x64xf32> to vector<1x64xf32>
    %98 = arith.maximumf %96, %97 : vector<1x64xf32>
    %99 = vector.extract_strided_slice %10 {offsets = [30, 0], sizes = [1, 64], strides = [1, 1]} : vector<32x64xf32> to vector<1x64xf32>
    %100 = arith.maximumf %98, %99 : vector<1x64xf32>
    %101 = vector.extract_strided_slice %10 {offsets = [31, 0], sizes = [1, 64], strides = [1, 1]} : vector<32x64xf32> to vector<1x64xf32>
    %102 = arith.maximumf %100, %101 : vector<1x64xf32>
    %103 = tpu.concatenate %17, %24, %35, %46, %57, %68, %85, %102 in 0 : vector<1x64xf32>, vector<1x64xf32>, vector<1x64xf32>, vector<1x64xf32>, vector<1x64xf32>, vector<1x64xf32>, vector<1x64xf32>, vector<1x64xf32> -> vector<8x64xf32>
    %cst_8 = arith.constant 0.000000e+00 : f32
    %104 = vector.broadcast %cst_8 : f32 to vector<8x256xf32>
    %c0_9 = arith.constant 0 : index
    %c0_10 = arith.constant 0 : index
    %105 = vector.load %arg24[%c0_9, %c0_10] : memref<8x256xf32, #tpu.memory_space<vmem>>, vector<8x256xf32>
    tpu.vector_store %arg24[%c0_9, %c0_10], %104 {strides = array<i32>} : memref<8x256xf32, #tpu.memory_space<vmem>>, vector<8x256xf32>,
    %c0_11 = arith.constant 0 : index
    %c0_12 = arith.constant 0 : index
    %106 = vector.load %arg24[%c0_11, %c0_12] : memref<8x256xf32, #tpu.memory_space<vmem>>, vector<8x64xf32>
    tpu.vector_store %arg24[%c0_11, %c0_12], %103 {strides = array<i32>} : memref<8x256xf32, #tpu.memory_space<vmem>>, vector<8x64xf32>,
    %cst_13 = arith.constant 0.000000e+00 : f32
    %107 = vector.broadcast %cst_13 : f32 to vector<2x128xf32>
    %c0_14 = arith.constant 0 : index
    %c0_15 = arith.constant 0 : index
    %108 = vector.load %arg24[%c0_14, %c0_15] : memref<8x256xf32, #tpu.memory_space<vmem>>, vector<8x256xf32>
    %c0_16 = arith.constant 0 : index
    %c0_17 = arith.constant 0 : index
    %109 = vector.load %arg4[%c0_16, %c0_17] : memref<6x256xf32, #tpu.memory_space<vmem>>, vector<1x256xf32>
    %110 = vector.broadcast %109 : vector<1x256xf32> to vector<8x256xf32>
    %111 = arith.mulf %108, %110 : vector<8x256xf32>
    %c0_18 = arith.constant 0 : index
    %c0_19 = arith.constant 0 : index
    %112 = vector.load %arg5[%c0_18, %c0_19] : memref<6x256xf32, #tpu.memory_space<vmem>>, vector<1x256xf32>
    %113 = vector.broadcast %112 : vector<1x256xf32> to vector<8x256xf32>
    %114 = arith.addf %111, %113 : vector<8x256xf32>
    %cst_20 = arith.constant 0.000000e+00 : f32
    %115 = vector.broadcast %cst_20 : f32 to vector<8x256xf32>
    %116 = arith.maximumf %114, %115 : vector<8x256xf32>
    %c0_21 = arith.constant 0 : index
    %c0_22 = arith.constant 0 : index
    %c0_23 = arith.constant 0 : index
    %117 = vector.load %arg6[%c0_21, %c0_22, %c0_23] : memref<6x256x128xf32, #tpu.memory_space<vmem>>, vector<1x256x128xf32>
    %118 = vector.shape_cast %117 : vector<1x256x128xf32> to vector<256x128xf32>
    %cst_24 = arith.constant dense<0.000000e+00> : vector<8x128xf32>
    %119 = tpu.matmul %116, %118, %cst_24 {dimension_numbers = #tpu.dot_dimension_numbers<[1], [0], [0], [1], [0, 0, 1, 1], [], []>} : vector<8x256xf32>, vector<256x128xf32>, vector<8x128xf32> -> vector<8x128xf32>
    %c0_25 = arith.constant 0 : index
    %c0_26 = arith.constant 0 : index
    %120 = vector.load %arg7[%c0_25, %c0_26] : memref<6x128xf32, #tpu.memory_space<vmem>>, vector<1x128xf32>
    %121 = vector.broadcast %120 : vector<1x128xf32> to vector<8x128xf32>
    %122 = arith.mulf %119, %121 : vector<8x128xf32>
    %c0_27 = arith.constant 0 : index
    %c0_28 = arith.constant 0 : index
    %123 = vector.load %arg8[%c0_27, %c0_28] : memref<6x128xf32, #tpu.memory_space<vmem>>, vector<1x128xf32>
    %124 = vector.broadcast %123 : vector<1x128xf32> to vector<8x128xf32>
    %125 = arith.addf %122, %124 : vector<8x128xf32>
    %cst_29 = arith.constant 0.000000e+00 : f32
    %126 = vector.broadcast %cst_29 : f32 to vector<8x128xf32>
    %127 = arith.maximumf %125, %126 : vector<8x128xf32>
    %128 = vector.extract_strided_slice %127 {offsets = [0, 0], sizes = [2, 128], strides = [1, 1]} : vector<8x128xf32> to vector<2x128xf32>
    %129 = vector.extract_strided_slice %127 {offsets = [2, 0], sizes = [2, 128], strides = [1, 1]} : vector<8x128xf32> to vector<2x128xf32>
    %130 = vector.extract_strided_slice %127 {offsets = [4, 0], sizes = [2, 128], strides = [1, 1]} : vector<8x128xf32> to vector<2x128xf32>
    %131 = vector.extract_strided_slice %127 {offsets = [6, 0], sizes = [2, 128], strides = [1, 1]} : vector<8x128xf32> to vector<2x128xf32>
    %132 = tpu.concatenate %107, %107, %107, %107, %128, %129, %107, %130, %131 in 1 : vector<2x128xf32>, vector<2x128xf32>, vector<2x128xf32>, vector<2x128xf32>, vector<2x128xf32>, vector<2x128xf32>, vector<2x128xf32>, vector<2x128xf32>, vector<2x128xf32> -> vector<2x1152xf32>
    %133 = vector.extract_strided_slice %127 {offsets = [0, 0], sizes = [2, 128], strides = [1, 1]} : vector<8x128xf32> to vector<2x128xf32>
    %134 = vector.extract_strided_slice %127 {offsets = [2, 0], sizes = [2, 128], strides = [1, 1]} : vector<8x128xf32> to vector<2x128xf32>
    %135 = vector.extract_strided_slice %127 {offsets = [4, 0], sizes = [2, 128], strides = [1, 1]} : vector<8x128xf32> to vector<2x128xf32>
    %136 = vector.extract_strided_slice %127 {offsets = [6, 0], sizes = [2, 128], strides = [1, 1]} : vector<8x128xf32> to vector<2x128xf32>
    %137 = tpu.concatenate %107, %107, %107, %133, %134, %107, %135, %136, %107 in 1 : vector<2x128xf32>, vector<2x128xf32>, vector<2x128xf32>, vector<2x128xf32>, vector<2x128xf32>, vector<2x128xf32>, vector<2x128xf32>, vector<2x128xf32>, vector<2x128xf32> -> vector<2x1152xf32>
    %138 = vector.extract_strided_slice %127 {offsets = [0, 0], sizes = [2, 128], strides = [1, 1]} : vector<8x128xf32> to vector<2x128xf32>
    %139 = vector.extract_strided_slice %127 {offsets = [2, 0], sizes = [2, 128], strides = [1, 1]} : vector<8x128xf32> to vector<2x128xf32>
    %140 = vector.extract_strided_slice %127 {offsets = [4, 0], sizes = [2, 128], strides = [1, 1]} : vector<8x128xf32> to vector<2x128xf32>
    %141 = vector.extract_strided_slice %127 {offsets = [6, 0], sizes = [2, 128], strides = [1, 1]} : vector<8x128xf32> to vector<2x128xf32>
    %142 = tpu.concatenate %107, %138, %139, %107, %140, %141, %107, %107, %107 in 1 : vector<2x128xf32>, vector<2x128xf32>, vector<2x128xf32>, vector<2x128xf32>, vector<2x128xf32>, vector<2x128xf32>, vector<2x128xf32>, vector<2x128xf32>, vector<2x128xf32> -> vector<2x1152xf32>
    %143 = vector.extract_strided_slice %127 {offsets = [0, 0], sizes = [2, 128], strides = [1, 1]} : vector<8x128xf32> to vector<2x128xf32>
    %144 = vector.extract_strided_slice %127 {offsets = [2, 0], sizes = [2, 128], strides = [1, 1]} : vector<8x128xf32> to vector<2x128xf32>
    %145 = vector.extract_strided_slice %127 {offsets = [4, 0], sizes = [2, 128], strides = [1, 1]} : vector<8x128xf32> to vector<2x128xf32>
    %146 = vector.extract_strided_slice %127 {offsets = [6, 0], sizes = [2, 128], strides = [1, 1]} : vector<8x128xf32> to vector<2x128xf32>
    %147 = tpu.concatenate %143, %144, %107, %145, %146, %107, %107, %107, %107 in 1 : vector<2x128xf32>, vector<2x128xf32>, vector<2x128xf32>, vector<2x128xf32>, vector<2x128xf32>, vector<2x128xf32>, vector<2x128xf32>, vector<2x128xf32>, vector<2x128xf32> -> vector<2x1152xf32>
    %148 = tpu.concatenate %132, %137, %142, %147 in 0 : vector<2x1152xf32>, vector<2x1152xf32>, vector<2x1152xf32>, vector<2x1152xf32> -> vector<8x1152xf32>
    %c0_30 = arith.constant 0 : index
    %c0_31 = arith.constant 0 : index
    %c0_32 = arith.constant 0 : index
    %149 = vector.load %arg9[%c0_30, %c0_31, %c0_32] : memref<6x1152x32xf32, #tpu.memory_space<vmem>>, vector<1x1152x32xf32>
    %150 = vector.shape_cast %149 : vector<1x1152x32xf32> to vector<1152x32xf32>
    %cst_33 = arith.constant dense<0.000000e+00> : vector<8x32xf32>
    %151 = tpu.matmul %148, %150, %cst_33 {dimension_numbers = #tpu.dot_dimension_numbers<[1], [0], [0], [1], [0, 0, 1, 1], [], []>} : vector<8x1152xf32>, vector<1152x32xf32>, vector<8x32xf32> -> vector<8x32xf32>
    %c0_34 = arith.constant 0 : index
    %c64 = arith.constant 64 : index
    %152 = vector.load %arg24[%c0_34, %c64] : memref<8x256xf32, #tpu.memory_space<vmem>>, vector<8x32xf32>
    tpu.vector_store %arg24[%c0_34, %c64], %151 {strides = array<i32>} : memref<8x256xf32, #tpu.memory_space<vmem>>, vector<8x32xf32>,
    %c0_35 = arith.constant 0 : index
    %c0_36 = arith.constant 0 : index
    %153 = vector.load %arg24[%c0_35, %c0_36] : memref<8x256xf32, #tpu.memory_space<vmem>>, vector<8x256xf32>
    %c1 = arith.constant 1 : index
    %c0_37 = arith.constant 0 : index
    %154 = vector.load %arg4[%c1, %c0_37] : memref<6x256xf32, #tpu.memory_space<vmem>>, vector<1x256xf32>
    %155 = vector.broadcast %154 : vector<1x256xf32> to vector<8x256xf32>
    %156 = arith.mulf %153, %155 : vector<8x256xf32>
    %c1_38 = arith.constant 1 : index
    %c0_39 = arith.constant 0 : index
    %157 = vector.load %arg5[%c1_38, %c0_39] : memref<6x256xf32, #tpu.memory_space<vmem>>, vector<1x256xf32>
    %158 = vector.broadcast %157 : vector<1x256xf32> to vector<8x256xf32>
    %159 = arith.addf %156, %158 : vector<8x256xf32>
    %cst_40 = arith.constant 0.000000e+00 : f32
    %160 = vector.broadcast %cst_40 : f32 to vector<8x256xf32>
    %161 = arith.maximumf %159, %160 : vector<8x256xf32>
    %c1_41 = arith.constant 1 : index
    %c0_42 = arith.constant 0 : index
    %c0_43 = arith.constant 0 : index
    %162 = vector.load %arg6[%c1_41, %c0_42, %c0_43] : memref<6x256x128xf32, #tpu.memory_space<vmem>>, vector<1x256x128xf32>
    %163 = vector.shape_cast %162 : vector<1x256x128xf32> to vector<256x128xf32>
    %cst_44 = arith.constant dense<0.000000e+00> : vector<8x128xf32>
    %164 = tpu.matmul %161, %163, %cst_44 {dimension_numbers = #tpu.dot_dimension_numbers<[1], [0], [0], [1], [0, 0, 1, 1], [], []>} : vector<8x256xf32>, vector<256x128xf32>, vector<8x128xf32> -> vector<8x128xf32>
    %c1_45 = arith.constant 1 : index
    %c0_46 = arith.constant 0 : index
    %165 = vector.load %arg7[%c1_45, %c0_46] : memref<6x128xf32, #tpu.memory_space<vmem>>, vector<1x128xf32>
    %166 = vector.broadcast %165 : vector<1x128xf32> to vector<8x128xf32>
    %167 = arith.mulf %164, %166 : vector<8x128xf32>
    %c1_47 = arith.constant 1 : index
    %c0_48 = arith.constant 0 : index
    %168 = vector.load %arg8[%c1_47, %c0_48] : memref<6x128xf32, #tpu.memory_space<vmem>>, vector<1x128xf32>
    %169 = vector.broadcast %168 : vector<1x128xf32> to vector<8x128xf32>
    %170 = arith.addf %167, %169 : vector<8x128xf32>
    %cst_49 = arith.constant 0.000000e+00 : f32
    %171 = vector.broadcast %cst_49 : f32 to vector<8x128xf32>
    %172 = arith.maximumf %170, %171 : vector<8x128xf32>
    %173 = vector.extract_strided_slice %172 {offsets = [0, 0], sizes = [2, 128], strides = [1, 1]} : vector<8x128xf32> to vector<2x128xf32>
    %174 = vector.extract_strided_slice %172 {offsets = [2, 0], sizes = [2, 128], strides = [1, 1]} : vector<8x128xf32> to vector<2x128xf32>
    %175 = vector.extract_strided_slice %172 {offsets = [4, 0], sizes = [2, 128], strides = [1, 1]} : vector<8x128xf32> to vector<2x128xf32>
    %176 = vector.extract_strided_slice %172 {offsets = [6, 0], sizes = [2, 128], strides = [1, 1]} : vector<8x128xf32> to vector<2x128xf32>
    %177 = tpu.concatenate %107, %107, %107, %107, %173, %174, %107, %175, %176 in 1 : vector<2x128xf32>, vector<2x128xf32>, vector<2x128xf32>, vector<2x128xf32>, vector<2x128xf32>, vector<2x128xf32>, vector<2x128xf32>, vector<2x128xf32>, vector<2x128xf32> -> vector<2x1152xf32>
    %178 = vector.extract_strided_slice %172 {offsets = [0, 0], sizes = [2, 128], strides = [1, 1]} : vector<8x128xf32> to vector<2x128xf32>
    %179 = vector.extract_strided_slice %172 {offsets = [2, 0], sizes = [2, 128], strides = [1, 1]} : vector<8x128xf32> to vector<2x128xf32>
    %180 = vector.extract_strided_slice %172 {offsets = [4, 0], sizes = [2, 128], strides = [1, 1]} : vector<8x128xf32> to vector<2x128xf32>
    %181 = vector.extract_strided_slice %172 {offsets = [6, 0], sizes = [2, 128], strides = [1, 1]} : vector<8x128xf32> to vector<2x128xf32>
    %182 = tpu.concatenate %107, %107, %107, %178, %179, %107, %180, %181, %107 in 1 : vector<2x128xf32>, vector<2x128xf32>, vector<2x128xf32>, vector<2x128xf32>, vector<2x128xf32>, vector<2x128xf32>, vector<2x128xf32>, vector<2x128xf32>, vector<2x128xf32> -> vector<2x1152xf32>
    %183 = vector.extract_strided_slice %172 {offsets = [0, 0], sizes = [2, 128], strides = [1, 1]} : vector<8x128xf32> to vector<2x128xf32>
    %184 = vector.extract_strided_slice %172 {offsets = [2, 0], sizes = [2, 128], strides = [1, 1]} : vector<8x128xf32> to vector<2x128xf32>
    %185 = vector.extract_strided_slice %172 {offsets = [4, 0], sizes = [2, 128], strides = [1, 1]} : vector<8x128xf32> to vector<2x128xf32>
    %186 = vector.extract_strided_slice %172 {offsets = [6, 0], sizes = [2, 128], strides = [1, 1]} : vector<8x128xf32> to vector<2x128xf32>
    %187 = tpu.concatenate %107, %183, %184, %107, %185, %186, %107, %107, %107 in 1 : vector<2x128xf32>, vector<2x128xf32>, vector<2x128xf32>, vector<2x128xf32>, vector<2x128xf32>, vector<2x128xf32>, vector<2x128xf32>, vector<2x128xf32>, vector<2x128xf32> -> vector<2x1152xf32>
    %188 = vector.extract_strided_slice %172 {offsets = [0, 0], sizes = [2, 128], strides = [1, 1]} : vector<8x128xf32> to vector<2x128xf32>
    %189 = vector.extract_strided_slice %172 {offsets = [2, 0], sizes = [2, 128], strides = [1, 1]} : vector<8x128xf32> to vector<2x128xf32>
    %190 = vector.extract_strided_slice %172 {offsets = [4, 0], sizes = [2, 128], strides = [1, 1]} : vector<8x128xf32> to vector<2x128xf32>
    %191 = vector.extract_strided_slice %172 {offsets = [6, 0], sizes = [2, 128], strides = [1, 1]} : vector<8x128xf32> to vector<2x128xf32>
    %192 = tpu.concatenate %188, %189, %107, %190, %191, %107, %107, %107, %107 in 1 : vector<2x128xf32>, vector<2x128xf32>, vector<2x128xf32>, vector<2x128xf32>, vector<2x128xf32>, vector<2x128xf32>, vector<2x128xf32>, vector<2x128xf32>, vector<2x128xf32> -> vector<2x1152xf32>
    %193 = tpu.concatenate %177, %182, %187, %192 in 0 : vector<2x1152xf32>, vector<2x1152xf32>, vector<2x1152xf32>, vector<2x1152xf32> -> vector<8x1152xf32>
    %c1_50 = arith.constant 1 : index
    %c0_51 = arith.constant 0 : index
    %c0_52 = arith.constant 0 : index
    %194 = vector.load %arg9[%c1_50, %c0_51, %c0_52] : memref<6x1152x32xf32, #tpu.memory_space<vmem>>, vector<1x1152x32xf32>
    %195 = vector.shape_cast %194 : vector<1x1152x32xf32> to vector<1152x32xf32>
    %cst_53 = arith.constant dense<0.000000e+00> : vector<8x32xf32>
    %196 = tpu.matmul %193, %195, %cst_53 {dimension_numbers = #tpu.dot_dimension_numbers<[1], [0], [0], [1], [0, 0, 1, 1], [], []>} : vector<8x1152xf32>, vector<1152x32xf32>, vector<8x32xf32> -> vector<8x32xf32>
    %c0_54 = arith.constant 0 : index
    %c96 = arith.constant 96 : index
    %197 = vector.load %arg24[%c0_54, %c96] : memref<8x256xf32, #tpu.memory_space<vmem>>, vector<8x32xf32>
    tpu.vector_store %arg24[%c0_54, %c96], %196 {strides = array<i32>} : memref<8x256xf32, #tpu.memory_space<vmem>>, vector<8x32xf32>,
    %c0_55 = arith.constant 0 : index
    %c0_56 = arith.constant 0 : index
    %198 = vector.load %arg24[%c0_55, %c0_56] : memref<8x256xf32, #tpu.memory_space<vmem>>, vector<8x256xf32>
    %c2 = arith.constant 2 : index
    %c0_57 = arith.constant 0 : index
    %199 = vector.load %arg4[%c2, %c0_57] : memref<6x256xf32, #tpu.memory_space<vmem>>, vector<1x256xf32>
    %200 = vector.broadcast %199 : vector<1x256xf32> to vector<8x256xf32>
    %201 = arith.mulf %198, %200 : vector<8x256xf32>
    %c2_58 = arith.constant 2 : index
    %c0_59 = arith.constant 0 : index
    %202 = vector.load %arg5[%c2_58, %c0_59] : memref<6x256xf32, #tpu.memory_space<vmem>>, vector<1x256xf32>
    %203 = vector.broadcast %202 : vector<1x256xf32> to vector<8x256xf32>
    %204 = arith.addf %201, %203 : vector<8x256xf32>
    %cst_60 = arith.constant 0.000000e+00 : f32
    %205 = vector.broadcast %cst_60 : f32 to vector<8x256xf32>
    %206 = arith.maximumf %204, %205 : vector<8x256xf32>
    %c2_61 = arith.constant 2 : index
    %c0_62 = arith.constant 0 : index
    %c0_63 = arith.constant 0 : index
    %207 = vector.load %arg6[%c2_61, %c0_62, %c0_63] : memref<6x256x128xf32, #tpu.memory_space<vmem>>, vector<1x256x128xf32>
    %208 = vector.shape_cast %207 : vector<1x256x128xf32> to vector<256x128xf32>
    %cst_64 = arith.constant dense<0.000000e+00> : vector<8x128xf32>
    %209 = tpu.matmul %206, %208, %cst_64 {dimension_numbers = #tpu.dot_dimension_numbers<[1], [0], [0], [1], [0, 0, 1, 1], [], []>} : vector<8x256xf32>, vector<256x128xf32>, vector<8x128xf32> -> vector<8x128xf32>
    %c2_65 = arith.constant 2 : index
    %c0_66 = arith.constant 0 : index
    %210 = vector.load %arg7[%c2_65, %c0_66] : memref<6x128xf32, #tpu.memory_space<vmem>>, vector<1x128xf32>
    %211 = vector.broadcast %210 : vector<1x128xf32> to vector<8x128xf32>
    %212 = arith.mulf %209, %211 : vector<8x128xf32>
    %c2_67 = arith.constant 2 : index
    %c0_68 = arith.constant 0 : index
    %213 = vector.load %arg8[%c2_67, %c0_68] : memref<6x128xf32, #tpu.memory_space<vmem>>, vector<1x128xf32>
    %214 = vector.broadcast %213 : vector<1x128xf32> to vector<8x128xf32>
    %215 = arith.addf %212, %214 : vector<8x128xf32>
    %cst_69 = arith.constant 0.000000e+00 : f32
    %216 = vector.broadcast %cst_69 : f32 to vector<8x128xf32>
    %217 = arith.maximumf %215, %216 : vector<8x128xf32>
    %218 = vector.extract_strided_slice %217 {offsets = [0, 0], sizes = [2, 128], strides = [1, 1]} : vector<8x128xf32> to vector<2x128xf32>
    %219 = vector.extract_strided_slice %217 {offsets = [2, 0], sizes = [2, 128], strides = [1, 1]} : vector<8x128xf32> to vector<2x128xf32>
    %220 = vector.extract_strided_slice %217 {offsets = [4, 0], sizes = [2, 128], strides = [1, 1]} : vector<8x128xf32> to vector<2x128xf32>
    %221 = vector.extract_strided_slice %217 {offsets = [6, 0], sizes = [2, 128], strides = [1, 1]} : vector<8x128xf32> to vector<2x128xf32>
    %222 = tpu.concatenate %107, %107, %107, %107, %218, %219, %107, %220, %221 in 1 : vector<2x128xf32>, vector<2x128xf32>, vector<2x128xf32>, vector<2x128xf32>, vector<2x128xf32>, vector<2x128xf32>, vector<2x128xf32>, vector<2x128xf32>, vector<2x128xf32> -> vector<2x1152xf32>
    %223 = vector.extract_strided_slice %217 {offsets = [0, 0], sizes = [2, 128], strides = [1, 1]} : vector<8x128xf32> to vector<2x128xf32>
    %224 = vector.extract_strided_slice %217 {offsets = [2, 0], sizes = [2, 128], strides = [1, 1]} : vector<8x128xf32> to vector<2x128xf32>
    %225 = vector.extract_strided_slice %217 {offsets = [4, 0], sizes = [2, 128], strides = [1, 1]} : vector<8x128xf32> to vector<2x128xf32>
    %226 = vector.extract_strided_slice %217 {offsets = [6, 0], sizes = [2, 128], strides = [1, 1]} : vector<8x128xf32> to vector<2x128xf32>
    %227 = tpu.concatenate %107, %107, %107, %223, %224, %107, %225, %226, %107 in 1 : vector<2x128xf32>, vector<2x128xf32>, vector<2x128xf32>, vector<2x128xf32>, vector<2x128xf32>, vector<2x128xf32>, vector<2x128xf32>, vector<2x128xf32>, vector<2x128xf32> -> vector<2x1152xf32>
    %228 = vector.extract_strided_slice %217 {offsets = [0, 0], sizes = [2, 128], strides = [1, 1]} : vector<8x128xf32> to vector<2x128xf32>
    %229 = vector.extract_strided_slice %217 {offsets = [2, 0], sizes = [2, 128], strides = [1, 1]} : vector<8x128xf32> to vector<2x128xf32>
    %230 = vector.extract_strided_slice %217 {offsets = [4, 0], sizes = [2, 128], strides = [1, 1]} : vector<8x128xf32> to vector<2x128xf32>
    %231 = vector.extract_strided_slice %217 {offsets = [6, 0], sizes = [2, 128], strides = [1, 1]} : vector<8x128xf32> to vector<2x128xf32>
    %232 = tpu.concatenate %107, %228, %229, %107, %230, %231, %107, %107, %107 in 1 : vector<2x128xf32>, vector<2x128xf32>, vector<2x128xf32>, vector<2x128xf32>, vector<2x128xf32>, vector<2x128xf32>, vector<2x128xf32>, vector<2x128xf32>, vector<2x128xf32> -> vector<2x1152xf32>
    %233 = vector.extract_strided_slice %217 {offsets = [0, 0], sizes = [2, 128], strides = [1, 1]} : vector<8x128xf32> to vector<2x128xf32>
    %234 = vector.extract_strided_slice %217 {offsets = [2, 0], sizes = [2, 128], strides = [1, 1]} : vector<8x128xf32> to vector<2x128xf32>
    %235 = vector.extract_strided_slice %217 {offsets = [4, 0], sizes = [2, 128], strides = [1, 1]} : vector<8x128xf32> to vector<2x128xf32>
    %236 = vector.extract_strided_slice %217 {offsets = [6, 0], sizes = [2, 128], strides = [1, 1]} : vector<8x128xf32> to vector<2x128xf32>
    %237 = tpu.concatenate %233, %234, %107, %235, %236, %107, %107, %107, %107 in 1 : vector<2x128xf32>, vector<2x128xf32>, vector<2x128xf32>, vector<2x128xf32>, vector<2x128xf32>, vector<2x128xf32>, vector<2x128xf32>, vector<2x128xf32>, vector<2x128xf32> -> vector<2x1152xf32>
    %238 = tpu.concatenate %222, %227, %232, %237 in 0 : vector<2x1152xf32>, vector<2x1152xf32>, vector<2x1152xf32>, vector<2x1152xf32> -> vector<8x1152xf32>
    %c2_70 = arith.constant 2 : index
    %c0_71 = arith.constant 0 : index
    %c0_72 = arith.constant 0 : index
    %239 = vector.load %arg9[%c2_70, %c0_71, %c0_72] : memref<6x1152x32xf32, #tpu.memory_space<vmem>>, vector<1x1152x32xf32>
    %240 = vector.shape_cast %239 : vector<1x1152x32xf32> to vector<1152x32xf32>
    %cst_73 = arith.constant dense<0.000000e+00> : vector<8x32xf32>
    %241 = tpu.matmul %238, %240, %cst_73 {dimension_numbers = #tpu.dot_dimension_numbers<[1], [0], [0], [1], [0, 0, 1, 1], [], []>} : vector<8x1152xf32>, vector<1152x32xf32>, vector<8x32xf32> -> vector<8x32xf32>
    %c0_74 = arith.constant 0 : index
    %c128 = arith.constant 128 : index
    %242 = vector.load %arg24[%c0_74, %c128] : memref<8x256xf32, #tpu.memory_space<vmem>>, vector<8x32xf32>
    tpu.vector_store %arg24[%c0_74, %c128], %241 {strides = array<i32>} : memref<8x256xf32, #tpu.memory_space<vmem>>, vector<8x32xf32>,
    %c0_75 = arith.constant 0 : index
    %c0_76 = arith.constant 0 : index
    %243 = vector.load %arg24[%c0_75, %c0_76] : memref<8x256xf32, #tpu.memory_space<vmem>>, vector<8x256xf32>
    %c3 = arith.constant 3 : index
    %c0_77 = arith.constant 0 : index
    %244 = vector.load %arg4[%c3, %c0_77] : memref<6x256xf32, #tpu.memory_space<vmem>>, vector<1x256xf32>
    %245 = vector.broadcast %244 : vector<1x256xf32> to vector<8x256xf32>
    %246 = arith.mulf %243, %245 : vector<8x256xf32>
    %c3_78 = arith.constant 3 : index
    %c0_79 = arith.constant 0 : index
    %247 = vector.load %arg5[%c3_78, %c0_79] : memref<6x256xf32, #tpu.memory_space<vmem>>, vector<1x256xf32>
    %248 = vector.broadcast %247 : vector<1x256xf32> to vector<8x256xf32>
    %249 = arith.addf %246, %248 : vector<8x256xf32>
    %cst_80 = arith.constant 0.000000e+00 : f32
    %250 = vector.broadcast %cst_80 : f32 to vector<8x256xf32>
    %251 = arith.maximumf %249, %250 : vector<8x256xf32>
    %c3_81 = arith.constant 3 : index
    %c0_82 = arith.constant 0 : index
    %c0_83 = arith.constant 0 : index
    %252 = vector.load %arg6[%c3_81, %c0_82, %c0_83] : memref<6x256x128xf32, #tpu.memory_space<vmem>>, vector<1x256x128xf32>
    %253 = vector.shape_cast %252 : vector<1x256x128xf32> to vector<256x128xf32>
    %cst_84 = arith.constant dense<0.000000e+00> : vector<8x128xf32>
    %254 = tpu.matmul %251, %253, %cst_84 {dimension_numbers = #tpu.dot_dimension_numbers<[1], [0], [0], [1], [0, 0, 1, 1], [], []>} : vector<8x256xf32>, vector<256x128xf32>, vector<8x128xf32> -> vector<8x128xf32>
    %c3_85 = arith.constant 3 : index
    %c0_86 = arith.constant 0 : index
    %255 = vector.load %arg7[%c3_85, %c0_86] : memref<6x128xf32, #tpu.memory_space<vmem>>, vector<1x128xf32>
    %256 = vector.broadcast %255 : vector<1x128xf32> to vector<8x128xf32>
    %257 = arith.mulf %254, %256 : vector<8x128xf32>
    %c3_87 = arith.constant 3 : index
    %c0_88 = arith.constant 0 : index
    %258 = vector.load %arg8[%c3_87, %c0_88] : memref<6x128xf32, #tpu.memory_space<vmem>>, vector<1x128xf32>
    %259 = vector.broadcast %258 : vector<1x128xf32> to vector<8x128xf32>
    %260 = arith.addf %257, %259 : vector<8x128xf32>
    %cst_89 = arith.constant 0.000000e+00 : f32
    %261 = vector.broadcast %cst_89 : f32 to vector<8x128xf32>
    %262 = arith.maximumf %260, %261 : vector<8x128xf32>
    %263 = vector.extract_strided_slice %262 {offsets = [0, 0], sizes = [2, 128], strides = [1, 1]} : vector<8x128xf32> to vector<2x128xf32>
    %264 = vector.extract_strided_slice %262 {offsets = [2, 0], sizes = [2, 128], strides = [1, 1]} : vector<8x128xf32> to vector<2x128xf32>
    %265 = vector.extract_strided_slice %262 {offsets = [4, 0], sizes = [2, 128], strides = [1, 1]} : vector<8x128xf32> to vector<2x128xf32>
    %266 = vector.extract_strided_slice %262 {offsets = [6, 0], sizes = [2, 128], strides = [1, 1]} : vector<8x128xf32> to vector<2x128xf32>
    %267 = tpu.concatenate %107, %107, %107, %107, %263, %264, %107, %265, %266 in 1 : vector<2x128xf32>, vector<2x128xf32>, vector<2x128xf32>, vector<2x128xf32>, vector<2x128xf32>, vector<2x128xf32>, vector<2x128xf32>, vector<2x128xf32>, vector<2x128xf32> -> vector<2x1152xf32>
    %268 = vector.extract_strided_slice %262 {offsets = [0, 0], sizes = [2, 128], strides = [1, 1]} : vector<8x128xf32> to vector<2x128xf32>
    %269 = vector.extract_strided_slice %262 {offsets = [2, 0], sizes = [2, 128], strides = [1, 1]} : vector<8x128xf32> to vector<2x128xf32>
    %270 = vector.extract_strided_slice %262 {offsets = [4, 0], sizes = [2, 128], strides = [1, 1]} : vector<8x128xf32> to vector<2x128xf32>
    %271 = vector.extract_strided_slice %262 {offsets = [6, 0], sizes = [2, 128], strides = [1, 1]} : vector<8x128xf32> to vector<2x128xf32>
    %272 = tpu.concatenate %107, %107, %107, %268, %269, %107, %270, %271, %107 in 1 : vector<2x128xf32>, vector<2x128xf32>, vector<2x128xf32>, vector<2x128xf32>, vector<2x128xf32>, vector<2x128xf32>, vector<2x128xf32>, vector<2x128xf32>, vector<2x128xf32> -> vector<2x1152xf32>
    %273 = vector.extract_strided_slice %262 {offsets = [0, 0], sizes = [2, 128], strides = [1, 1]} : vector<8x128xf32> to vector<2x128xf32>
    %274 = vector.extract_strided_slice %262 {offsets = [2, 0], sizes = [2, 128], strides = [1, 1]} : vector<8x128xf32> to vector<2x128xf32>
    %275 = vector.extract_strided_slice %262 {offsets = [4, 0], sizes = [2, 128], strides = [1, 1]} : vector<8x128xf32> to vector<2x128xf32>
    %276 = vector.extract_strided_slice %262 {offsets = [6, 0], sizes = [2, 128], strides = [1, 1]} : vector<8x128xf32> to vector<2x128xf32>
    %277 = tpu.concatenate %107, %273, %274, %107, %275, %276, %107, %107, %107 in 1 : vector<2x128xf32>, vector<2x128xf32>, vector<2x128xf32>, vector<2x128xf32>, vector<2x128xf32>, vector<2x128xf32>, vector<2x128xf32>, vector<2x128xf32>, vector<2x128xf32> -> vector<2x1152xf32>
    %278 = vector.extract_strided_slice %262 {offsets = [0, 0], sizes = [2, 128], strides = [1, 1]} : vector<8x128xf32> to vector<2x128xf32>
    %279 = vector.extract_strided_slice %262 {offsets = [2, 0], sizes = [2, 128], strides = [1, 1]} : vector<8x128xf32> to vector<2x128xf32>
    %280 = vector.extract_strided_slice %262 {offsets = [4, 0], sizes = [2, 128], strides = [1, 1]} : vector<8x128xf32> to vector<2x128xf32>
    %281 = vector.extract_strided_slice %262 {offsets = [6, 0], sizes = [2, 128], strides = [1, 1]} : vector<8x128xf32> to vector<2x128xf32>
    %282 = tpu.concatenate %278, %279, %107, %280, %281, %107, %107, %107, %107 in 1 : vector<2x128xf32>, vector<2x128xf32>, vector<2x128xf32>, vector<2x128xf32>, vector<2x128xf32>, vector<2x128xf32>, vector<2x128xf32>, vector<2x128xf32>, vector<2x128xf32> -> vector<2x1152xf32>
    %283 = tpu.concatenate %267, %272, %277, %282 in 0 : vector<2x1152xf32>, vector<2x1152xf32>, vector<2x1152xf32>, vector<2x1152xf32> -> vector<8x1152xf32>
    %c3_90 = arith.constant 3 : index
    %c0_91 = arith.constant 0 : index
    %c0_92 = arith.constant 0 : index
    %284 = vector.load %arg9[%c3_90, %c0_91, %c0_92] : memref<6x1152x32xf32, #tpu.memory_space<vmem>>, vector<1x1152x32xf32>
    %285 = vector.shape_cast %284 : vector<1x1152x32xf32> to vector<1152x32xf32>
    %cst_93 = arith.constant dense<0.000000e+00> : vector<8x32xf32>
    %286 = tpu.matmul %283, %285, %cst_93 {dimension_numbers = #tpu.dot_dimension_numbers<[1], [0], [0], [1], [0, 0, 1, 1], [], []>} : vector<8x1152xf32>, vector<1152x32xf32>, vector<8x32xf32> -> vector<8x32xf32>
    %c0_94 = arith.constant 0 : index
    %c160 = arith.constant 160 : index
    %287 = vector.load %arg24[%c0_94, %c160] : memref<8x256xf32, #tpu.memory_space<vmem>>, vector<8x32xf32>
    tpu.vector_store %arg24[%c0_94, %c160], %286 {strides = array<i32>} : memref<8x256xf32, #tpu.memory_space<vmem>>, vector<8x32xf32>,
    %c0_95 = arith.constant 0 : index
    %c0_96 = arith.constant 0 : index
    %288 = vector.load %arg24[%c0_95, %c0_96] : memref<8x256xf32, #tpu.memory_space<vmem>>, vector<8x256xf32>
    %c4 = arith.constant 4 : index
    %c0_97 = arith.constant 0 : index
    %289 = vector.load %arg4[%c4, %c0_97] : memref<6x256xf32, #tpu.memory_space<vmem>>, vector<1x256xf32>
    %290 = vector.broadcast %289 : vector<1x256xf32> to vector<8x256xf32>
    %291 = arith.mulf %288, %290 : vector<8x256xf32>
    %c4_98 = arith.constant 4 : index
    %c0_99 = arith.constant 0 : index
    %292 = vector.load %arg5[%c4_98, %c0_99] : memref<6x256xf32, #tpu.memory_space<vmem>>, vector<1x256xf32>
    %293 = vector.broadcast %292 : vector<1x256xf32> to vector<8x256xf32>
    %294 = arith.addf %291, %293 : vector<8x256xf32>
    %cst_100 = arith.constant 0.000000e+00 : f32
    %295 = vector.broadcast %cst_100 : f32 to vector<8x256xf32>
    %296 = arith.maximumf %294, %295 : vector<8x256xf32>
    %c4_101 = arith.constant 4 : index
    %c0_102 = arith.constant 0 : index
    %c0_103 = arith.constant 0 : index
    %297 = vector.load %arg6[%c4_101, %c0_102, %c0_103] : memref<6x256x128xf32, #tpu.memory_space<vmem>>, vector<1x256x128xf32>
    %298 = vector.shape_cast %297 : vector<1x256x128xf32> to vector<256x128xf32>
    %cst_104 = arith.constant dense<0.000000e+00> : vector<8x128xf32>
    %299 = tpu.matmul %296, %298, %cst_104 {dimension_numbers = #tpu.dot_dimension_numbers<[1], [0], [0], [1], [0, 0, 1, 1], [], []>} : vector<8x256xf32>, vector<256x128xf32>, vector<8x128xf32> -> vector<8x128xf32>
    %c4_105 = arith.constant 4 : index
    %c0_106 = arith.constant 0 : index
    %300 = vector.load %arg7[%c4_105, %c0_106] : memref<6x128xf32, #tpu.memory_space<vmem>>, vector<1x128xf32>
    %301 = vector.broadcast %300 : vector<1x128xf32> to vector<8x128xf32>
    %302 = arith.mulf %299, %301 : vector<8x128xf32>
    %c4_107 = arith.constant 4 : index
    %c0_108 = arith.constant 0 : index
    %303 = vector.load %arg8[%c4_107, %c0_108] : memref<6x128xf32, #tpu.memory_space<vmem>>, vector<1x128xf32>
    %304 = vector.broadcast %303 : vector<1x128xf32> to vector<8x128xf32>
    %305 = arith.addf %302, %304 : vector<8x128xf32>
    %cst_109 = arith.constant 0.000000e+00 : f32
    %306 = vector.broadcast %cst_109 : f32 to vector<8x128xf32>
    %307 = arith.maximumf %305, %306 : vector<8x128xf32>
    %308 = vector.extract_strided_slice %307 {offsets = [0, 0], sizes = [2, 128], strides = [1, 1]} : vector<8x128xf32> to vector<2x128xf32>
    %309 = vector.extract_strided_slice %307 {offsets = [2, 0], sizes = [2, 128], strides = [1, 1]} : vector<8x128xf32> to vector<2x128xf32>
    %310 = vector.extract_strided_slice %307 {offsets = [4, 0], sizes = [2, 128], strides = [1, 1]} : vector<8x128xf32> to vector<2x128xf32>
    %311 = vector.extract_strided_slice %307 {offsets = [6, 0], sizes = [2, 128], strides = [1, 1]} : vector<8x128xf32> to vector<2x128xf32>
    %312 = tpu.concatenate %107, %107, %107, %107, %308, %309, %107, %310, %311 in 1 : vector<2x128xf32>, vector<2x128xf32>, vector<2x128xf32>, vector<2x128xf32>, vector<2x128xf32>, vector<2x128xf32>, vector<2x128xf32>, vector<2x128xf32>, vector<2x128xf32> -> vector<2x1152xf32>
    %313 = vector.extract_strided_slice %307 {offsets = [0, 0], sizes = [2, 128], strides = [1, 1]} : vector<8x128xf32> to vector<2x128xf32>
    %314 = vector.extract_strided_slice %307 {offsets = [2, 0], sizes = [2, 128], strides = [1, 1]} : vector<8x128xf32> to vector<2x128xf32>
    %315 = vector.extract_strided_slice %307 {offsets = [4, 0], sizes = [2, 128], strides = [1, 1]} : vector<8x128xf32> to vector<2x128xf32>
    %316 = vector.extract_strided_slice %307 {offsets = [6, 0], sizes = [2, 128], strides = [1, 1]} : vector<8x128xf32> to vector<2x128xf32>
    %317 = tpu.concatenate %107, %107, %107, %313, %314, %107, %315, %316, %107 in 1 : vector<2x128xf32>, vector<2x128xf32>, vector<2x128xf32>, vector<2x128xf32>, vector<2x128xf32>, vector<2x128xf32>, vector<2x128xf32>, vector<2x128xf32>, vector<2x128xf32> -> vector<2x1152xf32>
    %318 = vector.extract_strided_slice %307 {offsets = [0, 0], sizes = [2, 128], strides = [1, 1]} : vector<8x128xf32> to vector<2x128xf32>
    %319 = vector.extract_strided_slice %307 {offsets = [2, 0], sizes = [2, 128], strides = [1, 1]} : vector<8x128xf32> to vector<2x128xf32>
    %320 = vector.extract_strided_slice %307 {offsets = [4, 0], sizes = [2, 128], strides = [1, 1]} : vector<8x128xf32> to vector<2x128xf32>
    %321 = vector.extract_strided_slice %307 {offsets = [6, 0], sizes = [2, 128], strides = [1, 1]} : vector<8x128xf32> to vector<2x128xf32>
    %322 = tpu.concatenate %107, %318, %319, %107, %320, %321, %107, %107, %107 in 1 : vector<2x128xf32>, vector<2x128xf32>, vector<2x128xf32>, vector<2x128xf32>, vector<2x128xf32>, vector<2x128xf32>, vector<2x128xf32>, vector<2x128xf32>, vector<2x128xf32> -> vector<2x1152xf32>
    %323 = vector.extract_strided_slice %307 {offsets = [0, 0], sizes = [2, 128], strides = [1, 1]} : vector<8x128xf32> to vector<2x128xf32>
    %324 = vector.extract_strided_slice %307 {offsets = [2, 0], sizes = [2, 128], strides = [1, 1]} : vector<8x128xf32> to vector<2x128xf32>
    %325 = vector.extract_strided_slice %307 {offsets = [4, 0], sizes = [2, 128], strides = [1, 1]} : vector<8x128xf32> to vector<2x128xf32>
    %326 = vector.extract_strided_slice %307 {offsets = [6, 0], sizes = [2, 128], strides = [1, 1]} : vector<8x128xf32> to vector<2x128xf32>
    %327 = tpu.concatenate %323, %324, %107, %325, %326, %107, %107, %107, %107 in 1 : vector<2x128xf32>, vector<2x128xf32>, vector<2x128xf32>, vector<2x128xf32>, vector<2x128xf32>, vector<2x128xf32>, vector<2x128xf32>, vector<2x128xf32>, vector<2x128xf32> -> vector<2x1152xf32>
    %328 = tpu.concatenate %312, %317, %322, %327 in 0 : vector<2x1152xf32>, vector<2x1152xf32>, vector<2x1152xf32>, vector<2x1152xf32> -> vector<8x1152xf32>
    %c4_110 = arith.constant 4 : index
    %c0_111 = arith.constant 0 : index
    %c0_112 = arith.constant 0 : index
    %329 = vector.load %arg9[%c4_110, %c0_111, %c0_112] : memref<6x1152x32xf32, #tpu.memory_space<vmem>>, vector<1x1152x32xf32>
    %330 = vector.shape_cast %329 : vector<1x1152x32xf32> to vector<1152x32xf32>
    %cst_113 = arith.constant dense<0.000000e+00> : vector<8x32xf32>
    %331 = tpu.matmul %328, %330, %cst_113 {dimension_numbers = #tpu.dot_dimension_numbers<[1], [0], [0], [1], [0, 0, 1, 1], [], []>} : vector<8x1152xf32>, vector<1152x32xf32>, vector<8x32xf32> -> vector<8x32xf32>
    %c0_114 = arith.constant 0 : index
    %c192 = arith.constant 192 : index
    %332 = vector.load %arg24[%c0_114, %c192] : memref<8x256xf32, #tpu.memory_space<vmem>>, vector<8x32xf32>
    tpu.vector_store %arg24[%c0_114, %c192], %331 {strides = array<i32>} : memref<8x256xf32, #tpu.memory_space<vmem>>, vector<8x32xf32>,
    %c0_115 = arith.constant 0 : index
    %c0_116 = arith.constant 0 : index
    %333 = vector.load %arg24[%c0_115, %c0_116] : memref<8x256xf32, #tpu.memory_space<vmem>>, vector<8x256xf32>
    %c5 = arith.constant 5 : index
    %c0_117 = arith.constant 0 : index
    %334 = vector.load %arg4[%c5, %c0_117] : memref<6x256xf32, #tpu.memory_space<vmem>>, vector<1x256xf32>
    %335 = vector.broadcast %334 : vector<1x256xf32> to vector<8x256xf32>
    %336 = arith.mulf %333, %335 : vector<8x256xf32>
    %c5_118 = arith.constant 5 : index
    %c0_119 = arith.constant 0 : index
    %337 = vector.load %arg5[%c5_118, %c0_119] : memref<6x256xf32, #tpu.memory_space<vmem>>, vector<1x256xf32>
    %338 = vector.broadcast %337 : vector<1x256xf32> to vector<8x256xf32>
    %339 = arith.addf %336, %338 : vector<8x256xf32>
    %cst_120 = arith.constant 0.000000e+00 : f32
    %340 = vector.broadcast %cst_120 : f32 to vector<8x256xf32>
    %341 = arith.maximumf %339, %340 : vector<8x256xf32>
    %c5_121 = arith.constant 5 : index
    %c0_122 = arith.constant 0 : index
    %c0_123 = arith.constant 0 : index
    %342 = vector.load %arg6[%c5_121, %c0_122, %c0_123] : memref<6x256x128xf32, #tpu.memory_space<vmem>>, vector<1x256x128xf32>
    %343 = vector.shape_cast %342 : vector<1x256x128xf32> to vector<256x128xf32>
    %cst_124 = arith.constant dense<0.000000e+00> : vector<8x128xf32>
    %344 = tpu.matmul %341, %343, %cst_124 {dimension_numbers = #tpu.dot_dimension_numbers<[1], [0], [0], [1], [0, 0, 1, 1], [], []>} : vector<8x256xf32>, vector<256x128xf32>, vector<8x128xf32> -> vector<8x128xf32>
    %c5_125 = arith.constant 5 : index
    %c0_126 = arith.constant 0 : index
    %345 = vector.load %arg7[%c5_125, %c0_126] : memref<6x128xf32, #tpu.memory_space<vmem>>, vector<1x128xf32>
    %346 = vector.broadcast %345 : vector<1x128xf32> to vector<8x128xf32>
    %347 = arith.mulf %344, %346 : vector<8x128xf32>
    %c5_127 = arith.constant 5 : index
    %c0_128 = arith.constant 0 : index
    %348 = vector.load %arg8[%c5_127, %c0_128] : memref<6x128xf32, #tpu.memory_space<vmem>>, vector<1x128xf32>
    %349 = vector.broadcast %348 : vector<1x128xf32> to vector<8x128xf32>
    %350 = arith.addf %347, %349 : vector<8x128xf32>
    %cst_129 = arith.constant 0.000000e+00 : f32
    %351 = vector.broadcast %cst_129 : f32 to vector<8x128xf32>
    %352 = arith.maximumf %350, %351 : vector<8x128xf32>
    %353 = vector.extract_strided_slice %352 {offsets = [0, 0], sizes = [2, 128], strides = [1, 1]} : vector<8x128xf32> to vector<2x128xf32>
    %354 = vector.extract_strided_slice %352 {offsets = [2, 0], sizes = [2, 128], strides = [1, 1]} : vector<8x128xf32> to vector<2x128xf32>
    %355 = vector.extract_strided_slice %352 {offsets = [4, 0], sizes = [2, 128], strides = [1, 1]} : vector<8x128xf32> to vector<2x128xf32>
    %356 = vector.extract_strided_slice %352 {offsets = [6, 0], sizes = [2, 128], strides = [1, 1]} : vector<8x128xf32> to vector<2x128xf32>
    %357 = tpu.concatenate %107, %107, %107, %107, %353, %354, %107, %355, %356 in 1 : vector<2x128xf32>, vector<2x128xf32>, vector<2x128xf32>, vector<2x128xf32>, vector<2x128xf32>, vector<2x128xf32>, vector<2x128xf32>, vector<2x128xf32>, vector<2x128xf32> -> vector<2x1152xf32>
    %358 = vector.extract_strided_slice %352 {offsets = [0, 0], sizes = [2, 128], strides = [1, 1]} : vector<8x128xf32> to vector<2x128xf32>
    %359 = vector.extract_strided_slice %352 {offsets = [2, 0], sizes = [2, 128], strides = [1, 1]} : vector<8x128xf32> to vector<2x128xf32>
    %360 = vector.extract_strided_slice %352 {offsets = [4, 0], sizes = [2, 128], strides = [1, 1]} : vector<8x128xf32> to vector<2x128xf32>
    %361 = vector.extract_strided_slice %352 {offsets = [6, 0], sizes = [2, 128], strides = [1, 1]} : vector<8x128xf32> to vector<2x128xf32>
    %362 = tpu.concatenate %107, %107, %107, %358, %359, %107, %360, %361, %107 in 1 : vector<2x128xf32>, vector<2x128xf32>, vector<2x128xf32>, vector<2x128xf32>, vector<2x128xf32>, vector<2x128xf32>, vector<2x128xf32>, vector<2x128xf32>, vector<2x128xf32> -> vector<2x1152xf32>
    %363 = vector.extract_strided_slice %352 {offsets = [0, 0], sizes = [2, 128], strides = [1, 1]} : vector<8x128xf32> to vector<2x128xf32>
    %364 = vector.extract_strided_slice %352 {offsets = [2, 0], sizes = [2, 128], strides = [1, 1]} : vector<8x128xf32> to vector<2x128xf32>
    %365 = vector.extract_strided_slice %352 {offsets = [4, 0], sizes = [2, 128], strides = [1, 1]} : vector<8x128xf32> to vector<2x128xf32>
    %366 = vector.extract_strided_slice %352 {offsets = [6, 0], sizes = [2, 128], strides = [1, 1]} : vector<8x128xf32> to vector<2x128xf32>
    %367 = tpu.concatenate %107, %363, %364, %107, %365, %366, %107, %107, %107 in 1 : vector<2x128xf32>, vector<2x128xf32>, vector<2x128xf32>, vector<2x128xf32>, vector<2x128xf32>, vector<2x128xf32>, vector<2x128xf32>, vector<2x128xf32>, vector<2x128xf32> -> vector<2x1152xf32>
    %368 = vector.extract_strided_slice %352 {offsets = [0, 0], sizes = [2, 128], strides = [1, 1]} : vector<8x128xf32> to vector<2x128xf32>
    %369 = vector.extract_strided_slice %352 {offsets = [2, 0], sizes = [2, 128], strides = [1, 1]} : vector<8x128xf32> to vector<2x128xf32>
    %370 = vector.extract_strided_slice %352 {offsets = [4, 0], sizes = [2, 128], strides = [1, 1]} : vector<8x128xf32> to vector<2x128xf32>
    %371 = vector.extract_strided_slice %352 {offsets = [6, 0], sizes = [2, 128], strides = [1, 1]} : vector<8x128xf32> to vector<2x128xf32>
    %372 = tpu.concatenate %368, %369, %107, %370, %371, %107, %107, %107, %107 in 1 : vector<2x128xf32>, vector<2x128xf32>, vector<2x128xf32>, vector<2x128xf32>, vector<2x128xf32>, vector<2x128xf32>, vector<2x128xf32>, vector<2x128xf32>, vector<2x128xf32> -> vector<2x1152xf32>
    %373 = tpu.concatenate %357, %362, %367, %372 in 0 : vector<2x1152xf32>, vector<2x1152xf32>, vector<2x1152xf32>, vector<2x1152xf32> -> vector<8x1152xf32>
    %c5_130 = arith.constant 5 : index
    %c0_131 = arith.constant 0 : index
    %c0_132 = arith.constant 0 : index
    %374 = vector.load %arg9[%c5_130, %c0_131, %c0_132] : memref<6x1152x32xf32, #tpu.memory_space<vmem>>, vector<1x1152x32xf32>
    %375 = vector.shape_cast %374 : vector<1x1152x32xf32> to vector<1152x32xf32>
    %cst_133 = arith.constant dense<0.000000e+00> : vector<8x32xf32>
    %376 = tpu.matmul %373, %375, %cst_133 {dimension_numbers = #tpu.dot_dimension_numbers<[1], [0], [0], [1], [0, 0, 1, 1], [], []>} : vector<8x1152xf32>, vector<1152x32xf32>, vector<8x32xf32> -> vector<8x32xf32>
    %c0_134 = arith.constant 0 : index
    %c224 = arith.constant 224 : index
    %377 = vector.load %arg24[%c0_134, %c224] : memref<8x256xf32, #tpu.memory_space<vmem>>, vector<8x32xf32>
    tpu.vector_store %arg24[%c0_134, %c224], %376 {strides = array<i32>} : memref<8x256xf32, #tpu.memory_space<vmem>>, vector<8x32xf32>,
    %c0_135 = arith.constant 0 : index
    %c0_136 = arith.constant 0 : index
    %378 = vector.load %arg24[%c0_135, %c0_136] : memref<8x256xf32, #tpu.memory_space<vmem>>, vector<8x256xf32>
    %c0_137 = arith.constant 0 : index
    %c0_138 = arith.constant 0 : index
    %379 = vector.load %arg10[%c0_137, %c0_138] : memref<1x256xf32, #tpu.memory_space<vmem>>, vector<1x256xf32>
    %380 = vector.broadcast %379 : vector<1x256xf32> to vector<8x256xf32>
    %381 = arith.mulf %378, %380 : vector<8x256xf32>
    %c0_139 = arith.constant 0 : index
    %c0_140 = arith.constant 0 : index
    %382 = vector.load %arg11[%c0_139, %c0_140] : memref<1x256xf32, #tpu.memory_space<vmem>>, vector<1x256xf32>
    %383 = vector.broadcast %382 : vector<1x256xf32> to vector<8x256xf32>
    %384 = arith.addf %381, %383 : vector<8x256xf32>
    %cst_141 = arith.constant 0.000000e+00 : f32
    %385 = vector.broadcast %cst_141 : f32 to vector<8x256xf32>
    %386 = arith.maximumf %384, %385 : vector<8x256xf32>
    %c0_142 = arith.constant 0 : index
    %c0_143 = arith.constant 0 : index
    %387 = vector.load %arg12[%c0_142, %c0_143] : memref<256x128xf32, #tpu.memory_space<vmem>>, vector<256x128xf32>
    %cst_144 = arith.constant dense<0.000000e+00> : vector<8x128xf32>
    %388 = tpu.matmul %386, %387, %cst_144 {dimension_numbers = #tpu.dot_dimension_numbers<[1], [0], [0], [1], [0, 0, 1, 1], [], []>} : vector<8x256xf32>, vector<256x128xf32>, vector<8x128xf32> -> vector<8x128xf32>
    %389 = vector.extract_strided_slice %388 {offsets = [0, 0], sizes = [2, 128], strides = [1, 1]} : vector<8x128xf32> to vector<2x128xf32>
    %390 = vector.extract_strided_slice %388 {offsets = [2, 0], sizes = [2, 128], strides = [1, 1]} : vector<8x128xf32> to vector<2x128xf32>
    %391 = arith.addf %389, %390 : vector<2x128xf32>
    %392 = vector.extract_strided_slice %388 {offsets = [4, 0], sizes = [2, 128], strides = [1, 1]} : vector<8x128xf32> to vector<2x128xf32>
    %393 = arith.addf %391, %392 : vector<2x128xf32>
    %394 = vector.extract_strided_slice %388 {offsets = [6, 0], sizes = [2, 128], strides = [1, 1]} : vector<8x128xf32> to vector<2x128xf32>
    %395 = arith.addf %393, %394 : vector<2x128xf32>
    %cst_145 = arith.constant 2.500000e-01 : f32
    %396 = vector.broadcast %cst_145 : f32 to vector<2x128xf32>
    %397 = arith.mulf %395, %396 : vector<2x128xf32>
    %cst_146 = arith.constant 0.000000e+00 : f32
    %398 = vector.broadcast %cst_146 : f32 to vector<2x512xf32>
    %c0_147 = arith.constant 0 : index
    %c0_148 = arith.constant 0 : index
    %399 = vector.load %arg25[%c0_147, %c0_148] : memref<2x512xf32, #tpu.memory_space<vmem>>, vector<2x512xf32>
    tpu.vector_store %arg25[%c0_147, %c0_148], %398 {strides = array<i32>} : memref<2x512xf32, #tpu.memory_space<vmem>>, vector<2x512xf32>,
    %c0_149 = arith.constant 0 : index
    %c0_150 = arith.constant 0 : index
    %400 = vector.load %arg25[%c0_149, %c0_150] : memref<2x512xf32, #tpu.memory_space<vmem>>, vector<2x128xf32>
    tpu.vector_store %arg25[%c0_149, %c0_150], %397 {strides = array<i32>} : memref<2x512xf32, #tpu.memory_space<vmem>>, vector<2x128xf32>,
    %c0_151 = arith.constant 0 : index
    %c0_152 = arith.constant 0 : index
    %401 = vector.load %arg25[%c0_151, %c0_152] : memref<2x512xf32, #tpu.memory_space<vmem>>, vector<2x512xf32>
    %c0_153 = arith.constant 0 : index
    %c0_154 = arith.constant 0 : index
    %402 = vector.load %arg13[%c0_153, %c0_154] : memref<12x512xf32, #tpu.memory_space<vmem>>, vector<1x512xf32>
    %403 = vector.broadcast %402 : vector<1x512xf32> to vector<2x512xf32>
    %404 = arith.mulf %401, %403 : vector<2x512xf32>
    %c0_155 = arith.constant 0 : index
    %c0_156 = arith.constant 0 : index
    %405 = vector.load %arg14[%c0_155, %c0_156] : memref<12x512xf32, #tpu.memory_space<vmem>>, vector<1x512xf32>
    %406 = vector.broadcast %405 : vector<1x512xf32> to vector<2x512xf32>
    %407 = arith.addf %404, %406 : vector<2x512xf32>
    %cst_157 = arith.constant 0.000000e+00 : f32
    %408 = vector.broadcast %cst_157 : f32 to vector<2x512xf32>
    %409 = arith.maximumf %407, %408 : vector<2x512xf32>
    %c0_158 = arith.constant 0 : index
    %c0_159 = arith.constant 0 : index
    %c0_160 = arith.constant 0 : index
    %410 = vector.load %arg15[%c0_158, %c0_159, %c0_160] : memref<12x512x128xf32, #tpu.memory_space<vmem>>, vector<1x512x128xf32>
    %411 = vector.shape_cast %410 : vector<1x512x128xf32> to vector<512x128xf32>
    %cst_161 = arith.constant dense<0.000000e+00> : vector<2x128xf32>
    %412 = tpu.matmul %409, %411, %cst_161 {dimension_numbers = #tpu.dot_dimension_numbers<[1], [0], [0], [1], [0, 0, 1, 1], [], []>} : vector<2x512xf32>, vector<512x128xf32>, vector<2x128xf32> -> vector<2x128xf32>
    %c0_162 = arith.constant 0 : index
    %c0_163 = arith.constant 0 : index
    %413 = vector.load %arg16[%c0_162, %c0_163] : memref<12x128xf32, #tpu.memory_space<vmem>>, vector<1x128xf32>
    %414 = vector.broadcast %413 : vector<1x128xf32> to vector<2x128xf32>
    %415 = arith.mulf %412, %414 : vector<2x128xf32>
    %c0_164 = arith.constant 0 : index
    %c0_165 = arith.constant 0 : index
    %416 = vector.load %arg17[%c0_164, %c0_165] : memref<12x128xf32, #tpu.memory_space<vmem>>, vector<1x128xf32>
    %417 = vector.broadcast %416 : vector<1x128xf32> to vector<2x128xf32>
    %418 = arith.addf %415, %417 : vector<2x128xf32>
    %cst_166 = arith.constant 0.000000e+00 : f32
    %419 = vector.broadcast %cst_166 : f32 to vector<2x128xf32>
    %420 = arith.maximumf %418, %419 : vector<2x128xf32>
    %c0_167 = arith.constant 0 : index
    %c0_168 = arith.constant 0 : index
    %c0_169 = arith.constant 0 : index
    %421 = vector.load %arg18[%c0_167, %c0_168, %c0_169] : memref<12x128x32xf32, #tpu.memory_space<vmem>>, vector<1x128x32xf32>
    %422 = vector.shape_cast %421 : vector<1x128x32xf32> to vector<128x32xf32>
    %cst_170 = arith.constant dense<0.000000e+00> : vector<2x32xf32>
    %423 = tpu.matmul %420, %422, %cst_170 {dimension_numbers = #tpu.dot_dimension_numbers<[1], [0], [0], [1], [0, 0, 1, 1], [], []>} : vector<2x128xf32>, vector<128x32xf32>, vector<2x32xf32> -> vector<2x32xf32>
    %c0_171 = arith.constant 0 : index
    %c128_172 = arith.constant 128 : index
    %424 = vector.load %arg25[%c0_171, %c128_172] : memref<2x512xf32, #tpu.memory_space<vmem>>, vector<2x32xf32>
    tpu.vector_store %arg25[%c0_171, %c128_172], %423 {strides = array<i32>} : memref<2x512xf32, #tpu.memory_space<vmem>>, vector<2x32xf32>,
    %c0_173 = arith.constant 0 : index
    %c0_174 = arith.constant 0 : index
    %425 = vector.load %arg25[%c0_173, %c0_174] : memref<2x512xf32, #tpu.memory_space<vmem>>, vector<2x512xf32>
    %c1_175 = arith.constant 1 : index
    %c0_176 = arith.constant 0 : index
    %426 = vector.load %arg13[%c1_175, %c0_176] : memref<12x512xf32, #tpu.memory_space<vmem>>, vector<1x512xf32>
    %427 = vector.broadcast %426 : vector<1x512xf32> to vector<2x512xf32>
    %428 = arith.mulf %425, %427 : vector<2x512xf32>
    %c1_177 = arith.constant 1 : index
    %c0_178 = arith.constant 0 : index
    %429 = vector.load %arg14[%c1_177, %c0_178] : memref<12x512xf32, #tpu.memory_space<vmem>>, vector<1x512xf32>
    %430 = vector.broadcast %429 : vector<1x512xf32> to vector<2x512xf32>
    %431 = arith.addf %428, %430 : vector<2x512xf32>
    %cst_179 = arith.constant 0.000000e+00 : f32
    %432 = vector.broadcast %cst_179 : f32 to vector<2x512xf32>
    %433 = arith.maximumf %431, %432 : vector<2x512xf32>
    %c1_180 = arith.constant 1 : index
    %c0_181 = arith.constant 0 : index
    %c0_182 = arith.constant 0 : index
    %434 = vector.load %arg15[%c1_180, %c0_181, %c0_182] : memref<12x512x128xf32, #tpu.memory_space<vmem>>, vector<1x512x128xf32>
    %435 = vector.shape_cast %434 : vector<1x512x128xf32> to vector<512x128xf32>
    %cst_183 = arith.constant dense<0.000000e+00> : vector<2x128xf32>
    %436 = tpu.matmul %433, %435, %cst_183 {dimension_numbers = #tpu.dot_dimension_numbers<[1], [0], [0], [1], [0, 0, 1, 1], [], []>} : vector<2x512xf32>, vector<512x128xf32>, vector<2x128xf32> -> vector<2x128xf32>
    %c1_184 = arith.constant 1 : index
    %c0_185 = arith.constant 0 : index
    %437 = vector.load %arg16[%c1_184, %c0_185] : memref<12x128xf32, #tpu.memory_space<vmem>>, vector<1x128xf32>
    %438 = vector.broadcast %437 : vector<1x128xf32> to vector<2x128xf32>
    %439 = arith.mulf %436, %438 : vector<2x128xf32>
    %c1_186 = arith.constant 1 : index
    %c0_187 = arith.constant 0 : index
    %440 = vector.load %arg17[%c1_186, %c0_187] : memref<12x128xf32, #tpu.memory_space<vmem>>, vector<1x128xf32>
    %441 = vector.broadcast %440 : vector<1x128xf32> to vector<2x128xf32>
    %442 = arith.addf %439, %441 : vector<2x128xf32>
    %cst_188 = arith.constant 0.000000e+00 : f32
    %443 = vector.broadcast %cst_188 : f32 to vector<2x128xf32>
    %444 = arith.maximumf %442, %443 : vector<2x128xf32>
    %c1_189 = arith.constant 1 : index
    %c0_190 = arith.constant 0 : index
    %c0_191 = arith.constant 0 : index
    %445 = vector.load %arg18[%c1_189, %c0_190, %c0_191] : memref<12x128x32xf32, #tpu.memory_space<vmem>>, vector<1x128x32xf32>
    %446 = vector.shape_cast %445 : vector<1x128x32xf32> to vector<128x32xf32>
    %cst_192 = arith.constant dense<0.000000e+00> : vector<2x32xf32>
    %447 = tpu.matmul %444, %446, %cst_192 {dimension_numbers = #tpu.dot_dimension_numbers<[1], [0], [0], [1], [0, 0, 1, 1], [], []>} : vector<2x128xf32>, vector<128x32xf32>, vector<2x32xf32> -> vector<2x32xf32>
    %c0_193 = arith.constant 0 : index
    %c160_194 = arith.constant 160 : index
    %448 = vector.load %arg25[%c0_193, %c160_194] : memref<2x512xf32, #tpu.memory_space<vmem>>, vector<2x32xf32>
    tpu.vector_store %arg25[%c0_193, %c160_194], %447 {strides = array<i32>} : memref<2x512xf32, #tpu.memory_space<vmem>>, vector<2x32xf32>,
    %c0_195 = arith.constant 0 : index
    %c0_196 = arith.constant 0 : index
    %449 = vector.load %arg25[%c0_195, %c0_196] : memref<2x512xf32, #tpu.memory_space<vmem>>, vector<2x512xf32>
    %c2_197 = arith.constant 2 : index
    %c0_198 = arith.constant 0 : index
    %450 = vector.load %arg13[%c2_197, %c0_198] : memref<12x512xf32, #tpu.memory_space<vmem>>, vector<1x512xf32>
    %451 = vector.broadcast %450 : vector<1x512xf32> to vector<2x512xf32>
    %452 = arith.mulf %449, %451 : vector<2x512xf32>
    %c2_199 = arith.constant 2 : index
    %c0_200 = arith.constant 0 : index
    %453 = vector.load %arg14[%c2_199, %c0_200] : memref<12x512xf32, #tpu.memory_space<vmem>>, vector<1x512xf32>
    %454 = vector.broadcast %453 : vector<1x512xf32> to vector<2x512xf32>
    %455 = arith.addf %452, %454 : vector<2x512xf32>
    %cst_201 = arith.constant 0.000000e+00 : f32
    %456 = vector.broadcast %cst_201 : f32 to vector<2x512xf32>
    %457 = arith.maximumf %455, %456 : vector<2x512xf32>
    %c2_202 = arith.constant 2 : index
    %c0_203 = arith.constant 0 : index
    %c0_204 = arith.constant 0 : index
    %458 = vector.load %arg15[%c2_202, %c0_203, %c0_204] : memref<12x512x128xf32, #tpu.memory_space<vmem>>, vector<1x512x128xf32>
    %459 = vector.shape_cast %458 : vector<1x512x128xf32> to vector<512x128xf32>
    %cst_205 = arith.constant dense<0.000000e+00> : vector<2x128xf32>
    %460 = tpu.matmul %457, %459, %cst_205 {dimension_numbers = #tpu.dot_dimension_numbers<[1], [0], [0], [1], [0, 0, 1, 1], [], []>} : vector<2x512xf32>, vector<512x128xf32>, vector<2x128xf32> -> vector<2x128xf32>
    %c2_206 = arith.constant 2 : index
    %c0_207 = arith.constant 0 : index
    %461 = vector.load %arg16[%c2_206, %c0_207] : memref<12x128xf32, #tpu.memory_space<vmem>>, vector<1x128xf32>
    %462 = vector.broadcast %461 : vector<1x128xf32> to vector<2x128xf32>
    %463 = arith.mulf %460, %462 : vector<2x128xf32>
    %c2_208 = arith.constant 2 : index
    %c0_209 = arith.constant 0 : index
    %464 = vector.load %arg17[%c2_208, %c0_209] : memref<12x128xf32, #tpu.memory_space<vmem>>, vector<1x128xf32>
    %465 = vector.broadcast %464 : vector<1x128xf32> to vector<2x128xf32>
    %466 = arith.addf %463, %465 : vector<2x128xf32>
    %cst_210 = arith.constant 0.000000e+00 : f32
    %467 = vector.broadcast %cst_210 : f32 to vector<2x128xf32>
    %468 = arith.maximumf %466, %467 : vector<2x128xf32>
    %c2_211 = arith.constant 2 : index
    %c0_212 = arith.constant 0 : index
    %c0_213 = arith.constant 0 : index
    %469 = vector.load %arg18[%c2_211, %c0_212, %c0_213] : memref<12x128x32xf32, #tpu.memory_space<vmem>>, vector<1x128x32xf32>
    %470 = vector.shape_cast %469 : vector<1x128x32xf32> to vector<128x32xf32>
    %cst_214 = arith.constant dense<0.000000e+00> : vector<2x32xf32>
    %471 = tpu.matmul %468, %470, %cst_214 {dimension_numbers = #tpu.dot_dimension_numbers<[1], [0], [0], [1], [0, 0, 1, 1], [], []>} : vector<2x128xf32>, vector<128x32xf32>, vector<2x32xf32> -> vector<2x32xf32>
    %c0_215 = arith.constant 0 : index
    %c192_216 = arith.constant 192 : index
    %472 = vector.load %arg25[%c0_215, %c192_216] : memref<2x512xf32, #tpu.memory_space<vmem>>, vector<2x32xf32>
    tpu.vector_store %arg25[%c0_215, %c192_216], %471 {strides = array<i32>} : memref<2x512xf32, #tpu.memory_space<vmem>>, vector<2x32xf32>,
    %c0_217 = arith.constant 0 : index
    %c0_218 = arith.constant 0 : index
    %473 = vector.load %arg25[%c0_217, %c0_218] : memref<2x512xf32, #tpu.memory_space<vmem>>, vector<2x512xf32>
    %c3_219 = arith.constant 3 : index
    %c0_220 = arith.constant 0 : index
    %474 = vector.load %arg13[%c3_219, %c0_220] : memref<12x512xf32, #tpu.memory_space<vmem>>, vector<1x512xf32>
    %475 = vector.broadcast %474 : vector<1x512xf32> to vector<2x512xf32>
    %476 = arith.mulf %473, %475 : vector<2x512xf32>
    %c3_221 = arith.constant 3 : index
    %c0_222 = arith.constant 0 : index
    %477 = vector.load %arg14[%c3_221, %c0_222] : memref<12x512xf32, #tpu.memory_space<vmem>>, vector<1x512xf32>
    %478 = vector.broadcast %477 : vector<1x512xf32> to vector<2x512xf32>
    %479 = arith.addf %476, %478 : vector<2x512xf32>
    %cst_223 = arith.constant 0.000000e+00 : f32
    %480 = vector.broadcast %cst_223 : f32 to vector<2x512xf32>
    %481 = arith.maximumf %479, %480 : vector<2x512xf32>
    %c3_224 = arith.constant 3 : index
    %c0_225 = arith.constant 0 : index
    %c0_226 = arith.constant 0 : index
    %482 = vector.load %arg15[%c3_224, %c0_225, %c0_226] : memref<12x512x128xf32, #tpu.memory_space<vmem>>, vector<1x512x128xf32>
    %483 = vector.shape_cast %482 : vector<1x512x128xf32> to vector<512x128xf32>
    %cst_227 = arith.constant dense<0.000000e+00> : vector<2x128xf32>
    %484 = tpu.matmul %481, %483, %cst_227 {dimension_numbers = #tpu.dot_dimension_numbers<[1], [0], [0], [1], [0, 0, 1, 1], [], []>} : vector<2x512xf32>, vector<512x128xf32>, vector<2x128xf32> -> vector<2x128xf32>
    %c3_228 = arith.constant 3 : index
    %c0_229 = arith.constant 0 : index
    %485 = vector.load %arg16[%c3_228, %c0_229] : memref<12x128xf32, #tpu.memory_space<vmem>>, vector<1x128xf32>
    %486 = vector.broadcast %485 : vector<1x128xf32> to vector<2x128xf32>
    %487 = arith.mulf %484, %486 : vector<2x128xf32>
    %c3_230 = arith.constant 3 : index
    %c0_231 = arith.constant 0 : index
    %488 = vector.load %arg17[%c3_230, %c0_231] : memref<12x128xf32, #tpu.memory_space<vmem>>, vector<1x128xf32>
    %489 = vector.broadcast %488 : vector<1x128xf32> to vector<2x128xf32>
    %490 = arith.addf %487, %489 : vector<2x128xf32>
    %cst_232 = arith.constant 0.000000e+00 : f32
    %491 = vector.broadcast %cst_232 : f32 to vector<2x128xf32>
    %492 = arith.maximumf %490, %491 : vector<2x128xf32>
    %c3_233 = arith.constant 3 : index
    %c0_234 = arith.constant 0 : index
    %c0_235 = arith.constant 0 : index
    %493 = vector.load %arg18[%c3_233, %c0_234, %c0_235] : memref<12x128x32xf32, #tpu.memory_space<vmem>>, vector<1x128x32xf32>
    %494 = vector.shape_cast %493 : vector<1x128x32xf32> to vector<128x32xf32>
    %cst_236 = arith.constant dense<0.000000e+00> : vector<2x32xf32>
    %495 = tpu.matmul %492, %494, %cst_236 {dimension_numbers = #tpu.dot_dimension_numbers<[1], [0], [0], [1], [0, 0, 1, 1], [], []>} : vector<2x128xf32>, vector<128x32xf32>, vector<2x32xf32> -> vector<2x32xf32>
    %c0_237 = arith.constant 0 : index
    %c224_238 = arith.constant 224 : index
    %496 = vector.load %arg25[%c0_237, %c224_238] : memref<2x512xf32, #tpu.memory_space<vmem>>, vector<2x32xf32>
    tpu.vector_store %arg25[%c0_237, %c224_238], %495 {strides = array<i32>} : memref<2x512xf32, #tpu.memory_space<vmem>>, vector<2x32xf32>,
    %c0_239 = arith.constant 0 : index
    %c0_240 = arith.constant 0 : index
    %497 = vector.load %arg25[%c0_239, %c0_240] : memref<2x512xf32, #tpu.memory_space<vmem>>, vector<2x512xf32>
    %c4_241 = arith.constant 4 : index
    %c0_242 = arith.constant 0 : index
    %498 = vector.load %arg13[%c4_241, %c0_242] : memref<12x512xf32, #tpu.memory_space<vmem>>, vector<1x512xf32>
    %499 = vector.broadcast %498 : vector<1x512xf32> to vector<2x512xf32>
    %500 = arith.mulf %497, %499 : vector<2x512xf32>
    %c4_243 = arith.constant 4 : index
    %c0_244 = arith.constant 0 : index
    %501 = vector.load %arg14[%c4_243, %c0_244] : memref<12x512xf32, #tpu.memory_space<vmem>>, vector<1x512xf32>
    %502 = vector.broadcast %501 : vector<1x512xf32> to vector<2x512xf32>
    %503 = arith.addf %500, %502 : vector<2x512xf32>
    %cst_245 = arith.constant 0.000000e+00 : f32
    %504 = vector.broadcast %cst_245 : f32 to vector<2x512xf32>
    %505 = arith.maximumf %503, %504 : vector<2x512xf32>
    %c4_246 = arith.constant 4 : index
    %c0_247 = arith.constant 0 : index
    %c0_248 = arith.constant 0 : index
    %506 = vector.load %arg15[%c4_246, %c0_247, %c0_248] : memref<12x512x128xf32, #tpu.memory_space<vmem>>, vector<1x512x128xf32>
    %507 = vector.shape_cast %506 : vector<1x512x128xf32> to vector<512x128xf32>
    %cst_249 = arith.constant dense<0.000000e+00> : vector<2x128xf32>
    %508 = tpu.matmul %505, %507, %cst_249 {dimension_numbers = #tpu.dot_dimension_numbers<[1], [0], [0], [1], [0, 0, 1, 1], [], []>} : vector<2x512xf32>, vector<512x128xf32>, vector<2x128xf32> -> vector<2x128xf32>
    %c4_250 = arith.constant 4 : index
    %c0_251 = arith.constant 0 : index
    %509 = vector.load %arg16[%c4_250, %c0_251] : memref<12x128xf32, #tpu.memory_space<vmem>>, vector<1x128xf32>
    %510 = vector.broadcast %509 : vector<1x128xf32> to vector<2x128xf32>
    %511 = arith.mulf %508, %510 : vector<2x128xf32>
    %c4_252 = arith.constant 4 : index
    %c0_253 = arith.constant 0 : index
    %512 = vector.load %arg17[%c4_252, %c0_253] : memref<12x128xf32, #tpu.memory_space<vmem>>, vector<1x128xf32>
    %513 = vector.broadcast %512 : vector<1x128xf32> to vector<2x128xf32>
    %514 = arith.addf %511, %513 : vector<2x128xf32>
    %cst_254 = arith.constant 0.000000e+00 : f32
    %515 = vector.broadcast %cst_254 : f32 to vector<2x128xf32>
    %516 = arith.maximumf %514, %515 : vector<2x128xf32>
    %c4_255 = arith.constant 4 : index
    %c0_256 = arith.constant 0 : index
    %c0_257 = arith.constant 0 : index
    %517 = vector.load %arg18[%c4_255, %c0_256, %c0_257] : memref<12x128x32xf32, #tpu.memory_space<vmem>>, vector<1x128x32xf32>
    %518 = vector.shape_cast %517 : vector<1x128x32xf32> to vector<128x32xf32>
    %cst_258 = arith.constant dense<0.000000e+00> : vector<2x32xf32>
    %519 = tpu.matmul %516, %518, %cst_258 {dimension_numbers = #tpu.dot_dimension_numbers<[1], [0], [0], [1], [0, 0, 1, 1], [], []>} : vector<2x128xf32>, vector<128x32xf32>, vector<2x32xf32> -> vector<2x32xf32>
    %c0_259 = arith.constant 0 : index
    %c256 = arith.constant 256 : index
    %520 = vector.load %arg25[%c0_259, %c256] : memref<2x512xf32, #tpu.memory_space<vmem>>, vector<2x32xf32>
    tpu.vector_store %arg25[%c0_259, %c256], %519 {strides = array<i32>} : memref<2x512xf32, #tpu.memory_space<vmem>>, vector<2x32xf32>,
    %c0_260 = arith.constant 0 : index
    %c0_261 = arith.constant 0 : index
    %521 = vector.load %arg25[%c0_260, %c0_261] : memref<2x512xf32, #tpu.memory_space<vmem>>, vector<2x512xf32>
    %c5_262 = arith.constant 5 : index
    %c0_263 = arith.constant 0 : index
    %522 = vector.load %arg13[%c5_262, %c0_263] : memref<12x512xf32, #tpu.memory_space<vmem>>, vector<1x512xf32>
    %523 = vector.broadcast %522 : vector<1x512xf32> to vector<2x512xf32>
    %524 = arith.mulf %521, %523 : vector<2x512xf32>
    %c5_264 = arith.constant 5 : index
    %c0_265 = arith.constant 0 : index
    %525 = vector.load %arg14[%c5_264, %c0_265] : memref<12x512xf32, #tpu.memory_space<vmem>>, vector<1x512xf32>
    %526 = vector.broadcast %525 : vector<1x512xf32> to vector<2x512xf32>
    %527 = arith.addf %524, %526 : vector<2x512xf32>
    %cst_266 = arith.constant 0.000000e+00 : f32
    %528 = vector.broadcast %cst_266 : f32 to vector<2x512xf32>
    %529 = arith.maximumf %527, %528 : vector<2x512xf32>
    %c5_267 = arith.constant 5 : index
    %c0_268 = arith.constant 0 : index
    %c0_269 = arith.constant 0 : index
    %530 = vector.load %arg15[%c5_267, %c0_268, %c0_269] : memref<12x512x128xf32, #tpu.memory_space<vmem>>, vector<1x512x128xf32>
    %531 = vector.shape_cast %530 : vector<1x512x128xf32> to vector<512x128xf32>
    %cst_270 = arith.constant dense<0.000000e+00> : vector<2x128xf32>
    %532 = tpu.matmul %529, %531, %cst_270 {dimension_numbers = #tpu.dot_dimension_numbers<[1], [0], [0], [1], [0, 0, 1, 1], [], []>} : vector<2x512xf32>, vector<512x128xf32>, vector<2x128xf32> -> vector<2x128xf32>
    %c5_271 = arith.constant 5 : index
    %c0_272 = arith.constant 0 : index
    %533 = vector.load %arg16[%c5_271, %c0_272] : memref<12x128xf32, #tpu.memory_space<vmem>>, vector<1x128xf32>
    %534 = vector.broadcast %533 : vector<1x128xf32> to vector<2x128xf32>
    %535 = arith.mulf %532, %534 : vector<2x128xf32>
    %c5_273 = arith.constant 5 : index
    %c0_274 = arith.constant 0 : index
    %536 = vector.load %arg17[%c5_273, %c0_274] : memref<12x128xf32, #tpu.memory_space<vmem>>, vector<1x128xf32>
    %537 = vector.broadcast %536 : vector<1x128xf32> to vector<2x128xf32>
    %538 = arith.addf %535, %537 : vector<2x128xf32>
    %cst_275 = arith.constant 0.000000e+00 : f32
    %539 = vector.broadcast %cst_275 : f32 to vector<2x128xf32>
    %540 = arith.maximumf %538, %539 : vector<2x128xf32>
    %c5_276 = arith.constant 5 : index
    %c0_277 = arith.constant 0 : index
    %c0_278 = arith.constant 0 : index
    %541 = vector.load %arg18[%c5_276, %c0_277, %c0_278] : memref<12x128x32xf32, #tpu.memory_space<vmem>>, vector<1x128x32xf32>
    %542 = vector.shape_cast %541 : vector<1x128x32xf32> to vector<128x32xf32>
    %cst_279 = arith.constant dense<0.000000e+00> : vector<2x32xf32>
    %543 = tpu.matmul %540, %542, %cst_279 {dimension_numbers = #tpu.dot_dimension_numbers<[1], [0], [0], [1], [0, 0, 1, 1], [], []>} : vector<2x128xf32>, vector<128x32xf32>, vector<2x32xf32> -> vector<2x32xf32>
    %c0_280 = arith.constant 0 : index
    %c288 = arith.constant 288 : index
    %544 = vector.load %arg25[%c0_280, %c288] : memref<2x512xf32, #tpu.memory_space<vmem>>, vector<2x32xf32>
    tpu.vector_store %arg25[%c0_280, %c288], %543 {strides = array<i32>} : memref<2x512xf32, #tpu.memory_space<vmem>>, vector<2x32xf32>,
    %c0_281 = arith.constant 0 : index
    %c0_282 = arith.constant 0 : index
    %545 = vector.load %arg25[%c0_281, %c0_282] : memref<2x512xf32, #tpu.memory_space<vmem>>, vector<2x512xf32>
    %c6 = arith.constant 6 : index
    %c0_283 = arith.constant 0 : index
    %546 = vector.load %arg13[%c6, %c0_283] : memref<12x512xf32, #tpu.memory_space<vmem>>, vector<1x512xf32>
    %547 = vector.broadcast %546 : vector<1x512xf32> to vector<2x512xf32>
    %548 = arith.mulf %545, %547 : vector<2x512xf32>
    %c6_284 = arith.constant 6 : index
    %c0_285 = arith.constant 0 : index
    %549 = vector.load %arg14[%c6_284, %c0_285] : memref<12x512xf32, #tpu.memory_space<vmem>>, vector<1x512xf32>
    %550 = vector.broadcast %549 : vector<1x512xf32> to vector<2x512xf32>
    %551 = arith.addf %548, %550 : vector<2x512xf32>
    %cst_286 = arith.constant 0.000000e+00 : f32
    %552 = vector.broadcast %cst_286 : f32 to vector<2x512xf32>
    %553 = arith.maximumf %551, %552 : vector<2x512xf32>
    %c6_287 = arith.constant 6 : index
    %c0_288 = arith.constant 0 : index
    %c0_289 = arith.constant 0 : index
    %554 = vector.load %arg15[%c6_287, %c0_288, %c0_289] : memref<12x512x128xf32, #tpu.memory_space<vmem>>, vector<1x512x128xf32>
    %555 = vector.shape_cast %554 : vector<1x512x128xf32> to vector<512x128xf32>
    %cst_290 = arith.constant dense<0.000000e+00> : vector<2x128xf32>
    %556 = tpu.matmul %553, %555, %cst_290 {dimension_numbers = #tpu.dot_dimension_numbers<[1], [0], [0], [1], [0, 0, 1, 1], [], []>} : vector<2x512xf32>, vector<512x128xf32>, vector<2x128xf32> -> vector<2x128xf32>
    %c6_291 = arith.constant 6 : index
    %c0_292 = arith.constant 0 : index
    %557 = vector.load %arg16[%c6_291, %c0_292] : memref<12x128xf32, #tpu.memory_space<vmem>>, vector<1x128xf32>
    %558 = vector.broadcast %557 : vector<1x128xf32> to vector<2x128xf32>
    %559 = arith.mulf %556, %558 : vector<2x128xf32>
    %c6_293 = arith.constant 6 : index
    %c0_294 = arith.constant 0 : index
    %560 = vector.load %arg17[%c6_293, %c0_294] : memref<12x128xf32, #tpu.memory_space<vmem>>, vector<1x128xf32>
    %561 = vector.broadcast %560 : vector<1x128xf32> to vector<2x128xf32>
    %562 = arith.addf %559, %561 : vector<2x128xf32>
    %cst_295 = arith.constant 0.000000e+00 : f32
    %563 = vector.broadcast %cst_295 : f32 to vector<2x128xf32>
    %564 = arith.maximumf %562, %563 : vector<2x128xf32>
    %c6_296 = arith.constant 6 : index
    %c0_297 = arith.constant 0 : index
    %c0_298 = arith.constant 0 : index
    %565 = vector.load %arg18[%c6_296, %c0_297, %c0_298] : memref<12x128x32xf32, #tpu.memory_space<vmem>>, vector<1x128x32xf32>
    %566 = vector.shape_cast %565 : vector<1x128x32xf32> to vector<128x32xf32>
    %cst_299 = arith.constant dense<0.000000e+00> : vector<2x32xf32>
    %567 = tpu.matmul %564, %566, %cst_299 {dimension_numbers = #tpu.dot_dimension_numbers<[1], [0], [0], [1], [0, 0, 1, 1], [], []>} : vector<2x128xf32>, vector<128x32xf32>, vector<2x32xf32> -> vector<2x32xf32>
    %c0_300 = arith.constant 0 : index
    %c320 = arith.constant 320 : index
    %568 = vector.load %arg25[%c0_300, %c320] : memref<2x512xf32, #tpu.memory_space<vmem>>, vector<2x32xf32>
    tpu.vector_store %arg25[%c0_300, %c320], %567 {strides = array<i32>} : memref<2x512xf32, #tpu.memory_space<vmem>>, vector<2x32xf32>,
    %c0_301 = arith.constant 0 : index
    %c0_302 = arith.constant 0 : index
    %569 = vector.load %arg25[%c0_301, %c0_302] : memref<2x512xf32, #tpu.memory_space<vmem>>, vector<2x512xf32>
    %c7 = arith.constant 7 : index
    %c0_303 = arith.constant 0 : index
    %570 = vector.load %arg13[%c7, %c0_303] : memref<12x512xf32, #tpu.memory_space<vmem>>, vector<1x512xf32>
    %571 = vector.broadcast %570 : vector<1x512xf32> to vector<2x512xf32>
    %572 = arith.mulf %569, %571 : vector<2x512xf32>
    %c7_304 = arith.constant 7 : index
    %c0_305 = arith.constant 0 : index
    %573 = vector.load %arg14[%c7_304, %c0_305] : memref<12x512xf32, #tpu.memory_space<vmem>>, vector<1x512xf32>
    %574 = vector.broadcast %573 : vector<1x512xf32> to vector<2x512xf32>
    %575 = arith.addf %572, %574 : vector<2x512xf32>
    %cst_306 = arith.constant 0.000000e+00 : f32
    %576 = vector.broadcast %cst_306 : f32 to vector<2x512xf32>
    %577 = arith.maximumf %575, %576 : vector<2x512xf32>
    %c7_307 = arith.constant 7 : index
    %c0_308 = arith.constant 0 : index
    %c0_309 = arith.constant 0 : index
    %578 = vector.load %arg15[%c7_307, %c0_308, %c0_309] : memref<12x512x128xf32, #tpu.memory_space<vmem>>, vector<1x512x128xf32>
    %579 = vector.shape_cast %578 : vector<1x512x128xf32> to vector<512x128xf32>
    %cst_310 = arith.constant dense<0.000000e+00> : vector<2x128xf32>
    %580 = tpu.matmul %577, %579, %cst_310 {dimension_numbers = #tpu.dot_dimension_numbers<[1], [0], [0], [1], [0, 0, 1, 1], [], []>} : vector<2x512xf32>, vector<512x128xf32>, vector<2x128xf32> -> vector<2x128xf32>
    %c7_311 = arith.constant 7 : index
    %c0_312 = arith.constant 0 : index
    %581 = vector.load %arg16[%c7_311, %c0_312] : memref<12x128xf32, #tpu.memory_space<vmem>>, vector<1x128xf32>
    %582 = vector.broadcast %581 : vector<1x128xf32> to vector<2x128xf32>
    %583 = arith.mulf %580, %582 : vector<2x128xf32>
    %c7_313 = arith.constant 7 : index
    %c0_314 = arith.constant 0 : index
    %584 = vector.load %arg17[%c7_313, %c0_314] : memref<12x128xf32, #tpu.memory_space<vmem>>, vector<1x128xf32>
    %585 = vector.broadcast %584 : vector<1x128xf32> to vector<2x128xf32>
    %586 = arith.addf %583, %585 : vector<2x128xf32>
    %cst_315 = arith.constant 0.000000e+00 : f32
    %587 = vector.broadcast %cst_315 : f32 to vector<2x128xf32>
    %588 = arith.maximumf %586, %587 : vector<2x128xf32>
    %c7_316 = arith.constant 7 : index
    %c0_317 = arith.constant 0 : index
    %c0_318 = arith.constant 0 : index
    %589 = vector.load %arg18[%c7_316, %c0_317, %c0_318] : memref<12x128x32xf32, #tpu.memory_space<vmem>>, vector<1x128x32xf32>
    %590 = vector.shape_cast %589 : vector<1x128x32xf32> to vector<128x32xf32>
    %cst_319 = arith.constant dense<0.000000e+00> : vector<2x32xf32>
    %591 = tpu.matmul %588, %590, %cst_319 {dimension_numbers = #tpu.dot_dimension_numbers<[1], [0], [0], [1], [0, 0, 1, 1], [], []>} : vector<2x128xf32>, vector<128x32xf32>, vector<2x32xf32> -> vector<2x32xf32>
    %c0_320 = arith.constant 0 : index
    %c352 = arith.constant 352 : index
    %592 = vector.load %arg25[%c0_320, %c352] : memref<2x512xf32, #tpu.memory_space<vmem>>, vector<2x32xf32>
    tpu.vector_store %arg25[%c0_320, %c352], %591 {strides = array<i32>} : memref<2x512xf32, #tpu.memory_space<vmem>>, vector<2x32xf32>,
    %c0_321 = arith.constant 0 : index
    %c0_322 = arith.constant 0 : index
    %593 = vector.load %arg25[%c0_321, %c0_322] : memref<2x512xf32, #tpu.memory_space<vmem>>, vector<2x512xf32>
    %c8 = arith.constant 8 : index
    %c0_323 = arith.constant 0 : index
    %594 = vector.load %arg13[%c8, %c0_323] : memref<12x512xf32, #tpu.memory_space<vmem>>, vector<1x512xf32>
    %595 = vector.broadcast %594 : vector<1x512xf32> to vector<2x512xf32>
    %596 = arith.mulf %593, %595 : vector<2x512xf32>
    %c8_324 = arith.constant 8 : index
    %c0_325 = arith.constant 0 : index
    %597 = vector.load %arg14[%c8_324, %c0_325] : memref<12x512xf32, #tpu.memory_space<vmem>>, vector<1x512xf32>
    %598 = vector.broadcast %597 : vector<1x512xf32> to vector<2x512xf32>
    %599 = arith.addf %596, %598 : vector<2x512xf32>
    %cst_326 = arith.constant 0.000000e+00 : f32
    %600 = vector.broadcast %cst_326 : f32 to vector<2x512xf32>
    %601 = arith.maximumf %599, %600 : vector<2x512xf32>
    %c8_327 = arith.constant 8 : index
    %c0_328 = arith.constant 0 : index
    %c0_329 = arith.constant 0 : index
    %602 = vector.load %arg15[%c8_327, %c0_328, %c0_329] : memref<12x512x128xf32, #tpu.memory_space<vmem>>, vector<1x512x128xf32>
    %603 = vector.shape_cast %602 : vector<1x512x128xf32> to vector<512x128xf32>
    %cst_330 = arith.constant dense<0.000000e+00> : vector<2x128xf32>
    %604 = tpu.matmul %601, %603, %cst_330 {dimension_numbers = #tpu.dot_dimension_numbers<[1], [0], [0], [1], [0, 0, 1, 1], [], []>} : vector<2x512xf32>, vector<512x128xf32>, vector<2x128xf32> -> vector<2x128xf32>
    %c8_331 = arith.constant 8 : index
    %c0_332 = arith.constant 0 : index
    %605 = vector.load %arg16[%c8_331, %c0_332] : memref<12x128xf32, #tpu.memory_space<vmem>>, vector<1x128xf32>
    %606 = vector.broadcast %605 : vector<1x128xf32> to vector<2x128xf32>
    %607 = arith.mulf %604, %606 : vector<2x128xf32>
    %c8_333 = arith.constant 8 : index
    %c0_334 = arith.constant 0 : index
    %608 = vector.load %arg17[%c8_333, %c0_334] : memref<12x128xf32, #tpu.memory_space<vmem>>, vector<1x128xf32>
    %609 = vector.broadcast %608 : vector<1x128xf32> to vector<2x128xf32>
    %610 = arith.addf %607, %609 : vector<2x128xf32>
    %cst_335 = arith.constant 0.000000e+00 : f32
    %611 = vector.broadcast %cst_335 : f32 to vector<2x128xf32>
    %612 = arith.maximumf %610, %611 : vector<2x128xf32>
    %c8_336 = arith.constant 8 : index
    %c0_337 = arith.constant 0 : index
    %c0_338 = arith.constant 0 : index
    %613 = vector.load %arg18[%c8_336, %c0_337, %c0_338] : memref<12x128x32xf32, #tpu.memory_space<vmem>>, vector<1x128x32xf32>
    %614 = vector.shape_cast %613 : vector<1x128x32xf32> to vector<128x32xf32>
    %cst_339 = arith.constant dense<0.000000e+00> : vector<2x32xf32>
    %615 = tpu.matmul %612, %614, %cst_339 {dimension_numbers = #tpu.dot_dimension_numbers<[1], [0], [0], [1], [0, 0, 1, 1], [], []>} : vector<2x128xf32>, vector<128x32xf32>, vector<2x32xf32> -> vector<2x32xf32>
    %c0_340 = arith.constant 0 : index
    %c384 = arith.constant 384 : index
    %616 = vector.load %arg25[%c0_340, %c384] : memref<2x512xf32, #tpu.memory_space<vmem>>, vector<2x32xf32>
    tpu.vector_store %arg25[%c0_340, %c384], %615 {strides = array<i32>} : memref<2x512xf32, #tpu.memory_space<vmem>>, vector<2x32xf32>,
    %c0_341 = arith.constant 0 : index
    %c0_342 = arith.constant 0 : index
    %617 = vector.load %arg25[%c0_341, %c0_342] : memref<2x512xf32, #tpu.memory_space<vmem>>, vector<2x512xf32>
    %c9 = arith.constant 9 : index
    %c0_343 = arith.constant 0 : index
    %618 = vector.load %arg13[%c9, %c0_343] : memref<12x512xf32, #tpu.memory_space<vmem>>, vector<1x512xf32>
    %619 = vector.broadcast %618 : vector<1x512xf32> to vector<2x512xf32>
    %620 = arith.mulf %617, %619 : vector<2x512xf32>
    %c9_344 = arith.constant 9 : index
    %c0_345 = arith.constant 0 : index
    %621 = vector.load %arg14[%c9_344, %c0_345] : memref<12x512xf32, #tpu.memory_space<vmem>>, vector<1x512xf32>
    %622 = vector.broadcast %621 : vector<1x512xf32> to vector<2x512xf32>
    %623 = arith.addf %620, %622 : vector<2x512xf32>
    %cst_346 = arith.constant 0.000000e+00 : f32
    %624 = vector.broadcast %cst_346 : f32 to vector<2x512xf32>
    %625 = arith.maximumf %623, %624 : vector<2x512xf32>
    %c9_347 = arith.constant 9 : index
    %c0_348 = arith.constant 0 : index
    %c0_349 = arith.constant 0 : index
    %626 = vector.load %arg15[%c9_347, %c0_348, %c0_349] : memref<12x512x128xf32, #tpu.memory_space<vmem>>, vector<1x512x128xf32>
    %627 = vector.shape_cast %626 : vector<1x512x128xf32> to vector<512x128xf32>
    %cst_350 = arith.constant dense<0.000000e+00> : vector<2x128xf32>
    %628 = tpu.matmul %625, %627, %cst_350 {dimension_numbers = #tpu.dot_dimension_numbers<[1], [0], [0], [1], [0, 0, 1, 1], [], []>} : vector<2x512xf32>, vector<512x128xf32>, vector<2x128xf32> -> vector<2x128xf32>
    %c9_351 = arith.constant 9 : index
    %c0_352 = arith.constant 0 : index
    %629 = vector.load %arg16[%c9_351, %c0_352] : memref<12x128xf32, #tpu.memory_space<vmem>>, vector<1x128xf32>
    %630 = vector.broadcast %629 : vector<1x128xf32> to vector<2x128xf32>
    %631 = arith.mulf %628, %630 : vector<2x128xf32>
    %c9_353 = arith.constant 9 : index
    %c0_354 = arith.constant 0 : index
    %632 = vector.load %arg17[%c9_353, %c0_354] : memref<12x128xf32, #tpu.memory_space<vmem>>, vector<1x128xf32>
    %633 = vector.broadcast %632 : vector<1x128xf32> to vector<2x128xf32>
    %634 = arith.addf %631, %633 : vector<2x128xf32>
    %cst_355 = arith.constant 0.000000e+00 : f32
    %635 = vector.broadcast %cst_355 : f32 to vector<2x128xf32>
    %636 = arith.maximumf %634, %635 : vector<2x128xf32>
    %c9_356 = arith.constant 9 : index
    %c0_357 = arith.constant 0 : index
    %c0_358 = arith.constant 0 : index
    %637 = vector.load %arg18[%c9_356, %c0_357, %c0_358] : memref<12x128x32xf32, #tpu.memory_space<vmem>>, vector<1x128x32xf32>
    %638 = vector.shape_cast %637 : vector<1x128x32xf32> to vector<128x32xf32>
    %cst_359 = arith.constant dense<0.000000e+00> : vector<2x32xf32>
    %639 = tpu.matmul %636, %638, %cst_359 {dimension_numbers = #tpu.dot_dimension_numbers<[1], [0], [0], [1], [0, 0, 1, 1], [], []>} : vector<2x128xf32>, vector<128x32xf32>, vector<2x32xf32> -> vector<2x32xf32>
    %c0_360 = arith.constant 0 : index
    %c416 = arith.constant 416 : index
    %640 = vector.load %arg25[%c0_360, %c416] : memref<2x512xf32, #tpu.memory_space<vmem>>, vector<2x32xf32>
    tpu.vector_store %arg25[%c0_360, %c416], %639 {strides = array<i32>} : memref<2x512xf32, #tpu.memory_space<vmem>>, vector<2x32xf32>,
    %c0_361 = arith.constant 0 : index
    %c0_362 = arith.constant 0 : index
    %641 = vector.load %arg25[%c0_361, %c0_362] : memref<2x512xf32, #tpu.memory_space<vmem>>, vector<2x512xf32>
    %c10 = arith.constant 10 : index
    %c0_363 = arith.constant 0 : index
    %642 = vector.load %arg13[%c10, %c0_363] : memref<12x512xf32, #tpu.memory_space<vmem>>, vector<1x512xf32>
    %643 = vector.broadcast %642 : vector<1x512xf32> to vector<2x512xf32>
    %644 = arith.mulf %641, %643 : vector<2x512xf32>
    %c10_364 = arith.constant 10 : index
    %c0_365 = arith.constant 0 : index
    %645 = vector.load %arg14[%c10_364, %c0_365] : memref<12x512xf32, #tpu.memory_space<vmem>>, vector<1x512xf32>
    %646 = vector.broadcast %645 : vector<1x512xf32> to vector<2x512xf32>
    %647 = arith.addf %644, %646 : vector<2x512xf32>
    %cst_366 = arith.constant 0.000000e+00 : f32
    %648 = vector.broadcast %cst_366 : f32 to vector<2x512xf32>
    %649 = arith.maximumf %647, %648 : vector<2x512xf32>
    %c10_367 = arith.constant 10 : index
    %c0_368 = arith.constant 0 : index
    %c0_369 = arith.constant 0 : index
    %650 = vector.load %arg15[%c10_367, %c0_368, %c0_369] : memref<12x512x128xf32, #tpu.memory_space<vmem>>, vector<1x512x128xf32>
    %651 = vector.shape_cast %650 : vector<1x512x128xf32> to vector<512x128xf32>
    %cst_370 = arith.constant dense<0.000000e+00> : vector<2x128xf32>
    %652 = tpu.matmul %649, %651, %cst_370 {dimension_numbers = #tpu.dot_dimension_numbers<[1], [0], [0], [1], [0, 0, 1, 1], [], []>} : vector<2x512xf32>, vector<512x128xf32>, vector<2x128xf32> -> vector<2x128xf32>
    %c10_371 = arith.constant 10 : index
    %c0_372 = arith.constant 0 : index
    %653 = vector.load %arg16[%c10_371, %c0_372] : memref<12x128xf32, #tpu.memory_space<vmem>>, vector<1x128xf32>
    %654 = vector.broadcast %653 : vector<1x128xf32> to vector<2x128xf32>
    %655 = arith.mulf %652, %654 : vector<2x128xf32>
    %c10_373 = arith.constant 10 : index
    %c0_374 = arith.constant 0 : index
    %656 = vector.load %arg17[%c10_373, %c0_374] : memref<12x128xf32, #tpu.memory_space<vmem>>, vector<1x128xf32>
    %657 = vector.broadcast %656 : vector<1x128xf32> to vector<2x128xf32>
    %658 = arith.addf %655, %657 : vector<2x128xf32>
    %cst_375 = arith.constant 0.000000e+00 : f32
    %659 = vector.broadcast %cst_375 : f32 to vector<2x128xf32>
    %660 = arith.maximumf %658, %659 : vector<2x128xf32>
    %c10_376 = arith.constant 10 : index
    %c0_377 = arith.constant 0 : index
    %c0_378 = arith.constant 0 : index
    %661 = vector.load %arg18[%c10_376, %c0_377, %c0_378] : memref<12x128x32xf32, #tpu.memory_space<vmem>>, vector<1x128x32xf32>
    %662 = vector.shape_cast %661 : vector<1x128x32xf32> to vector<128x32xf32>
    %cst_379 = arith.constant dense<0.000000e+00> : vector<2x32xf32>
    %663 = tpu.matmul %660, %662, %cst_379 {dimension_numbers = #tpu.dot_dimension_numbers<[1], [0], [0], [1], [0, 0, 1, 1], [], []>} : vector<2x128xf32>, vector<128x32xf32>, vector<2x32xf32> -> vector<2x32xf32>
    %c0_380 = arith.constant 0 : index
    %c448 = arith.constant 448 : index
    %664 = vector.load %arg25[%c0_380, %c448] : memref<2x512xf32, #tpu.memory_space<vmem>>, vector<2x32xf32>
    tpu.vector_store %arg25[%c0_380, %c448], %663 {strides = array<i32>} : memref<2x512xf32, #tpu.memory_space<vmem>>, vector<2x32xf32>,
    %c0_381 = arith.constant 0 : index
    %c0_382 = arith.constant 0 : index
    %665 = vector.load %arg25[%c0_381, %c0_382] : memref<2x512xf32, #tpu.memory_space<vmem>>, vector<2x512xf32>
    %c11 = arith.constant 11 : index
    %c0_383 = arith.constant 0 : index
    %666 = vector.load %arg13[%c11, %c0_383] : memref<12x512xf32, #tpu.memory_space<vmem>>, vector<1x512xf32>
    %667 = vector.broadcast %666 : vector<1x512xf32> to vector<2x512xf32>
    %668 = arith.mulf %665, %667 : vector<2x512xf32>
    %c11_384 = arith.constant 11 : index
    %c0_385 = arith.constant 0 : index
    %669 = vector.load %arg14[%c11_384, %c0_385] : memref<12x512xf32, #tpu.memory_space<vmem>>, vector<1x512xf32>
    %670 = vector.broadcast %669 : vector<1x512xf32> to vector<2x512xf32>
    %671 = arith.addf %668, %670 : vector<2x512xf32>
    %cst_386 = arith.constant 0.000000e+00 : f32
    %672 = vector.broadcast %cst_386 : f32 to vector<2x512xf32>
    %673 = arith.maximumf %671, %672 : vector<2x512xf32>
    %c11_387 = arith.constant 11 : index
    %c0_388 = arith.constant 0 : index
    %c0_389 = arith.constant 0 : index
    %674 = vector.load %arg15[%c11_387, %c0_388, %c0_389] : memref<12x512x128xf32, #tpu.memory_space<vmem>>, vector<1x512x128xf32>
    %675 = vector.shape_cast %674 : vector<1x512x128xf32> to vector<512x128xf32>
    %cst_390 = arith.constant dense<0.000000e+00> : vector<2x128xf32>
    %676 = tpu.matmul %673, %675, %cst_390 {dimension_numbers = #tpu.dot_dimension_numbers<[1], [0], [0], [1], [0, 0, 1, 1], [], []>} : vector<2x512xf32>, vector<512x128xf32>, vector<2x128xf32> -> vector<2x128xf32>
    %c11_391 = arith.constant 11 : index
    %c0_392 = arith.constant 0 : index
    %677 = vector.load %arg16[%c11_391, %c0_392] : memref<12x128xf32, #tpu.memory_space<vmem>>, vector<1x128xf32>
    %678 = vector.broadcast %677 : vector<1x128xf32> to vector<2x128xf32>
    %679 = arith.mulf %676, %678 : vector<2x128xf32>
    %c11_393 = arith.constant 11 : index
    %c0_394 = arith.constant 0 : index
    %680 = vector.load %arg17[%c11_393, %c0_394] : memref<12x128xf32, #tpu.memory_space<vmem>>, vector<1x128xf32>
    %681 = vector.broadcast %680 : vector<1x128xf32> to vector<2x128xf32>
    %682 = arith.addf %679, %681 : vector<2x128xf32>
    %cst_395 = arith.constant 0.000000e+00 : f32
    %683 = vector.broadcast %cst_395 : f32 to vector<2x128xf32>
    %684 = arith.maximumf %682, %683 : vector<2x128xf32>
    %c11_396 = arith.constant 11 : index
    %c0_397 = arith.constant 0 : index
    %c0_398 = arith.constant 0 : index
    %685 = vector.load %arg18[%c11_396, %c0_397, %c0_398] : memref<12x128x32xf32, #tpu.memory_space<vmem>>, vector<1x128x32xf32>
    %686 = vector.shape_cast %685 : vector<1x128x32xf32> to vector<128x32xf32>
    %cst_399 = arith.constant dense<0.000000e+00> : vector<2x32xf32>
    %687 = tpu.matmul %684, %686, %cst_399 {dimension_numbers = #tpu.dot_dimension_numbers<[1], [0], [0], [1], [0, 0, 1, 1], [], []>} : vector<2x128xf32>, vector<128x32xf32>, vector<2x32xf32> -> vector<2x32xf32>
    %c0_400 = arith.constant 0 : index
    %c480 = arith.constant 480 : index
    %688 = vector.load %arg25[%c0_400, %c480] : memref<2x512xf32, #tpu.memory_space<vmem>>, vector<2x32xf32>
    tpu.vector_store %arg25[%c0_400, %c480], %687 {strides = array<i32>} : memref<2x512xf32, #tpu.memory_space<vmem>>, vector<2x32xf32>,
    %c0_401 = arith.constant 0 : index
    %c0_402 = arith.constant 0 : index
    %689 = vector.load %arg25[%c0_401, %c0_402] : memref<2x512xf32, #tpu.memory_space<vmem>>, vector<2x512xf32>
    %c0_403 = arith.constant 0 : index
    %c0_404 = arith.constant 0 : index
    %690 = vector.load %arg19[%c0_403, %c0_404] : memref<1x512xf32, #tpu.memory_space<vmem>>, vector<1x512xf32>
    %691 = vector.broadcast %690 : vector<1x512xf32> to vector<2x512xf32>
    %692 = arith.mulf %689, %691 : vector<2x512xf32>
    %c0_405 = arith.constant 0 : index
    %c0_406 = arith.constant 0 : index
    %693 = vector.load %arg20[%c0_405, %c0_406] : memref<1x512xf32, #tpu.memory_space<vmem>>, vector<1x512xf32>
    %694 = vector.broadcast %693 : vector<1x512xf32> to vector<2x512xf32>
    %695 = arith.addf %692, %694 : vector<2x512xf32>
    %cst_407 = arith.constant 0.000000e+00 : f32
    %696 = vector.broadcast %cst_407 : f32 to vector<2x512xf32>
    %697 = arith.maximumf %695, %696 : vector<2x512xf32>
    %c0_408 = arith.constant 0 : index
    %c0_409 = arith.constant 0 : index
    %698 = vector.load %arg21[%c0_408, %c0_409] : memref<512x10xf32, #tpu.memory_space<vmem>>, vector<512x10xf32>
    %cst_410 = arith.constant dense<0.000000e+00> : vector<2x10xf32>
    %699 = tpu.matmul %697, %698, %cst_410 {dimension_numbers = #tpu.dot_dimension_numbers<[1], [0], [0], [1], [0, 0, 1, 1], [], []>} : vector<2x512xf32>, vector<512x10xf32>, vector<2x10xf32> -> vector<2x10xf32>
    %c0_411 = arith.constant 0 : index
    %c0_412 = arith.constant 0 : index
    %700 = vector.load %arg22[%c0_411, %c0_412] : memref<1x10xf32, #tpu.memory_space<vmem>>, vector<1x10xf32>
    %701 = vector.broadcast %700 : vector<1x10xf32> to vector<2x10xf32>
    %702 = arith.addf %699, %701 : vector<2x10xf32>
    %c0_413 = arith.constant 0 : index
    %c0_414 = arith.constant 0 : index
    %703 = vector.load %arg23[%c0_413, %c0_414] : memref<2x10xf32, #tpu.memory_space<vmem>>, vector<2x10xf32>
    tpu.vector_store %arg23[%c0_413, %c0_414], %702 {strides = array<i32>} : memref<2x10xf32, #tpu.memory_space<vmem>>, vector<2x10xf32>,
    return
  }
}

</mosaic_0001>

<llo_original>
// kernel: forward.1
$region0: #{forward.1}
  #allocation0 [shape = 'u32[]', space=smem, size = 0x4, offset = 0x4, fixed_abs, tag = 'smem constant byte address 0x4 - core index']
  #allocation1 [shape = 'u32[144,128]{1,0:T(1,128)}', space=vmem, size = 0x12000, scoped, tag = 'internal scratch']
  #allocation2 [shape = 'f32[8,256]{1,0:T(8,128)}', space=vmem, size = 0x2000, scoped, tag = 'scratch operand']
  #allocation3 [shape = 'f32[2,512]{1,0:T(2,128)}', space=vmem, size = 0x1000, scoped, tag = 'scratch operand']
  %s0 = inlined_call_operand.vmem [shape: f32[32,147], index: 0, kind: input, shape index: {}]
  %s1 = inlined_call_operand.vmem [shape: f32[147,64], index: 1, kind: input, shape index: {}]
  %s2 = inlined_call_operand.vmem [shape: f32[1,64], index: 2, kind: input, shape index: {}]
  %s3 = inlined_call_operand.vmem [shape: f32[1,64], index: 3, kind: input, shape index: {}]
  %s4 = inlined_call_operand.vmem [shape: f32[6,256], index: 4, kind: input, shape index: {}]
  %s5 = inlined_call_operand.vmem [shape: f32[6,256], index: 5, kind: input, shape index: {}]
  %s6 = inlined_call_operand.vmem [shape: f32[6,256,128], index: 6, kind: input, shape index: {}]
  %s7 = inlined_call_operand.vmem [shape: f32[6,128], index: 7, kind: input, shape index: {}]
  %s8 = inlined_call_operand.vmem [shape: f32[6,128], index: 8, kind: input, shape index: {}]
  %s9 = inlined_call_operand.vmem [shape: f32[6,1152,32], index: 9, kind: input, shape index: {}]
  %s10 = inlined_call_operand.vmem [shape: f32[1,256], index: 10, kind: input, shape index: {}]
  %s11 = inlined_call_operand.vmem [shape: f32[1,256], index: 11, kind: input, shape index: {}]
  %s12 = inlined_call_operand.vmem [shape: f32[256,128], index: 12, kind: input, shape index: {}]
  %s13 = inlined_call_operand.vmem [shape: f32[12,512], index: 13, kind: input, shape index: {}]
  %s14 = inlined_call_operand.vmem [shape: f32[12,512], index: 14, kind: input, shape index: {}]
  %s15 = inlined_call_operand.vmem [shape: f32[12,512,128], index: 15, kind: input, shape index: {}]
  %s16 = inlined_call_operand.vmem [shape: f32[12,128], index: 16, kind: input, shape index: {}]
  %s17 = inlined_call_operand.vmem [shape: f32[12,128], index: 17, kind: input, shape index: {}]
  %s18 = inlined_call_operand.vmem [shape: f32[12,128,32], index: 18, kind: input, shape index: {}]
  %s19 = inlined_call_operand.vmem [shape: f32[1,512], index: 19, kind: input, shape index: {}]
  %s20 = inlined_call_operand.vmem [shape: f32[1,512], index: 20, kind: input, shape index: {}]
  %s21 = inlined_call_operand.vmem [shape: f32[512,10], index: 21, kind: input, shape index: {}]
  %s22 = inlined_call_operand.vmem [shape: f32[1,10], index: 22, kind: input, shape index: {}]
  %s23 = inlined_call_operand.hbm [shape: f32[2,10], index: 23, kind: output, shape index: {}]
  %s24 = sld [smem:[#allocation0]]
  $region102: #{forward.1} parent=0
    _
  %s26 = ssub.s32 1, %s24
  %s27 = scalar_select 0, %s26, %s24
  $region1: #{forward.1} parent=0
    #allocation4 [shape = 'u8[1024]{0}', space=vmem, size = 0x400, scoped, tag = 'output window, operand 0, single buffered']
    #allocation5 [shape = 's32[1]{0}', space=sflag, size = 0x4, scoped, tag = 'scoped memory for forward.1']
    %28 = vsyncpa [#allocation5], 0
    // Predicated region
    $region2: #{forward.1} parent=1 // pred_check
      _
    $region3: #{forward.1} parent=1 // pred_check_branch
      %30 = sbr.rel (0) target = $region5
    $region4: #{forward.1} parent=1 // pred_region
      _
    $region5: #{forward.1} parent=1 // pred_fallthru
      _
    // Predicated region
    $region6: #{forward.1} parent=1 // pred_check
      _
    $region7: #{forward.1} parent=1 // pred_check_branch
      %32 = sbr.rel (0) target = $region9
    $region8: #{forward.1} parent=1 // pred_region
      _
    $region9: #{forward.1} parent=1 // pred_fallthru
      _
    // Predicated region
    $region10: #{forward.1} parent=1 // pred_check
      _
    $region11: #{forward.1} parent=1 // pred_check_branch
      %34 = sbr.rel (0) target = $region13
    $region12: #{forward.1} parent=1 // pred_region
      _
    $region13: #{forward.1} parent=1 // pred_fallthru
      _
    // Predicated region
    $region14: #{forward.1} parent=1 // pred_check
      _
    $region15: #{forward.1} parent=1 // pred_check_branch
      %36 = sbr.rel (0) target = $region17
    $region16: #{forward.1} parent=1 // pred_region
      _
    $region17: #{forward.1} parent=1 // pred_fallthru
      _
    // Predicated region
    $region18: #{forward.1} parent=1 // pred_check
      _
    $region19: #{forward.1} parent=1 // pred_check_branch
      %38 = sbr.rel (0) target = $region21
    $region20: #{forward.1} parent=1 // pred_region
      _
    $region21: #{forward.1} parent=1 // pred_fallthru
      _
    // Predicated region
    $region22: #{forward.1} parent=1 // pred_check
      _
    $region23: #{forward.1} parent=1 // pred_check_branch
      %40 = sbr.rel (0) target = $region25
    $region24: #{forward.1} parent=1 // pred_region
      _
    $region25: #{forward.1} parent=1 // pred_fallthru
      _
    // Predicated region
    $region26: #{forward.1} parent=1 // pred_check
      _
    $region27: #{forward.1} parent=1 // pred_check_branch
      %42 = sbr.rel (0) target = $region29
    $region28: #{forward.1} parent=1 // pred_region
      _
    $region29: #{forward.1} parent=1 // pred_fallthru
      _
    // Predicated region
    $region30: #{forward.1} parent=1 // pred_check
      _
    $region31: #{forward.1} parent=1 // pred_check_branch
      %44 = sbr.rel (0) target = $region33
    $region32: #{forward.1} parent=1 // pred_region
      _
    $region33: #{forward.1} parent=1 // pred_fallthru
      _
    // Predicated region
    $region34: #{forward.1} parent=1 // pred_check
      _
    $region35: #{forward.1} parent=1 // pred_check_branch
      %46 = sbr.rel (0) target = $region37
    $region36: #{forward.1} parent=1 // pred_region
      _
    $region37: #{forward.1} parent=1 // pred_fallthru
      _
    // Predicated region
    $region38: #{forward.1} parent=1 // pred_check
      _
    $region39: #{forward.1} parent=1 // pred_check_branch
      %48 = sbr.rel (0) target = $region41
    $region40: #{forward.1} parent=1 // pred_region
      _
    $region41: #{forward.1} parent=1 // pred_fallthru
      _
    // Predicated region
    $region42: #{forward.1} parent=1 // pred_check
      _
    $region43: #{forward.1} parent=1 // pred_check_branch
      %50 = sbr.rel (0) target = $region45
    $region44: #{forward.1} parent=1 // pred_region
      _
    $region45: #{forward.1} parent=1 // pred_fallthru
      _
    // Predicated region
    $region46: #{forward.1} parent=1 // pred_check
      _
    $region47: #{forward.1} parent=1 // pred_check_branch
      %52 = sbr.rel (0) target = $region49
    $region48: #{forward.1} parent=1 // pred_region
      _
    $region49: #{forward.1} parent=1 // pred_fallthru
      _
    // Predicated region
    $region50: #{forward.1} parent=1 // pred_check
      _
    $region51: #{forward.1} parent=1 // pred_check_branch
      %54 = sbr.rel (0) target = $region53
    $region52: #{forward.1} parent=1 // pred_region
      _
    $region53: #{forward.1} parent=1 // pred_fallthru
      _
    // Predicated region
    $region54: #{forward.1} parent=1 // pred_check
      _
    $region55: #{forward.1} parent=1 // pred_check_branch
      %56 = sbr.rel (0) target = $region57
    $region56: #{forward.1} parent=1 // pred_region
      _
    $region57: #{forward.1} parent=1 // pred_fallthru
      _
    // Predicated region
    $region58: #{forward.1} parent=1 // pred_check
      _
    $region59: #{forward.1} parent=1 // pred_check_branch
      %58 = sbr.rel (0) target = $region61
    $region60: #{forward.1} parent=1 // pred_region
      _
    $region61: #{forward.1} parent=1 // pred_fallthru
      _
    // Predicated region
    $region62: #{forward.1} parent=1 // pred_check
      _
    $region63: #{forward.1} parent=1 // pred_check_branch
      %60 = sbr.rel (0) target = $region65
    $region64: #{forward.1} parent=1 // pred_region
      _
    $region65: #{forward.1} parent=1 // pred_fallthru
      _
    // Predicated region
    $region66: #{forward.1} parent=1 // pred_check
      _
    $region67: #{forward.1} parent=1 // pred_check_branch
      %62 = sbr.rel (0) target = $region69
    $region68: #{forward.1} parent=1 // pred_region
      _
    $region69: #{forward.1} parent=1 // pred_fallthru
      _
    // Predicated region
    $region70: #{forward.1} parent=1 // pred_check
      _
    $region71: #{forward.1} parent=1 // pred_check_branch
      %64 = sbr.rel (0) target = $region73
    $region72: #{forward.1} parent=1 // pred_region
      _
    $region73: #{forward.1} parent=1 // pred_fallthru
      _
    // Predicated region
    $region74: #{forward.1} parent=1 // pred_check
      _
    $region75: #{forward.1} parent=1 // pred_check_branch
      %66 = sbr.rel (0) target = $region77
    $region76: #{forward.1} parent=1 // pred_region
      _
    $region77: #{forward.1} parent=1 // pred_fallthru
      _
    // Predicated region
    $region78: #{forward.1} parent=1 // pred_check
      _
    $region79: #{forward.1} parent=1 // pred_check_branch
      %68 = sbr.rel (0) target = $region81
    $region80: #{forward.1} parent=1 // pred_region
      _
    $region81: #{forward.1} parent=1 // pred_fallthru
      _
    // Predicated region
    $region82: #{forward.1} parent=1 // pred_check
      _
    $region83: #{forward.1} parent=1 // pred_check_branch
      %70 = sbr.rel (0) target = $region85
    $region84: #{forward.1} parent=1 // pred_region
      _
    $region85: #{forward.1} parent=1 // pred_fallthru
      _
    // Predicated region
    $region86: #{forward.1} parent=1 // pred_check
      _
    $region87: #{forward.1} parent=1 // pred_check_branch
      %72 = sbr.rel (0) target = $region89
    $region88: #{forward.1} parent=1 // pred_region
      _
    $region89: #{forward.1} parent=1 // pred_fallthru
      _
    // Predicated region
    $region90: #{forward.1} parent=1 // pred_check
      _
    $region91: #{forward.1} parent=1 // pred_check_branch
      %74 = sbr.rel (0) target = $region93
    $region92: #{forward.1} parent=1 // pred_region
      _
    $region93: #{forward.1} parent=1 // pred_fallthru
      _
    %v75 = vld [vmem:[%s0] sm:$0xff]
    %v76 = vld [vmem:[%s0 + $0x8] sm:$0xff]
    %v77 = vld [vmem:[%s0 + $0x10] sm:$0xff]
    %v78 = vld [vmem:[%s0 + $0x18] sm:$0xff]
    %v79 = vld [vmem:[%s0 + $0x20] sm:$0xff]
    %v80 = vld [vmem:[%s0 + $0x28] sm:$0xff]
    %v81 = vld [vmem:[%s0 + $0x30] sm:$0xff]
    %v82 = vld [vmem:[%s0 + $0x38] sm:$0xff]
    %v83 = vld [vmem:[%s1] sm:$0xff]
    %v84 = vld [vmem:[%s1 + $0x8] sm:$0xff]
    %v85 = vld [vmem:[%s1 + $0x10] sm:$0xff]
    %v86 = vld [vmem:[%s1 + $0x18] sm:$0xff]
    %v87 = vld [vmem:[%s1 + $0x20] sm:$0xff]
    %v88 = vld [vmem:[%s1 + $0x28] sm:$0xff]
    %v89 = vld [vmem:[%s1 + $0x30] sm:$0xff]
    %v90 = vld [vmem:[%s1 + $0x38] sm:$0xff]
    %v91 = vld [vmem:[%s1 + $0x40] sm:$0xff]
    %v92 = vld [vmem:[%s1 + $0x48] sm:$0xff]
    %v93 = vld [vmem:[%s1 + $0x50] sm:$0xff]
    %v94 = vld [vmem:[%s1 + $0x58] sm:$0xff]
    %v95 = vld [vmem:[%s1 + $0x60] sm:$0xff]
    %v96 = vld [vmem:[%s1 + $0x68] sm:$0xff]
    %v97 = vld [vmem:[%s1 + $0x70] sm:$0xff]
    %v98 = vld [vmem:[%s1 + $0x78] sm:$0xff]
    %v99 = vld [vmem:[%s1 + $0x80] sm:$0xff]
    %v100 = vld [vmem:[%s1 + $0x88] sm:$0xff]
    %v101 = vld [vmem:[%s1 + $0x90] sm:$0x7]
    %vm102 = vcmask 154624
    %v104 = vsel %vm102, %v76, 0
    %v107 = vsel %vm102, %v78, 0
    %v110 = vsel %vm102, %v80, 0
    %v113 = vsel %vm102, %v82, 0
    %vm115 = vcmask 1042432
    %v117 = vsel %vm115, %v101, 0
    %119 = vmatprep.subr.mxu0 0.0
    %120 = vmatpush1.msra.mxu0 %v83
    %121 = vmatprep.subr.mxu0 0.0
    %122 = vmatpush1.msra.mxu0 %v84
    %123 = vmatprep.subr.mxu0 0.0
    %124 = vmatpush1.msra.mxu0 %v85
    %125 = vmatprep.subr.mxu0 0.0
    %126 = vmatpush1.msra.mxu0 %v86
    %127 = vmatprep.subr.mxu0 0.0
    %128 = vmatpush1.msra.mxu0 %v87
    %129 = vmatprep.subr.mxu0 0.0
    %130 = vmatpush1.msra.mxu0 %v88
    %131 = vmatprep.subr.mxu0 0.0
    %132 = vmatpush1.msra.mxu0 %v89
    %133 = vmatprep.subr.mxu0 0.0
    %134 = vmatpush1.msra.mxu0 %v90
    %135 = vmatprep.subr.mxu0 0.0
    %136 = vmatpush1.msra.mxu0 %v91
    %137 = vmatprep.subr.mxu0 0.0
    %138 = vmatpush1.msra.mxu0 %v92
    %139 = vmatprep.subr.mxu0 0.0
    %140 = vmatpush1.msra.mxu0 %v93
    %141 = vmatprep.subr.mxu0 0.0
    %142 = vmatpush1.msra.mxu0 %v94
    %143 = vmatprep.subr.mxu0 0.0
    %144 = vmatpush1.msra.mxu0 %v95
    %145 = vmatprep.subr.mxu0 0.0
    %146 = vmatpush1.msra.mxu0 %v96
    %147 = vmatprep.subr.mxu0 0.0
    %148 = vmatpush1.msra.mxu0 %v97
    %149 = vmatprep.subr.mxu0 0.0
    %150 = vmatpush1.msra.mxu0 %v98
    %151 = vmatprep.subr.mxu0 0.0
    %152 = vmatpush1.msra.mxu0 %v99
    %153 = vmatprep.subr.mxu0 0.0
    %154 = vmatpush1.msra.mxu0 %v100
    %155 = vmatprep.subr.mxu0 0.0
    %156 = vmatpush1.msra.mxu0 %v117
    %157 = vmatprep.subr.mxu0 0.0
    %158 = vmatpush1.msra.mxu0 0.0
    %159 = vmatprep.subr.mxu0 0.0
    %160 = vmatpush1.msra.mxu0 0.0
    %161 = vmatprep.subr.mxu0 0.0
    %162 = vmatpush1.msra.mxu0 0.0
    %163 = vmatprep.subr.mxu0 0.0
    %164 = vmatpush1.msra.mxu0 0.0
    %165 = vmatprep.subr.mxu0 0.0
    %166 = vmatpush1.msra.mxu0 0.0
    %167 = vmatprep.subr.mxu0 0.0
    %168 = vmatpush1.msra.mxu0 0.0
    %169 = vmatprep.subr.mxu0 0.0
    %170 = vmatpush1.msra.mxu0 0.0
    %171 = vmatprep.subr.mxu0 0.0
    %172 = vmatpush1.msra.mxu0 0.0
    %173 = vmatprep.subr.mxu0 0.0
    %174 = vmatpush1.msra.mxu0 0.0
    %175 = vmatprep.subr.mxu0 0.0
    %176 = vmatpush1.msra.mxu0 0.0
    %177 = vmatprep.subr.mxu0 0.0
    %178 = vmatpush1.msra.mxu0 0.0
    %179 = vmatprep.subr.mxu0 0.0
    %180 = vmatpush1.msra.mxu0 0.0
    %181 = vmatprep.subr.mxu0 0.0
    %182 = vmatpush1.msra.mxu0 0.0
    %183 = vmatprep.mubr.f32.mxu0 %v104
    %184 = vmatmul.mubr.f32.gmra.mrb[0].mxu0 %v75
    %v185 = vpop.f32.mrb[0].mxu0
    %v186 = vadd.f32 0.0, %v185
    %v187 = vpop.f32.mrb[0].mxu0
    %188 = vmatprep.mubr.f32.mxu0 %v107
    %189 = vmatmul.mubr.f32.gmra.mrb[0].mxu0 %v77
    %v190 = vpop.f32.mrb[0].mxu0
    %v191 = vadd.f32 0.0, %v190
    %v192 = vpop.f32.mrb[0].mxu0
    %193 = vmatprep.mubr.f32.mxu0 %v110
    %194 = vmatmul.mubr.f32.gmra.mrb[0].mxu0 %v79
    %v195 = vpop.f32.mrb[0].mxu0
    %v196 = vadd.f32 0.0, %v195
    %v197 = vpop.f32.mrb[0].mxu0
    %198 = vmatprep.mubr.f32.mxu0 %v113
    %199 = vmatmul.mubr.f32.gmra.mrb[0].mxu0 %v81
    %v200 = vpop.f32.mrb[0].mxu0
    %v201 = vadd.f32 0.0, %v200
    %v202 = vpop.f32.mrb[0].mxu0
    %203 = vdwg.mxu0
    %v204 = vld [vmem:[%s2] sm:$0x1]
    %v206 = vlaneseq
    %v207 = vshrl.u32 %v206, 7
    %v208 = vsub.s32 0, %v207
    %v209 = vrot.slane %v204, %v208
    %v211 = vmul.f32 %v186, %v209
    %v212 = vmul.f32 %v191, %v209
    %v213 = vmul.f32 %v196, %v209
    %v214 = vmul.f32 %v201, %v209
    %v215 = vld [vmem:[%s3] sm:$0x1]
    %v217 = vlaneseq
    %v218 = vshrl.u32 %v217, 7
    %v219 = vsub.s32 0, %v218
    %v220 = vrot.slane %v215, %v219
    %v222 = vadd.f32 %v211, %v220
    %v223 = vadd.f32 %v212, %v220
    %v224 = vadd.f32 %v213, %v220
    %v225 = vadd.f32 %v214, %v220
    %v226 = vmax.f32 %v222, 0.0
    %v227 = vmax.f32 %v223, 0.0
    %v228 = vmax.f32 %v224, 0.0
    %v229 = vmax.f32 %v225, 0.0
    %v231 = vrot.slane %v226, 1
    %v233 = vmax.f32 %v226, %v231
    %v234 = vrot.slane %v226, 4
    %v236 = vmax.f32 %v233, %v234
    %v237 = vrot.slane %v226, 5
    %v239 = vmax.f32 %v236, %v237
    %v241 = vrot.slane %v228, 1
    %v243 = vmax.f32 %v228, %v241
    %v244 = vrot.slane %v228, 4
    %v246 = vmax.f32 %v243, %v244
    %v247 = vrot.slane %v228, 5
    %v249 = vmax.f32 %v246, %v247
    %v250 = vrot.slane %v226, 2
    %v252 = vmax.f32 %v233, %v250
    %v253 = vmax.f32 %v252, %v234
    %v254 = vmax.f32 %v253, %v237
    %v255 = vrot.slane %v226, 6
    %v257 = vmax.f32 %v254, %v255
    %v258 = vrot.slane %v228, 2
    %v260 = vmax.f32 %v243, %v258
    %v261 = vmax.f32 %v260, %v244
    %v262 = vmax.f32 %v261, %v247
    %v263 = vrot.slane %v228, 6
    %v265 = vmax.f32 %v262, %v263
    %v267 = vrot.slane %v227, 4
    %v269 = vmax.f32 %v233, %v267
    %v270 = vrot.slane %v227, 5
    %v272 = vmax.f32 %v269, %v270
    %v273 = vmax.f32 %v272, %v227
    %v274 = vrot.slane %v227, 1
    %v276 = vmax.f32 %v273, %v274
    %v278 = vrot.slane %v229, 4
    %v280 = vmax.f32 %v243, %v278
    %v281 = vrot.slane %v229, 5
    %v283 = vmax.f32 %v280, %v281
    %v284 = vmax.f32 %v283, %v229
    %v285 = vrot.slane %v229, 1
    %v287 = vmax.f32 %v284, %v285
    %v288 = vmax.f32 %v252, %v267
    %v289 = vmax.f32 %v288, %v270
    %v290 = vrot.slane %v227, 6
    %v292 = vmax.f32 %v289, %v290
    %v293 = vmax.f32 %v292, %v227
    %v294 = vmax.f32 %v293, %v274
    %v295 = vrot.slane %v227, 2
    %v297 = vmax.f32 %v294, %v295
    %v298 = vmax.f32 %v260, %v278
    %v299 = vmax.f32 %v298, %v281
    %v300 = vrot.slane %v229, 6
    %v302 = vmax.f32 %v299, %v300
    %v303 = vmax.f32 %v302, %v229
    %v304 = vmax.f32 %v303, %v285
    %v305 = vrot.slane %v229, 2
    %v307 = vmax.f32 %v304, %v305
    %v309 = vrot.slane %v249, 7
    %v312 = vrot.slane %v257, 7
    %v315 = vrot.slane %v265, 6
    %v318 = vrot.slane %v287, 7
    %v321 = vrot.slane %v297, 7
    %v324 = vrot.slane %v307, 6
    %vm326 = vcmask 1040384
    %v327 = vsel %vm326, %v239, %v309
    %vm328 = vcmask 1041408
    %v329 = vsel %vm328, %v327, %v312
    %v330 = vsel %vm115, %v329, %v315
    %vm331 = vcmask 1043456
    %v332 = vsel %vm331, %v330, %v276
    %vm333 = vcmask 1044480
    %v334 = vsel %vm333, %v332, %v318
    %vm335 = vcmask 1045504
    %v336 = vsel %vm335, %v334, %v321
    %vm337 = vcmask 1046528
    %v338 = vsel %vm337, %v336, %v324
    %339 = vst [vmem:[#allocation2] sm:$0xff] 0.0
    %340 = vst [vmem:[#allocation2 + $0x8] sm:$0xff] 0.0
    %vm341 = vcmask 523264
    %342 = vst.msk [vmem:[#allocation2] sm:$0xff] %vm341, %v338
    %v343 = vld [vmem:[#allocation2] sm:$0xff]
    %v344 = vld [vmem:[#allocation2 + $0x8] sm:$0xff]
    %v345 = vld [vmem:[%s4] ss:$8 sm:$0x3]
    %v347 = vlaneseq
    %v348 = vshrl.u32 %v347, 7
    %v349 = vsub.s32 0, %v348
    %v350 = vrot.slane %v345, %v349
    %v351 = vlaneseq
    %v352 = vshrl.u32 %v351, 7
    %v353 = vsub.s32 1, %v352
    %v354 = vrot.slane %v345, %v353
    %v357 = vmul.f32 %v343, %v350
    %v358 = vmul.f32 %v344, %v354
    %v359 = vld [vmem:[%s5] ss:$8 sm:$0x3]
    %v361 = vlaneseq
    %v362 = vshrl.u32 %v361, 7
    %v363 = vsub.s32 0, %v362
    %v364 = vrot.slane %v359, %v363
    %v365 = vlaneseq
    %v366 = vshrl.u32 %v365, 7
    %v367 = vsub.s32 1, %v366
    %v368 = vrot.slane %v359, %v367
    %v371 = vadd.f32 %v357, %v364
    %v372 = vadd.f32 %v358, %v368
    %v373 = vmax.f32 %v371, 0.0
    %v374 = vmax.f32 %v372, 0.0
    %v375 = vld [vmem:[%s6] sm:$0xff]
    %v376 = vld [vmem:[%s6 + $0x8] sm:$0xff]
    %v377 = vld [vmem:[%s6 + $0x10] sm:$0xff]
    %v378 = vld [vmem:[%s6 + $0x18] sm:$0xff]
    %v379 = vld [vmem:[%s6 + $0x20] sm:$0xff]
    %v380 = vld [vmem:[%s6 + $0x28] sm:$0xff]
    %v381 = vld [vmem:[%s6 + $0x30] sm:$0xff]
    %v382 = vld [vmem:[%s6 + $0x38] sm:$0xff]
    %v383 = vld [vmem:[%s6 + $0x40] sm:$0xff]
    %v384 = vld [vmem:[%s6 + $0x48] sm:$0xff]
    %v385 = vld [vmem:[%s6 + $0x50] sm:$0xff]
    %v386 = vld [vmem:[%s6 + $0x58] sm:$0xff]
    %v387 = vld [vmem:[%s6 + $0x60] sm:$0xff]
    %v388 = vld [vmem:[%s6 + $0x68] sm:$0xff]
    %v389 = vld [vmem:[%s6 + $0x70] sm:$0xff]
    %v390 = vld [vmem:[%s6 + $0x78] sm:$0xff]
    %v391 = vld [vmem:[%s6 + $0x80] sm:$0xff]
    %v392 = vld [vmem:[%s6 + $0x88] sm:$0xff]
    %v393 = vld [vmem:[%s6 + $0x90] sm:$0xff]
    %v394 = vld [vmem:[%s6 + $0x98] sm:$0xff]
    %v395 = vld [vmem:[%s6 + $0xa0] sm:$0xff]
    %v396 = vld [vmem:[%s6 + $0xa8] sm:$0xff]
    %v397 = vld [vmem:[%s6 + $0xb0] sm:$0xff]
    %v398 = vld [vmem:[%s6 + $0xb8] sm:$0xff]
    %v399 = vld [vmem:[%s6 + $0xc0] sm:$0xff]
    %v400 = vld [vmem:[%s6 + $0xc8] sm:$0xff]
    %v401 = vld [vmem:[%s6 + $0xd0] sm:$0xff]
    %v402 = vld [vmem:[%s6 + $0xd8] sm:$0xff]
    %v403 = vld [vmem:[%s6 + $0xe0] sm:$0xff]
    %v404 = vld [vmem:[%s6 + $0xe8] sm:$0xff]
    %v405 = vld [vmem:[%s6 + $0xf0] sm:$0xff]
    %v406 = vld [vmem:[%s6 + $0xf8] sm:$0xff]
    %407 = vmatprep.subr.mxu0 0.0
    %408 = vmatpush1.msra.mxu0 %v375
    %409 = vmatprep.subr.mxu0 0.0
    %410 = vmatpush1.msra.mxu0 %v376
    %411 = vmatprep.subr.mxu0 0.0
    %412 = vmatpush1.msra.mxu0 %v377
    %413 = vmatprep.subr.mxu0 0.0
    %414 = vmatpush1.msra.mxu0 %v378
    %415 = vmatprep.subr.mxu0 0.0
    %416 = vmatpush1.msra.mxu0 %v379
    %417 = vmatprep.subr.mxu0 0.0
    %418 = vmatpush1.msra.mxu0 %v380
    %419 = vmatprep.subr.mxu0 0.0
    %420 = vmatpush1.msra.mxu0 %v381
    %421 = vmatprep.subr.mxu0 0.0
    %422 = vmatpush1.msra.mxu0 %v382
    %423 = vmatprep.subr.mxu0 0.0
    %424 = vmatpush1.msra.mxu0 %v383
    %425 = vmatprep.subr.mxu0 0.0
    %426 = vmatpush1.msra.mxu0 %v384
    %427 = vmatprep.subr.mxu0 0.0
    %428 = vmatpush1.msra.mxu0 %v385
    %429 = vmatprep.subr.mxu0 0.0
    %430 = vmatpush1.msra.mxu0 %v386
    %431 = vmatprep.subr.mxu0 0.0
    %432 = vmatpush1.msra.mxu0 %v387
    %433 = vmatprep.subr.mxu0 0.0
    %434 = vmatpush1.msra.mxu0 %v388
    %435 = vmatprep.subr.mxu0 0.0
    %436 = vmatpush1.msra.mxu0 %v389
    %437 = vmatprep.subr.mxu0 0.0
    %438 = vmatpush1.msra.mxu0 %v390
    %439 = vmatprep.subr.mxu0 0.0
    %440 = vmatpush1.msra.mxu0 %v391
    %441 = vmatprep.subr.mxu0 0.0
    %442 = vmatpush1.msra.mxu0 %v392
    %443 = vmatprep.subr.mxu0 0.0
    %444 = vmatpush1.msra.mxu0 %v393
    %445 = vmatprep.subr.mxu0 0.0
    %446 = vmatpush1.msra.mxu0 %v394
    %447 = vmatprep.subr.mxu0 0.0
    %448 = vmatpush1.msra.mxu0 %v395
    %449 = vmatprep.subr.mxu0 0.0
    %450 = vmatpush1.msra.mxu0 %v396
    %451 = vmatprep.subr.mxu0 0.0
    %452 = vmatpush1.msra.mxu0 %v397
    %453 = vmatprep.subr.mxu0 0.0
    %454 = vmatpush1.msra.mxu0 %v398
    %455 = vmatprep.subr.mxu0 0.0
    %456 = vmatpush1.msra.mxu0 %v399
    %457 = vmatprep.subr.mxu0 0.0
    %458 = vmatpush1.msra.mxu0 %v400
    %459 = vmatprep.subr.mxu0 0.0
    %460 = vmatpush1.msra.mxu0 %v401
    %461 = vmatprep.subr.mxu0 0.0
    %462 = vmatpush1.msra.mxu0 %v402
    %463 = vmatprep.subr.mxu0 0.0
    %464 = vmatpush1.msra.mxu0 %v403
    %465 = vmatprep.subr.mxu0 0.0
    %466 = vmatpush1.msra.mxu0 %v404
    %467 = vmatprep.subr.mxu0 0.0
    %468 = vmatpush1.msra.mxu0 %v405
    %469 = vmatprep.subr.mxu0 0.0
    %470 = vmatpush1.msra.mxu0 %v406
    %471 = vmatprep.mubr.f32.mxu0 %v374
    %472 = vmatmul.mubr.f32.gmra.mrb[0].mxu0 %v373
    %v473 = vpop.f32.mrb[0].mxu0
    %v474 = vadd.f32 0.0, %v473
    %v475 = vpop.f32.mrb[0].mxu0
    %476 = vdwg.mxu0
    %v477 = vld [vmem:[%s7] sm:$0x1]
    %v478 = vlaneseq
    %v479 = vshrl.u32 %v478, 7
    %v480 = vsub.s32 0, %v479
    %v481 = vrot.slane %v477, %v480
    %v482 = vmul.f32 %v474, %v481
    %v483 = vld [vmem:[%s8] sm:$0x1]
    %v484 = vlaneseq
    %v485 = vshrl.u32 %v484, 7
    %v486 = vsub.s32 0, %v485
    %v487 = vrot.slane %v483, %v486
    %v488 = vadd.f32 %v482, %v487
    %v489 = vmax.f32 %v488, 0.0
    %v491 = vrot.slane %v489, 2
    %v493 = vrot.slane %v489, 4
    %v495 = vrot.slane %v489, 6
    %v498 = vrot.slane 0.0, 6
    %v499 = vrot.slane %v491, 6
    %v500 = vrot.slane %v493, 6
    %v501 = vrot.slane %v495, 6
    %v506 = vrot.slane 0.0, 4
    %v507 = vrot.slane %v491, 4
    %v508 = vrot.slane %v493, 4
    %v509 = vrot.slane %v495, 4
    %v514 = vrot.slane %v491, 2
    %v515 = vrot.slane 0.0, 2
    %v516 = vrot.slane %v493, 2
    %v517 = vrot.slane %v495, 2
    %v522 = vsel %vm328, 0.0, %v498
    %v523 = vsel %vm328, 0.0, %v495
    %v524 = vsel %vm328, %v489, %v499
    %v525 = vsel %vm328, %v491, %v498
    %v526 = vsel %vm328, 0.0, %v500
    %v527 = vsel %vm328, %v493, %v501
    %v528 = vsel %vm328, %v495, %v498
    %v529 = vsel %vm331, %v522, %v506
    %v530 = vsel %vm331, %v522, %v493
    %v531 = vsel %vm331, %v522, %v507
    %v532 = vsel %vm331, %v523, %v506
    %v533 = vsel %vm331, %v524, %v508
    %v534 = vsel %vm331, %v525, %v509
    %v535 = vsel %vm331, %v526, %v506
    %v536 = vsel %vm331, %v527, %v506
    %v537 = vsel %vm331, %v528, %v506
    %v538 = vsel %vm335, %v529, %v491
    %v539 = vsel %vm335, %v530, %v514
    %v540 = vsel %vm335, %v531, %v515
    %v541 = vsel %vm335, %v532, %v516
    %v542 = vsel %vm335, %v533, %v517
    %v543 = vsel %vm335, %v534, %v515
    %v544 = vsel %vm335, %v535, %v515
    %v545 = vsel %vm335, %v536, %v515
    %v546 = vsel %vm335, %v537, %v515
    %v547 = vld [vmem:[%s9] sm:$0xff]
    %v548 = vld [vmem:[%s9 + $0x8] sm:$0xff]
    %v549 = vld [vmem:[%s9 + $0x10] sm:$0xff]
    %v550 = vld [vmem:[%s9 + $0x18] sm:$0xff]
    %v551 = vld [vmem:[%s9 + $0x20] sm:$0xff]
    %v552 = vld [vmem:[%s9 + $0x28] sm:$0xff]
    %v553 = vld [vmem:[%s9 + $0x30] sm:$0xff]
    %v554 = vld [vmem:[%s9 + $0x38] sm:$0xff]
    %v555 = vld [vmem:[%s9 + $0x40] sm:$0xff]
    %v556 = vld [vmem:[%s9 + $0x48] sm:$0xff]
    %v557 = vld [vmem:[%s9 + $0x50] sm:$0xff]
    %v558 = vld [vmem:[%s9 + $0x58] sm:$0xff]
    %v559 = vld [vmem:[%s9 + $0x60] sm:$0xff]
    %v560 = vld [vmem:[%s9 + $0x68] sm:$0xff]
    %v561 = vld [vmem:[%s9 + $0x70] sm:$0xff]
    %v562 = vld [vmem:[%s9 + $0x78] sm:$0xff]
    %v563 = vld [vmem:[%s9 + $0x80] sm:$0xff]
    %v564 = vld [vmem:[%s9 + $0x88] sm:$0xff]
    %v565 = vld [vmem:[%s9 + $0x90] sm:$0xff]
    %v566 = vld [vmem:[%s9 + $0x98] sm:$0xff]
    %v567 = vld [vmem:[%s9 + $0xa0] sm:$0xff]
    %v568 = vld [vmem:[%s9 + $0xa8] sm:$0xff]
    %v569 = vld [vmem:[%s9 + $0xb0] sm:$0xff]
    %v570 = vld [vmem:[%s9 + $0xb8] sm:$0xff]
    %v571 = vld [vmem:[%s9 + $0xc0] sm:$0xff]
    %v572 = vld [vmem:[%s9 + $0xc8] sm:$0xff]
    %v573 = vld [vmem:[%s9 + $0xd0] sm:$0xff]
    %v574 = vld [vmem:[%s9 + $0xd8] sm:$0xff]
    %v575 = vld [vmem:[%s9 + $0xe0] sm:$0xff]
    %v576 = vld [vmem:[%s9 + $0xe8] sm:$0xff]
    %v577 = vld [vmem:[%s9 + $0xf0] sm:$0xff]
    %v578 = vld [vmem:[%s9 + $0xf8] sm:$0xff]
    %v579 = vld [vmem:[%s9 + $0x100] sm:$0xff]
    %v580 = vld [vmem:[%s9 + $0x108] sm:$0xff]
    %v581 = vld [vmem:[%s9 + $0x110] sm:$0xff]
    %v582 = vld [vmem:[%s9 + $0x118] sm:$0xff]
    %v583 = vld [vmem:[%s9 + $0x120] sm:$0xff]
    %v584 = vld [vmem:[%s9 + $0x128] sm:$0xff]
    %v585 = vld [vmem:[%s9 + $0x130] sm:$0xff]
    %v586 = vld [vmem:[%s9 + $0x138] sm:$0xff]
    %v587 = vld [vmem:[%s9 + $0x140] sm:$0xff]
    %v588 = vld [vmem:[%s9 + $0x148] sm:$0xff]
    %v589 = vld [vmem:[%s9 + $0x150] sm:$0xff]
    %v590 = vld [vmem:[%s9 + $0x158] sm:$0xff]
    %v591 = vld [vmem:[%s9 + $0x160] sm:$0xff]
    %v592 = vld [vmem:[%s9 + $0x168] sm:$0xff]
    %v593 = vld [vmem:[%s9 + $0x170] sm:$0xff]
    %v594 = vld [vmem:[%s9 + $0x178] sm:$0xff]
    %v595 = vld [vmem:[%s9 + $0x180] sm:$0xff]
    %v596 = vld [vmem:[%s9 + $0x188] sm:$0xff]
    %v597 = vld [vmem:[%s9 + $0x190] sm:$0xff]
    %v598 = vld [vmem:[%s9 + $0x198] sm:$0xff]
    %v599 = vld [vmem:[%s9 + $0x1a0] sm:$0xff]
    %v600 = vld [vmem:[%s9 + $0x1a8] sm:$0xff]
    %v601 = vld [vmem:[%s9 + $0x1b0] sm:$0xff]
    %v602 = vld [vmem:[%s9 + $0x1b8] sm:$0xff]
    %v603 = vld [vmem:[%s9 + $0x1c0] sm:$0xff]
    %v604 = vld [vmem:[%s9 + $0x1c8] sm:$0xff]
    %v605 = vld [vmem:[%s9 + $0x1d0] sm:$0xff]
    %v606 = vld [vmem:[%s9 + $0x1d8] sm:$0xff]
    %v607 = vld [vmem:[%s9 + $0x1e0] sm:$0xff]
    %v608 = vld [vmem:[%s9 + $0x1e8] sm:$0xff]
    %v609 = vld [vmem:[%s9 + $0x1f0] sm:$0xff]
    %v610 = vld [vmem:[%s9 + $0x1f8] sm:$0xff]
    %v611 = vld [vmem:[%s9 + $0x200] sm:$0xff]
    %v612 = vld [vmem:[%s9 + $0x208] sm:$0xff]
    %v613 = vld [vmem:[%s9 + $0x210] sm:$0xff]
    %v614 = vld [vmem:[%s9 + $0x218] sm:$0xff]
    %v615 = vld [vmem:[%s9 + $0x220] sm:$0xff]
    %v616 = vld [vmem:[%s9 + $0x228] sm:$0xff]
    %v617 = vld [vmem:[%s9 + $0x230] sm:$0xff]
    %v618 = vld [vmem:[%s9 + $0x238] sm:$0xff]
    %v619 = vld [vmem:[%s9 + $0x240] sm:$0xff]
    %v620 = vld [vmem:[%s9 + $0x248] sm:$0xff]
    %v621 = vld [vmem:[%s9 + $0x250] sm:$0xff]
    %v622 = vld [vmem:[%s9 + $0x258] sm:$0xff]
    %v623 = vld [vmem:[%s9 + $0x260] sm:$0xff]
    %v624 = vld [vmem:[%s9 + $0x268] sm:$0xff]
    %v625 = vld [vmem:[%s9 + $0x270] sm:$0xff]
    %v626 = vld [vmem:[%s9 + $0x278] sm:$0xff]
    %v627 = vld [vmem:[%s9 + $0x280] sm:$0xff]
    %v628 = vld [vmem:[%s9 + $0x288] sm:$0xff]
    %v629 = vld [vmem:[%s9 + $0x290] sm:$0xff]
    %v630 = vld [vmem:[%s9 + $0x298] sm:$0xff]
    %v631 = vld [vmem:[%s9 + $0x2a0] sm:$0xff]
    %v632 = vld [vmem:[%s9 + $0x2a8] sm:$0xff]
    %v633 = vld [vmem:[%s9 + $0x2b0] sm:$0xff]
    %v634 = vld [vmem:[%s9 + $0x2b8] sm:$0xff]
    %v635 = vld [vmem:[%s9 + $0x2c0] sm:$0xff]
    %v636 = vld [vmem:[%s9 + $0x2c8] sm:$0xff]
    %v637 = vld [vmem:[%s9 + $0x2d0] sm:$0xff]
    %v638 = vld [vmem:[%s9 + $0x2d8] sm:$0xff]
    %v639 = vld [vmem:[%s9 + $0x2e0] sm:$0xff]
    %v640 = vld [vmem:[%s9 + $0x2e8] sm:$0xff]
    %v641 = vld [vmem:[%s9 + $0x2f0] sm:$0xff]
    %v642 = vld [vmem:[%s9 + $0x2f8] sm:$0xff]
    %v643 = vld [vmem:[%s9 + $0x300] sm:$0xff]
    %v644 = vld [vmem:[%s9 + $0x308] sm:$0xff]
    %v645 = vld [vmem:[%s9 + $0x310] sm:$0xff]
    %v646 = vld [vmem:[%s9 + $0x318] sm:$0xff]
    %v647 = vld [vmem:[%s9 + $0x320] sm:$0xff]
    %v648 = vld [vmem:[%s9 + $0x328] sm:$0xff]
    %v649 = vld [vmem:[%s9 + $0x330] sm:$0xff]
    %v650 = vld [vmem:[%s9 + $0x338] sm:$0xff]
    %v651 = vld [vmem:[%s9 + $0x340] sm:$0xff]
    %v652 = vld [vmem:[%s9 + $0x348] sm:$0xff]
    %v653 = vld [vmem:[%s9 + $0x350] sm:$0xff]
    %v654 = vld [vmem:[%s9 + $0x358] sm:$0xff]
    %v655 = vld [vmem:[%s9 + $0x360] sm:$0xff]
    %v656 = vld [vmem:[%s9 + $0x368] sm:$0xff]
    %v657 = vld [vmem:[%s9 + $0x370] sm:$0xff]
    %v658 = vld [vmem:[%s9 + $0x378] sm:$0xff]
    %v659 = vld [vmem:[%s9 + $0x380] sm:$0xff]
    %v660 = vld [vmem:[%s9 + $0x388] sm:$0xff]
    %v661 = vld [vmem:[%s9 + $0x390] sm:$0xff]
    %v662 = vld [vmem:[%s9 + $0x398] sm:$0xff]
    %v663 = vld [vmem:[%s9 + $0x3a0] sm:$0xff]
    %v664 = vld [vmem:[%s9 + $0x3a8] sm:$0xff]
    %v665 = vld [vmem:[%s9 + $0x3b0] sm:$0xff]
    %v666 = vld [vmem:[%s9 + $0x3b8] sm:$0xff]
    %v667 = vld [vmem:[%s9 + $0x3c0] sm:$0xff]
    %v668 = vld [vmem:[%s9 + $0x3c8] sm:$0xff]
    %v669 = vld [vmem:[%s9 + $0x3d0] sm:$0xff]
    %v670 = vld [vmem:[%s9 + $0x3d8] sm:$0xff]
    %v671 = vld [vmem:[%s9 + $0x3e0] sm:$0xff]
    %v672 = vld [vmem:[%s9 + $0x3e8] sm:$0xff]
    %v673 = vld [vmem:[%s9 + $0x3f0] sm:$0xff]
    %v674 = vld [vmem:[%s9 + $0x3f8] sm:$0xff]
    %v675 = vld [vmem:[%s9 + $0x400] sm:$0xff]
    %v676 = vld [vmem:[%s9 + $0x408] sm:$0xff]
    %v677 = vld [vmem:[%s9 + $0x410] sm:$0xff]
    %v678 = vld [vmem:[%s9 + $0x418] sm:$0xff]
    %v679 = vld [vmem:[%s9 + $0x420] sm:$0xff]
    %v680 = vld [vmem:[%s9 + $0x428] sm:$0xff]
    %v681 = vld [vmem:[%s9 + $0x430] sm:$0xff]
    %v682 = vld [vmem:[%s9 + $0x438] sm:$0xff]
    %v683 = vld [vmem:[%s9 + $0x440] sm:$0xff]
    %v684 = vld [vmem:[%s9 + $0x448] sm:$0xff]
    %v685 = vld [vmem:[%s9 + $0x450] sm:$0xff]
    %v686 = vld [vmem:[%s9 + $0x458] sm:$0xff]
    %v687 = vld [vmem:[%s9 + $0x460] sm:$0xff]
    %v688 = vld [vmem:[%s9 + $0x468] sm:$0xff]
    %v689 = vld [vmem:[%s9 + $0x470] sm:$0xff]
    %v690 = vld [vmem:[%s9 + $0x478] sm:$0xff]
    %691 = vmatprep.subr.mxu0 0.0
    %692 = vmatpush1.msra.mxu0 %v547
    %693 = vmatprep.subr.mxu0 0.0
    %694 = vmatpush1.msra.mxu0 %v548
    %695 = vmatprep.subr.mxu0 0.0
    %696 = vmatpush1.msra.mxu0 %v549
    %697 = vmatprep.subr.mxu0 0.0
    %698 = vmatpush1.msra.mxu0 %v550
    %699 = vmatprep.subr.mxu0 0.0
    %700 = vmatpush1.msra.mxu0 %v551
    %701 = vmatprep.subr.mxu0 0.0
    %702 = vmatpush1.msra.mxu0 %v552
    %703 = vmatprep.subr.mxu0 0.0
    %704 = vmatpush1.msra.mxu0 %v553
    %705 = vmatprep.subr.mxu0 0.0
    %706 = vmatpush1.msra.mxu0 %v554
    %707 = vmatprep.subr.mxu0 0.0
    %708 = vmatpush1.msra.mxu0 %v555
    %709 = vmatprep.subr.mxu0 0.0
    %710 = vmatpush1.msra.mxu0 %v556
    %711 = vmatprep.subr.mxu0 0.0
    %712 = vmatpush1.msra.mxu0 %v557
    %713 = vmatprep.subr.mxu0 0.0
    %714 = vmatpush1.msra.mxu0 %v558
    %715 = vmatprep.subr.mxu0 0.0
    %716 = vmatpush1.msra.mxu0 %v559
    %717 = vmatprep.subr.mxu0 0.0
    %718 = vmatpush1.msra.mxu0 %v560
    %719 = vmatprep.subr.mxu0 0.0
    %720 = vmatpush1.msra.mxu0 %v561
    %721 = vmatprep.subr.mxu0 0.0
    %722 = vmatpush1.msra.mxu0 %v562
    %723 = vmatprep.subr.mxu0 0.0
    %724 = vmatpush1.msra.mxu0 %v563
    %725 = vmatprep.subr.mxu0 0.0
    %726 = vmatpush1.msra.mxu0 %v564
    %727 = vmatprep.subr.mxu0 0.0
    %728 = vmatpush1.msra.mxu0 %v565
    %729 = vmatprep.subr.mxu0 0.0
    %730 = vmatpush1.msra.mxu0 %v566
    %731 = vmatprep.subr.mxu0 0.0
    %732 = vmatpush1.msra.mxu0 %v567
    %733 = vmatprep.subr.mxu0 0.0
    %734 = vmatpush1.msra.mxu0 %v568
    %735 = vmatprep.subr.mxu0 0.0
    %736 = vmatpush1.msra.mxu0 %v569
    %737 = vmatprep.subr.mxu0 0.0
    %738 = vmatpush1.msra.mxu0 %v570
    %739 = vmatprep.subr.mxu0 0.0
    %740 = vmatpush1.msra.mxu0 %v571
    %741 = vmatprep.subr.mxu0 0.0
    %742 = vmatpush1.msra.mxu0 %v572
    %743 = vmatprep.subr.mxu0 0.0
    %744 = vmatpush1.msra.mxu0 %v573
    %745 = vmatprep.subr.mxu0 0.0
    %746 = vmatpush1.msra.mxu0 %v574
    %747 = vmatprep.subr.mxu0 0.0
    %748 = vmatpush1.msra.mxu0 %v575
    %749 = vmatprep.subr.mxu0 0.0
    %750 = vmatpush1.msra.mxu0 %v576
    %751 = vmatprep.subr.mxu0 0.0
    %752 = vmatpush1.msra.mxu0 %v577
    %753 = vmatprep.subr.mxu0 0.0
    %754 = vmatpush1.msra.mxu0 %v578
    %755 = vmatprep.mubr.f32.mxu0 %v539
    %756 = vmatmul.mubr.f32.gmra.mrb[0].mxu0 %v538
    %v757 = vpop.f32.mrb[0].mxu0
    %v758 = vadd.f32 0.0, %v757
    %v759 = vpop.f32.mrb[0].mxu0
    %760 = vdwg.mxu0
    %761 = vmatprep.subr.mxu0 0.0
    %762 = vmatpush1.msra.mxu0 %v579
    %763 = vmatprep.subr.mxu0 0.0
    %764 = vmatpush1.msra.mxu0 %v580
    %765 = vmatprep.subr.mxu0 0.0
    %766 = vmatpush1.msra.mxu0 %v581
    %767 = vmatprep.subr.mxu0 0.0
    %768 = vmatpush1.msra.mxu0 %v582
    %769 = vmatprep.subr.mxu0 0.0
    %770 = vmatpush1.msra.mxu0 %v583
    %771 = vmatprep.subr.mxu0 0.0
    %772 = vmatpush1.msra.mxu0 %v584
    %773 = vmatprep.subr.mxu0 0.0
    %774 = vmatpush1.msra.mxu0 %v585
    %775 = vmatprep.subr.mxu0 0.0
    %776 = vmatpush1.msra.mxu0 %v586
    %777 = vmatprep.subr.mxu0 0.0
    %778 = vmatpush1.msra.mxu0 %v587
    %779 = vmatprep.subr.mxu0 0.0
    %780 = vmatpush1.msra.mxu0 %v588
    %781 = vmatprep.subr.mxu0 0.0
    %782 = vmatpush1.msra.mxu0 %v589
    %783 = vmatprep.subr.mxu0 0.0
    %784 = vmatpush1.msra.mxu0 %v590
    %785 = vmatprep.subr.mxu0 0.0
    %786 = vmatpush1.msra.mxu0 %v591
    %787 = vmatprep.subr.mxu0 0.0
    %788 = vmatpush1.msra.mxu0 %v592
    %789 = vmatprep.subr.mxu0 0.0
    %790 = vmatpush1.msra.mxu0 %v593
    %791 = vmatprep.subr.mxu0 0.0
    %792 = vmatpush1.msra.mxu0 %v594
    %793 = vmatprep.subr.mxu0 0.0
    %794 = vmatpush1.msra.mxu0 %v595
    %795 = vmatprep.subr.mxu0 0.0
    %796 = vmatpush1.msra.mxu0 %v596
    %797 = vmatprep.subr.mxu0 0.0
    %798 = vmatpush1.msra.mxu0 %v597
    %799 = vmatprep.subr.mxu0 0.0
    %800 = vmatpush1.msra.mxu0 %v598
    %801 = vmatprep.subr.mxu0 0.0
    %802 = vmatpush1.msra.mxu0 %v599
    %803 = vmatprep.subr.mxu0 0.0
    %804 = vmatpush1.msra.mxu0 %v600
    %805 = vmatprep.subr.mxu0 0.0
    %806 = vmatpush1.msra.mxu0 %v601
    %807 = vmatprep.subr.mxu0 0.0
    %808 = vmatpush1.msra.mxu0 %v602
    %809 = vmatprep.subr.mxu0 0.0
    %810 = vmatpush1.msra.mxu0 %v603
    %811 = vmatprep.subr.mxu0 0.0
    %812 = vmatpush1.msra.mxu0 %v604
    %813 = vmatprep.subr.mxu0 0.0
    %814 = vmatpush1.msra.mxu0 %v605
    %815 = vmatprep.subr.mxu0 0.0
    %816 = vmatpush1.msra.mxu0 %v606
    %817 = vmatprep.subr.mxu0 0.0
    %818 = vmatpush1.msra.mxu0 %v607
    %819 = vmatprep.subr.mxu0 0.0
    %820 = vmatpush1.msra.mxu0 %v608
    %821 = vmatprep.subr.mxu0 0.0
    %822 = vmatpush1.msra.mxu0 %v609
    %823 = vmatprep.subr.mxu0 0.0
    %824 = vmatpush1.msra.mxu0 %v610
    %825 = vmatprep.mubr.f32.mxu0 %v541
    %826 = vmatmul.mubr.f32.gmra.mrb[0].mxu0 %v540
    %v827 = vpop.f32.mrb[0].mxu0
    %v828 = vadd.f32 %v758, %v827
    %v829 = vpop.f32.mrb[0].mxu0
    %830 = vdwg.mxu0
    %831 = vmatprep.subr.mxu0 0.0
    %832 = vmatpush1.msra.mxu0 %v611
    %833 = vmatprep.subr.mxu0 0.0
    %834 = vmatpush1.msra.mxu0 %v612
    %835 = vmatprep.subr.mxu0 0.0
    %836 = vmatpush1.msra.mxu0 %v613
    %837 = vmatprep.subr.mxu0 0.0
    %838 = vmatpush1.msra.mxu0 %v614
    %839 = vmatprep.subr.mxu0 0.0
    %840 = vmatpush1.msra.mxu0 %v615
    %841 = vmatprep.subr.mxu0 0.0
    %842 = vmatpush1.msra.mxu0 %v616
    %843 = vmatprep.subr.mxu0 0.0
    %844 = vmatpush1.msra.mxu0 %v617
    %845 = vmatprep.subr.mxu0 0.0
    %846 = vmatpush1.msra.mxu0 %v618
    %847 = vmatprep.subr.mxu0 0.0
    %848 = vmatpush1.msra.mxu0 %v619
    %849 = vmatprep.subr.mxu0 0.0
    %850 = vmatpush1.msra.mxu0 %v620
    %851 = vmatprep.subr.mxu0 0.0
    %852 = vmatpush1.msra.mxu0 %v621
    %853 = vmatprep.subr.mxu0 0.0
    %854 = vmatpush1.msra.mxu0 %v622
    %855 = vmatprep.subr.mxu0 0.0
    %856 = vmatpush1.msra.mxu0 %v623
    %857 = vmatprep.subr.mxu0 0.0
    %858 = vmatpush1.msra.mxu0 %v624
    %859 = vmatprep.subr.mxu0 0.0
    %860 = vmatpush1.msra.mxu0 %v625
    %861 = vmatprep.subr.mxu0 0.0
    %862 = vmatpush1.msra.mxu0 %v626
    %863 = vmatprep.subr.mxu0 0.0
    %864 = vmatpush1.msra.mxu0 %v627
    %865 = vmatprep.subr.mxu0 0.0
    %866 = vmatpush1.msra.mxu0 %v628
    %867 = vmatprep.subr.mxu0 0.0
    %868 = vmatpush1.msra.mxu0 %v629
    %869 = vmatprep.subr.mxu0 0.0
    %870 = vmatpush1.msra.mxu0 %v630
    %871 = vmatprep.subr.mxu0 0.0
    %872 = vmatpush1.msra.mxu0 %v631
    %873 = vmatprep.subr.mxu0 0.0
    %874 = vmatpush1.msra.mxu0 %v632
    %875 = vmatprep.subr.mxu0 0.0
    %876 = vmatpush1.msra.mxu0 %v633
    %877 = vmatprep.subr.mxu0 0.0
    %878 = vmatpush1.msra.mxu0 %v634
    %879 = vmatprep.subr.mxu0 0.0
    %880 = vmatpush1.msra.mxu0 %v635
    %881 = vmatprep.subr.mxu0 0.0
    %882 = vmatpush1.msra.mxu0 %v636
    %883 = vmatprep.subr.mxu0 0.0
    %884 = vmatpush1.msra.mxu0 %v637
    %885 = vmatprep.subr.mxu0 0.0
    %886 = vmatpush1.msra.mxu0 %v638
    %887 = vmatprep.subr.mxu0 0.0
    %888 = vmatpush1.msra.mxu0 %v639
    %889 = vmatprep.subr.mxu0 0.0
    %890 = vmatpush1.msra.mxu0 %v640
    %891 = vmatprep.subr.mxu0 0.0
    %892 = vmatpush1.msra.mxu0 %v641
    %893 = vmatprep.subr.mxu0 0.0
    %894 = vmatpush1.msra.mxu0 %v642
    %895 = vmatprep.mubr.f32.mxu0 %v543
    %896 = vmatmul.mubr.f32.gmra.mrb[0].mxu0 %v542
    %v897 = vpop.f32.mrb[0].mxu0
    %v898 = vadd.f32 %v828, %v897
    %v899 = vpop.f32.mrb[0].mxu0
    %900 = vdwg.mxu0
    %901 = vmatprep.subr.mxu0 0.0
    %902 = vmatpush1.msra.mxu0 %v643
    %903 = vmatprep.subr.mxu0 0.0
    %904 = vmatpush1.msra.mxu0 %v644
    %905 = vmatprep.subr.mxu0 0.0
    %906 = vmatpush1.msra.mxu0 %v645
    %907 = vmatprep.subr.mxu0 0.0
    %908 = vmatpush1.msra.mxu0 %v646
    %909 = vmatprep.subr.mxu0 0.0
    %910 = vmatpush1.msra.mxu0 %v647
    %911 = vmatprep.subr.mxu0 0.0
    %912 = vmatpush1.msra.mxu0 %v648
    %913 = vmatprep.subr.mxu0 0.0
    %914 = vmatpush1.msra.mxu0 %v649
    %915 = vmatprep.subr.mxu0 0.0
    %916 = vmatpush1.msra.mxu0 %v650
    %917 = vmatprep.subr.mxu0 0.0
    %918 = vmatpush1.msra.mxu0 %v651
    %919 = vmatprep.subr.mxu0 0.0
    %920 = vmatpush1.msra.mxu0 %v652
    %921 = vmatprep.subr.mxu0 0.0
    %922 = vmatpush1.msra.mxu0 %v653
    %923 = vmatprep.subr.mxu0 0.0
    %924 = vmatpush1.msra.mxu0 %v654
    %925 = vmatprep.subr.mxu0 0.0
    %926 = vmatpush1.msra.mxu0 %v655
    %927 = vmatprep.subr.mxu0 0.0
    %928 = vmatpush1.msra.mxu0 %v656
    %929 = vmatprep.subr.mxu0 0.0
    %930 = vmatpush1.msra.mxu0 %v657
    %931 = vmatprep.subr.mxu0 0.0
    %932 = vmatpush1.msra.mxu0 %v658
    %933 = vmatprep.subr.mxu0 0.0
    %934 = vmatpush1.msra.mxu0 %v659
    %935 = vmatprep.subr.mxu0 0.0
    %936 = vmatpush1.msra.mxu0 %v660
    %937 = vmatprep.subr.mxu0 0.0
    %938 = vmatpush1.msra.mxu0 %v661
    %939 = vmatprep.subr.mxu0 0.0
    %940 = vmatpush1.msra.mxu0 %v662
    %941 = vmatprep.subr.mxu0 0.0
    %942 = vmatpush1.msra.mxu0 %v663
    %943 = vmatprep.subr.mxu0 0.0
    %944 = vmatpush1.msra.mxu0 %v664
    %945 = vmatprep.subr.mxu0 0.0
    %946 = vmatpush1.msra.mxu0 %v665
    %947 = vmatprep.subr.mxu0 0.0
    %948 = vmatpush1.msra.mxu0 %v666
    %949 = vmatprep.subr.mxu0 0.0
    %950 = vmatpush1.msra.mxu0 %v667
    %951 = vmatprep.subr.mxu0 0.0
    %952 = vmatpush1.msra.mxu0 %v668
    %953 = vmatprep.subr.mxu0 0.0
    %954 = vmatpush1.msra.mxu0 %v669
    %955 = vmatprep.subr.mxu0 0.0
    %956 = vmatpush1.msra.mxu0 %v670
    %957 = vmatprep.subr.mxu0 0.0
    %958 = vmatpush1.msra.mxu0 %v671
    %959 = vmatprep.subr.mxu0 0.0
    %960 = vmatpush1.msra.mxu0 %v672
    %961 = vmatprep.subr.mxu0 0.0
    %962 = vmatpush1.msra.mxu0 %v673
    %963 = vmatprep.subr.mxu0 0.0
    %964 = vmatpush1.msra.mxu0 %v674
    %965 = vmatprep.mubr.f32.mxu0 %v545
    %966 = vmatmul.mubr.f32.gmra.mrb[0].mxu0 %v544
    %v967 = vpop.f32.mrb[0].mxu0
    %v968 = vadd.f32 %v898, %v967
    %v969 = vpop.f32.mrb[0].mxu0
    %970 = vdwg.mxu0
    %971 = vmatprep.subr.mxu0 0.0
    %972 = vmatpush1.msra.mxu0 %v675
    %973 = vmatprep.subr.mxu0 0.0
    %974 = vmatpush1.msra.mxu0 %v676
    %975 = vmatprep.subr.mxu0 0.0
    %976 = vmatpush1.msra.mxu0 %v677
    %977 = vmatprep.subr.mxu0 0.0
    %978 = vmatpush1.msra.mxu0 %v678
    %979 = vmatprep.subr.mxu0 0.0
    %980 = vmatpush1.msra.mxu0 %v679
    %981 = vmatprep.subr.mxu0 0.0
    %982 = vmatpush1.msra.mxu0 %v680
    %983 = vmatprep.subr.mxu0 0.0
    %984 = vmatpush1.msra.mxu0 %v681
    %985 = vmatprep.subr.mxu0 0.0
    %986 = vmatpush1.msra.mxu0 %v682
    %987 = vmatprep.subr.mxu0 0.0
    %988 = vmatpush1.msra.mxu0 %v683
    %989 = vmatprep.subr.mxu0 0.0
    %990 = vmatpush1.msra.mxu0 %v684
    %991 = vmatprep.subr.mxu0 0.0
    %992 = vmatpush1.msra.mxu0 %v685
    %993 = vmatprep.subr.mxu0 0.0
    %994 = vmatpush1.msra.mxu0 %v686
    %995 = vmatprep.subr.mxu0 0.0
    %996 = vmatpush1.msra.mxu0 %v687
    %997 = vmatprep.subr.mxu0 0.0
    %998 = vmatpush1.msra.mxu0 %v688
    %999 = vmatprep.subr.mxu0 0.0
    %1000 = vmatpush1.msra.mxu0 %v689
    %1001 = vmatprep.subr.mxu0 0.0
    %1002 = vmatpush1.msra.mxu0 %v690
    %1003 = vmatprep.subr.mxu0 0.0
    %1004 = vmatpush1.msra.mxu0 0.0
    %1005 = vmatprep.subr.mxu0 0.0
    %1006 = vmatpush1.msra.mxu0 0.0
    %1007 = vmatprep.subr.mxu0 0.0
    %1008 = vmatpush1.msra.mxu0 0.0
    %1009 = vmatprep.subr.mxu0 0.0
    %1010 = vmatpush1.msra.mxu0 0.0
    %1011 = vmatprep.subr.mxu0 0.0
    %1012 = vmatpush1.msra.mxu0 0.0
    %1013 = vmatprep.subr.mxu0 0.0
    %1014 = vmatpush1.msra.mxu0 0.0
    %1015 = vmatprep.subr.mxu0 0.0
    %1016 = vmatpush1.msra.mxu0 0.0
    %1017 = vmatprep.subr.mxu0 0.0
    %1018 = vmatpush1.msra.mxu0 0.0
    %1019 = vmatprep.subr.mxu0 0.0
    %1020 = vmatpush1.msra.mxu0 0.0
    %1021 = vmatprep.subr.mxu0 0.0
    %1022 = vmatpush1.msra.mxu0 0.0
    %1023 = vmatprep.subr.mxu0 0.0
    %1024 = vmatpush1.msra.mxu0 0.0
    %1025 = vmatprep.subr.mxu0 0.0
    %1026 = vmatpush1.msra.mxu0 0.0
    %1027 = vmatprep.subr.mxu0 0.0
    %1028 = vmatpush1.msra.mxu0 0.0
    %1029 = vmatprep.subr.mxu0 0.0
    %1030 = vmatpush1.msra.mxu0 0.0
    %1031 = vmatprep.subr.mxu0 0.0
    %1032 = vmatpush1.msra.mxu0 0.0
    %1033 = vmatprep.subr.mxu0 0.0
    %1034 = vmatpush1.msra.mxu0 0.0
    %1035 = vmatprep.mubr.f32.mxu0 0.0
    %1036 = vmatmul.mubr.f32.gmra.mrb[0].mxu0 %v546
    %v1037 = vpop.f32.mrb[0].mxu0
    %v1038 = vadd.f32 %v968, %v1037
    %v1039 = vpop.f32.mrb[0].mxu0
    %1040 = vdwg.mxu0
    %1042 = vrot.lane.b32.xlu0 %v1038, 64
    %v1043 = vpop.permute.xlu0 %1042
    %vm1045 = vcmask 785920
    %1046 = vst.msk [vmem:[#allocation2] sm:$0xff] %vm1045, %v1043
    %v1047 = vld [vmem:[#allocation2] sm:$0xff]
    %v1048 = vld [vmem:[#allocation2 + $0x8] sm:$0xff]
    %s1049 = scalar_lea.vmem %s4, 1
    %v1050 = vld [vmem:[%s1049] ss:$8 sm:$0x3]
    %v1052 = vlaneseq
    %v1053 = vshrl.u32 %v1052, 7
    %v1054 = vsub.s32 0, %v1053
    %v1055 = vrot.slane %v1050, %v1054
    %v1056 = vlaneseq
    %v1057 = vshrl.u32 %v1056, 7
    %v1058 = vsub.s32 1, %v1057
    %v1059 = vrot.slane %v1050, %v1058
    %v1062 = vmul.f32 %v1047, %v1055
    %v1063 = vmul.f32 %v1048, %v1059
    %s1064 = scalar_lea.vmem %s5, 1
    %v1065 = vld [vmem:[%s1064] ss:$8 sm:$0x3]
    %v1067 = vlaneseq
    %v1068 = vshrl.u32 %v1067, 7
    %v1069 = vsub.s32 0, %v1068
    %v1070 = vrot.slane %v1065, %v1069
    %v1071 = vlaneseq
    %v1072 = vshrl.u32 %v1071, 7
    %v1073 = vsub.s32 1, %v1072
    %v1074 = vrot.slane %v1065, %v1073
    %v1077 = vadd.f32 %v1062, %v1070
    %v1078 = vadd.f32 %v1063, %v1074
    %v1079 = vmax.f32 %v1077, 0.0
    %v1080 = vmax.f32 %v1078, 0.0
    %s1081 = scalar_lea.vmem %s6, 256
    %v1082 = vld [vmem:[%s1081] sm:$0xff]
    %v1083 = vld [vmem:[%s1081 + $0x8] sm:$0xff]
    %v1084 = vld [vmem:[%s1081 + $0x10] sm:$0xff]
    %v1085 = vld [vmem:[%s1081 + $0x18] sm:$0xff]
    %v1086 = vld [vmem:[%s1081 + $0x20] sm:$0xff]
    %v1087 = vld [vmem:[%s1081 + $0x28] sm:$0xff]
    %v1088 = vld [vmem:[%s1081 + $0x30] sm:$0xff]
    %v1089 = vld [vmem:[%s1081 + $0x38] sm:$0xff]
    %v1090 = vld [vmem:[%s1081 + $0x40] sm:$0xff]
    %v1091 = vld [vmem:[%s1081 + $0x48] sm:$0xff]
    %v1092 = vld [vmem:[%s1081 + $0x50] sm:$0xff]
    %v1093 = vld [vmem:[%s1081 + $0x58] sm:$0xff]
    %v1094 = vld [vmem:[%s1081 + $0x60] sm:$0xff]
    %v1095 = vld [vmem:[%s1081 + $0x68] sm:$0xff]
    %v1096 = vld [vmem:[%s1081 + $0x70] sm:$0xff]
    %v1097 = vld [vmem:[%s1081 + $0x78] sm:$0xff]
    %v1098 = vld [vmem:[%s1081 + $0x80] sm:$0xff]
    %v1099 = vld [vmem:[%s1081 + $0x88] sm:$0xff]
    %v1100 = vld [vmem:[%s1081 + $0x90] sm:$0xff]
    %v1101 = vld [vmem:[%s1081 + $0x98] sm:$0xff]
    %v1102 = vld [vmem:[%s1081 + $0xa0] sm:$0xff]
    %v1103 = vld [vmem:[%s1081 + $0xa8] sm:$0xff]
    %v1104 = vld [vmem:[%s1081 + $0xb0] sm:$0xff]
    %v1105 = vld [vmem:[%s1081 + $0xb8] sm:$0xff]
    %v1106 = vld [vmem:[%s1081 + $0xc0] sm:$0xff]
    %v1107 = vld [vmem:[%s1081 + $0xc8] sm:$0xff]
    %v1108 = vld [vmem:[%s1081 + $0xd0] sm:$0xff]
    %v1109 = vld [vmem:[%s1081 + $0xd8] sm:$0xff]
    %v1110 = vld [vmem:[%s1081 + $0xe0] sm:$0xff]
    %v1111 = vld [vmem:[%s1081 + $0xe8] sm:$0xff]
    %v1112 = vld [vmem:[%s1081 + $0xf0] sm:$0xff]
    %v1113 = vld [vmem:[%s1081 + $0xf8] sm:$0xff]
    %1114 = vmatprep.subr.mxu0 0.0
    %1115 = vmatpush1.msra.mxu0 %v1082
    %1116 = vmatprep.subr.mxu0 0.0
    %1117 = vmatpush1.msra.mxu0 %v1083
    %1118 = vmatprep.subr.mxu0 0.0
    %1119 = vmatpush1.msra.mxu0 %v1084
    %1120 = vmatprep.subr.mxu0 0.0
    %1121 = vmatpush1.msra.mxu0 %v1085
    %1122 = vmatprep.subr.mxu0 0.0
    %1123 = vmatpush1.msra.mxu0 %v1086
    %1124 = vmatprep.subr.mxu0 0.0
    %1125 = vmatpush1.msra.mxu0 %v1087
    %1126 = vmatprep.subr.mxu0 0.0
    %1127 = vmatpush1.msra.mxu0 %v1088
    %1128 = vmatprep.subr.mxu0 0.0
    %1129 = vmatpush1.msra.mxu0 %v1089
    %1130 = vmatprep.subr.mxu0 0.0
    %1131 = vmatpush1.msra.mxu0 %v1090
    %1132 = vmatprep.subr.mxu0 0.0
    %1133 = vmatpush1.msra.mxu0 %v1091
    %1134 = vmatprep.subr.mxu0 0.0
    %1135 = vmatpush1.msra.mxu0 %v1092
    %1136 = vmatprep.subr.mxu0 0.0
    %1137 = vmatpush1.msra.mxu0 %v1093
    %1138 = vmatprep.subr.mxu0 0.0
    %1139 = vmatpush1.msra.mxu0 %v1094
    %1140 = vmatprep.subr.mxu0 0.0
    %1141 = vmatpush1.msra.mxu0 %v1095
    %1142 = vmatprep.subr.mxu0 0.0
    %1143 = vmatpush1.msra.mxu0 %v1096
    %1144 = vmatprep.subr.mxu0 0.0
    %1145 = vmatpush1.msra.mxu0 %v1097
    %1146 = vmatprep.subr.mxu0 0.0
    %1147 = vmatpush1.msra.mxu0 %v1098
    %1148 = vmatprep.subr.mxu0 0.0
    %1149 = vmatpush1.msra.mxu0 %v1099
    %1150 = vmatprep.subr.mxu0 0.0
    %1151 = vmatpush1.msra.mxu0 %v1100
    %1152 = vmatprep.subr.mxu0 0.0
    %1153 = vmatpush1.msra.mxu0 %v1101
    %1154 = vmatprep.subr.mxu0 0.0
    %1155 = vmatpush1.msra.mxu0 %v1102
    %1156 = vmatprep.subr.mxu0 0.0
    %1157 = vmatpush1.msra.mxu0 %v1103
    %1158 = vmatprep.subr.mxu0 0.0
    %1159 = vmatpush1.msra.mxu0 %v1104
    %1160 = vmatprep.subr.mxu0 0.0
    %1161 = vmatpush1.msra.mxu0 %v1105
    %1162 = vmatprep.subr.mxu0 0.0
    %1163 = vmatpush1.msra.mxu0 %v1106
    %1164 = vmatprep.subr.mxu0 0.0
    %1165 = vmatpush1.msra.mxu0 %v1107
    %1166 = vmatprep.subr.mxu0 0.0
    %1167 = vmatpush1.msra.mxu0 %v1108
    %1168 = vmatprep.subr.mxu0 0.0
    %1169 = vmatpush1.msra.mxu0 %v1109
    %1170 = vmatprep.subr.mxu0 0.0
    %1171 = vmatpush1.msra.mxu0 %v1110
    %1172 = vmatprep.subr.mxu0 0.0
    %1173 = vmatpush1.msra.mxu0 %v1111
    %1174 = vmatprep.subr.mxu0 0.0
    %1175 = vmatpush1.msra.mxu0 %v1112
    %1176 = vmatprep.subr.mxu0 0.0
    %1177 = vmatpush1.msra.mxu0 %v1113
    %1178 = vmatprep.mubr.f32.mxu0 %v1080
    %1179 = vmatmul.mubr.f32.gmra.mrb[0].mxu0 %v1079
    %v1180 = vpop.f32.mrb[0].mxu0
    %v1181 = vadd.f32 0.0, %v1180
    %v1182 = vpop.f32.mrb[0].mxu0
    %1183 = vdwg.mxu0
    %v1184 = vld [vmem:[%s7 + $0x1] sm:$0x1]
    %v1185 = vlaneseq
    %v1186 = vshrl.u32 %v1185, 7
    %v1187 = vsub.s32 0, %v1186
    %v1188 = vrot.slane %v1184, %v1187
    %v1189 = vmul.f32 %v1181, %v1188
    %v1190 = vld [vmem:[%s8 + $0x1] sm:$0x1]
    %v1191 = vlaneseq
    %v1192 = vshrl.u32 %v1191, 7
    %v1193 = vsub.s32 0, %v1192
    %v1194 = vrot.slane %v1190, %v1193
    %v1195 = vadd.f32 %v1189, %v1194
    %v1196 = vmax.f32 %v1195, 0.0
    %v1198 = vrot.slane %v1196, 2
    %v1200 = vrot.slane %v1196, 4
    %v1202 = vrot.slane %v1196, 6
    %v1204 = vrot.slane %v1198, 6
    %v1205 = vrot.slane %v1200, 6
    %v1206 = vrot.slane %v1202, 6
    %v1210 = vrot.slane %v1198, 4
    %v1211 = vrot.slane %v1200, 4
    %v1212 = vrot.slane %v1202, 4
    %v1216 = vrot.slane %v1198, 2
    %v1217 = vrot.slane %v1200, 2
    %v1218 = vrot.slane %v1202, 2
    %v1222 = vsel %vm328, 0.0, %v1202
    %v1223 = vsel %vm328, %v1196, %v1204
    %v1224 = vsel %vm328, %v1198, %v498
    %v1225 = vsel %vm328, 0.0, %v1205
    %v1226 = vsel %vm328, %v1200, %v1206
    %v1227 = vsel %vm328, %v1202, %v498
    %v1228 = vsel %vm331, %v522, %v1200
    %v1229 = vsel %vm331, %v522, %v1210
    %v1230 = vsel %vm331, %v1222, %v506
    %v1231 = vsel %vm331, %v1223, %v1211
    %v1232 = vsel %vm331, %v1224, %v1212
    %v1233 = vsel %vm331, %v1225, %v506
    %v1234 = vsel %vm331, %v1226, %v506
    %v1235 = vsel %vm331, %v1227, %v506
    %v1236 = vsel %vm335, %v529, %v1198
    %v1237 = vsel %vm335, %v1228, %v1216
    %v1238 = vsel %vm335, %v1229, %v515
    %v1239 = vsel %vm335, %v1230, %v1217
    %v1240 = vsel %vm335, %v1231, %v1218
    %v1241 = vsel %vm335, %v1232, %v515
    %v1242 = vsel %vm335, %v1233, %v515
    %v1243 = vsel %vm335, %v1234, %v515
    %v1244 = vsel %vm335, %v1235, %v515
    %s1245 = scalar_lea.vmem %s9, 1152
    %v1246 = vld [vmem:[%s1245] sm:$0xff]
    %v1247 = vld [vmem:[%s1245 + $0x8] sm:$0xff]
    %v1248 = vld [vmem:[%s1245 + $0x10] sm:$0xff]
    %v1249 = vld [vmem:[%s1245 + $0x18] sm:$0xff]
    %v1250 = vld [vmem:[%s1245 + $0x20] sm:$0xff]
    %v1251 = vld [vmem:[%s1245 + $0x28] sm:$0xff]
    %v1252 = vld [vmem:[%s1245 + $0x30] sm:$0xff]
    %v1253 = vld [vmem:[%s1245 + $0x38] sm:$0xff]
    %v1254 = vld [vmem:[%s1245 + $0x40] sm:$0xff]
    %v1255 = vld [vmem:[%s1245 + $0x48] sm:$0xff]
    %v1256 = vld [vmem:[%s1245 + $0x50] sm:$0xff]
    %v1257 = vld [vmem:[%s1245 + $0x58] sm:$0xff]
    %v1258 = vld [vmem:[%s1245 + $0x60] sm:$0xff]
    %v1259 = vld [vmem:[%s1245 + $0x68] sm:$0xff]
    %v1260 = vld [vmem:[%s1245 + $0x70] sm:$0xff]
    %v1261 = vld [vmem:[%s1245 + $0x78] sm:$0xff]
    %v1262 = vld [vmem:[%s1245 + $0x80] sm:$0xff]
    %v1263 = vld [vmem:[%s1245 + $0x88] sm:$0xff]
    %v1264 = vld [vmem:[%s1245 + $0x90] sm:$0xff]
    %v1265 = vld [vmem:[%s1245 + $0x98] sm:$0xff]
    %v1266 = vld [vmem:[%s1245 + $0xa0] sm:$0xff]
    %v1267 = vld [vmem:[%s1245 + $0xa8] sm:$0xff]
    %v1268 = vld [vmem:[%s1245 + $0xb0] sm:$0xff]
    %v1269 = vld [vmem:[%s1245 + $0xb8] sm:$0xff]
    %v1270 = vld [vmem:[%s1245 + $0xc0] sm:$0xff]
    %v1271 = vld [vmem:[%s1245 + $0xc8] sm:$0xff]
    %v1272 = vld [vmem:[%s1245 + $0xd0] sm:$0xff]
    %v1273 = vld [vmem:[%s1245 + $0xd8] sm:$0xff]
    %v1274 = vld [vmem:[%s1245 + $0xe0] sm:$0xff]
    %v1275 = vld [vmem:[%s1245 + $0xe8] sm:$0xff]
    %v1276 = vld [vmem:[%s1245 + $0xf0] sm:$0xff]
    %v1277 = vld [vmem:[%s1245 + $0xf8] sm:$0xff]
    %v1278 = vld [vmem:[%s1245 + $0x100] sm:$0xff]
    %v1279 = vld [vmem:[%s1245 + $0x108] sm:$0xff]
    %v1280 = vld [vmem:[%s1245 + $0x110] sm:$0xff]
    %v1281 = vld [vmem:[%s1245 + $0x118] sm:$0xff]
    %v1282 = vld [vmem:[%s1245 + $0x120] sm:$0xff]
    %v1283 = vld [vmem:[%s1245 + $0x128] sm:$0xff]
    %v1284 = vld [vmem:[%s1245 + $0x130] sm:$0xff]
    %v1285 = vld [vmem:[%s1245 + $0x138] sm:$0xff]
    %v1286 = vld [vmem:[%s1245 + $0x140] sm:$0xff]
    %v1287 = vld [vmem:[%s1245 + $0x148] sm:$0xff]
    %v1288 = vld [vmem:[%s1245 + $0x150] sm:$0xff]
    %v1289 = vld [vmem:[%s1245 + $0x158] sm:$0xff]
    %v1290 = vld [vmem:[%s1245 + $0x160] sm:$0xff]
    %v1291 = vld [vmem:[%s1245 + $0x168] sm:$0xff]
    %v1292 = vld [vmem:[%s1245 + $0x170] sm:$0xff]
    %v1293 = vld [vmem:[%s1245 + $0x178] sm:$0xff]
    %v1294 = vld [vmem:[%s1245 + $0x180] sm:$0xff]
    %v1295 = vld [vmem:[%s1245 + $0x188] sm:$0xff]
    %v1296 = vld [vmem:[%s1245 + $0x190] sm:$0xff]
    %v1297 = vld [vmem:[%s1245 + $0x198] sm:$0xff]
    %v1298 = vld [vmem:[%s1245 + $0x1a0] sm:$0xff]
    %v1299 = vld [vmem:[%s1245 + $0x1a8] sm:$0xff]
    %v1300 = vld [vmem:[%s1245 + $0x1b0] sm:$0xff]
    %v1301 = vld [vmem:[%s1245 + $0x1b8] sm:$0xff]
    %v1302 = vld [vmem:[%s1245 + $0x1c0] sm:$0xff]
    %v1303 = vld [vmem:[%s1245 + $0x1c8] sm:$0xff]
    %v1304 = vld [vmem:[%s1245 + $0x1d0] sm:$0xff]
    %v1305 = vld [vmem:[%s1245 + $0x1d8] sm:$0xff]
    %v1306 = vld [vmem:[%s1245 + $0x1e0] sm:$0xff]
    %v1307 = vld [vmem:[%s1245 + $0x1e8] sm:$0xff]
    %v1308 = vld [vmem:[%s1245 + $0x1f0] sm:$0xff]
    %v1309 = vld [vmem:[%s1245 + $0x1f8] sm:$0xff]
    %v1310 = vld [vmem:[%s1245 + $0x200] sm:$0xff]
    %v1311 = vld [vmem:[%s1245 + $0x208] sm:$0xff]
    %v1312 = vld [vmem:[%s1245 + $0x210] sm:$0xff]
    %v1313 = vld [vmem:[%s1245 + $0x218] sm:$0xff]
    %v1314 = vld [vmem:[%s1245 + $0x220] sm:$0xff]
    %v1315 = vld [vmem:[%s1245 + $0x228] sm:$0xff]
    %v1316 = vld [vmem:[%s1245 + $0x230] sm:$0xff]
    %v1317 = vld [vmem:[%s1245 + $0x238] sm:$0xff]
    %v1318 = vld [vmem:[%s1245 + $0x240] sm:$0xff]
    %v1319 = vld [vmem:[%s1245 + $0x248] sm:$0xff]
    %v1320 = vld [vmem:[%s1245 + $0x250] sm:$0xff]
    %v1321 = vld [vmem:[%s1245 + $0x258] sm:$0xff]
    %v1322 = vld [vmem:[%s1245 + $0x260] sm:$0xff]
    %v1323 = vld [vmem:[%s1245 + $0x268] sm:$0xff]
    %v1324 = vld [vmem:[%s1245 + $0x270] sm:$0xff]
    %v1325 = vld [vmem:[%s1245 + $0x278] sm:$0xff]
    %v1326 = vld [vmem:[%s1245 + $0x280] sm:$0xff]
    %v1327 = vld [vmem:[%s1245 + $0x288] sm:$0xff]
    %v1328 = vld [vmem:[%s1245 + $0x290] sm:$0xff]
    %v1329 = vld [vmem:[%s1245 + $0x298] sm:$0xff]
    %v1330 = vld [vmem:[%s1245 + $0x2a0] sm:$0xff]
    %v1331 = vld [vmem:[%s1245 + $0x2a8] sm:$0xff]
    %v1332 = vld [vmem:[%s1245 + $0x2b0] sm:$0xff]
    %v1333 = vld [vmem:[%s1245 + $0x2b8] sm:$0xff]
    %v1334 = vld [vmem:[%s1245 + $0x2c0] sm:$0xff]
    %v1335 = vld [vmem:[%s1245 + $0x2c8] sm:$0xff]
    %v1336 = vld [vmem:[%s1245 + $0x2d0] sm:$0xff]
    %v1337 = vld [vmem:[%s1245 + $0x2d8] sm:$0xff]
    %v1338 = vld [vmem:[%s1245 + $0x2e0] sm:$0xff]
    %v1339 = vld [vmem:[%s1245 + $0x2e8] sm:$0xff]
    %v1340 = vld [vmem:[%s1245 + $0x2f0] sm:$0xff]
    %v1341 = vld [vmem:[%s1245 + $0x2f8] sm:$0xff]
    %v1342 = vld [vmem:[%s1245 + $0x300] sm:$0xff]
    %v1343 = vld [vmem:[%s1245 + $0x308] sm:$0xff]
    %v1344 = vld [vmem:[%s1245 + $0x310] sm:$0xff]
    %v1345 = vld [vmem:[%s1245 + $0x318] sm:$0xff]
    %v1346 = vld [vmem:[%s1245 + $0x320] sm:$0xff]
    %v1347 = vld [vmem:[%s1245 + $0x328] sm:$0xff]
    %v1348 = vld [vmem:[%s1245 + $0x330] sm:$0xff]
    %v1349 = vld [vmem:[%s1245 + $0x338] sm:$0xff]
    %v1350 = vld [vmem:[%s1245 + $0x340] sm:$0xff]
    %v1351 = vld [vmem:[%s1245 + $0x348] sm:$0xff]
    %v1352 = vld [vmem:[%s1245 + $0x350] sm:$0xff]
    %v1353 = vld [vmem:[%s1245 + $0x358] sm:$0xff]
    %v1354 = vld [vmem:[%s1245 + $0x360] sm:$0xff]
    %v1355 = vld [vmem:[%s1245 + $0x368] sm:$0xff]
    %v1356 = vld [vmem:[%s1245 + $0x370] sm:$0xff]
    %v1357 = vld [vmem:[%s1245 + $0x378] sm:$0xff]
    %v1358 = vld [vmem:[%s1245 + $0x380] sm:$0xff]
    %v1359 = vld [vmem:[%s1245 + $0x388] sm:$0xff]
    %v1360 = vld [vmem:[%s1245 + $0x390] sm:$0xff]
    %v1361 = vld [vmem:[%s1245 + $0x398] sm:$0xff]
    %v1362 = vld [vmem:[%s1245 + $0x3a0] sm:$0xff]
    %v1363 = vld [vmem:[%s1245 + $0x3a8] sm:$0xff]
    %v1364 = vld [vmem:[%s1245 + $0x3b0] sm:$0xff]
    %v1365 = vld [vmem:[%s1245 + $0x3b8] sm:$0xff]
    %v1366 = vld [vmem:[%s1245 + $0x3c0] sm:$0xff]
    %v1367 = vld [vmem:[%s1245 + $0x3c8] sm:$0xff]
    %v1368 = vld [vmem:[%s1245 + $0x3d0] sm:$0xff]
    %v1369 = vld [vmem:[%s1245 + $0x3d8] sm:$0xff]
    %v1370 = vld [vmem:[%s1245 + $0x3e0] sm:$0xff]
    %v1371 = vld [vmem:[%s1245 + $0x3e8] sm:$0xff]
    %v1372 = vld [vmem:[%s1245 + $0x3f0] sm:$0xff]
    %v1373 = vld [vmem:[%s1245 + $0x3f8] sm:$0xff]
    %v1374 = vld [vmem:[%s1245 + $0x400] sm:$0xff]
    %v1375 = vld [vmem:[%s1245 + $0x408] sm:$0xff]
    %v1376 = vld [vmem:[%s1245 + $0x410] sm:$0xff]
    %v1377 = vld [vmem:[%s1245 + $0x418] sm:$0xff]
    %v1378 = vld [vmem:[%s1245 + $0x420] sm:$0xff]
    %v1379 = vld [vmem:[%s1245 + $0x428] sm:$0xff]
    %v1380 = vld [vmem:[%s1245 + $0x430] sm:$0xff]
    %v1381 = vld [vmem:[%s1245 + $0x438] sm:$0xff]
    %v1382 = vld [vmem:[%s1245 + $0x440] sm:$0xff]
    %v1383 = vld [vmem:[%s1245 + $0x448] sm:$0xff]
    %v1384 = vld [vmem:[%s1245 + $0x450] sm:$0xff]
    %v1385 = vld [vmem:[%s1245 + $0x458] sm:$0xff]
    %v1386 = vld [vmem:[%s1245 + $0x460] sm:$0xff]
    %v1387 = vld [vmem:[%s1245 + $0x468] sm:$0xff]
    %v1388 = vld [vmem:[%s1245 + $0x470] sm:$0xff]
    %v1389 = vld [vmem:[%s1245 + $0x478] sm:$0xff]
    %1390 = vmatprep.subr.mxu0 0.0
    %1391 = vmatpush1.msra.mxu0 %v1246
    %1392 = vmatprep.subr.mxu0 0.0
    %1393 = vmatpush1.msra.mxu0 %v1247
    %1394 = vmatprep.subr.mxu0 0.0
    %1395 = vmatpush1.msra.mxu0 %v1248
    %1396 = vmatprep.subr.mxu0 0.0
    %1397 = vmatpush1.msra.mxu0 %v1249
    %1398 = vmatprep.subr.mxu0 0.0
    %1399 = vmatpush1.msra.mxu0 %v1250
    %1400 = vmatprep.subr.mxu0 0.0
    %1401 = vmatpush1.msra.mxu0 %v1251
    %1402 = vmatprep.subr.mxu0 0.0
    %1403 = vmatpush1.msra.mxu0 %v1252
    %1404 = vmatprep.subr.mxu0 0.0
    %1405 = vmatpush1.msra.mxu0 %v1253
    %1406 = vmatprep.subr.mxu0 0.0
    %1407 = vmatpush1.msra.mxu0 %v1254
    %1408 = vmatprep.subr.mxu0 0.0
    %1409 = vmatpush1.msra.mxu0 %v1255
    %1410 = vmatprep.subr.mxu0 0.0
    %1411 = vmatpush1.msra.mxu0 %v1256
    %1412 = vmatprep.subr.mxu0 0.0
    %1413 = vmatpush1.msra.mxu0 %v1257
    %1414 = vmatprep.subr.mxu0 0.0
    %1415 = vmatpush1.msra.mxu0 %v1258
    %1416 = vmatprep.subr.mxu0 0.0
    %1417 = vmatpush1.msra.mxu0 %v1259
    %1418 = vmatprep.subr.mxu0 0.0
    %1419 = vmatpush1.msra.mxu0 %v1260
    %1420 = vmatprep.subr.mxu0 0.0
    %1421 = vmatpush1.msra.mxu0 %v1261
    %1422 = vmatprep.subr.mxu0 0.0
    %1423 = vmatpush1.msra.mxu0 %v1262
    %1424 = vmatprep.subr.mxu0 0.0
    %1425 = vmatpush1.msra.mxu0 %v1263
    %1426 = vmatprep.subr.mxu0 0.0
    %1427 = vmatpush1.msra.mxu0 %v1264
    %1428 = vmatprep.subr.mxu0 0.0
    %1429 = vmatpush1.msra.mxu0 %v1265
    %1430 = vmatprep.subr.mxu0 0.0
    %1431 = vmatpush1.msra.mxu0 %v1266
    %1432 = vmatprep.subr.mxu0 0.0
    %1433 = vmatpush1.msra.mxu0 %v1267
    %1434 = vmatprep.subr.mxu0 0.0
    %1435 = vmatpush1.msra.mxu0 %v1268
    %1436 = vmatprep.subr.mxu0 0.0
    %1437 = vmatpush1.msra.mxu0 %v1269
    %1438 = vmatprep.subr.mxu0 0.0
    %1439 = vmatpush1.msra.mxu0 %v1270
    %1440 = vmatprep.subr.mxu0 0.0
    %1441 = vmatpush1.msra.mxu0 %v1271
    %1442 = vmatprep.subr.mxu0 0.0
    %1443 = vmatpush1.msra.mxu0 %v1272
    %1444 = vmatprep.subr.mxu0 0.0
    %1445 = vmatpush1.msra.mxu0 %v1273
    %1446 = vmatprep.subr.mxu0 0.0
    %1447 = vmatpush1.msra.mxu0 %v1274
    %1448 = vmatprep.subr.mxu0 0.0
    %1449 = vmatpush1.msra.mxu0 %v1275
    %1450 = vmatprep.subr.mxu0 0.0
    %1451 = vmatpush1.msra.mxu0 %v1276
    %1452 = vmatprep.subr.mxu0 0.0
    %1453 = vmatpush1.msra.mxu0 %v1277
    %1454 = vmatprep.mubr.f32.mxu0 %v1237
    %1455 = vmatmul.mubr.f32.gmra.mrb[0].mxu0 %v1236
    %v1456 = vpop.f32.mrb[0].mxu0
    %v1457 = vadd.f32 0.0, %v1456
    %v1458 = vpop.f32.mrb[0].mxu0
    %1459 = vdwg.mxu0
    %1460 = vmatprep.subr.mxu0 0.0
    %1461 = vmatpush1.msra.mxu0 %v1278
    %1462 = vmatprep.subr.mxu0 0.0
    %1463 = vmatpush1.msra.mxu0 %v1279
    %1464 = vmatprep.subr.mxu0 0.0
    %1465 = vmatpush1.msra.mxu0 %v1280
    %1466 = vmatprep.subr.mxu0 0.0
    %1467 = vmatpush1.msra.mxu0 %v1281
    %1468 = vmatprep.subr.mxu0 0.0
    %1469 = vmatpush1.msra.mxu0 %v1282
    %1470 = vmatprep.subr.mxu0 0.0
    %1471 = vmatpush1.msra.mxu0 %v1283
    %1472 = vmatprep.subr.mxu0 0.0
    %1473 = vmatpush1.msra.mxu0 %v1284
    %1474 = vmatprep.subr.mxu0 0.0
    %1475 = vmatpush1.msra.mxu0 %v1285
    %1476 = vmatprep.subr.mxu0 0.0
    %1477 = vmatpush1.msra.mxu0 %v1286
    %1478 = vmatprep.subr.mxu0 0.0
    %1479 = vmatpush1.msra.mxu0 %v1287
    %1480 = vmatprep.subr.mxu0 0.0
    %1481 = vmatpush1.msra.mxu0 %v1288
    %1482 = vmatprep.subr.mxu0 0.0
    %1483 = vmatpush1.msra.mxu0 %v1289
    %1484 = vmatprep.subr.mxu0 0.0
    %1485 = vmatpush1.msra.mxu0 %v1290
    %1486 = vmatprep.subr.mxu0 0.0
    %1487 = vmatpush1.msra.mxu0 %v1291
    %1488 = vmatprep.subr.mxu0 0.0
    %1489 = vmatpush1.msra.mxu0 %v1292
    %1490 = vmatprep.subr.mxu0 0.0
    %1491 = vmatpush1.msra.mxu0 %v1293
    %1492 = vmatprep.subr.mxu0 0.0
    %1493 = vmatpush1.msra.mxu0 %v1294
    %1494 = vmatprep.subr.mxu0 0.0
    %1495 = vmatpush1.msra.mxu0 %v1295
    %1496 = vmatprep.subr.mxu0 0.0
    %1497 = vmatpush1.msra.mxu0 %v1296
    %1498 = vmatprep.subr.mxu0 0.0
    %1499 = vmatpush1.msra.mxu0 %v1297
    %1500 = vmatprep.subr.mxu0 0.0
    %1501 = vmatpush1.msra.mxu0 %v1298
    %1502 = vmatprep.subr.mxu0 0.0
    %1503 = vmatpush1.msra.mxu0 %v1299
    %1504 = vmatprep.subr.mxu0 0.0
    %1505 = vmatpush1.msra.mxu0 %v1300
    %1506 = vmatprep.subr.mxu0 0.0
    %1507 = vmatpush1.msra.mxu0 %v1301
    %1508 = vmatprep.subr.mxu0 0.0
    %1509 = vmatpush1.msra.mxu0 %v1302
    %1510 = vmatprep.subr.mxu0 0.0
    %1511 = vmatpush1.msra.mxu0 %v1303
    %1512 = vmatprep.subr.mxu0 0.0
    %1513 = vmatpush1.msra.mxu0 %v1304
    %1514 = vmatprep.subr.mxu0 0.0
    %1515 = vmatpush1.msra.mxu0 %v1305
    %1516 = vmatprep.subr.mxu0 0.0
    %1517 = vmatpush1.msra.mxu0 %v1306
    %1518 = vmatprep.subr.mxu0 0.0
    %1519 = vmatpush1.msra.mxu0 %v1307
    %1520 = vmatprep.subr.mxu0 0.0
    %1521 = vmatpush1.msra.mxu0 %v1308
    %1522 = vmatprep.subr.mxu0 0.0
    %1523 = vmatpush1.msra.mxu0 %v1309
    %1524 = vmatprep.mubr.f32.mxu0 %v1239
    %1525 = vmatmul.mubr.f32.gmra.mrb[0].mxu0 %v1238
    %v1526 = vpop.f32.mrb[0].mxu0
    %v1527 = vadd.f32 %v1457, %v1526
    %v1528 = vpop.f32.mrb[0].mxu0
    %1529 = vdwg.mxu0
    %1530 = vmatprep.subr.mxu0 0.0
    %1531 = vmatpush1.msra.mxu0 %v1310
    %1532 = vmatprep.subr.mxu0 0.0
    %1533 = vmatpush1.msra.mxu0 %v1311
    %1534 = vmatprep.subr.mxu0 0.0
    %1535 = vmatpush1.msra.mxu0 %v1312
    %1536 = vmatprep.subr.mxu0 0.0
    %1537 = vmatpush1.msra.mxu0 %v1313
    %1538 = vmatprep.subr.mxu0 0.0
    %1539 = vmatpush1.msra.mxu0 %v1314
    %1540 = vmatprep.subr.mxu0 0.0
    %1541 = vmatpush1.msra.mxu0 %v1315
    %1542 = vmatprep.subr.mxu0 0.0
    %1543 = vmatpush1.msra.mxu0 %v1316
    %1544 = vmatprep.subr.mxu0 0.0
    %1545 = vmatpush1.msra.mxu0 %v1317
    %1546 = vmatprep.subr.mxu0 0.0
    %1547 = vmatpush1.msra.mxu0 %v1318
    %1548 = vmatprep.subr.mxu0 0.0
    %1549 = vmatpush1.msra.mxu0 %v1319
    %1550 = vmatprep.subr.mxu0 0.0
    %1551 = vmatpush1.msra.mxu0 %v1320
    %1552 = vmatprep.subr.mxu0 0.0
    %1553 = vmatpush1.msra.mxu0 %v1321
    %1554 = vmatprep.subr.mxu0 0.0
    %1555 = vmatpush1.msra.mxu0 %v1322
    %1556 = vmatprep.subr.mxu0 0.0
    %1557 = vmatpush1.msra.mxu0 %v1323
    %1558 = vmatprep.subr.mxu0 0.0
    %1559 = vmatpush1.msra.mxu0 %v1324
    %1560 = vmatprep.subr.mxu0 0.0
    %1561 = vmatpush1.msra.mxu0 %v1325
    %1562 = vmatprep.subr.mxu0 0.0
    %1563 = vmatpush1.msra.mxu0 %v1326
    %1564 = vmatprep.subr.mxu0 0.0
    %1565 = vmatpush1.msra.mxu0 %v1327
    %1566 = vmatprep.subr.mxu0 0.0
    %1567 = vmatpush1.msra.mxu0 %v1328
    %1568 = vmatprep.subr.mxu0 0.0
    %1569 = vmatpush1.msra.mxu0 %v1329
    %1570 = vmatprep.subr.mxu0 0.0
    %1571 = vmatpush1.msra.mxu0 %v1330
    %1572 = vmatprep.subr.mxu0 0.0
    %1573 = vmatpush1.msra.mxu0 %v1331
    %1574 = vmatprep.subr.mxu0 0.0
    %1575 = vmatpush1.msra.mxu0 %v1332
    %1576 = vmatprep.subr.mxu0 0.0
    %1577 = vmatpush1.msra.mxu0 %v1333
    %1578 = vmatprep.subr.mxu0 0.0
    %1579 = vmatpush1.msra.mxu0 %v1334
    %1580 = vmatprep.subr.mxu0 0.0
    %1581 = vmatpush1.msra.mxu0 %v1335
    %1582 = vmatprep.subr.mxu0 0.0
    %1583 = vmatpush1.msra.mxu0 %v1336
    %1584 = vmatprep.subr.mxu0 0.0
    %1585 = vmatpush1.msra.mxu0 %v1337
    %1586 = vmatprep.subr.mxu0 0.0
    %1587 = vmatpush1.msra.mxu0 %v1338
    %1588 = vmatprep.subr.mxu0 0.0
    %1589 = vmatpush1.msra.mxu0 %v1339
    %1590 = vmatprep.subr.mxu0 0.0
    %1591 = vmatpush1.msra.mxu0 %v1340
    %1592 = vmatprep.subr.mxu0 0.0
    %1593 = vmatpush1.msra.mxu0 %v1341
    %1594 = vmatprep.mubr.f32.mxu0 %v1241
    %1595 = vmatmul.mubr.f32.gmra.mrb[0].mxu0 %v1240
    %v1596 = vpop.f32.mrb[0].mxu0
    %v1597 = vadd.f32 %v1527, %v1596
    %v1598 = vpop.f32.mrb[0].mxu0
    %1599 = vdwg.mxu0
    %1600 = vmatprep.subr.mxu0 0.0
    %1601 = vmatpush1.msra.mxu0 %v1342
    %1602 = vmatprep.subr.mxu0 0.0
    %1603 = vmatpush1.msra.mxu0 %v1343
    %1604 = vmatprep.subr.mxu0 0.0
    %1605 = vmatpush1.msra.mxu0 %v1344
    %1606 = vmatprep.subr.mxu0 0.0
    %1607 = vmatpush1.msra.mxu0 %v1345
    %1608 = vmatprep.subr.mxu0 0.0
    %1609 = vmatpush1.msra.mxu0 %v1346
    %1610 = vmatprep.subr.mxu0 0.0
    %1611 = vmatpush1.msra.mxu0 %v1347
    %1612 = vmatprep.subr.mxu0 0.0
    %1613 = vmatpush1.msra.mxu0 %v1348
    %1614 = vmatprep.subr.mxu0 0.0
    %1615 = vmatpush1.msra.mxu0 %v1349
    %1616 = vmatprep.subr.mxu0 0.0
    %1617 = vmatpush1.msra.mxu0 %v1350
    %1618 = vmatprep.subr.mxu0 0.0
    %1619 = vmatpush1.msra.mxu0 %v1351
    %1620 = vmatprep.subr.mxu0 0.0
    %1621 = vmatpush1.msra.mxu0 %v1352
    %1622 = vmatprep.subr.mxu0 0.0
    %1623 = vmatpush1.msra.mxu0 %v1353
    %1624 = vmatprep.subr.mxu0 0.0
    %1625 = vmatpush1.msra.mxu0 %v1354
    %1626 = vmatprep.subr.mxu0 0.0
    %1627 = vmatpush1.msra.mxu0 %v1355
    %1628 = vmatprep.subr.mxu0 0.0
    %1629 = vmatpush1.msra.mxu0 %v1356
    %1630 = vmatprep.subr.mxu0 0.0
    %1631 = vmatpush1.msra.mxu0 %v1357
    %1632 = vmatprep.subr.mxu0 0.0
    %1633 = vmatpush1.msra.mxu0 %v1358
    %1634 = vmatprep.subr.mxu0 0.0
    %1635 = vmatpush1.msra.mxu0 %v1359
    %1636 = vmatprep.subr.mxu0 0.0
    %1637 = vmatpush1.msra.mxu0 %v1360
    %1638 = vmatprep.subr.mxu0 0.0
    %1639 = vmatpush1.msra.mxu0 %v1361
    %1640 = vmatprep.subr.mxu0 0.0
    %1641 = vmatpush1.msra.mxu0 %v1362
    %1642 = vmatprep.subr.mxu0 0.0
    %1643 = vmatpush1.msra.mxu0 %v1363
    %1644 = vmatprep.subr.mxu0 0.0
    %1645 = vmatpush1.msra.mxu0 %v1364
    %1646 = vmatprep.subr.mxu0 0.0
    %1647 = vmatpush1.msra.mxu0 %v1365
    %1648 = vmatprep.subr.mxu0 0.0
    %1649 = vmatpush1.msra.mxu0 %v1366
    %1650 = vmatprep.subr.mxu0 0.0
    %1651 = vmatpush1.msra.mxu0 %v1367
    %1652 = vmatprep.subr.mxu0 0.0
    %1653 = vmatpush1.msra.mxu0 %v1368
    %1654 = vmatprep.subr.mxu0 0.0
    %1655 = vmatpush1.msra.mxu0 %v1369
    %1656 = vmatprep.subr.mxu0 0.0
    %1657 = vmatpush1.msra.mxu0 %v1370
    %1658 = vmatprep.subr.mxu0 0.0
    %1659 = vmatpush1.msra.mxu0 %v1371
    %1660 = vmatprep.subr.mxu0 0.0
    %1661 = vmatpush1.msra.mxu0 %v1372
    %1662 = vmatprep.subr.mxu0 0.0
    %1663 = vmatpush1.msra.mxu0 %v1373
    %1664 = vmatprep.mubr.f32.mxu0 %v1243
    %1665 = vmatmul.mubr.f32.gmra.mrb[0].mxu0 %v1242
    %v1666 = vpop.f32.mrb[0].mxu0
    %v1667 = vadd.f32 %v1597, %v1666
    %v1668 = vpop.f32.mrb[0].mxu0
    %1669 = vdwg.mxu0
    %1670 = vmatprep.subr.mxu0 0.0
    %1671 = vmatpush1.msra.mxu0 %v1374
    %1672 = vmatprep.subr.mxu0 0.0
    %1673 = vmatpush1.msra.mxu0 %v1375
    %1674 = vmatprep.subr.mxu0 0.0
    %1675 = vmatpush1.msra.mxu0 %v1376
    %1676 = vmatprep.subr.mxu0 0.0
    %1677 = vmatpush1.msra.mxu0 %v1377
    %1678 = vmatprep.subr.mxu0 0.0
    %1679 = vmatpush1.msra.mxu0 %v1378
    %1680 = vmatprep.subr.mxu0 0.0
    %1681 = vmatpush1.msra.mxu0 %v1379
    %1682 = vmatprep.subr.mxu0 0.0
    %1683 = vmatpush1.msra.mxu0 %v1380
    %1684 = vmatprep.subr.mxu0 0.0
    %1685 = vmatpush1.msra.mxu0 %v1381
    %1686 = vmatprep.subr.mxu0 0.0
    %1687 = vmatpush1.msra.mxu0 %v1382
    %1688 = vmatprep.subr.mxu0 0.0
    %1689 = vmatpush1.msra.mxu0 %v1383
    %1690 = vmatprep.subr.mxu0 0.0
    %1691 = vmatpush1.msra.mxu0 %v1384
    %1692 = vmatprep.subr.mxu0 0.0
    %1693 = vmatpush1.msra.mxu0 %v1385
    %1694 = vmatprep.subr.mxu0 0.0
    %1695 = vmatpush1.msra.mxu0 %v1386
    %1696 = vmatprep.subr.mxu0 0.0
    %1697 = vmatpush1.msra.mxu0 %v1387
    %1698 = vmatprep.subr.mxu0 0.0
    %1699 = vmatpush1.msra.mxu0 %v1388
    %1700 = vmatprep.subr.mxu0 0.0
    %1701 = vmatpush1.msra.mxu0 %v1389
    %1702 = vmatprep.subr.mxu0 0.0
    %1703 = vmatpush1.msra.mxu0 0.0
    %1704 = vmatprep.subr.mxu0 0.0
    %1705 = vmatpush1.msra.mxu0 0.0
    %1706 = vmatprep.subr.mxu0 0.0
    %1707 = vmatpush1.msra.mxu0 0.0
    %1708 = vmatprep.subr.mxu0 0.0
    %1709 = vmatpush1.msra.mxu0 0.0
    %1710 = vmatprep.subr.mxu0 0.0
    %1711 = vmatpush1.msra.mxu0 0.0
    %1712 = vmatprep.subr.mxu0 0.0
    %1713 = vmatpush1.msra.mxu0 0.0
    %1714 = vmatprep.subr.mxu0 0.0
    %1715 = vmatpush1.msra.mxu0 0.0
    %1716 = vmatprep.subr.mxu0 0.0
    %1717 = vmatpush1.msra.mxu0 0.0
    %1718 = vmatprep.subr.mxu0 0.0
    %1719 = vmatpush1.msra.mxu0 0.0
    %1720 = vmatprep.subr.mxu0 0.0
    %1721 = vmatpush1.msra.mxu0 0.0
    %1722 = vmatprep.subr.mxu0 0.0
    %1723 = vmatpush1.msra.mxu0 0.0
    %1724 = vmatprep.subr.mxu0 0.0
    %1725 = vmatpush1.msra.mxu0 0.0
    %1726 = vmatprep.subr.mxu0 0.0
    %1727 = vmatpush1.msra.mxu0 0.0
    %1728 = vmatprep.subr.mxu0 0.0
    %1729 = vmatpush1.msra.mxu0 0.0
    %1730 = vmatprep.subr.mxu0 0.0
    %1731 = vmatpush1.msra.mxu0 0.0
    %1732 = vmatprep.subr.mxu0 0.0
    %1733 = vmatpush1.msra.mxu0 0.0
    %1734 = vmatprep.mubr.f32.mxu0 0.0
    %1735 = vmatmul.mubr.f32.gmra.mrb[0].mxu0 %v1244
    %v1736 = vpop.f32.mrb[0].mxu0
    %v1737 = vadd.f32 %v1667, %v1736
    %v1738 = vpop.f32.mrb[0].mxu0
    %1739 = vdwg.mxu0
    %1741 = vrot.lane.b32.xlu0 %v1737, 96
    %v1742 = vpop.permute.xlu0 %1741
    %vm1744 = vcmask 1048320
    %1745 = vst.msk [vmem:[#allocation2] sm:$0xff] %vm1744, %v1742
    %v1746 = vld [vmem:[#allocation2] sm:$0xff]
    %v1747 = vld [vmem:[#allocation2 + $0x8] sm:$0xff]
    %s1748 = scalar_lea.vmem %s4, 2
    %v1749 = vld [vmem:[%s1748] ss:$8 sm:$0x3]
    %v1751 = vlaneseq
    %v1752 = vshrl.u32 %v1751, 7
    %v1753 = vsub.s32 0, %v1752
    %v1754 = vrot.slane %v1749, %v1753
    %v1755 = vlaneseq
    %v1756 = vshrl.u32 %v1755, 7
    %v1757 = vsub.s32 1, %v1756
    %v1758 = vrot.slane %v1749, %v1757
    %v1761 = vmul.f32 %v1746, %v1754
    %v1762 = vmul.f32 %v1747, %v1758
    %s1763 = scalar_lea.vmem %s5, 2
    %v1764 = vld [vmem:[%s1763] ss:$8 sm:$0x3]
    %v1766 = vlaneseq
    %v1767 = vshrl.u32 %v1766, 7
    %v1768 = vsub.s32 0, %v1767
    %v1769 = vrot.slane %v1764, %v1768
    %v1770 = vlaneseq
    %v1771 = vshrl.u32 %v1770, 7
    %v1772 = vsub.s32 1, %v1771
    %v1773 = vrot.slane %v1764, %v1772
    %v1776 = vadd.f32 %v1761, %v1769
    %v1777 = vadd.f32 %v1762, %v1773
    %v1778 = vmax.f32 %v1776, 0.0
    %v1779 = vmax.f32 %v1777, 0.0
    %s1780 = scalar_lea.vmem %s6, 512
    %v1781 = vld [vmem:[%s1780] sm:$0xff]
    %v1782 = vld [vmem:[%s1780 + $0x8] sm:$0xff]
    %v1783 = vld [vmem:[%s1780 + $0x10] sm:$0xff]
    %v1784 = vld [vmem:[%s1780 + $0x18] sm:$0xff]
    %v1785 = vld [vmem:[%s1780 + $0x20] sm:$0xff]
    %v1786 = vld [vmem:[%s1780 + $0x28] sm:$0xff]
    %v1787 = vld [vmem:[%s1780 + $0x30] sm:$0xff]
    %v1788 = vld [vmem:[%s1780 + $0x38] sm:$0xff]
    %v1789 = vld [vmem:[%s1780 + $0x40] sm:$0xff]
    %v1790 = vld [vmem:[%s1780 + $0x48] sm:$0xff]
    %v1791 = vld [vmem:[%s1780 + $0x50] sm:$0xff]
    %v1792 = vld [vmem:[%s1780 + $0x58] sm:$0xff]
    %v1793 = vld [vmem:[%s1780 + $0x60] sm:$0xff]
    %v1794 = vld [vmem:[%s1780 + $0x68] sm:$0xff]
    %v1795 = vld [vmem:[%s1780 + $0x70] sm:$0xff]
    %v1796 = vld [vmem:[%s1780 + $0x78] sm:$0xff]
    %v1797 = vld [vmem:[%s1780 + $0x80] sm:$0xff]
    %v1798 = vld [vmem:[%s1780 + $0x88] sm:$0xff]
    %v1799 = vld [vmem:[%s1780 + $0x90] sm:$0xff]
    %v1800 = vld [vmem:[%s1780 + $0x98] sm:$0xff]
    %v1801 = vld [vmem:[%s1780 + $0xa0] sm:$0xff]
    %v1802 = vld [vmem:[%s1780 + $0xa8] sm:$0xff]
    %v1803 = vld [vmem:[%s1780 + $0xb0] sm:$0xff]
    %v1804 = vld [vmem:[%s1780 + $0xb8] sm:$0xff]
    %v1805 = vld [vmem:[%s1780 + $0xc0] sm:$0xff]
    %v1806 = vld [vmem:[%s1780 + $0xc8] sm:$0xff]
    %v1807 = vld [vmem:[%s1780 + $0xd0] sm:$0xff]
    %v1808 = vld [vmem:[%s1780 + $0xd8] sm:$0xff]
    %v1809 = vld [vmem:[%s1780 + $0xe0] sm:$0xff]
    %v1810 = vld [vmem:[%s1780 + $0xe8] sm:$0xff]
    %v1811 = vld [vmem:[%s1780 + $0xf0] sm:$0xff]
    %v1812 = vld [vmem:[%s1780 + $0xf8] sm:$0xff]
    %1813 = vmatprep.subr.mxu0 0.0
    %1814 = vmatpush1.msra.mxu0 %v1781
    %1815 = vmatprep.subr.mxu0 0.0
    %1816 = vmatpush1.msra.mxu0 %v1782
    %1817 = vmatprep.subr.mxu0 0.0
    %1818 = vmatpush1.msra.mxu0 %v1783
    %1819 = vmatprep.subr.mxu0 0.0
    %1820 = vmatpush1.msra.mxu0 %v1784
    %1821 = vmatprep.subr.mxu0 0.0
    %1822 = vmatpush1.msra.mxu0 %v1785
    %1823 = vmatprep.subr.mxu0 0.0
    %1824 = vmatpush1.msra.mxu0 %v1786
    %1825 = vmatprep.subr.mxu0 0.0
    %1826 = vmatpush1.msra.mxu0 %v1787
    %1827 = vmatprep.subr.mxu0 0.0
    %1828 = vmatpush1.msra.mxu0 %v1788
    %1829 = vmatprep.subr.mxu0 0.0
    %1830 = vmatpush1.msra.mxu0 %v1789
    %1831 = vmatprep.subr.mxu0 0.0
    %1832 = vmatpush1.msra.mxu0 %v1790
    %1833 = vmatprep.subr.mxu0 0.0
    %1834 = vmatpush1.msra.mxu0 %v1791
    %1835 = vmatprep.subr.mxu0 0.0
    %1836 = vmatpush1.msra.mxu0 %v1792
    %1837 = vmatprep.subr.mxu0 0.0
    %1838 = vmatpush1.msra.mxu0 %v1793
    %1839 = vmatprep.subr.mxu0 0.0
    %1840 = vmatpush1.msra.mxu0 %v1794
    %1841 = vmatprep.subr.mxu0 0.0
    %1842 = vmatpush1.msra.mxu0 %v1795
    %1843 = vmatprep.subr.mxu0 0.0
    %1844 = vmatpush1.msra.mxu0 %v1796
    %1845 = vmatprep.subr.mxu0 0.0
    %1846 = vmatpush1.msra.mxu0 %v1797
    %1847 = vmatprep.subr.mxu0 0.0
    %1848 = vmatpush1.msra.mxu0 %v1798
    %1849 = vmatprep.subr.mxu0 0.0
    %1850 = vmatpush1.msra.mxu0 %v1799
    %1851 = vmatprep.subr.mxu0 0.0
    %1852 = vmatpush1.msra.mxu0 %v1800
    %1853 = vmatprep.subr.mxu0 0.0
    %1854 = vmatpush1.msra.mxu0 %v1801
    %1855 = vmatprep.subr.mxu0 0.0
    %1856 = vmatpush1.msra.mxu0 %v1802
    %1857 = vmatprep.subr.mxu0 0.0
    %1858 = vmatpush1.msra.mxu0 %v1803
    %1859 = vmatprep.subr.mxu0 0.0
    %1860 = vmatpush1.msra.mxu0 %v1804
    %1861 = vmatprep.subr.mxu0 0.0
    %1862 = vmatpush1.msra.mxu0 %v1805
    %1863 = vmatprep.subr.mxu0 0.0
    %1864 = vmatpush1.msra.mxu0 %v1806
    %1865 = vmatprep.subr.mxu0 0.0
    %1866 = vmatpush1.msra.mxu0 %v1807
    %1867 = vmatprep.subr.mxu0 0.0
    %1868 = vmatpush1.msra.mxu0 %v1808
    %1869 = vmatprep.subr.mxu0 0.0
    %1870 = vmatpush1.msra.mxu0 %v1809
    %1871 = vmatprep.subr.mxu0 0.0
    %1872 = vmatpush1.msra.mxu0 %v1810
    %1873 = vmatprep.subr.mxu0 0.0
    %1874 = vmatpush1.msra.mxu0 %v1811
    %1875 = vmatprep.subr.mxu0 0.0
    %1876 = vmatpush1.msra.mxu0 %v1812
    %1877 = vmatprep.mubr.f32.mxu0 %v1779
    %1878 = vmatmul.mubr.f32.gmra.mrb[0].mxu0 %v1778
    %v1879 = vpop.f32.mrb[0].mxu0
    %v1880 = vadd.f32 0.0, %v1879
    %v1881 = vpop.f32.mrb[0].mxu0
    %1882 = vdwg.mxu0
    %v1883 = vld [vmem:[%s7 + $0x2] sm:$0x1]
    %v1884 = vlaneseq
    %v1885 = vshrl.u32 %v1884, 7
    %v1886 = vsub.s32 0, %v1885
    %v1887 = vrot.slane %v1883, %v1886
    %v1888 = vmul.f32 %v1880, %v1887
    %v1889 = vld [vmem:[%s8 + $0x2] sm:$0x1]
    %v1890 = vlaneseq
    %v1891 = vshrl.u32 %v1890, 7
    %v1892 = vsub.s32 0, %v1891
    %v1893 = vrot.slane %v1889, %v1892
    %v1894 = vadd.f32 %v1888, %v1893
    %v1895 = vmax.f32 %v1894, 0.0
    %v1897 = vrot.slane %v1895, 2
    %v1899 = vrot.slane %v1895, 4
    %v1901 = vrot.slane %v1895, 6
    %v1903 = vrot.slane %v1897, 6
    %v1904 = vrot.slane %v1899, 6
    %v1905 = vrot.slane %v1901, 6
    %v1909 = vrot.slane %v1897, 4
    %v1910 = vrot.slane %v1899, 4
    %v1911 = vrot.slane %v1901, 4
    %v1915 = vrot.slane %v1897, 2
    %v1916 = vrot.slane %v1899, 2
    %v1917 = vrot.slane %v1901, 2
    %v1921 = vsel %vm328, 0.0, %v1901
    %v1922 = vsel %vm328, %v1895, %v1903
    %v1923 = vsel %vm328, %v1897, %v498
    %v1924 = vsel %vm328, 0.0, %v1904
    %v1925 = vsel %vm328, %v1899, %v1905
    %v1926 = vsel %vm328, %v1901, %v498
    %v1927 = vsel %vm331, %v522, %v1899
    %v1928 = vsel %vm331, %v522, %v1909
    %v1929 = vsel %vm331, %v1921, %v506
    %v1930 = vsel %vm331, %v1922, %v1910
    %v1931 = vsel %vm331, %v1923, %v1911
    %v1932 = vsel %vm331, %v1924, %v506
    %v1933 = vsel %vm331, %v1925, %v506
    %v1934 = vsel %vm331, %v1926, %v506
    %v1935 = vsel %vm335, %v529, %v1897
    %v1936 = vsel %vm335, %v1927, %v1915
    %v1937 = vsel %vm335, %v1928, %v515
    %v1938 = vsel %vm335, %v1929, %v1916
    %v1939 = vsel %vm335, %v1930, %v1917
    %v1940 = vsel %vm335, %v1931, %v515
    %v1941 = vsel %vm335, %v1932, %v515
    %v1942 = vsel %vm335, %v1933, %v515
    %v1943 = vsel %vm335, %v1934, %v515
    %s1944 = scalar_lea.vmem %s9, 2304
    %v1945 = vld [vmem:[%s1944] sm:$0xff]
    %v1946 = vld [vmem:[%s1944 + $0x8] sm:$0xff]
    %v1947 = vld [vmem:[%s1944 + $0x10] sm:$0xff]
    %v1948 = vld [vmem:[%s1944 + $0x18] sm:$0xff]
    %v1949 = vld [vmem:[%s1944 + $0x20] sm:$0xff]
    %v1950 = vld [vmem:[%s1944 + $0x28] sm:$0xff]
    %v1951 = vld [vmem:[%s1944 + $0x30] sm:$0xff]
    %v1952 = vld [vmem:[%s1944 + $0x38] sm:$0xff]
    %v1953 = vld [vmem:[%s1944 + $0x40] sm:$0xff]
    %v1954 = vld [vmem:[%s1944 + $0x48] sm:$0xff]
    %v1955 = vld [vmem:[%s1944 + $0x50] sm:$0xff]
    %v1956 = vld [vmem:[%s1944 + $0x58] sm:$0xff]
    %v1957 = vld [vmem:[%s1944 + $0x60] sm:$0xff]
    %v1958 = vld [vmem:[%s1944 + $0x68] sm:$0xff]
    %v1959 = vld [vmem:[%s1944 + $0x70] sm:$0xff]
    %v1960 = vld [vmem:[%s1944 + $0x78] sm:$0xff]
    %v1961 = vld [vmem:[%s1944 + $0x80] sm:$0xff]
    %v1962 = vld [vmem:[%s1944 + $0x88] sm:$0xff]
    %v1963 = vld [vmem:[%s1944 + $0x90] sm:$0xff]
    %v1964 = vld [vmem:[%s1944 + $0x98] sm:$0xff]
    %v1965 = vld [vmem:[%s1944 + $0xa0] sm:$0xff]
    %v1966 = vld [vmem:[%s1944 + $0xa8] sm:$0xff]
    %v1967 = vld [vmem:[%s1944 + $0xb0] sm:$0xff]
    %v1968 = vld [vmem:[%s1944 + $0xb8] sm:$0xff]
    %v1969 = vld [vmem:[%s1944 + $0xc0] sm:$0xff]
    %v1970 = vld [vmem:[%s1944 + $0xc8] sm:$0xff]
    %v1971 = vld [vmem:[%s1944 + $0xd0] sm:$0xff]
    %v1972 = vld [vmem:[%s1944 + $0xd8] sm:$0xff]
    %v1973 = vld [vmem:[%s1944 + $0xe0] sm:$0xff]
    %v1974 = vld [vmem:[%s1944 + $0xe8] sm:$0xff]
    %v1975 = vld [vmem:[%s1944 + $0xf0] sm:$0xff]
    %v1976 = vld [vmem:[%s1944 + $0xf8] sm:$0xff]
    %v1977 = vld [vmem:[%s1944 + $0x100] sm:$0xff]
    %v1978 = vld [vmem:[%s1944 + $0x108] sm:$0xff]
    %v1979 = vld [vmem:[%s1944 + $0x110] sm:$0xff]
    %v1980 = vld [vmem:[%s1944 + $0x118] sm:$0xff]
    %v1981 = vld [vmem:[%s1944 + $0x120] sm:$0xff]
    %v1982 = vld [vmem:[%s1944 + $0x128] sm:$0xff]
    %v1983 = vld [vmem:[%s1944 + $0x130] sm:$0xff]
    %v1984 = vld [vmem:[%s1944 + $0x138] sm:$0xff]
    %v1985 = vld [vmem:[%s1944 + $0x140] sm:$0xff]
    %v1986 = vld [vmem:[%s1944 + $0x148] sm:$0xff]
    %v1987 = vld [vmem:[%s1944 + $0x150] sm:$0xff]
    %v1988 = vld [vmem:[%s1944 + $0x158] sm:$0xff]
    %v1989 = vld [vmem:[%s1944 + $0x160] sm:$0xff]
    %v1990 = vld [vmem:[%s1944 + $0x168] sm:$0xff]
    %v1991 = vld [vmem:[%s1944 + $0x170] sm:$0xff]
    %v1992 = vld [vmem:[%s1944 + $0x178] sm:$0xff]
    %v1993 = vld [vmem:[%s1944 + $0x180] sm:$0xff]
    %v1994 = vld [vmem:[%s1944 + $0x188] sm:$0xff]
    %v1995 = vld [vmem:[%s1944 + $0x190] sm:$0xff]
    %v1996 = vld [vmem:[%s1944 + $0x198] sm:$0xff]
    %v1997 = vld [vmem:[%s1944 + $0x1a0] sm:$0xff]
    %v1998 = vld [vmem:[%s1944 + $0x1a8] sm:$0xff]
    %v1999 = vld [vmem:[%s1944 + $0x1b0] sm:$0xff]
    %v2000 = vld [vmem:[%s1944 + $0x1b8] sm:$0xff]
    %v2001 = vld [vmem:[%s1944 + $0x1c0] sm:$0xff]
    %v2002 = vld [vmem:[%s1944 + $0x1c8] sm:$0xff]
    %v2003 = vld [vmem:[%s1944 + $0x1d0] sm:$0xff]
    %v2004 = vld [vmem:[%s1944 + $0x1d8] sm:$0xff]
    %v2005 = vld [vmem:[%s1944 + $0x1e0] sm:$0xff]
    %v2006 = vld [vmem:[%s1944 + $0x1e8] sm:$0xff]
    %v2007 = vld [vmem:[%s1944 + $0x1f0] sm:$0xff]
    %v2008 = vld [vmem:[%s1944 + $0x1f8] sm:$0xff]
    %v2009 = vld [vmem:[%s1944 + $0x200] sm:$0xff]
    %v2010 = vld [vmem:[%s1944 + $0x208] sm:$0xff]
    %v2011 = vld [vmem:[%s1944 + $0x210] sm:$0xff]
    %v2012 = vld [vmem:[%s1944 + $0x218] sm:$0xff]
    %v2013 = vld [vmem:[%s1944 + $0x220] sm:$0xff]
    %v2014 = vld [vmem:[%s1944 + $0x228] sm:$0xff]
    %v2015 = vld [vmem:[%s1944 + $0x230] sm:$0xff]
    %v2016 = vld [vmem:[%s1944 + $0x238] sm:$0xff]
    %v2017 = vld [vmem:[%s1944 + $0x240] sm:$0xff]
    %v2018 = vld [vmem:[%s1944 + $0x248] sm:$0xff]
    %v2019 = vld [vmem:[%s1944 + $0x250] sm:$0xff]
    %v2020 = vld [vmem:[%s1944 + $0x258] sm:$0xff]
    %v2021 = vld [vmem:[%s1944 + $0x260] sm:$0xff]
    %v2022 = vld [vmem:[%s1944 + $0x268] sm:$0xff]
    %v2023 = vld [vmem:[%s1944 + $0x270] sm:$0xff]
    %v2024 = vld [vmem:[%s1944 + $0x278] sm:$0xff]
    %v2025 = vld [vmem:[%s1944 + $0x280] sm:$0xff]
    %v2026 = vld [vmem:[%s1944 + $0x288] sm:$0xff]
    %v2027 = vld [vmem:[%s1944 + $0x290] sm:$0xff]
    %v2028 = vld [vmem:[%s1944 + $0x298] sm:$0xff]
    %v2029 = vld [vmem:[%s1944 + $0x2a0] sm:$0xff]
    %v2030 = vld [vmem:[%s1944 + $0x2a8] sm:$0xff]
    %v2031 = vld [vmem:[%s1944 + $0x2b0] sm:$0xff]
    %v2032 = vld [vmem:[%s1944 + $0x2b8] sm:$0xff]
    %v2033 = vld [vmem:[%s1944 + $0x2c0] sm:$0xff]
    %v2034 = vld [vmem:[%s1944 + $0x2c8] sm:$0xff]
    %v2035 = vld [vmem:[%s1944 + $0x2d0] sm:$0xff]
    %v2036 = vld [vmem:[%s1944 + $0x2d8] sm:$0xff]
    %v2037 = vld [vmem:[%s1944 + $0x2e0] sm:$0xff]
    %v2038 = vld [vmem:[%s1944 + $0x2e8] sm:$0xff]
    %v2039 = vld [vmem:[%s1944 + $0x2f0] sm:$0xff]
    %v2040 = vld [vmem:[%s1944 + $0x2f8] sm:$0xff]
    %v2041 = vld [vmem:[%s1944 + $0x300] sm:$0xff]
    %v2042 = vld [vmem:[%s1944 + $0x308] sm:$0xff]
    %v2043 = vld [vmem:[%s1944 + $0x310] sm:$0xff]
    %v2044 = vld [vmem:[%s1944 + $0x318] sm:$0xff]
    %v2045 = vld [vmem:[%s1944 + $0x320] sm:$0xff]
    %v2046 = vld [vmem:[%s1944 + $0x328] sm:$0xff]
    %v2047 = vld [vmem:[%s1944 + $0x330] sm:$0xff]
    %v2048 = vld [vmem:[%s1944 + $0x338] sm:$0xff]
    %v2049 = vld [vmem:[%s1944 + $0x340] sm:$0xff]
    %v2050 = vld [vmem:[%s1944 + $0x348] sm:$0xff]
    %v2051 = vld [vmem:[%s1944 + $0x350] sm:$0xff]
    %v2052 = vld [vmem:[%s1944 + $0x358] sm:$0xff]
    %v2053 = vld [vmem:[%s1944 + $0x360] sm:$0xff]
    %v2054 = vld [vmem:[%s1944 + $0x368] sm:$0xff]
    %v2055 = vld [vmem:[%s1944 + $0x370] sm:$0xff]
    %v2056 = vld [vmem:[%s1944 + $0x378] sm:$0xff]
    %v2057 = vld [vmem:[%s1944 + $0x380] sm:$0xff]
    %v2058 = vld [vmem:[%s1944 + $0x388] sm:$0xff]
    %v2059 = vld [vmem:[%s1944 + $0x390] sm:$0xff]
    %v2060 = vld [vmem:[%s1944 + $0x398] sm:$0xff]
    %v2061 = vld [vmem:[%s1944 + $0x3a0] sm:$0xff]
    %v2062 = vld [vmem:[%s1944 + $0x3a8] sm:$0xff]
    %v2063 = vld [vmem:[%s1944 + $0x3b0] sm:$0xff]
    %v2064 = vld [vmem:[%s1944 + $0x3b8] sm:$0xff]
    %v2065 = vld [vmem:[%s1944 + $0x3c0] sm:$0xff]
    %v2066 = vld [vmem:[%s1944 + $0x3c8] sm:$0xff]
    %v2067 = vld [vmem:[%s1944 + $0x3d0] sm:$0xff]
    %v2068 = vld [vmem:[%s1944 + $0x3d8] sm:$0xff]
    %v2069 = vld [vmem:[%s1944 + $0x3e0] sm:$0xff]
    %v2070 = vld [vmem:[%s1944 + $0x3e8] sm:$0xff]
    %v2071 = vld [vmem:[%s1944 + $0x3f0] sm:$0xff]
    %v2072 = vld [vmem:[%s1944 + $0x3f8] sm:$0xff]
    %v2073 = vld [vmem:[%s1944 + $0x400] sm:$0xff]
    %v2074 = vld [vmem:[%s1944 + $0x408] sm:$0xff]
    %v2075 = vld [vmem:[%s1944 + $0x410] sm:$0xff]
    %v2076 = vld [vmem:[%s1944 + $0x418] sm:$0xff]
    %v2077 = vld [vmem:[%s1944 + $0x420] sm:$0xff]
    %v2078 = vld [vmem:[%s1944 + $0x428] sm:$0xff]
    %v2079 = vld [vmem:[%s1944 + $0x430] sm:$0xff]
    %v2080 = vld [vmem:[%s1944 + $0x438] sm:$0xff]
    %v2081 = vld [vmem:[%s1944 + $0x440] sm:$0xff]
    %v2082 = vld [vmem:[%s1944 + $0x448] sm:$0xff]
    %v2083 = vld [vmem:[%s1944 + $0x450] sm:$0xff]
    %v2084 = vld [vmem:[%s1944 + $0x458] sm:$0xff]
    %v2085 = vld [vmem:[%s1944 + $0x460] sm:$0xff]
    %v2086 = vld [vmem:[%s1944 + $0x468] sm:$0xff]
    %v2087 = vld [vmem:[%s1944 + $0x470] sm:$0xff]
    %v2088 = vld [vmem:[%s1944 + $0x478] sm:$0xff]
    %2089 = vmatprep.subr.mxu0 0.0
    %2090 = vmatpush1.msra.mxu0 %v1945
    %2091 = vmatprep.subr.mxu0 0.0
    %2092 = vmatpush1.msra.mxu0 %v1946
    %2093 = vmatprep.subr.mxu0 0.0
    %2094 = vmatpush1.msra.mxu0 %v1947
    %2095 = vmatprep.subr.mxu0 0.0
    %2096 = vmatpush1.msra.mxu0 %v1948
    %2097 = vmatprep.subr.mxu0 0.0
    %2098 = vmatpush1.msra.mxu0 %v1949
    %2099 = vmatprep.subr.mxu0 0.0
    %2100 = vmatpush1.msra.mxu0 %v1950
    %2101 = vmatprep.subr.mxu0 0.0
    %2102 = vmatpush1.msra.mxu0 %v1951
    %2103 = vmatprep.subr.mxu0 0.0
    %2104 = vmatpush1.msra.mxu0 %v1952
    %2105 = vmatprep.subr.mxu0 0.0
    %2106 = vmatpush1.msra.mxu0 %v1953
    %2107 = vmatprep.subr.mxu0 0.0
    %2108 = vmatpush1.msra.mxu0 %v1954
    %2109 = vmatprep.subr.mxu0 0.0
    %2110 = vmatpush1.msra.mxu0 %v1955
    %2111 = vmatprep.subr.mxu0 0.0
    %2112 = vmatpush1.msra.mxu0 %v1956
    %2113 = vmatprep.subr.mxu0 0.0
    %2114 = vmatpush1.msra.mxu0 %v1957
    %2115 = vmatprep.subr.mxu0 0.0
    %2116 = vmatpush1.msra.mxu0 %v1958
    %2117 = vmatprep.subr.mxu0 0.0
    %2118 = vmatpush1.msra.mxu0 %v1959
    %2119 = vmatprep.subr.mxu0 0.0
    %2120 = vmatpush1.msra.mxu0 %v1960
    %2121 = vmatprep.subr.mxu0 0.0
    %2122 = vmatpush1.msra.mxu0 %v1961
    %2123 = vmatprep.subr.mxu0 0.0
    %2124 = vmatpush1.msra.mxu0 %v1962
    %2125 = vmatprep.subr.mxu0 0.0
    %2126 = vmatpush1.msra.mxu0 %v1963
    %2127 = vmatprep.subr.mxu0 0.0
    %2128 = vmatpush1.msra.mxu0 %v1964
    %2129 = vmatprep.subr.mxu0 0.0
    %2130 = vmatpush1.msra.mxu0 %v1965
    %2131 = vmatprep.subr.mxu0 0.0
    %2132 = vmatpush1.msra.mxu0 %v1966
    %2133 = vmatprep.subr.mxu0 0.0
    %2134 = vmatpush1.msra.mxu0 %v1967
    %2135 = vmatprep.subr.mxu0 0.0
    %2136 = vmatpush1.msra.mxu0 %v1968
    %2137 = vmatprep.subr.mxu0 0.0
    %2138 = vmatpush1.msra.mxu0 %v1969
    %2139 = vmatprep.subr.mxu0 0.0
    %2140 = vmatpush1.msra.mxu0 %v1970
    %2141 = vmatprep.subr.mxu0 0.0
    %2142 = vmatpush1.msra.mxu0 %v1971
    %2143 = vmatprep.subr.mxu0 0.0
    %2144 = vmatpush1.msra.mxu0 %v1972
    %2145 = vmatprep.subr.mxu0 0.0
    %2146 = vmatpush1.msra.mxu0 %v1973
    %2147 = vmatprep.subr.mxu0 0.0
    %2148 = vmatpush1.msra.mxu0 %v1974
    %2149 = vmatprep.subr.mxu0 0.0
    %2150 = vmatpush1.msra.mxu0 %v1975
    %2151 = vmatprep.subr.mxu0 0.0
    %2152 = vmatpush1.msra.mxu0 %v1976
    %2153 = vmatprep.mubr.f32.mxu0 %v1936
    %2154 = vmatmul.mubr.f32.gmra.mrb[0].mxu0 %v1935
    %v2155 = vpop.f32.mrb[0].mxu0
    %v2156 = vadd.f32 0.0, %v2155
    %v2157 = vpop.f32.mrb[0].mxu0
    %2158 = vdwg.mxu0
    %2159 = vmatprep.subr.mxu0 0.0
    %2160 = vmatpush1.msra.mxu0 %v1977
    %2161 = vmatprep.subr.mxu0 0.0
    %2162 = vmatpush1.msra.mxu0 %v1978
    %2163 = vmatprep.subr.mxu0 0.0
    %2164 = vmatpush1.msra.mxu0 %v1979
    %2165 = vmatprep.subr.mxu0 0.0
    %2166 = vmatpush1.msra.mxu0 %v1980
    %2167 = vmatprep.subr.mxu0 0.0
    %2168 = vmatpush1.msra.mxu0 %v1981
    %2169 = vmatprep.subr.mxu0 0.0
    %2170 = vmatpush1.msra.mxu0 %v1982
    %2171 = vmatprep.subr.mxu0 0.0
    %2172 = vmatpush1.msra.mxu0 %v1983
    %2173 = vmatprep.subr.mxu0 0.0
    %2174 = vmatpush1.msra.mxu0 %v1984
    %2175 = vmatprep.subr.mxu0 0.0
    %2176 = vmatpush1.msra.mxu0 %v1985
    %2177 = vmatprep.subr.mxu0 0.0
    %2178 = vmatpush1.msra.mxu0 %v1986
    %2179 = vmatprep.subr.mxu0 0.0
    %2180 = vmatpush1.msra.mxu0 %v1987
    %2181 = vmatprep.subr.mxu0 0.0
    %2182 = vmatpush1.msra.mxu0 %v1988
    %2183 = vmatprep.subr.mxu0 0.0
    %2184 = vmatpush1.msra.mxu0 %v1989
    %2185 = vmatprep.subr.mxu0 0.0
    %2186 = vmatpush1.msra.mxu0 %v1990
    %2187 = vmatprep.subr.mxu0 0.0
    %2188 = vmatpush1.msra.mxu0 %v1991
    %2189 = vmatprep.subr.mxu0 0.0
    %2190 = vmatpush1.msra.mxu0 %v1992
    %2191 = vmatprep.subr.mxu0 0.0
    %2192 = vmatpush1.msra.mxu0 %v1993
    %2193 = vmatprep.subr.mxu0 0.0
    %2194 = vmatpush1.msra.mxu0 %v1994
    %2195 = vmatprep.subr.mxu0 0.0
    %2196 = vmatpush1.msra.mxu0 %v1995
    %2197 = vmatprep.subr.mxu0 0.0
    %2198 = vmatpush1.msra.mxu0 %v1996
    %2199 = vmatprep.subr.mxu0 0.0
    %2200 = vmatpush1.msra.mxu0 %v1997
    %2201 = vmatprep.subr.mxu0 0.0
    %2202 = vmatpush1.msra.mxu0 %v1998
    %2203 = vmatprep.subr.mxu0 0.0
    %2204 = vmatpush1.msra.mxu0 %v1999
    %2205 = vmatprep.subr.mxu0 0.0
    %2206 = vmatpush1.msra.mxu0 %v2000
    %2207 = vmatprep.subr.mxu0 0.0
    %2208 = vmatpush1.msra.mxu0 %v2001
    %2209 = vmatprep.subr.mxu0 0.0
    %2210 = vmatpush1.msra.mxu0 %v2002
    %2211 = vmatprep.subr.mxu0 0.0
    %2212 = vmatpush1.msra.mxu0 %v2003
    %2213 = vmatprep.subr.mxu0 0.0
    %2214 = vmatpush1.msra.mxu0 %v2004
    %2215 = vmatprep.subr.mxu0 0.0
    %2216 = vmatpush1.msra.mxu0 %v2005
    %2217 = vmatprep.subr.mxu0 0.0
    %2218 = vmatpush1.msra.mxu0 %v2006
    %2219 = vmatprep.subr.mxu0 0.0
    %2220 = vmatpush1.msra.mxu0 %v2007
    %2221 = vmatprep.subr.mxu0 0.0
    %2222 = vmatpush1.msra.mxu0 %v2008
    %2223 = vmatprep.mubr.f32.mxu0 %v1938
    %2224 = vmatmul.mubr.f32.gmra.mrb[0].mxu0 %v1937
    %v2225 = vpop.f32.mrb[0].mxu0
    %v2226 = vadd.f32 %v2156, %v2225
    %v2227 = vpop.f32.mrb[0].mxu0
    %2228 = vdwg.mxu0
    %2229 = vmatprep.subr.mxu0 0.0
    %2230 = vmatpush1.msra.mxu0 %v2009
    %2231 = vmatprep.subr.mxu0 0.0
    %2232 = vmatpush1.msra.mxu0 %v2010
    %2233 = vmatprep.subr.mxu0 0.0
    %2234 = vmatpush1.msra.mxu0 %v2011
    %2235 = vmatprep.subr.mxu0 0.0
    %2236 = vmatpush1.msra.mxu0 %v2012
    %2237 = vmatprep.subr.mxu0 0.0
    %2238 = vmatpush1.msra.mxu0 %v2013
    %2239 = vmatprep.subr.mxu0 0.0
    %2240 = vmatpush1.msra.mxu0 %v2014
    %2241 = vmatprep.subr.mxu0 0.0
    %2242 = vmatpush1.msra.mxu0 %v2015
    %2243 = vmatprep.subr.mxu0 0.0
    %2244 = vmatpush1.msra.mxu0 %v2016
    %2245 = vmatprep.subr.mxu0 0.0
    %2246 = vmatpush1.msra.mxu0 %v2017
    %2247 = vmatprep.subr.mxu0 0.0
    %2248 = vmatpush1.msra.mxu0 %v2018
    %2249 = vmatprep.subr.mxu0 0.0
    %2250 = vmatpush1.msra.mxu0 %v2019
    %2251 = vmatprep.subr.mxu0 0.0
    %2252 = vmatpush1.msra.mxu0 %v2020
    %2253 = vmatprep.subr.mxu0 0.0
    %2254 = vmatpush1.msra.mxu0 %v2021
    %2255 = vmatprep.subr.mxu0 0.0
    %2256 = vmatpush1.msra.mxu0 %v2022
    %2257 = vmatprep.subr.mxu0 0.0
    %2258 = vmatpush1.msra.mxu0 %v2023
    %2259 = vmatprep.subr.mxu0 0.0
    %2260 = vmatpush1.msra.mxu0 %v2024
    %2261 = vmatprep.subr.mxu0 0.0
    %2262 = vmatpush1.msra.mxu0 %v2025
    %2263 = vmatprep.subr.mxu0 0.0
    %2264 = vmatpush1.msra.mxu0 %v2026
    %2265 = vmatprep.subr.mxu0 0.0
    %2266 = vmatpush1.msra.mxu0 %v2027
    %2267 = vmatprep.subr.mxu0 0.0
    %2268 = vmatpush1.msra.mxu0 %v2028
    %2269 = vmatprep.subr.mxu0 0.0
    %2270 = vmatpush1.msra.mxu0 %v2029
    %2271 = vmatprep.subr.mxu0 0.0
    %2272 = vmatpush1.msra.mxu0 %v2030
    %2273 = vmatprep.subr.mxu0 0.0
    %2274 = vmatpush1.msra.mxu0 %v2031
    %2275 = vmatprep.subr.mxu0 0.0
    %2276 = vmatpush1.msra.mxu0 %v2032
    %2277 = vmatprep.subr.mxu0 0.0
    %2278 = vmatpush1.msra.mxu0 %v2033
    %2279 = vmatprep.subr.mxu0 0.0
    %2280 = vmatpush1.msra.mxu0 %v2034
    %2281 = vmatprep.subr.mxu0 0.0
    %2282 = vmatpush1.msra.mxu0 %v2035
    %2283 = vmatprep.subr.mxu0 0.0
    %2284 = vmatpush1.msra.mxu0 %v2036
    %2285 = vmatprep.subr.mxu0 0.0
    %2286 = vmatpush1.msra.mxu0 %v2037
    %2287 = vmatprep.subr.mxu0 0.0
    %2288 = vmatpush1.msra.mxu0 %v2038
    %2289 = vmatprep.subr.mxu0 0.0
    %2290 = vmatpush1.msra.mxu0 %v2039
    %2291 = vmatprep.subr.mxu0 0.0
    %2292 = vmatpush1.msra.mxu0 %v2040
    %2293 = vmatprep.mubr.f32.mxu0 %v1940
    %2294 = vmatmul.mubr.f32.gmra.mrb[0].mxu0 %v1939
    %v2295 = vpop.f32.mrb[0].mxu0
    %v2296 = vadd.f32 %v2226, %v2295
    %v2297 = vpop.f32.mrb[0].mxu0
    %2298 = vdwg.mxu0
    %2299 = vmatprep.subr.mxu0 0.0
    %2300 = vmatpush1.msra.mxu0 %v2041
    %2301 = vmatprep.subr.mxu0 0.0
    %2302 = vmatpush1.msra.mxu0 %v2042
    %2303 = vmatprep.subr.mxu0 0.0
    %2304 = vmatpush1.msra.mxu0 %v2043
    %2305 = vmatprep.subr.mxu0 0.0
    %2306 = vmatpush1.msra.mxu0 %v2044
    %2307 = vmatprep.subr.mxu0 0.0
    %2308 = vmatpush1.msra.mxu0 %v2045
    %2309 = vmatprep.subr.mxu0 0.0
    %2310 = vmatpush1.msra.mxu0 %v2046
    %2311 = vmatprep.subr.mxu0 0.0
    %2312 = vmatpush1.msra.mxu0 %v2047
    %2313 = vmatprep.subr.mxu0 0.0
    %2314 = vmatpush1.msra.mxu0 %v2048
    %2315 = vmatprep.subr.mxu0 0.0
    %2316 = vmatpush1.msra.mxu0 %v2049
    %2317 = vmatprep.subr.mxu0 0.0
    %2318 = vmatpush1.msra.mxu0 %v2050
    %2319 = vmatprep.subr.mxu0 0.0
    %2320 = vmatpush1.msra.mxu0 %v2051
    %2321 = vmatprep.subr.mxu0 0.0
    %2322 = vmatpush1.msra.mxu0 %v2052
    %2323 = vmatprep.subr.mxu0 0.0
    %2324 = vmatpush1.msra.mxu0 %v2053
    %2325 = vmatprep.subr.mxu0 0.0
    %2326 = vmatpush1.msra.mxu0 %v2054
    %2327 = vmatprep.subr.mxu0 0.0
    %2328 = vmatpush1.msra.mxu0 %v2055
    %2329 = vmatprep.subr.mxu0 0.0
    %2330 = vmatpush1.msra.mxu0 %v2056
    %2331 = vmatprep.subr.mxu0 0.0
    %2332 = vmatpush1.msra.mxu0 %v2057
    %2333 = vmatprep.subr.mxu0 0.0
    %2334 = vmatpush1.msra.mxu0 %v2058
    %2335 = vmatprep.subr.mxu0 0.0
    %2336 = vmatpush1.msra.mxu0 %v2059
    %2337 = vmatprep.subr.mxu0 0.0
    %2338 = vmatpush1.msra.mxu0 %v2060
    %2339 = vmatprep.subr.mxu0 0.0
    %2340 = vmatpush1.msra.mxu0 %v2061
    %2341 = vmatprep.subr.mxu0 0.0
    %2342 = vmatpush1.msra.mxu0 %v2062
    %2343 = vmatprep.subr.mxu0 0.0
    %2344 = vmatpush1.msra.mxu0 %v2063
    %2345 = vmatprep.subr.mxu0 0.0
    %2346 = vmatpush1.msra.mxu0 %v2064
    %2347 = vmatprep.subr.mxu0 0.0
    %2348 = vmatpush1.msra.mxu0 %v2065
    %2349 = vmatprep.subr.mxu0 0.0
    %2350 = vmatpush1.msra.mxu0 %v2066
    %2351 = vmatprep.subr.mxu0 0.0
    %2352 = vmatpush1.msra.mxu0 %v2067
    %2353 = vmatprep.subr.mxu0 0.0
    %2354 = vmatpush1.msra.mxu0 %v2068
    %2355 = vmatprep.subr.mxu0 0.0
    %2356 = vmatpush1.msra.mxu0 %v2069
    %2357 = vmatprep.subr.mxu0 0.0
    %2358 = vmatpush1.msra.mxu0 %v2070
    %2359 = vmatprep.subr.mxu0 0.0
    %2360 = vmatpush1.msra.mxu0 %v2071
    %2361 = vmatprep.subr.mxu0 0.0
    %2362 = vmatpush1.msra.mxu0 %v2072
    %2363 = vmatprep.mubr.f32.mxu0 %v1942
    %2364 = vmatmul.mubr.f32.gmra.mrb[0].mxu0 %v1941
    %v2365 = vpop.f32.mrb[0].mxu0
    %v2366 = vadd.f32 %v2296, %v2365
    %v2367 = vpop.f32.mrb[0].mxu0
    %2368 = vdwg.mxu0
    %2369 = vmatprep.subr.mxu0 0.0
    %2370 = vmatpush1.msra.mxu0 %v2073
    %2371 = vmatprep.subr.mxu0 0.0
    %2372 = vmatpush1.msra.mxu0 %v2074
    %2373 = vmatprep.subr.mxu0 0.0
    %2374 = vmatpush1.msra.mxu0 %v2075
    %2375 = vmatprep.subr.mxu0 0.0
    %2376 = vmatpush1.msra.mxu0 %v2076
    %2377 = vmatprep.subr.mxu0 0.0
    %2378 = vmatpush1.msra.mxu0 %v2077
    %2379 = vmatprep.subr.mxu0 0.0
    %2380 = vmatpush1.msra.mxu0 %v2078
    %2381 = vmatprep.subr.mxu0 0.0
    %2382 = vmatpush1.msra.mxu0 %v2079
    %2383 = vmatprep.subr.mxu0 0.0
    %2384 = vmatpush1.msra.mxu0 %v2080
    %2385 = vmatprep.subr.mxu0 0.0
    %2386 = vmatpush1.msra.mxu0 %v2081
    %2387 = vmatprep.subr.mxu0 0.0
    %2388 = vmatpush1.msra.mxu0 %v2082
    %2389 = vmatprep.subr.mxu0 0.0
    %2390 = vmatpush1.msra.mxu0 %v2083
    %2391 = vmatprep.subr.mxu0 0.0
    %2392 = vmatpush1.msra.mxu0 %v2084
    %2393 = vmatprep.subr.mxu0 0.0
    %2394 = vmatpush1.msra.mxu0 %v2085
    %2395 = vmatprep.subr.mxu0 0.0
    %2396 = vmatpush1.msra.mxu0 %v2086
    %2397 = vmatprep.subr.mxu0 0.0
    %2398 = vmatpush1.msra.mxu0 %v2087
    %2399 = vmatprep.subr.mxu0 0.0
    %2400 = vmatpush1.msra.mxu0 %v2088
    %2401 = vmatprep.subr.mxu0 0.0
    %2402 = vmatpush1.msra.mxu0 0.0
    %2403 = vmatprep.subr.mxu0 0.0
    %2404 = vmatpush1.msra.mxu0 0.0
    %2405 = vmatprep.subr.mxu0 0.0
    %2406 = vmatpush1.msra.mxu0 0.0
    %2407 = vmatprep.subr.mxu0 0.0
    %2408 = vmatpush1.msra.mxu0 0.0
    %2409 = vmatprep.subr.mxu0 0.0
    %2410 = vmatpush1.msra.mxu0 0.0
    %2411 = vmatprep.subr.mxu0 0.0
    %2412 = vmatpush1.msra.mxu0 0.0
    %2413 = vmatprep.subr.mxu0 0.0
    %2414 = vmatpush1.msra.mxu0 0.0
    %2415 = vmatprep.subr.mxu0 0.0
    %2416 = vmatpush1.msra.mxu0 0.0
    %2417 = vmatprep.subr.mxu0 0.0
    %2418 = vmatpush1.msra.mxu0 0.0
    %2419 = vmatprep.subr.mxu0 0.0
    %2420 = vmatpush1.msra.mxu0 0.0
    %2421 = vmatprep.subr.mxu0 0.0
    %2422 = vmatpush1.msra.mxu0 0.0
    %2423 = vmatprep.subr.mxu0 0.0
    %2424 = vmatpush1.msra.mxu0 0.0
    %2425 = vmatprep.subr.mxu0 0.0
    %2426 = vmatpush1.msra.mxu0 0.0
    %2427 = vmatprep.subr.mxu0 0.0
    %2428 = vmatpush1.msra.mxu0 0.0
    %2429 = vmatprep.subr.mxu0 0.0
    %2430 = vmatpush1.msra.mxu0 0.0
    %2431 = vmatprep.subr.mxu0 0.0
    %2432 = vmatpush1.msra.mxu0 0.0
    %2433 = vmatprep.mubr.f32.mxu0 0.0
    %2434 = vmatmul.mubr.f32.gmra.mrb[0].mxu0 %v1943
    %v2435 = vpop.f32.mrb[0].mxu0
    %v2436 = vadd.f32 %v2366, %v2435
    %v2437 = vpop.f32.mrb[0].mxu0
    %2438 = vdwg.mxu0
    %vm2439 = vcmask 261120
    %2440 = vst.msk [vmem:[#allocation2 + $0x8] sm:$0xff] %vm2439, %v2436
    %v2441 = vld [vmem:[#allocation2] sm:$0xff]
    %v2442 = vld [vmem:[#allocation2 + $0x8] sm:$0xff]
    %s2443 = scalar_lea.vmem %s4, 3
    %v2444 = vld [vmem:[%s2443] ss:$8 sm:$0x3]
    %v2446 = vlaneseq
    %v2447 = vshrl.u32 %v2446, 7
    %v2448 = vsub.s32 0, %v2447
    %v2449 = vrot.slane %v2444, %v2448
    %v2450 = vlaneseq
    %v2451 = vshrl.u32 %v2450, 7
    %v2452 = vsub.s32 1, %v2451
    %v2453 = vrot.slane %v2444, %v2452
    %v2456 = vmul.f32 %v2441, %v2449
    %v2457 = vmul.f32 %v2442, %v2453
    %s2458 = scalar_lea.vmem %s5, 3
    %v2459 = vld [vmem:[%s2458] ss:$8 sm:$0x3]
    %v2461 = vlaneseq
    %v2462 = vshrl.u32 %v2461, 7
    %v2463 = vsub.s32 0, %v2462
    %v2464 = vrot.slane %v2459, %v2463
    %v2465 = vlaneseq
    %v2466 = vshrl.u32 %v2465, 7
    %v2467 = vsub.s32 1, %v2466
    %v2468 = vrot.slane %v2459, %v2467
    %v2471 = vadd.f32 %v2456, %v2464
    %v2472 = vadd.f32 %v2457, %v2468
    %v2473 = vmax.f32 %v2471, 0.0
    %v2474 = vmax.f32 %v2472, 0.0
    %s2475 = scalar_lea.vmem %s6, 768
    %v2476 = vld [vmem:[%s2475] sm:$0xff]
    %v2477 = vld [vmem:[%s2475 + $0x8] sm:$0xff]
    %v2478 = vld [vmem:[%s2475 + $0x10] sm:$0xff]
    %v2479 = vld [vmem:[%s2475 + $0x18] sm:$0xff]
    %v2480 = vld [vmem:[%s2475 + $0x20] sm:$0xff]
    %v2481 = vld [vmem:[%s2475 + $0x28] sm:$0xff]
    %v2482 = vld [vmem:[%s2475 + $0x30] sm:$0xff]
    %v2483 = vld [vmem:[%s2475 + $0x38] sm:$0xff]
    %v2484 = vld [vmem:[%s2475 + $0x40] sm:$0xff]
    %v2485 = vld [vmem:[%s2475 + $0x48] sm:$0xff]
    %v2486 = vld [vmem:[%s2475 + $0x50] sm:$0xff]
    %v2487 = vld [vmem:[%s2475 + $0x58] sm:$0xff]
    %v2488 = vld [vmem:[%s2475 + $0x60] sm:$0xff]
    %v2489 = vld [vmem:[%s2475 + $0x68] sm:$0xff]
    %v2490 = vld [vmem:[%s2475 + $0x70] sm:$0xff]
    %v2491 = vld [vmem:[%s2475 + $0x78] sm:$0xff]
    %v2492 = vld [vmem:[%s2475 + $0x80] sm:$0xff]
    %v2493 = vld [vmem:[%s2475 + $0x88] sm:$0xff]
    %v2494 = vld [vmem:[%s2475 + $0x90] sm:$0xff]
    %v2495 = vld [vmem:[%s2475 + $0x98] sm:$0xff]
    %v2496 = vld [vmem:[%s2475 + $0xa0] sm:$0xff]
    %v2497 = vld [vmem:[%s2475 + $0xa8] sm:$0xff]
    %v2498 = vld [vmem:[%s2475 + $0xb0] sm:$0xff]
    %v2499 = vld [vmem:[%s2475 + $0xb8] sm:$0xff]
    %v2500 = vld [vmem:[%s2475 + $0xc0] sm:$0xff]
    %v2501 = vld [vmem:[%s2475 + $0xc8] sm:$0xff]
    %v2502 = vld [vmem:[%s2475 + $0xd0] sm:$0xff]
    %v2503 = vld [vmem:[%s2475 + $0xd8] sm:$0xff]
    %v2504 = vld [vmem:[%s2475 + $0xe0] sm:$0xff]
    %v2505 = vld [vmem:[%s2475 + $0xe8] sm:$0xff]
    %v2506 = vld [vmem:[%s2475 + $0xf0] sm:$0xff]
    %v2507 = vld [vmem:[%s2475 + $0xf8] sm:$0xff]
    %2508 = vmatprep.subr.mxu0 0.0
    %2509 = vmatpush1.msra.mxu0 %v2476
    %2510 = vmatprep.subr.mxu0 0.0
    %2511 = vmatpush1.msra.mxu0 %v2477
    %2512 = vmatprep.subr.mxu0 0.0
    %2513 = vmatpush1.msra.mxu0 %v2478
    %2514 = vmatprep.subr.mxu0 0.0
    %2515 = vmatpush1.msra.mxu0 %v2479
    %2516 = vmatprep.subr.mxu0 0.0
    %2517 = vmatpush1.msra.mxu0 %v2480
    %2518 = vmatprep.subr.mxu0 0.0
    %2519 = vmatpush1.msra.mxu0 %v2481
    %2520 = vmatprep.subr.mxu0 0.0
    %2521 = vmatpush1.msra.mxu0 %v2482
    %2522 = vmatprep.subr.mxu0 0.0
    %2523 = vmatpush1.msra.mxu0 %v2483
    %2524 = vmatprep.subr.mxu0 0.0
    %2525 = vmatpush1.msra.mxu0 %v2484
    %2526 = vmatprep.subr.mxu0 0.0
    %2527 = vmatpush1.msra.mxu0 %v2485
    %2528 = vmatprep.subr.mxu0 0.0
    %2529 = vmatpush1.msra.mxu0 %v2486
    %2530 = vmatprep.subr.mxu0 0.0
    %2531 = vmatpush1.msra.mxu0 %v2487
    %2532 = vmatprep.subr.mxu0 0.0
    %2533 = vmatpush1.msra.mxu0 %v2488
    %2534 = vmatprep.subr.mxu0 0.0
    %2535 = vmatpush1.msra.mxu0 %v2489
    %2536 = vmatprep.subr.mxu0 0.0
    %2537 = vmatpush1.msra.mxu0 %v2490
    %2538 = vmatprep.subr.mxu0 0.0
    %2539 = vmatpush1.msra.mxu0 %v2491
    %2540 = vmatprep.subr.mxu0 0.0
    %2541 = vmatpush1.msra.mxu0 %v2492
    %2542 = vmatprep.subr.mxu0 0.0
    %2543 = vmatpush1.msra.mxu0 %v2493
    %2544 = vmatprep.subr.mxu0 0.0
    %2545 = vmatpush1.msra.mxu0 %v2494
    %2546 = vmatprep.subr.mxu0 0.0
    %2547 = vmatpush1.msra.mxu0 %v2495
    %2548 = vmatprep.subr.mxu0 0.0
    %2549 = vmatpush1.msra.mxu0 %v2496
    %2550 = vmatprep.subr.mxu0 0.0
    %2551 = vmatpush1.msra.mxu0 %v2497
    %2552 = vmatprep.subr.mxu0 0.0
    %2553 = vmatpush1.msra.mxu0 %v2498
    %2554 = vmatprep.subr.mxu0 0.0
    %2555 = vmatpush1.msra.mxu0 %v2499
    %2556 = vmatprep.subr.mxu0 0.0
    %2557 = vmatpush1.msra.mxu0 %v2500
    %2558 = vmatprep.subr.mxu0 0.0
    %2559 = vmatpush1.msra.mxu0 %v2501
    %2560 = vmatprep.subr.mxu0 0.0
    %2561 = vmatpush1.msra.mxu0 %v2502
    %2562 = vmatprep.subr.mxu0 0.0
    %2563 = vmatpush1.msra.mxu0 %v2503
    %2564 = vmatprep.subr.mxu0 0.0
    %2565 = vmatpush1.msra.mxu0 %v2504
    %2566 = vmatprep.subr.mxu0 0.0
    %2567 = vmatpush1.msra.mxu0 %v2505
    %2568 = vmatprep.subr.mxu0 0.0
    %2569 = vmatpush1.msra.mxu0 %v2506
    %2570 = vmatprep.subr.mxu0 0.0
    %2571 = vmatpush1.msra.mxu0 %v2507
    %2572 = vmatprep.mubr.f32.mxu0 %v2474
    %2573 = vmatmul.mubr.f32.gmra.mrb[0].mxu0 %v2473
    %v2574 = vpop.f32.mrb[0].mxu0
    %v2575 = vadd.f32 0.0, %v2574
    %v2576 = vpop.f32.mrb[0].mxu0
    %2577 = vdwg.mxu0
    %v2578 = vld [vmem:[%s7 + $0x3] sm:$0x1]
    %v2579 = vlaneseq
    %v2580 = vshrl.u32 %v2579, 7
    %v2581 = vsub.s32 0, %v2580
    %v2582 = vrot.slane %v2578, %v2581
    %v2583 = vmul.f32 %v2575, %v2582
    %v2584 = vld [vmem:[%s8 + $0x3] sm:$0x1]
    %v2585 = vlaneseq
    %v2586 = vshrl.u32 %v2585, 7
    %v2587 = vsub.s32 0, %v2586
    %v2588 = vrot.slane %v2584, %v2587
    %v2589 = vadd.f32 %v2583, %v2588
    %v2590 = vmax.f32 %v2589, 0.0
    %v2592 = vrot.slane %v2590, 2
    %v2594 = vrot.slane %v2590, 4
    %v2596 = vrot.slane %v2590, 6
    %v2598 = vrot.slane %v2592, 6
    %v2599 = vrot.slane %v2594, 6
    %v2600 = vrot.slane %v2596, 6
    %v2604 = vrot.slane %v2592, 4
    %v2605 = vrot.slane %v2594, 4
    %v2606 = vrot.slane %v2596, 4
    %v2610 = vrot.slane %v2592, 2
    %v2611 = vrot.slane %v2594, 2
    %v2612 = vrot.slane %v2596, 2
    %v2616 = vsel %vm328, 0.0, %v2596
    %v2617 = vsel %vm328, %v2590, %v2598
    %v2618 = vsel %vm328, %v2592, %v498
    %v2619 = vsel %vm328, 0.0, %v2599
    %v2620 = vsel %vm328, %v2594, %v2600
    %v2621 = vsel %vm328, %v2596, %v498
    %v2622 = vsel %vm331, %v522, %v2594
    %v2623 = vsel %vm331, %v522, %v2604
    %v2624 = vsel %vm331, %v2616, %v506
    %v2625 = vsel %vm331, %v2617, %v2605
    %v2626 = vsel %vm331, %v2618, %v2606
    %v2627 = vsel %vm331, %v2619, %v506
    %v2628 = vsel %vm331, %v2620, %v506
    %v2629 = vsel %vm331, %v2621, %v506
    %v2630 = vsel %vm335, %v529, %v2592
    %v2631 = vsel %vm335, %v2622, %v2610
    %v2632 = vsel %vm335, %v2623, %v515
    %v2633 = vsel %vm335, %v2624, %v2611
    %v2634 = vsel %vm335, %v2625, %v2612
    %v2635 = vsel %vm335, %v2626, %v515
    %v2636 = vsel %vm335, %v2627, %v515
    %v2637 = vsel %vm335, %v2628, %v515
    %v2638 = vsel %vm335, %v2629, %v515
    %s2639 = scalar_lea.vmem %s9, 3456
    %v2640 = vld [vmem:[%s2639] sm:$0xff]
    %v2641 = vld [vmem:[%s2639 + $0x8] sm:$0xff]
    %v2642 = vld [vmem:[%s2639 + $0x10] sm:$0xff]
    %v2643 = vld [vmem:[%s2639 + $0x18] sm:$0xff]
    %v2644 = vld [vmem:[%s2639 + $0x20] sm:$0xff]
    %v2645 = vld [vmem:[%s2639 + $0x28] sm:$0xff]
    %v2646 = vld [vmem:[%s2639 + $0x30] sm:$0xff]
    %v2647 = vld [vmem:[%s2639 + $0x38] sm:$0xff]
    %v2648 = vld [vmem:[%s2639 + $0x40] sm:$0xff]
    %v2649 = vld [vmem:[%s2639 + $0x48] sm:$0xff]
    %v2650 = vld [vmem:[%s2639 + $0x50] sm:$0xff]
    %v2651 = vld [vmem:[%s2639 + $0x58] sm:$0xff]
    %v2652 = vld [vmem:[%s2639 + $0x60] sm:$0xff]
    %v2653 = vld [vmem:[%s2639 + $0x68] sm:$0xff]
    %v2654 = vld [vmem:[%s2639 + $0x70] sm:$0xff]
    %v2655 = vld [vmem:[%s2639 + $0x78] sm:$0xff]
    %v2656 = vld [vmem:[%s2639 + $0x80] sm:$0xff]
    %v2657 = vld [vmem:[%s2639 + $0x88] sm:$0xff]
    %v2658 = vld [vmem:[%s2639 + $0x90] sm:$0xff]
    %v2659 = vld [vmem:[%s2639 + $0x98] sm:$0xff]
    %v2660 = vld [vmem:[%s2639 + $0xa0] sm:$0xff]
    %v2661 = vld [vmem:[%s2639 + $0xa8] sm:$0xff]
    %v2662 = vld [vmem:[%s2639 + $0xb0] sm:$0xff]
    %v2663 = vld [vmem:[%s2639 + $0xb8] sm:$0xff]
    %v2664 = vld [vmem:[%s2639 + $0xc0] sm:$0xff]
    %v2665 = vld [vmem:[%s2639 + $0xc8] sm:$0xff]
    %v2666 = vld [vmem:[%s2639 + $0xd0] sm:$0xff]
    %v2667 = vld [vmem:[%s2639 + $0xd8] sm:$0xff]
    %v2668 = vld [vmem:[%s2639 + $0xe0] sm:$0xff]
    %v2669 = vld [vmem:[%s2639 + $0xe8] sm:$0xff]
    %v2670 = vld [vmem:[%s2639 + $0xf0] sm:$0xff]
    %v2671 = vld [vmem:[%s2639 + $0xf8] sm:$0xff]
    %v2672 = vld [vmem:[%s2639 + $0x100] sm:$0xff]
    %v2673 = vld [vmem:[%s2639 + $0x108] sm:$0xff]
    %v2674 = vld [vmem:[%s2639 + $0x110] sm:$0xff]
    %v2675 = vld [vmem:[%s2639 + $0x118] sm:$0xff]
    %v2676 = vld [vmem:[%s2639 + $0x120] sm:$0xff]
    %v2677 = vld [vmem:[%s2639 + $0x128] sm:$0xff]
    %v2678 = vld [vmem:[%s2639 + $0x130] sm:$0xff]
    %v2679 = vld [vmem:[%s2639 + $0x138] sm:$0xff]
    %v2680 = vld [vmem:[%s2639 + $0x140] sm:$0xff]
    %v2681 = vld [vmem:[%s2639 + $0x148] sm:$0xff]
    %v2682 = vld [vmem:[%s2639 + $0x150] sm:$0xff]
    %v2683 = vld [vmem:[%s2639 + $0x158] sm:$0xff]
    %v2684 = vld [vmem:[%s2639 + $0x160] sm:$0xff]
    %v2685 = vld [vmem:[%s2639 + $0x168] sm:$0xff]
    %v2686 = vld [vmem:[%s2639 + $0x170] sm:$0xff]
    %v2687 = vld [vmem:[%s2639 + $0x178] sm:$0xff]
    %v2688 = vld [vmem:[%s2639 + $0x180] sm:$0xff]
    %v2689 = vld [vmem:[%s2639 + $0x188] sm:$0xff]
    %v2690 = vld [vmem:[%s2639 + $0x190] sm:$0xff]
    %v2691 = vld [vmem:[%s2639 + $0x198] sm:$0xff]
    %v2692 = vld [vmem:[%s2639 + $0x1a0] sm:$0xff]
    %v2693 = vld [vmem:[%s2639 + $0x1a8] sm:$0xff]
    %v2694 = vld [vmem:[%s2639 + $0x1b0] sm:$0xff]
    %v2695 = vld [vmem:[%s2639 + $0x1b8] sm:$0xff]
    %v2696 = vld [vmem:[%s2639 + $0x1c0] sm:$0xff]
    %v2697 = vld [vmem:[%s2639 + $0x1c8] sm:$0xff]
    %v2698 = vld [vmem:[%s2639 + $0x1d0] sm:$0xff]
    %v2699 = vld [vmem:[%s2639 + $0x1d8] sm:$0xff]
    %v2700 = vld [vmem:[%s2639 + $0x1e0] sm:$0xff]
    %v2701 = vld [vmem:[%s2639 + $0x1e8] sm:$0xff]
    %v2702 = vld [vmem:[%s2639 + $0x1f0] sm:$0xff]
    %v2703 = vld [vmem:[%s2639 + $0x1f8] sm:$0xff]
    %v2704 = vld [vmem:[%s2639 + $0x200] sm:$0xff]
    %v2705 = vld [vmem:[%s2639 + $0x208] sm:$0xff]
    %v2706 = vld [vmem:[%s2639 + $0x210] sm:$0xff]
    %v2707 = vld [vmem:[%s2639 + $0x218] sm:$0xff]
    %v2708 = vld [vmem:[%s2639 + $0x220] sm:$0xff]
    %v2709 = vld [vmem:[%s2639 + $0x228] sm:$0xff]
    %v2710 = vld [vmem:[%s2639 + $0x230] sm:$0xff]
    %v2711 = vld [vmem:[%s2639 + $0x238] sm:$0xff]
    %v2712 = vld [vmem:[%s2639 + $0x240] sm:$0xff]
    %v2713 = vld [vmem:[%s2639 + $0x248] sm:$0xff]
    %v2714 = vld [vmem:[%s2639 + $0x250] sm:$0xff]
    %v2715 = vld [vmem:[%s2639 + $0x258] sm:$0xff]
    %v2716 = vld [vmem:[%s2639 + $0x260] sm:$0xff]
    %v2717 = vld [vmem:[%s2639 + $0x268] sm:$0xff]
    %v2718 = vld [vmem:[%s2639 + $0x270] sm:$0xff]
    %v2719 = vld [vmem:[%s2639 + $0x278] sm:$0xff]
    %v2720 = vld [vmem:[%s2639 + $0x280] sm:$0xff]
    %v2721 = vld [vmem:[%s2639 + $0x288] sm:$0xff]
    %v2722 = vld [vmem:[%s2639 + $0x290] sm:$0xff]
    %v2723 = vld [vmem:[%s2639 + $0x298] sm:$0xff]
    %v2724 = vld [vmem:[%s2639 + $0x2a0] sm:$0xff]
    %v2725 = vld [vmem:[%s2639 + $0x2a8] sm:$0xff]
    %v2726 = vld [vmem:[%s2639 + $0x2b0] sm:$0xff]
    %v2727 = vld [vmem:[%s2639 + $0x2b8] sm:$0xff]
    %v2728 = vld [vmem:[%s2639 + $0x2c0] sm:$0xff]
    %v2729 = vld [vmem:[%s2639 + $0x2c8] sm:$0xff]
    %v2730 = vld [vmem:[%s2639 + $0x2d0] sm:$0xff]
    %v2731 = vld [vmem:[%s2639 + $0x2d8] sm:$0xff]
    %v2732 = vld [vmem:[%s2639 + $0x2e0] sm:$0xff]
    %v2733 = vld [vmem:[%s2639 + $0x2e8] sm:$0xff]
    %v2734 = vld [vmem:[%s2639 + $0x2f0] sm:$0xff]
    %v2735 = vld [vmem:[%s2639 + $0x2f8] sm:$0xff]
    %v2736 = vld [vmem:[%s2639 + $0x300] sm:$0xff]
    %v2737 = vld [vmem:[%s2639 + $0x308] sm:$0xff]
    %v2738 = vld [vmem:[%s2639 + $0x310] sm:$0xff]
    %v2739 = vld [vmem:[%s2639 + $0x318] sm:$0xff]
    %v2740 = vld [vmem:[%s2639 + $0x320] sm:$0xff]
    %v2741 = vld [vmem:[%s2639 + $0x328] sm:$0xff]
    %v2742 = vld [vmem:[%s2639 + $0x330] sm:$0xff]
    %v2743 = vld [vmem:[%s2639 + $0x338] sm:$0xff]
    %v2744 = vld [vmem:[%s2639 + $0x340] sm:$0xff]
    %v2745 = vld [vmem:[%s2639 + $0x348] sm:$0xff]
    %v2746 = vld [vmem:[%s2639 + $0x350] sm:$0xff]
    %v2747 = vld [vmem:[%s2639 + $0x358] sm:$0xff]
    %v2748 = vld [vmem:[%s2639 + $0x360] sm:$0xff]
    %v2749 = vld [vmem:[%s2639 + $0x368] sm:$0xff]
    %v2750 = vld [vmem:[%s2639 + $0x370] sm:$0xff]
    %v2751 = vld [vmem:[%s2639 + $0x378] sm:$0xff]
    %v2752 = vld [vmem:[%s2639 + $0x380] sm:$0xff]
    %v2753 = vld [vmem:[%s2639 + $0x388] sm:$0xff]
    %v2754 = vld [vmem:[%s2639 + $0x390] sm:$0xff]
    %v2755 = vld [vmem:[%s2639 + $0x398] sm:$0xff]
    %v2756 = vld [vmem:[%s2639 + $0x3a0] sm:$0xff]
    %v2757 = vld [vmem:[%s2639 + $0x3a8] sm:$0xff]
    %v2758 = vld [vmem:[%s2639 + $0x3b0] sm:$0xff]
    %v2759 = vld [vmem:[%s2639 + $0x3b8] sm:$0xff]
    %v2760 = vld [vmem:[%s2639 + $0x3c0] sm:$0xff]
    %v2761 = vld [vmem:[%s2639 + $0x3c8] sm:$0xff]
    %v2762 = vld [vmem:[%s2639 + $0x3d0] sm:$0xff]
    %v2763 = vld [vmem:[%s2639 + $0x3d8] sm:$0xff]
    %v2764 = vld [vmem:[%s2639 + $0x3e0] sm:$0xff]
    %v2765 = vld [vmem:[%s2639 + $0x3e8] sm:$0xff]
    %v2766 = vld [vmem:[%s2639 + $0x3f0] sm:$0xff]
    %v2767 = vld [vmem:[%s2639 + $0x3f8] sm:$0xff]
    %v2768 = vld [vmem:[%s2639 + $0x400] sm:$0xff]
    %v2769 = vld [vmem:[%s2639 + $0x408] sm:$0xff]
    %v2770 = vld [vmem:[%s2639 + $0x410] sm:$0xff]
    %v2771 = vld [vmem:[%s2639 + $0x418] sm:$0xff]
    %v2772 = vld [vmem:[%s2639 + $0x420] sm:$0xff]
    %v2773 = vld [vmem:[%s2639 + $0x428] sm:$0xff]
    %v2774 = vld [vmem:[%s2639 + $0x430] sm:$0xff]
    %v2775 = vld [vmem:[%s2639 + $0x438] sm:$0xff]
    %v2776 = vld [vmem:[%s2639 + $0x440] sm:$0xff]
    %v2777 = vld [vmem:[%s2639 + $0x448] sm:$0xff]
    %v2778 = vld [vmem:[%s2639 + $0x450] sm:$0xff]
    %v2779 = vld [vmem:[%s2639 + $0x458] sm:$0xff]
    %v2780 = vld [vmem:[%s2639 + $0x460] sm:$0xff]
    %v2781 = vld [vmem:[%s2639 + $0x468] sm:$0xff]
    %v2782 = vld [vmem:[%s2639 + $0x470] sm:$0xff]
    %v2783 = vld [vmem:[%s2639 + $0x478] sm:$0xff]
    %2784 = vmatprep.subr.mxu0 0.0
    %2785 = vmatpush1.msra.mxu0 %v2640
    %2786 = vmatprep.subr.mxu0 0.0
    %2787 = vmatpush1.msra.mxu0 %v2641
    %2788 = vmatprep.subr.mxu0 0.0
    %2789 = vmatpush1.msra.mxu0 %v2642
    %2790 = vmatprep.subr.mxu0 0.0
    %2791 = vmatpush1.msra.mxu0 %v2643
    %2792 = vmatprep.subr.mxu0 0.0
    %2793 = vmatpush1.msra.mxu0 %v2644
    %2794 = vmatprep.subr.mxu0 0.0
    %2795 = vmatpush1.msra.mxu0 %v2645
    %2796 = vmatprep.subr.mxu0 0.0
    %2797 = vmatpush1.msra.mxu0 %v2646
    %2798 = vmatprep.subr.mxu0 0.0
    %2799 = vmatpush1.msra.mxu0 %v2647
    %2800 = vmatprep.subr.mxu0 0.0
    %2801 = vmatpush1.msra.mxu0 %v2648
    %2802 = vmatprep.subr.mxu0 0.0
    %2803 = vmatpush1.msra.mxu0 %v2649
    %2804 = vmatprep.subr.mxu0 0.0
    %2805 = vmatpush1.msra.mxu0 %v2650
    %2806 = vmatprep.subr.mxu0 0.0
    %2807 = vmatpush1.msra.mxu0 %v2651
    %2808 = vmatprep.subr.mxu0 0.0
    %2809 = vmatpush1.msra.mxu0 %v2652
    %2810 = vmatprep.subr.mxu0 0.0
    %2811 = vmatpush1.msra.mxu0 %v2653
    %2812 = vmatprep.subr.mxu0 0.0
    %2813 = vmatpush1.msra.mxu0 %v2654
    %2814 = vmatprep.subr.mxu0 0.0
    %2815 = vmatpush1.msra.mxu0 %v2655
    %2816 = vmatprep.subr.mxu0 0.0
    %2817 = vmatpush1.msra.mxu0 %v2656
    %2818 = vmatprep.subr.mxu0 0.0
    %2819 = vmatpush1.msra.mxu0 %v2657
    %2820 = vmatprep.subr.mxu0 0.0
    %2821 = vmatpush1.msra.mxu0 %v2658
    %2822 = vmatprep.subr.mxu0 0.0
    %2823 = vmatpush1.msra.mxu0 %v2659
    %2824 = vmatprep.subr.mxu0 0.0
    %2825 = vmatpush1.msra.mxu0 %v2660
    %2826 = vmatprep.subr.mxu0 0.0
    %2827 = vmatpush1.msra.mxu0 %v2661
    %2828 = vmatprep.subr.mxu0 0.0
    %2829 = vmatpush1.msra.mxu0 %v2662
    %2830 = vmatprep.subr.mxu0 0.0
    %2831 = vmatpush1.msra.mxu0 %v2663
    %2832 = vmatprep.subr.mxu0 0.0
    %2833 = vmatpush1.msra.mxu0 %v2664
    %2834 = vmatprep.subr.mxu0 0.0
    %2835 = vmatpush1.msra.mxu0 %v2665
    %2836 = vmatprep.subr.mxu0 0.0
    %2837 = vmatpush1.msra.mxu0 %v2666
    %2838 = vmatprep.subr.mxu0 0.0
    %2839 = vmatpush1.msra.mxu0 %v2667
    %2840 = vmatprep.subr.mxu0 0.0
    %2841 = vmatpush1.msra.mxu0 %v2668
    %2842 = vmatprep.subr.mxu0 0.0
    %2843 = vmatpush1.msra.mxu0 %v2669
    %2844 = vmatprep.subr.mxu0 0.0
    %2845 = vmatpush1.msra.mxu0 %v2670
    %2846 = vmatprep.subr.mxu0 0.0
    %2847 = vmatpush1.msra.mxu0 %v2671
    %2848 = vmatprep.mubr.f32.mxu0 %v2631
    %2849 = vmatmul.mubr.f32.gmra.mrb[0].mxu0 %v2630
    %v2850 = vpop.f32.mrb[0].mxu0
    %v2851 = vadd.f32 0.0, %v2850
    %v2852 = vpop.f32.mrb[0].mxu0
    %2853 = vdwg.mxu0
    %2854 = vmatprep.subr.mxu0 0.0
    %2855 = vmatpush1.msra.mxu0 %v2672
    %2856 = vmatprep.subr.mxu0 0.0
    %2857 = vmatpush1.msra.mxu0 %v2673
    %2858 = vmatprep.subr.mxu0 0.0
    %2859 = vmatpush1.msra.mxu0 %v2674
    %2860 = vmatprep.subr.mxu0 0.0
    %2861 = vmatpush1.msra.mxu0 %v2675
    %2862 = vmatprep.subr.mxu0 0.0
    %2863 = vmatpush1.msra.mxu0 %v2676
    %2864 = vmatprep.subr.mxu0 0.0
    %2865 = vmatpush1.msra.mxu0 %v2677
    %2866 = vmatprep.subr.mxu0 0.0
    %2867 = vmatpush1.msra.mxu0 %v2678
    %2868 = vmatprep.subr.mxu0 0.0
    %2869 = vmatpush1.msra.mxu0 %v2679
    %2870 = vmatprep.subr.mxu0 0.0
    %2871 = vmatpush1.msra.mxu0 %v2680
    %2872 = vmatprep.subr.mxu0 0.0
    %2873 = vmatpush1.msra.mxu0 %v2681
    %2874 = vmatprep.subr.mxu0 0.0
    %2875 = vmatpush1.msra.mxu0 %v2682
    %2876 = vmatprep.subr.mxu0 0.0
    %2877 = vmatpush1.msra.mxu0 %v2683
    %2878 = vmatprep.subr.mxu0 0.0
    %2879 = vmatpush1.msra.mxu0 %v2684
    %2880 = vmatprep.subr.mxu0 0.0
    %2881 = vmatpush1.msra.mxu0 %v2685
    %2882 = vmatprep.subr.mxu0 0.0
    %2883 = vmatpush1.msra.mxu0 %v2686
    %2884 = vmatprep.subr.mxu0 0.0
    %2885 = vmatpush1.msra.mxu0 %v2687
    %2886 = vmatprep.subr.mxu0 0.0
    %2887 = vmatpush1.msra.mxu0 %v2688
    %2888 = vmatprep.subr.mxu0 0.0
    %2889 = vmatpush1.msra.mxu0 %v2689
    %2890 = vmatprep.subr.mxu0 0.0
    %2891 = vmatpush1.msra.mxu0 %v2690
    %2892 = vmatprep.subr.mxu0 0.0
    %2893 = vmatpush1.msra.mxu0 %v2691
    %2894 = vmatprep.subr.mxu0 0.0
    %2895 = vmatpush1.msra.mxu0 %v2692
    %2896 = vmatprep.subr.mxu0 0.0
    %2897 = vmatpush1.msra.mxu0 %v2693
    %2898 = vmatprep.subr.mxu0 0.0
    %2899 = vmatpush1.msra.mxu0 %v2694
    %2900 = vmatprep.subr.mxu0 0.0
    %2901 = vmatpush1.msra.mxu0 %v2695
    %2902 = vmatprep.subr.mxu0 0.0
    %2903 = vmatpush1.msra.mxu0 %v2696
    %2904 = vmatprep.subr.mxu0 0.0
    %2905 = vmatpush1.msra.mxu0 %v2697
    %2906 = vmatprep.subr.mxu0 0.0
    %2907 = vmatpush1.msra.mxu0 %v2698
    %2908 = vmatprep.subr.mxu0 0.0
    %2909 = vmatpush1.msra.mxu0 %v2699
    %2910 = vmatprep.subr.mxu0 0.0
    %2911 = vmatpush1.msra.mxu0 %v2700
    %2912 = vmatprep.subr.mxu0 0.0
    %2913 = vmatpush1.msra.mxu0 %v2701
    %2914 = vmatprep.subr.mxu0 0.0
    %2915 = vmatpush1.msra.mxu0 %v2702
    %2916 = vmatprep.subr.mxu0 0.0
    %2917 = vmatpush1.msra.mxu0 %v2703
    %2918 = vmatprep.mubr.f32.mxu0 %v2633
    %2919 = vmatmul.mubr.f32.gmra.mrb[0].mxu0 %v2632
    %v2920 = vpop.f32.mrb[0].mxu0
    %v2921 = vadd.f32 %v2851, %v2920
    %v2922 = vpop.f32.mrb[0].mxu0
    %2923 = vdwg.mxu0
    %2924 = vmatprep.subr.mxu0 0.0
    %2925 = vmatpush1.msra.mxu0 %v2704
    %2926 = vmatprep.subr.mxu0 0.0
    %2927 = vmatpush1.msra.mxu0 %v2705
    %2928 = vmatprep.subr.mxu0 0.0
    %2929 = vmatpush1.msra.mxu0 %v2706
    %2930 = vmatprep.subr.mxu0 0.0
    %2931 = vmatpush1.msra.mxu0 %v2707
    %2932 = vmatprep.subr.mxu0 0.0
    %2933 = vmatpush1.msra.mxu0 %v2708
    %2934 = vmatprep.subr.mxu0 0.0
    %2935 = vmatpush1.msra.mxu0 %v2709
    %2936 = vmatprep.subr.mxu0 0.0
    %2937 = vmatpush1.msra.mxu0 %v2710
    %2938 = vmatprep.subr.mxu0 0.0
    %2939 = vmatpush1.msra.mxu0 %v2711
    %2940 = vmatprep.subr.mxu0 0.0
    %2941 = vmatpush1.msra.mxu0 %v2712
    %2942 = vmatprep.subr.mxu0 0.0
    %2943 = vmatpush1.msra.mxu0 %v2713
    %2944 = vmatprep.subr.mxu0 0.0
    %2945 = vmatpush1.msra.mxu0 %v2714
    %2946 = vmatprep.subr.mxu0 0.0
    %2947 = vmatpush1.msra.mxu0 %v2715
    %2948 = vmatprep.subr.mxu0 0.0
    %2949 = vmatpush1.msra.mxu0 %v2716
    %2950 = vmatprep.subr.mxu0 0.0
    %2951 = vmatpush1.msra.mxu0 %v2717
    %2952 = vmatprep.subr.mxu0 0.0
    %2953 = vmatpush1.msra.mxu0 %v2718
    %2954 = vmatprep.subr.mxu0 0.0
    %2955 = vmatpush1.msra.mxu0 %v2719
    %2956 = vmatprep.subr.mxu0 0.0
    %2957 = vmatpush1.msra.mxu0 %v2720
    %2958 = vmatprep.subr.mxu0 0.0
    %2959 = vmatpush1.msra.mxu0 %v2721
    %2960 = vmatprep.subr.mxu0 0.0
    %2961 = vmatpush1.msra.mxu0 %v2722
    %2962 = vmatprep.subr.mxu0 0.0
    %2963 = vmatpush1.msra.mxu0 %v2723
    %2964 = vmatprep.subr.mxu0 0.0
    %2965 = vmatpush1.msra.mxu0 %v2724
    %2966 = vmatprep.subr.mxu0 0.0
    %2967 = vmatpush1.msra.mxu0 %v2725
    %2968 = vmatprep.subr.mxu0 0.0
    %2969 = vmatpush1.msra.mxu0 %v2726
    %2970 = vmatprep.subr.mxu0 0.0
    %2971 = vmatpush1.msra.mxu0 %v2727
    %2972 = vmatprep.subr.mxu0 0.0
    %2973 = vmatpush1.msra.mxu0 %v2728
    %2974 = vmatprep.subr.mxu0 0.0
    %2975 = vmatpush1.msra.mxu0 %v2729
    %2976 = vmatprep.subr.mxu0 0.0
    %2977 = vmatpush1.msra.mxu0 %v2730
    %2978 = vmatprep.subr.mxu0 0.0
    %2979 = vmatpush1.msra.mxu0 %v2731
    %2980 = vmatprep.subr.mxu0 0.0
    %2981 = vmatpush1.msra.mxu0 %v2732
    %2982 = vmatprep.subr.mxu0 0.0
    %2983 = vmatpush1.msra.mxu0 %v2733
    %2984 = vmatprep.subr.mxu0 0.0
    %2985 = vmatpush1.msra.mxu0 %v2734
    %2986 = vmatprep.subr.mxu0 0.0
    %2987 = vmatpush1.msra.mxu0 %v2735
    %2988 = vmatprep.mubr.f32.mxu0 %v2635
    %2989 = vmatmul.mubr.f32.gmra.mrb[0].mxu0 %v2634
    %v2990 = vpop.f32.mrb[0].mxu0
    %v2991 = vadd.f32 %v2921, %v2990
    %v2992 = vpop.f32.mrb[0].mxu0
    %2993 = vdwg.mxu0
    %2994 = vmatprep.subr.mxu0 0.0
    %2995 = vmatpush1.msra.mxu0 %v2736
    %2996 = vmatprep.subr.mxu0 0.0
    %2997 = vmatpush1.msra.mxu0 %v2737
    %2998 = vmatprep.subr.mxu0 0.0
    %2999 = vmatpush1.msra.mxu0 %v2738
    %3000 = vmatprep.subr.mxu0 0.0
    %3001 = vmatpush1.msra.mxu0 %v2739
    %3002 = vmatprep.subr.mxu0 0.0
    %3003 = vmatpush1.msra.mxu0 %v2740
    %3004 = vmatprep.subr.mxu0 0.0
    %3005 = vmatpush1.msra.mxu0 %v2741
    %3006 = vmatprep.subr.mxu0 0.0
    %3007 = vmatpush1.msra.mxu0 %v2742
    %3008 = vmatprep.subr.mxu0 0.0
    %3009 = vmatpush1.msra.mxu0 %v2743
    %3010 = vmatprep.subr.mxu0 0.0
    %3011 = vmatpush1.msra.mxu0 %v2744
    %3012 = vmatprep.subr.mxu0 0.0
    %3013 = vmatpush1.msra.mxu0 %v2745
    %3014 = vmatprep.subr.mxu0 0.0
    %3015 = vmatpush1.msra.mxu0 %v2746
    %3016 = vmatprep.subr.mxu0 0.0
    %3017 = vmatpush1.msra.mxu0 %v2747
    %3018 = vmatprep.subr.mxu0 0.0
    %3019 = vmatpush1.msra.mxu0 %v2748
    %3020 = vmatprep.subr.mxu0 0.0
    %3021 = vmatpush1.msra.mxu0 %v2749
    %3022 = vmatprep.subr.mxu0 0.0
    %3023 = vmatpush1.msra.mxu0 %v2750
    %3024 = vmatprep.subr.mxu0 0.0
    %3025 = vmatpush1.msra.mxu0 %v2751
    %3026 = vmatprep.subr.mxu0 0.0
    %3027 = vmatpush1.msra.mxu0 %v2752
    %3028 = vmatprep.subr.mxu0 0.0
    %3029 = vmatpush1.msra.mxu0 %v2753
    %3030 = vmatprep.subr.mxu0 0.0
    %3031 = vmatpush1.msra.mxu0 %v2754
    %3032 = vmatprep.subr.mxu0 0.0
    %3033 = vmatpush1.msra.mxu0 %v2755
    %3034 = vmatprep.subr.mxu0 0.0
    %3035 = vmatpush1.msra.mxu0 %v2756
    %3036 = vmatprep.subr.mxu0 0.0
    %3037 = vmatpush1.msra.mxu0 %v2757
    %3038 = vmatprep.subr.mxu0 0.0
    %3039 = vmatpush1.msra.mxu0 %v2758
    %3040 = vmatprep.subr.mxu0 0.0
    %3041 = vmatpush1.msra.mxu0 %v2759
    %3042 = vmatprep.subr.mxu0 0.0
    %3043 = vmatpush1.msra.mxu0 %v2760
    %3044 = vmatprep.subr.mxu0 0.0
    %3045 = vmatpush1.msra.mxu0 %v2761
    %3046 = vmatprep.subr.mxu0 0.0
    %3047 = vmatpush1.msra.mxu0 %v2762
    %3048 = vmatprep.subr.mxu0 0.0
    %3049 = vmatpush1.msra.mxu0 %v2763
    %3050 = vmatprep.subr.mxu0 0.0
    %3051 = vmatpush1.msra.mxu0 %v2764
    %3052 = vmatprep.subr.mxu0 0.0
    %3053 = vmatpush1.msra.mxu0 %v2765
    %3054 = vmatprep.subr.mxu0 0.0
    %3055 = vmatpush1.msra.mxu0 %v2766
    %3056 = vmatprep.subr.mxu0 0.0
    %3057 = vmatpush1.msra.mxu0 %v2767
    %3058 = vmatprep.mubr.f32.mxu0 %v2637
    %3059 = vmatmul.mubr.f32.gmra.mrb[0].mxu0 %v2636
    %v3060 = vpop.f32.mrb[0].mxu0
    %v3061 = vadd.f32 %v2991, %v3060
    %v3062 = vpop.f32.mrb[0].mxu0
    %3063 = vdwg.mxu0
    %3064 = vmatprep.subr.mxu0 0.0
    %3065 = vmatpush1.msra.mxu0 %v2768
    %3066 = vmatprep.subr.mxu0 0.0
    %3067 = vmatpush1.msra.mxu0 %v2769
    %3068 = vmatprep.subr.mxu0 0.0
    %3069 = vmatpush1.msra.mxu0 %v2770
    %3070 = vmatprep.subr.mxu0 0.0
    %3071 = vmatpush1.msra.mxu0 %v2771
    %3072 = vmatprep.subr.mxu0 0.0
    %3073 = vmatpush1.msra.mxu0 %v2772
    %3074 = vmatprep.subr.mxu0 0.0
    %3075 = vmatpush1.msra.mxu0 %v2773
    %3076 = vmatprep.subr.mxu0 0.0
    %3077 = vmatpush1.msra.mxu0 %v2774
    %3078 = vmatprep.subr.mxu0 0.0
    %3079 = vmatpush1.msra.mxu0 %v2775
    %3080 = vmatprep.subr.mxu0 0.0
    %3081 = vmatpush1.msra.mxu0 %v2776
    %3082 = vmatprep.subr.mxu0 0.0
    %3083 = vmatpush1.msra.mxu0 %v2777
    %3084 = vmatprep.subr.mxu0 0.0
    %3085 = vmatpush1.msra.mxu0 %v2778
    %3086 = vmatprep.subr.mxu0 0.0
    %3087 = vmatpush1.msra.mxu0 %v2779
    %3088 = vmatprep.subr.mxu0 0.0
    %3089 = vmatpush1.msra.mxu0 %v2780
    %3090 = vmatprep.subr.mxu0 0.0
    %3091 = vmatpush1.msra.mxu0 %v2781
    %3092 = vmatprep.subr.mxu0 0.0
    %3093 = vmatpush1.msra.mxu0 %v2782
    %3094 = vmatprep.subr.mxu0 0.0
    %3095 = vmatpush1.msra.mxu0 %v2783
    %3096 = vmatprep.subr.mxu0 0.0
    %3097 = vmatpush1.msra.mxu0 0.0
    %3098 = vmatprep.subr.mxu0 0.0
    %3099 = vmatpush1.msra.mxu0 0.0
    %3100 = vmatprep.subr.mxu0 0.0
    %3101 = vmatpush1.msra.mxu0 0.0
    %3102 = vmatprep.subr.mxu0 0.0
    %3103 = vmatpush1.msra.mxu0 0.0
    %3104 = vmatprep.subr.mxu0 0.0
    %3105 = vmatpush1.msra.mxu0 0.0
    %3106 = vmatprep.subr.mxu0 0.0
    %3107 = vmatpush1.msra.mxu0 0.0
    %3108 = vmatprep.subr.mxu0 0.0
    %3109 = vmatpush1.msra.mxu0 0.0
    %3110 = vmatprep.subr.mxu0 0.0
    %3111 = vmatpush1.msra.mxu0 0.0
    %3112 = vmatprep.subr.mxu0 0.0
    %3113 = vmatpush1.msra.mxu0 0.0
    %3114 = vmatprep.subr.mxu0 0.0
    %3115 = vmatpush1.msra.mxu0 0.0
    %3116 = vmatprep.subr.mxu0 0.0
    %3117 = vmatpush1.msra.mxu0 0.0
    %3118 = vmatprep.subr.mxu0 0.0
    %3119 = vmatpush1.msra.mxu0 0.0
    %3120 = vmatprep.subr.mxu0 0.0
    %3121 = vmatpush1.msra.mxu0 0.0
    %3122 = vmatprep.subr.mxu0 0.0
    %3123 = vmatpush1.msra.mxu0 0.0
    %3124 = vmatprep.subr.mxu0 0.0
    %3125 = vmatpush1.msra.mxu0 0.0
    %3126 = vmatprep.subr.mxu0 0.0
    %3127 = vmatpush1.msra.mxu0 0.0
    %3128 = vmatprep.mubr.f32.mxu0 0.0
    %3129 = vmatmul.mubr.f32.gmra.mrb[0].mxu0 %v2638
    %v3130 = vpop.f32.mrb[0].mxu0
    %v3131 = vadd.f32 %v3061, %v3130
    %v3132 = vpop.f32.mrb[0].mxu0
    %3133 = vdwg.mxu0
    %3135 = vrot.lane.b32.xlu0 %v3131, 32
    %v3136 = vpop.permute.xlu0 %3135
    %vm3138 = vcmask 523520
    %3139 = vst.msk [vmem:[#allocation2 + $0x8] sm:$0xff] %vm3138, %v3136
    %v3140 = vld [vmem:[#allocation2] sm:$0xff]
    %v3141 = vld [vmem:[#allocation2 + $0x8] sm:$0xff]
    %s3142 = scalar_lea.vmem %s4, 4
    %v3143 = vld [vmem:[%s3142] ss:$8 sm:$0x3]
    %v3145 = vlaneseq
    %v3146 = vshrl.u32 %v3145, 7
    %v3147 = vsub.s32 0, %v3146
    %v3148 = vrot.slane %v3143, %v3147
    %v3149 = vlaneseq
    %v3150 = vshrl.u32 %v3149, 7
    %v3151 = vsub.s32 1, %v3150
    %v3152 = vrot.slane %v3143, %v3151
    %v3155 = vmul.f32 %v3140, %v3148
    %v3156 = vmul.f32 %v3141, %v3152
    %s3157 = scalar_lea.vmem %s5, 4
    %v3158 = vld [vmem:[%s3157] ss:$8 sm:$0x3]
    %v3160 = vlaneseq
    %v3161 = vshrl.u32 %v3160, 7
    %v3162 = vsub.s32 0, %v3161
    %v3163 = vrot.slane %v3158, %v3162
    %v3164 = vlaneseq
    %v3165 = vshrl.u32 %v3164, 7
    %v3166 = vsub.s32 1, %v3165
    %v3167 = vrot.slane %v3158, %v3166
    %v3170 = vadd.f32 %v3155, %v3163
    %v3171 = vadd.f32 %v3156, %v3167
    %v3172 = vmax.f32 %v3170, 0.0
    %v3173 = vmax.f32 %v3171, 0.0
    %s3174 = scalar_lea.vmem %s6, 1024
    %v3175 = vld [vmem:[%s3174] sm:$0xff]
    %v3176 = vld [vmem:[%s3174 + $0x8] sm:$0xff]
    %v3177 = vld [vmem:[%s3174 + $0x10] sm:$0xff]
    %v3178 = vld [vmem:[%s3174 + $0x18] sm:$0xff]
    %v3179 = vld [vmem:[%s3174 + $0x20] sm:$0xff]
    %v3180 = vld [vmem:[%s3174 + $0x28] sm:$0xff]
    %v3181 = vld [vmem:[%s3174 + $0x30] sm:$0xff]
    %v3182 = vld [vmem:[%s3174 + $0x38] sm:$0xff]
    %v3183 = vld [vmem:[%s3174 + $0x40] sm:$0xff]
    %v3184 = vld [vmem:[%s3174 + $0x48] sm:$0xff]
    %v3185 = vld [vmem:[%s3174 + $0x50] sm:$0xff]
    %v3186 = vld [vmem:[%s3174 + $0x58] sm:$0xff]
    %v3187 = vld [vmem:[%s3174 + $0x60] sm:$0xff]
    %v3188 = vld [vmem:[%s3174 + $0x68] sm:$0xff]
    %v3189 = vld [vmem:[%s3174 + $0x70] sm:$0xff]
    %v3190 = vld [vmem:[%s3174 + $0x78] sm:$0xff]
    %v3191 = vld [vmem:[%s3174 + $0x80] sm:$0xff]
    %v3192 = vld [vmem:[%s3174 + $0x88] sm:$0xff]
    %v3193 = vld [vmem:[%s3174 + $0x90] sm:$0xff]
    %v3194 = vld [vmem:[%s3174 + $0x98] sm:$0xff]
    %v3195 = vld [vmem:[%s3174 + $0xa0] sm:$0xff]
    %v3196 = vld [vmem:[%s3174 + $0xa8] sm:$0xff]
    %v3197 = vld [vmem:[%s3174 + $0xb0] sm:$0xff]
    %v3198 = vld [vmem:[%s3174 + $0xb8] sm:$0xff]
    %v3199 = vld [vmem:[%s3174 + $0xc0] sm:$0xff]
    %v3200 = vld [vmem:[%s3174 + $0xc8] sm:$0xff]
    %v3201 = vld [vmem:[%s3174 + $0xd0] sm:$0xff]
    %v3202 = vld [vmem:[%s3174 + $0xd8] sm:$0xff]
    %v3203 = vld [vmem:[%s3174 + $0xe0] sm:$0xff]
    %v3204 = vld [vmem:[%s3174 + $0xe8] sm:$0xff]
    %v3205 = vld [vmem:[%s3174 + $0xf0] sm:$0xff]
    %v3206 = vld [vmem:[%s3174 + $0xf8] sm:$0xff]
    %3207 = vmatprep.subr.mxu0 0.0
    %3208 = vmatpush1.msra.mxu0 %v3175
    %3209 = vmatprep.subr.mxu0 0.0
    %3210 = vmatpush1.msra.mxu0 %v3176
    %3211 = vmatprep.subr.mxu0 0.0
    %3212 = vmatpush1.msra.mxu0 %v3177
    %3213 = vmatprep.subr.mxu0 0.0
    %3214 = vmatpush1.msra.mxu0 %v3178
    %3215 = vmatprep.subr.mxu0 0.0
    %3216 = vmatpush1.msra.mxu0 %v3179
    %3217 = vmatprep.subr.mxu0 0.0
    %3218 = vmatpush1.msra.mxu0 %v3180
    %3219 = vmatprep.subr.mxu0 0.0
    %3220 = vmatpush1.msra.mxu0 %v3181
    %3221 = vmatprep.subr.mxu0 0.0
    %3222 = vmatpush1.msra.mxu0 %v3182
    %3223 = vmatprep.subr.mxu0 0.0
    %3224 = vmatpush1.msra.mxu0 %v3183
    %3225 = vmatprep.subr.mxu0 0.0
    %3226 = vmatpush1.msra.mxu0 %v3184
    %3227 = vmatprep.subr.mxu0 0.0
    %3228 = vmatpush1.msra.mxu0 %v3185
    %3229 = vmatprep.subr.mxu0 0.0
    %3230 = vmatpush1.msra.mxu0 %v3186
    %3231 = vmatprep.subr.mxu0 0.0
    %3232 = vmatpush1.msra.mxu0 %v3187
    %3233 = vmatprep.subr.mxu0 0.0
    %3234 = vmatpush1.msra.mxu0 %v3188
    %3235 = vmatprep.subr.mxu0 0.0
    %3236 = vmatpush1.msra.mxu0 %v3189
    %3237 = vmatprep.subr.mxu0 0.0
    %3238 = vmatpush1.msra.mxu0 %v3190
    %3239 = vmatprep.subr.mxu0 0.0
    %3240 = vmatpush1.msra.mxu0 %v3191
    %3241 = vmatprep.subr.mxu0 0.0
    %3242 = vmatpush1.msra.mxu0 %v3192
    %3243 = vmatprep.subr.mxu0 0.0
    %3244 = vmatpush1.msra.mxu0 %v3193
    %3245 = vmatprep.subr.mxu0 0.0
    %3246 = vmatpush1.msra.mxu0 %v3194
    %3247 = vmatprep.subr.mxu0 0.0
    %3248 = vmatpush1.msra.mxu0 %v3195
    %3249 = vmatprep.subr.mxu0 0.0
    %3250 = vmatpush1.msra.mxu0 %v3196
    %3251 = vmatprep.subr.mxu0 0.0
    %3252 = vmatpush1.msra.mxu0 %v3197
    %3253 = vmatprep.subr.mxu0 0.0
    %3254 = vmatpush1.msra.mxu0 %v3198
    %3255 = vmatprep.subr.mxu0 0.0
    %3256 = vmatpush1.msra.mxu0 %v3199
    %3257 = vmatprep.subr.mxu0 0.0
    %3258 = vmatpush1.msra.mxu0 %v3200
    %3259 = vmatprep.subr.mxu0 0.0
    %3260 = vmatpush1.msra.mxu0 %v3201
    %3261 = vmatprep.subr.mxu0 0.0
    %3262 = vmatpush1.msra.mxu0 %v3202
    %3263 = vmatprep.subr.mxu0 0.0
    %3264 = vmatpush1.msra.mxu0 %v3203
    %3265 = vmatprep.subr.mxu0 0.0
    %3266 = vmatpush1.msra.mxu0 %v3204
    %3267 = vmatprep.subr.mxu0 0.0
    %3268 = vmatpush1.msra.mxu0 %v3205
    %3269 = vmatprep.subr.mxu0 0.0
    %3270 = vmatpush1.msra.mxu0 %v3206
    %3271 = vmatprep.mubr.f32.mxu0 %v3173
    %3272 = vmatmul.mubr.f32.gmra.mrb[0].mxu0 %v3172
    %v3273 = vpop.f32.mrb[0].mxu0
    %v3274 = vadd.f32 0.0, %v3273
    %v3275 = vpop.f32.mrb[0].mxu0
    %3276 = vdwg.mxu0
    %v3277 = vld [vmem:[%s7 + $0x4] sm:$0x1]
    %v3278 = vlaneseq
    %v3279 = vshrl.u32 %v3278, 7
    %v3280 = vsub.s32 0, %v3279
    %v3281 = vrot.slane %v3277, %v3280
    %v3282 = vmul.f32 %v3274, %v3281
    %v3283 = vld [vmem:[%s8 + $0x4] sm:$0x1]
    %v3284 = vlaneseq
    %v3285 = vshrl.u32 %v3284, 7
    %v3286 = vsub.s32 0, %v3285
    %v3287 = vrot.slane %v3283, %v3286
    %v3288 = vadd.f32 %v3282, %v3287
    %v3289 = vmax.f32 %v3288, 0.0
    %v3291 = vrot.slane %v3289, 2
    %v3293 = vrot.slane %v3289, 4
    %v3295 = vrot.slane %v3289, 6
    %v3297 = vrot.slane %v3291, 6
    %v3298 = vrot.slane %v3293, 6
    %v3299 = vrot.slane %v3295, 6
    %v3303 = vrot.slane %v3291, 4
    %v3304 = vrot.slane %v3293, 4
    %v3305 = vrot.slane %v3295, 4
    %v3309 = vrot.slane %v3291, 2
    %v3310 = vrot.slane %v3293, 2
    %v3311 = vrot.slane %v3295, 2
    %v3315 = vsel %vm328, 0.0, %v3295
    %v3316 = vsel %vm328, %v3289, %v3297
    %v3317 = vsel %vm328, %v3291, %v498
    %v3318 = vsel %vm328, 0.0, %v3298
    %v3319 = vsel %vm328, %v3293, %v3299
    %v3320 = vsel %vm328, %v3295, %v498
    %v3321 = vsel %vm331, %v522, %v3293
    %v3322 = vsel %vm331, %v522, %v3303
    %v3323 = vsel %vm331, %v3315, %v506
    %v3324 = vsel %vm331, %v3316, %v3304
    %v3325 = vsel %vm331, %v3317, %v3305
    %v3326 = vsel %vm331, %v3318, %v506
    %v3327 = vsel %vm331, %v3319, %v506
    %v3328 = vsel %vm331, %v3320, %v506
    %v3329 = vsel %vm335, %v529, %v3291
    %v3330 = vsel %vm335, %v3321, %v3309
    %v3331 = vsel %vm335, %v3322, %v515
    %v3332 = vsel %vm335, %v3323, %v3310
    %v3333 = vsel %vm335, %v3324, %v3311
    %v3334 = vsel %vm335, %v3325, %v515
    %v3335 = vsel %vm335, %v3326, %v515
    %v3336 = vsel %vm335, %v3327, %v515
    %v3337 = vsel %vm335, %v3328, %v515
    %s3338 = scalar_lea.vmem %s9, 4608
    %v3339 = vld [vmem:[%s3338] sm:$0xff]
    %v3340 = vld [vmem:[%s3338 + $0x8] sm:$0xff]
    %v3341 = vld [vmem:[%s3338 + $0x10] sm:$0xff]
    %v3342 = vld [vmem:[%s3338 + $0x18] sm:$0xff]
    %v3343 = vld [vmem:[%s3338 + $0x20] sm:$0xff]
    %v3344 = vld [vmem:[%s3338 + $0x28] sm:$0xff]
    %v3345 = vld [vmem:[%s3338 + $0x30] sm:$0xff]
    %v3346 = vld [vmem:[%s3338 + $0x38] sm:$0xff]
    %v3347 = vld [vmem:[%s3338 + $0x40] sm:$0xff]
    %v3348 = vld [vmem:[%s3338 + $0x48] sm:$0xff]
    %v3349 = vld [vmem:[%s3338 + $0x50] sm:$0xff]
    %v3350 = vld [vmem:[%s3338 + $0x58] sm:$0xff]
    %v3351 = vld [vmem:[%s3338 + $0x60] sm:$0xff]
    %v3352 = vld [vmem:[%s3338 + $0x68] sm:$0xff]
    %v3353 = vld [vmem:[%s3338 + $0x70] sm:$0xff]
    %v3354 = vld [vmem:[%s3338 + $0x78] sm:$0xff]
    %v3355 = vld [vmem:[%s3338 + $0x80] sm:$0xff]
    %v3356 = vld [vmem:[%s3338 + $0x88] sm:$0xff]
    %v3357 = vld [vmem:[%s3338 + $0x90] sm:$0xff]
    %v3358 = vld [vmem:[%s3338 + $0x98] sm:$0xff]
    %v3359 = vld [vmem:[%s3338 + $0xa0] sm:$0xff]
    %v3360 = vld [vmem:[%s3338 + $0xa8] sm:$0xff]
    %v3361 = vld [vmem:[%s3338 + $0xb0] sm:$0xff]
    %v3362 = vld [vmem:[%s3338 + $0xb8] sm:$0xff]
    %v3363 = vld [vmem:[%s3338 + $0xc0] sm:$0xff]
    %v3364 = vld [vmem:[%s3338 + $0xc8] sm:$0xff]
    %v3365 = vld [vmem:[%s3338 + $0xd0] sm:$0xff]
    %v3366 = vld [vmem:[%s3338 + $0xd8] sm:$0xff]
    %v3367 = vld [vmem:[%s3338 + $0xe0] sm:$0xff]
    %v3368 = vld [vmem:[%s3338 + $0xe8] sm:$0xff]
    %v3369 = vld [vmem:[%s3338 + $0xf0] sm:$0xff]
    %v3370 = vld [vmem:[%s3338 + $0xf8] sm:$0xff]
    %v3371 = vld [vmem:[%s3338 + $0x100] sm:$0xff]
    %v3372 = vld [vmem:[%s3338 + $0x108] sm:$0xff]
    %v3373 = vld [vmem:[%s3338 + $0x110] sm:$0xff]
    %v3374 = vld [vmem:[%s3338 + $0x118] sm:$0xff]
    %v3375 = vld [vmem:[%s3338 + $0x120] sm:$0xff]
    %v3376 = vld [vmem:[%s3338 + $0x128] sm:$0xff]
    %v3377 = vld [vmem:[%s3338 + $0x130] sm:$0xff]
    %v3378 = vld [vmem:[%s3338 + $0x138] sm:$0xff]
    %v3379 = vld [vmem:[%s3338 + $0x140] sm:$0xff]
    %v3380 = vld [vmem:[%s3338 + $0x148] sm:$0xff]
    %v3381 = vld [vmem:[%s3338 + $0x150] sm:$0xff]
    %v3382 = vld [vmem:[%s3338 + $0x158] sm:$0xff]
    %v3383 = vld [vmem:[%s3338 + $0x160] sm:$0xff]
    %v3384 = vld [vmem:[%s3338 + $0x168] sm:$0xff]
    %v3385 = vld [vmem:[%s3338 + $0x170] sm:$0xff]
    %v3386 = vld [vmem:[%s3338 + $0x178] sm:$0xff]
    %v3387 = vld [vmem:[%s3338 + $0x180] sm:$0xff]
    %v3388 = vld [vmem:[%s3338 + $0x188] sm:$0xff]
    %v3389 = vld [vmem:[%s3338 + $0x190] sm:$0xff]
    %v3390 = vld [vmem:[%s3338 + $0x198] sm:$0xff]
    %v3391 = vld [vmem:[%s3338 + $0x1a0] sm:$0xff]
    %v3392 = vld [vmem:[%s3338 + $0x1a8] sm:$0xff]
    %v3393 = vld [vmem:[%s3338 + $0x1b0] sm:$0xff]
    %v3394 = vld [vmem:[%s3338 + $0x1b8] sm:$0xff]
    %v3395 = vld [vmem:[%s3338 + $0x1c0] sm:$0xff]
    %v3396 = vld [vmem:[%s3338 + $0x1c8] sm:$0xff]
    %v3397 = vld [vmem:[%s3338 + $0x1d0] sm:$0xff]
    %v3398 = vld [vmem:[%s3338 + $0x1d8] sm:$0xff]
    %v3399 = vld [vmem:[%s3338 + $0x1e0] sm:$0xff]
    %v3400 = vld [vmem:[%s3338 + $0x1e8] sm:$0xff]
    %v3401 = vld [vmem:[%s3338 + $0x1f0] sm:$0xff]
    %v3402 = vld [vmem:[%s3338 + $0x1f8] sm:$0xff]
    %v3403 = vld [vmem:[%s3338 + $0x200] sm:$0xff]
    %v3404 = vld [vmem:[%s3338 + $0x208] sm:$0xff]
    %v3405 = vld [vmem:[%s3338 + $0x210] sm:$0xff]
    %v3406 = vld [vmem:[%s3338 + $0x218] sm:$0xff]
    %v3407 = vld [vmem:[%s3338 + $0x220] sm:$0xff]
    %v3408 = vld [vmem:[%s3338 + $0x228] sm:$0xff]
    %v3409 = vld [vmem:[%s3338 + $0x230] sm:$0xff]
    %v3410 = vld [vmem:[%s3338 + $0x238] sm:$0xff]
    %v3411 = vld [vmem:[%s3338 + $0x240] sm:$0xff]
    %v3412 = vld [vmem:[%s3338 + $0x248] sm:$0xff]
    %v3413 = vld [vmem:[%s3338 + $0x250] sm:$0xff]
    %v3414 = vld [vmem:[%s3338 + $0x258] sm:$0xff]
    %v3415 = vld [vmem:[%s3338 + $0x260] sm:$0xff]
    %v3416 = vld [vmem:[%s3338 + $0x268] sm:$0xff]
    %v3417 = vld [vmem:[%s3338 + $0x270] sm:$0xff]
    %v3418 = vld [vmem:[%s3338 + $0x278] sm:$0xff]
    %v3419 = vld [vmem:[%s3338 + $0x280] sm:$0xff]
    %v3420 = vld [vmem:[%s3338 + $0x288] sm:$0xff]
    %v3421 = vld [vmem:[%s3338 + $0x290] sm:$0xff]
    %v3422 = vld [vmem:[%s3338 + $0x298] sm:$0xff]
    %v3423 = vld [vmem:[%s3338 + $0x2a0] sm:$0xff]
    %v3424 = vld [vmem:[%s3338 + $0x2a8] sm:$0xff]
    %v3425 = vld [vmem:[%s3338 + $0x2b0] sm:$0xff]
    %v3426 = vld [vmem:[%s3338 + $0x2b8] sm:$0xff]
    %v3427 = vld [vmem:[%s3338 + $0x2c0] sm:$0xff]
    %v3428 = vld [vmem:[%s3338 + $0x2c8] sm:$0xff]
    %v3429 = vld [vmem:[%s3338 + $0x2d0] sm:$0xff]
    %v3430 = vld [vmem:[%s3338 + $0x2d8] sm:$0xff]
    %v3431 = vld [vmem:[%s3338 + $0x2e0] sm:$0xff]
    %v3432 = vld [vmem:[%s3338 + $0x2e8] sm:$0xff]
    %v3433 = vld [vmem:[%s3338 + $0x2f0] sm:$0xff]
    %v3434 = vld [vmem:[%s3338 + $0x2f8] sm:$0xff]
    %v3435 = vld [vmem:[%s3338 + $0x300] sm:$0xff]
    %v3436 = vld [vmem:[%s3338 + $0x308] sm:$0xff]
    %v3437 = vld [vmem:[%s3338 + $0x310] sm:$0xff]
    %v3438 = vld [vmem:[%s3338 + $0x318] sm:$0xff]
    %v3439 = vld [vmem:[%s3338 + $0x320] sm:$0xff]
    %v3440 = vld [vmem:[%s3338 + $0x328] sm:$0xff]
    %v3441 = vld [vmem:[%s3338 + $0x330] sm:$0xff]
    %v3442 = vld [vmem:[%s3338 + $0x338] sm:$0xff]
    %v3443 = vld [vmem:[%s3338 + $0x340] sm:$0xff]
    %v3444 = vld [vmem:[%s3338 + $0x348] sm:$0xff]
    %v3445 = vld [vmem:[%s3338 + $0x350] sm:$0xff]
    %v3446 = vld [vmem:[%s3338 + $0x358] sm:$0xff]
    %v3447 = vld [vmem:[%s3338 + $0x360] sm:$0xff]
    %v3448 = vld [vmem:[%s3338 + $0x368] sm:$0xff]
    %v3449 = vld [vmem:[%s3338 + $0x370] sm:$0xff]
    %v3450 = vld [vmem:[%s3338 + $0x378] sm:$0xff]
    %v3451 = vld [vmem:[%s3338 + $0x380] sm:$0xff]
    %v3452 = vld [vmem:[%s3338 + $0x388] sm:$0xff]
    %v3453 = vld [vmem:[%s3338 + $0x390] sm:$0xff]
    %v3454 = vld [vmem:[%s3338 + $0x398] sm:$0xff]
    %v3455 = vld [vmem:[%s3338 + $0x3a0] sm:$0xff]
    %v3456 = vld [vmem:[%s3338 + $0x3a8] sm:$0xff]
    %v3457 = vld [vmem:[%s3338 + $0x3b0] sm:$0xff]
    %v3458 = vld [vmem:[%s3338 + $0x3b8] sm:$0xff]
    %v3459 = vld [vmem:[%s3338 + $0x3c0] sm:$0xff]
    %v3460 = vld [vmem:[%s3338 + $0x3c8] sm:$0xff]
    %v3461 = vld [vmem:[%s3338 + $0x3d0] sm:$0xff]
    %v3462 = vld [vmem:[%s3338 + $0x3d8] sm:$0xff]
    %v3463 = vld [vmem:[%s3338 + $0x3e0] sm:$0xff]
    %v3464 = vld [vmem:[%s3338 + $0x3e8] sm:$0xff]
    %v3465 = vld [vmem:[%s3338 + $0x3f0] sm:$0xff]
    %v3466 = vld [vmem:[%s3338 + $0x3f8] sm:$0xff]
    %v3467 = vld [vmem:[%s3338 + $0x400] sm:$0xff]
    %v3468 = vld [vmem:[%s3338 + $0x408] sm:$0xff]
    %v3469 = vld [vmem:[%s3338 + $0x410] sm:$0xff]
    %v3470 = vld [vmem:[%s3338 + $0x418] sm:$0xff]
    %v3471 = vld [vmem:[%s3338 + $0x420] sm:$0xff]
    %v3472 = vld [vmem:[%s3338 + $0x428] sm:$0xff]
    %v3473 = vld [vmem:[%s3338 + $0x430] sm:$0xff]
    %v3474 = vld [vmem:[%s3338 + $0x438] sm:$0xff]
    %v3475 = vld [vmem:[%s3338 + $0x440] sm:$0xff]
    %v3476 = vld [vmem:[%s3338 + $0x448] sm:$0xff]
    %v3477 = vld [vmem:[%s3338 + $0x450] sm:$0xff]
    %v3478 = vld [vmem:[%s3338 + $0x458] sm:$0xff]
    %v3479 = vld [vmem:[%s3338 + $0x460] sm:$0xff]
    %v3480 = vld [vmem:[%s3338 + $0x468] sm:$0xff]
    %v3481 = vld [vmem:[%s3338 + $0x470] sm:$0xff]
    %v3482 = vld [vmem:[%s3338 + $0x478] sm:$0xff]
    %3483 = vmatprep.subr.mxu0 0.0
    %3484 = vmatpush1.msra.mxu0 %v3339
    %3485 = vmatprep.subr.mxu0 0.0
    %3486 = vmatpush1.msra.mxu0 %v3340
    %3487 = vmatprep.subr.mxu0 0.0
    %3488 = vmatpush1.msra.mxu0 %v3341
    %3489 = vmatprep.subr.mxu0 0.0
    %3490 = vmatpush1.msra.mxu0 %v3342
    %3491 = vmatprep.subr.mxu0 0.0
    %3492 = vmatpush1.msra.mxu0 %v3343
    %3493 = vmatprep.subr.mxu0 0.0
    %3494 = vmatpush1.msra.mxu0 %v3344
    %3495 = vmatprep.subr.mxu0 0.0
    %3496 = vmatpush1.msra.mxu0 %v3345
    %3497 = vmatprep.subr.mxu0 0.0
    %3498 = vmatpush1.msra.mxu0 %v3346
    %3499 = vmatprep.subr.mxu0 0.0
    %3500 = vmatpush1.msra.mxu0 %v3347
    %3501 = vmatprep.subr.mxu0 0.0
    %3502 = vmatpush1.msra.mxu0 %v3348
    %3503 = vmatprep.subr.mxu0 0.0
    %3504 = vmatpush1.msra.mxu0 %v3349
    %3505 = vmatprep.subr.mxu0 0.0
    %3506 = vmatpush1.msra.mxu0 %v3350
    %3507 = vmatprep.subr.mxu0 0.0
    %3508 = vmatpush1.msra.mxu0 %v3351
    %3509 = vmatprep.subr.mxu0 0.0
    %3510 = vmatpush1.msra.mxu0 %v3352
    %3511 = vmatprep.subr.mxu0 0.0
    %3512 = vmatpush1.msra.mxu0 %v3353
    %3513 = vmatprep.subr.mxu0 0.0
    %3514 = vmatpush1.msra.mxu0 %v3354
    %3515 = vmatprep.subr.mxu0 0.0
    %3516 = vmatpush1.msra.mxu0 %v3355
    %3517 = vmatprep.subr.mxu0 0.0
    %3518 = vmatpush1.msra.mxu0 %v3356
    %3519 = vmatprep.subr.mxu0 0.0
    %3520 = vmatpush1.msra.mxu0 %v3357
    %3521 = vmatprep.subr.mxu0 0.0
    %3522 = vmatpush1.msra.mxu0 %v3358
    %3523 = vmatprep.subr.mxu0 0.0
    %3524 = vmatpush1.msra.mxu0 %v3359
    %3525 = vmatprep.subr.mxu0 0.0
    %3526 = vmatpush1.msra.mxu0 %v3360
    %3527 = vmatprep.subr.mxu0 0.0
    %3528 = vmatpush1.msra.mxu0 %v3361
    %3529 = vmatprep.subr.mxu0 0.0
    %3530 = vmatpush1.msra.mxu0 %v3362
    %3531 = vmatprep.subr.mxu0 0.0
    %3532 = vmatpush1.msra.mxu0 %v3363
    %3533 = vmatprep.subr.mxu0 0.0
    %3534 = vmatpush1.msra.mxu0 %v3364
    %3535 = vmatprep.subr.mxu0 0.0
    %3536 = vmatpush1.msra.mxu0 %v3365
    %3537 = vmatprep.subr.mxu0 0.0
    %3538 = vmatpush1.msra.mxu0 %v3366
    %3539 = vmatprep.subr.mxu0 0.0
    %3540 = vmatpush1.msra.mxu0 %v3367
    %3541 = vmatprep.subr.mxu0 0.0
    %3542 = vmatpush1.msra.mxu0 %v3368
    %3543 = vmatprep.subr.mxu0 0.0
    %3544 = vmatpush1.msra.mxu0 %v3369
    %3545 = vmatprep.subr.mxu0 0.0
    %3546 = vmatpush1.msra.mxu0 %v3370
    %3547 = vmatprep.mubr.f32.mxu0 %v3330
    %3548 = vmatmul.mubr.f32.gmra.mrb[0].mxu0 %v3329
    %v3549 = vpop.f32.mrb[0].mxu0
    %v3550 = vadd.f32 0.0, %v3549
    %v3551 = vpop.f32.mrb[0].mxu0
    %3552 = vdwg.mxu0
    %3553 = vmatprep.subr.mxu0 0.0
    %3554 = vmatpush1.msra.mxu0 %v3371
    %3555 = vmatprep.subr.mxu0 0.0
    %3556 = vmatpush1.msra.mxu0 %v3372
    %3557 = vmatprep.subr.mxu0 0.0
    %3558 = vmatpush1.msra.mxu0 %v3373
    %3559 = vmatprep.subr.mxu0 0.0
    %3560 = vmatpush1.msra.mxu0 %v3374
    %3561 = vmatprep.subr.mxu0 0.0
    %3562 = vmatpush1.msra.mxu0 %v3375
    %3563 = vmatprep.subr.mxu0 0.0
    %3564 = vmatpush1.msra.mxu0 %v3376
    %3565 = vmatprep.subr.mxu0 0.0
    %3566 = vmatpush1.msra.mxu0 %v3377
    %3567 = vmatprep.subr.mxu0 0.0
    %3568 = vmatpush1.msra.mxu0 %v3378
    %3569 = vmatprep.subr.mxu0 0.0
    %3570 = vmatpush1.msra.mxu0 %v3379
    %3571 = vmatprep.subr.mxu0 0.0
    %3572 = vmatpush1.msra.mxu0 %v3380
    %3573 = vmatprep.subr.mxu0 0.0
    %3574 = vmatpush1.msra.mxu0 %v3381
    %3575 = vmatprep.subr.mxu0 0.0
    %3576 = vmatpush1.msra.mxu0 %v3382
    %3577 = vmatprep.subr.mxu0 0.0
    %3578 = vmatpush1.msra.mxu0 %v3383
    %3579 = vmatprep.subr.mxu0 0.0
    %3580 = vmatpush1.msra.mxu0 %v3384
    %3581 = vmatprep.subr.mxu0 0.0
    %3582 = vmatpush1.msra.mxu0 %v3385
    %3583 = vmatprep.subr.mxu0 0.0
    %3584 = vmatpush1.msra.mxu0 %v3386
    %3585 = vmatprep.subr.mxu0 0.0
    %3586 = vmatpush1.msra.mxu0 %v3387
    %3587 = vmatprep.subr.mxu0 0.0
    %3588 = vmatpush1.msra.mxu0 %v3388
    %3589 = vmatprep.subr.mxu0 0.0
    %3590 = vmatpush1.msra.mxu0 %v3389
    %3591 = vmatprep.subr.mxu0 0.0
    %3592 = vmatpush1.msra.mxu0 %v3390
    %3593 = vmatprep.subr.mxu0 0.0
    %3594 = vmatpush1.msra.mxu0 %v3391
    %3595 = vmatprep.subr.mxu0 0.0
    %3596 = vmatpush1.msra.mxu0 %v3392
    %3597 = vmatprep.subr.mxu0 0.0
    %3598 = vmatpush1.msra.mxu0 %v3393
    %3599 = vmatprep.subr.mxu0 0.0
    %3600 = vmatpush1.msra.mxu0 %v3394
    %3601 = vmatprep.subr.mxu0 0.0
    %3602 = vmatpush1.msra.mxu0 %v3395
    %3603 = vmatprep.subr.mxu0 0.0
    %3604 = vmatpush1.msra.mxu0 %v3396
    %3605 = vmatprep.subr.mxu0 0.0
    %3606 = vmatpush1.msra.mxu0 %v3397
    %3607 = vmatprep.subr.mxu0 0.0
    %3608 = vmatpush1.msra.mxu0 %v3398
    %3609 = vmatprep.subr.mxu0 0.0
    %3610 = vmatpush1.msra.mxu0 %v3399
    %3611 = vmatprep.subr.mxu0 0.0
    %3612 = vmatpush1.msra.mxu0 %v3400
    %3613 = vmatprep.subr.mxu0 0.0
    %3614 = vmatpush1.msra.mxu0 %v3401
    %3615 = vmatprep.subr.mxu0 0.0
    %3616 = vmatpush1.msra.mxu0 %v3402
    %3617 = vmatprep.mubr.f32.mxu0 %v3332
    %3618 = vmatmul.mubr.f32.gmra.mrb[0].mxu0 %v3331
    %v3619 = vpop.f32.mrb[0].mxu0
    %v3620 = vadd.f32 %v3550, %v3619
    %v3621 = vpop.f32.mrb[0].mxu0
    %3622 = vdwg.mxu0
    %3623 = vmatprep.subr.mxu0 0.0
    %3624 = vmatpush1.msra.mxu0 %v3403
    %3625 = vmatprep.subr.mxu0 0.0
    %3626 = vmatpush1.msra.mxu0 %v3404
    %3627 = vmatprep.subr.mxu0 0.0
    %3628 = vmatpush1.msra.mxu0 %v3405
    %3629 = vmatprep.subr.mxu0 0.0
    %3630 = vmatpush1.msra.mxu0 %v3406
    %3631 = vmatprep.subr.mxu0 0.0
    %3632 = vmatpush1.msra.mxu0 %v3407
    %3633 = vmatprep.subr.mxu0 0.0
    %3634 = vmatpush1.msra.mxu0 %v3408
    %3635 = vmatprep.subr.mxu0 0.0
    %3636 = vmatpush1.msra.mxu0 %v3409
    %3637 = vmatprep.subr.mxu0 0.0
    %3638 = vmatpush1.msra.mxu0 %v3410
    %3639 = vmatprep.subr.mxu0 0.0
    %3640 = vmatpush1.msra.mxu0 %v3411
    %3641 = vmatprep.subr.mxu0 0.0
    %3642 = vmatpush1.msra.mxu0 %v3412
    %3643 = vmatprep.subr.mxu0 0.0
    %3644 = vmatpush1.msra.mxu0 %v3413
    %3645 = vmatprep.subr.mxu0 0.0
    %3646 = vmatpush1.msra.mxu0 %v3414
    %3647 = vmatprep.subr.mxu0 0.0
    %3648 = vmatpush1.msra.mxu0 %v3415
    %3649 = vmatprep.subr.mxu0 0.0
    %3650 = vmatpush1.msra.mxu0 %v3416
    %3651 = vmatprep.subr.mxu0 0.0
    %3652 = vmatpush1.msra.mxu0 %v3417
    %3653 = vmatprep.subr.mxu0 0.0
    %3654 = vmatpush1.msra.mxu0 %v3418
    %3655 = vmatprep.subr.mxu0 0.0
    %3656 = vmatpush1.msra.mxu0 %v3419
    %3657 = vmatprep.subr.mxu0 0.0
    %3658 = vmatpush1.msra.mxu0 %v3420
    %3659 = vmatprep.subr.mxu0 0.0
    %3660 = vmatpush1.msra.mxu0 %v3421
    %3661 = vmatprep.subr.mxu0 0.0
    %3662 = vmatpush1.msra.mxu0 %v3422
    %3663 = vmatprep.subr.mxu0 0.0
    %3664 = vmatpush1.msra.mxu0 %v3423
    %3665 = vmatprep.subr.mxu0 0.0
    %3666 = vmatpush1.msra.mxu0 %v3424
    %3667 = vmatprep.subr.mxu0 0.0
    %3668 = vmatpush1.msra.mxu0 %v3425
    %3669 = vmatprep.subr.mxu0 0.0
    %3670 = vmatpush1.msra.mxu0 %v3426
    %3671 = vmatprep.subr.mxu0 0.0
    %3672 = vmatpush1.msra.mxu0 %v3427
    %3673 = vmatprep.subr.mxu0 0.0
    %3674 = vmatpush1.msra.mxu0 %v3428
    %3675 = vmatprep.subr.mxu0 0.0
    %3676 = vmatpush1.msra.mxu0 %v3429
    %3677 = vmatprep.subr.mxu0 0.0
    %3678 = vmatpush1.msra.mxu0 %v3430
    %3679 = vmatprep.subr.mxu0 0.0
    %3680 = vmatpush1.msra.mxu0 %v3431
    %3681 = vmatprep.subr.mxu0 0.0
    %3682 = vmatpush1.msra.mxu0 %v3432
    %3683 = vmatprep.subr.mxu0 0.0
    %3684 = vmatpush1.msra.mxu0 %v3433
    %3685 = vmatprep.subr.mxu0 0.0
    %3686 = vmatpush1.msra.mxu0 %v3434
    %3687 = vmatprep.mubr.f32.mxu0 %v3334
    %3688 = vmatmul.mubr.f32.gmra.mrb[0].mxu0 %v3333
    %v3689 = vpop.f32.mrb[0].mxu0
    %v3690 = vadd.f32 %v3620, %v3689
    %v3691 = vpop.f32.mrb[0].mxu0
    %3692 = vdwg.mxu0
    %3693 = vmatprep.subr.mxu0 0.0
    %3694 = vmatpush1.msra.mxu0 %v3435
    %3695 = vmatprep.subr.mxu0 0.0
    %3696 = vmatpush1.msra.mxu0 %v3436
    %3697 = vmatprep.subr.mxu0 0.0
    %3698 = vmatpush1.msra.mxu0 %v3437
    %3699 = vmatprep.subr.mxu0 0.0
    %3700 = vmatpush1.msra.mxu0 %v3438
    %3701 = vmatprep.subr.mxu0 0.0
    %3702 = vmatpush1.msra.mxu0 %v3439
    %3703 = vmatprep.subr.mxu0 0.0
    %3704 = vmatpush1.msra.mxu0 %v3440
    %3705 = vmatprep.subr.mxu0 0.0
    %3706 = vmatpush1.msra.mxu0 %v3441
    %3707 = vmatprep.subr.mxu0 0.0
    %3708 = vmatpush1.msra.mxu0 %v3442
    %3709 = vmatprep.subr.mxu0 0.0
    %3710 = vmatpush1.msra.mxu0 %v3443
    %3711 = vmatprep.subr.mxu0 0.0
    %3712 = vmatpush1.msra.mxu0 %v3444
    %3713 = vmatprep.subr.mxu0 0.0
    %3714 = vmatpush1.msra.mxu0 %v3445
    %3715 = vmatprep.subr.mxu0 0.0
    %3716 = vmatpush1.msra.mxu0 %v3446
    %3717 = vmatprep.subr.mxu0 0.0
    %3718 = vmatpush1.msra.mxu0 %v3447
    %3719 = vmatprep.subr.mxu0 0.0
    %3720 = vmatpush1.msra.mxu0 %v3448
    %3721 = vmatprep.subr.mxu0 0.0
    %3722 = vmatpush1.msra.mxu0 %v3449
    %3723 = vmatprep.subr.mxu0 0.0
    %3724 = vmatpush1.msra.mxu0 %v3450
    %3725 = vmatprep.subr.mxu0 0.0
    %3726 = vmatpush1.msra.mxu0 %v3451
    %3727 = vmatprep.subr.mxu0 0.0
    %3728 = vmatpush1.msra.mxu0 %v3452
    %3729 = vmatprep.subr.mxu0 0.0
    %3730 = vmatpush1.msra.mxu0 %v3453
    %3731 = vmatprep.subr.mxu0 0.0
    %3732 = vmatpush1.msra.mxu0 %v3454
    %3733 = vmatprep.subr.mxu0 0.0
    %3734 = vmatpush1.msra.mxu0 %v3455
    %3735 = vmatprep.subr.mxu0 0.0
    %3736 = vmatpush1.msra.mxu0 %v3456
    %3737 = vmatprep.subr.mxu0 0.0
    %3738 = vmatpush1.msra.mxu0 %v3457
    %3739 = vmatprep.subr.mxu0 0.0
    %3740 = vmatpush1.msra.mxu0 %v3458
    %3741 = vmatprep.subr.mxu0 0.0
    %3742 = vmatpush1.msra.mxu0 %v3459
    %3743 = vmatprep.subr.mxu0 0.0
    %3744 = vmatpush1.msra.mxu0 %v3460
    %3745 = vmatprep.subr.mxu0 0.0
    %3746 = vmatpush1.msra.mxu0 %v3461
    %3747 = vmatprep.subr.mxu0 0.0
    %3748 = vmatpush1.msra.mxu0 %v3462
    %3749 = vmatprep.subr.mxu0 0.0
    %3750 = vmatpush1.msra.mxu0 %v3463
    %3751 = vmatprep.subr.mxu0 0.0
    %3752 = vmatpush1.msra.mxu0 %v3464
    %3753 = vmatprep.subr.mxu0 0.0
    %3754 = vmatpush1.msra.mxu0 %v3465
    %3755 = vmatprep.subr.mxu0 0.0
    %3756 = vmatpush1.msra.mxu0 %v3466
    %3757 = vmatprep.mubr.f32.mxu0 %v3336
    %3758 = vmatmul.mubr.f32.gmra.mrb[0].mxu0 %v3335
    %v3759 = vpop.f32.mrb[0].mxu0
    %v3760 = vadd.f32 %v3690, %v3759
    %v3761 = vpop.f32.mrb[0].mxu0
    %3762 = vdwg.mxu0
    %3763 = vmatprep.subr.mxu0 0.0
    %3764 = vmatpush1.msra.mxu0 %v3467
    %3765 = vmatprep.subr.mxu0 0.0
    %3766 = vmatpush1.msra.mxu0 %v3468
    %3767 = vmatprep.subr.mxu0 0.0
    %3768 = vmatpush1.msra.mxu0 %v3469
    %3769 = vmatprep.subr.mxu0 0.0
    %3770 = vmatpush1.msra.mxu0 %v3470
    %3771 = vmatprep.subr.mxu0 0.0
    %3772 = vmatpush1.msra.mxu0 %v3471
    %3773 = vmatprep.subr.mxu0 0.0
    %3774 = vmatpush1.msra.mxu0 %v3472
    %3775 = vmatprep.subr.mxu0 0.0
    %3776 = vmatpush1.msra.mxu0 %v3473
    %3777 = vmatprep.subr.mxu0 0.0
    %3778 = vmatpush1.msra.mxu0 %v3474
    %3779 = vmatprep.subr.mxu0 0.0
    %3780 = vmatpush1.msra.mxu0 %v3475
    %3781 = vmatprep.subr.mxu0 0.0
    %3782 = vmatpush1.msra.mxu0 %v3476
    %3783 = vmatprep.subr.mxu0 0.0
    %3784 = vmatpush1.msra.mxu0 %v3477
    %3785 = vmatprep.subr.mxu0 0.0
    %3786 = vmatpush1.msra.mxu0 %v3478
    %3787 = vmatprep.subr.mxu0 0.0
    %3788 = vmatpush1.msra.mxu0 %v3479
    %3789 = vmatprep.subr.mxu0 0.0
    %3790 = vmatpush1.msra.mxu0 %v3480
    %3791 = vmatprep.subr.mxu0 0.0
    %3792 = vmatpush1.msra.mxu0 %v3481
    %3793 = vmatprep.subr.mxu0 0.0
    %3794 = vmatpush1.msra.mxu0 %v3482
    %3795 = vmatprep.subr.mxu0 0.0
    %3796 = vmatpush1.msra.mxu0 0.0
    %3797 = vmatprep.subr.mxu0 0.0
    %3798 = vmatpush1.msra.mxu0 0.0
    %3799 = vmatprep.subr.mxu0 0.0
    %3800 = vmatpush1.msra.mxu0 0.0
    %3801 = vmatprep.subr.mxu0 0.0
    %3802 = vmatpush1.msra.mxu0 0.0
    %3803 = vmatprep.subr.mxu0 0.0
    %3804 = vmatpush1.msra.mxu0 0.0
    %3805 = vmatprep.subr.mxu0 0.0
    %3806 = vmatpush1.msra.mxu0 0.0
    %3807 = vmatprep.subr.mxu0 0.0
    %3808 = vmatpush1.msra.mxu0 0.0
    %3809 = vmatprep.subr.mxu0 0.0
    %3810 = vmatpush1.msra.mxu0 0.0
    %3811 = vmatprep.subr.mxu0 0.0
    %3812 = vmatpush1.msra.mxu0 0.0
    %3813 = vmatprep.subr.mxu0 0.0
    %3814 = vmatpush1.msra.mxu0 0.0
    %3815 = vmatprep.subr.mxu0 0.0
    %3816 = vmatpush1.msra.mxu0 0.0
    %3817 = vmatprep.subr.mxu0 0.0
    %3818 = vmatpush1.msra.mxu0 0.0
    %3819 = vmatprep.subr.mxu0 0.0
    %3820 = vmatpush1.msra.mxu0 0.0
    %3821 = vmatprep.subr.mxu0 0.0
    %3822 = vmatpush1.msra.mxu0 0.0
    %3823 = vmatprep.subr.mxu0 0.0
    %3824 = vmatpush1.msra.mxu0 0.0
    %3825 = vmatprep.subr.mxu0 0.0
    %3826 = vmatpush1.msra.mxu0 0.0
    %3827 = vmatprep.mubr.f32.mxu0 0.0
    %3828 = vmatmul.mubr.f32.gmra.mrb[0].mxu0 %v3337
    %v3829 = vpop.f32.mrb[0].mxu0
    %v3830 = vadd.f32 %v3760, %v3829
    %v3831 = vpop.f32.mrb[0].mxu0
    %3832 = vdwg.mxu0
    %3834 = vrot.lane.b32.xlu0 %v3830, 64
    %v3835 = vpop.permute.xlu0 %3834
    %3837 = vst.msk [vmem:[#allocation2 + $0x8] sm:$0xff] %vm1045, %v3835
    %v3838 = vld [vmem:[#allocation2] sm:$0xff]
    %v3839 = vld [vmem:[#allocation2 + $0x8] sm:$0xff]
    %s3840 = scalar_lea.vmem %s4, 5
    %v3841 = vld [vmem:[%s3840] ss:$8 sm:$0x3]
    %v3843 = vlaneseq
    %v3844 = vshrl.u32 %v3843, 7
    %v3845 = vsub.s32 0, %v3844
    %v3846 = vrot.slane %v3841, %v3845
    %v3847 = vlaneseq
    %v3848 = vshrl.u32 %v3847, 7
    %v3849 = vsub.s32 1, %v3848
    %v3850 = vrot.slane %v3841, %v3849
    %v3853 = vmul.f32 %v3838, %v3846
    %v3854 = vmul.f32 %v3839, %v3850
    %s3855 = scalar_lea.vmem %s5, 5
    %v3856 = vld [vmem:[%s3855] ss:$8 sm:$0x3]
    %v3858 = vlaneseq
    %v3859 = vshrl.u32 %v3858, 7
    %v3860 = vsub.s32 0, %v3859
    %v3861 = vrot.slane %v3856, %v3860
    %v3862 = vlaneseq
    %v3863 = vshrl.u32 %v3862, 7
    %v3864 = vsub.s32 1, %v3863
    %v3865 = vrot.slane %v3856, %v3864
    %v3868 = vadd.f32 %v3853, %v3861
    %v3869 = vadd.f32 %v3854, %v3865
    %v3870 = vmax.f32 %v3868, 0.0
    %v3871 = vmax.f32 %v3869, 0.0
    %s3872 = scalar_lea.vmem %s6, 1280
    %v3873 = vld [vmem:[%s3872] sm:$0xff]
    %v3874 = vld [vmem:[%s3872 + $0x8] sm:$0xff]
    %v3875 = vld [vmem:[%s3872 + $0x10] sm:$0xff]
    %v3876 = vld [vmem:[%s3872 + $0x18] sm:$0xff]
    %v3877 = vld [vmem:[%s3872 + $0x20] sm:$0xff]
    %v3878 = vld [vmem:[%s3872 + $0x28] sm:$0xff]
    %v3879 = vld [vmem:[%s3872 + $0x30] sm:$0xff]
    %v3880 = vld [vmem:[%s3872 + $0x38] sm:$0xff]
    %v3881 = vld [vmem:[%s3872 + $0x40] sm:$0xff]
    %v3882 = vld [vmem:[%s3872 + $0x48] sm:$0xff]
    %v3883 = vld [vmem:[%s3872 + $0x50] sm:$0xff]
    %v3884 = vld [vmem:[%s3872 + $0x58] sm:$0xff]
    %v3885 = vld [vmem:[%s3872 + $0x60] sm:$0xff]
    %v3886 = vld [vmem:[%s3872 + $0x68] sm:$0xff]
    %v3887 = vld [vmem:[%s3872 + $0x70] sm:$0xff]
    %v3888 = vld [vmem:[%s3872 + $0x78] sm:$0xff]
    %v3889 = vld [vmem:[%s3872 + $0x80] sm:$0xff]
    %v3890 = vld [vmem:[%s3872 + $0x88] sm:$0xff]
    %v3891 = vld [vmem:[%s3872 + $0x90] sm:$0xff]
    %v3892 = vld [vmem:[%s3872 + $0x98] sm:$0xff]
    %v3893 = vld [vmem:[%s3872 + $0xa0] sm:$0xff]
    %v3894 = vld [vmem:[%s3872 + $0xa8] sm:$0xff]
    %v3895 = vld [vmem:[%s3872 + $0xb0] sm:$0xff]
    %v3896 = vld [vmem:[%s3872 + $0xb8] sm:$0xff]
    %v3897 = vld [vmem:[%s3872 + $0xc0] sm:$0xff]
    %v3898 = vld [vmem:[%s3872 + $0xc8] sm:$0xff]
    %v3899 = vld [vmem:[%s3872 + $0xd0] sm:$0xff]
    %v3900 = vld [vmem:[%s3872 + $0xd8] sm:$0xff]
    %v3901 = vld [vmem:[%s3872 + $0xe0] sm:$0xff]
    %v3902 = vld [vmem:[%s3872 + $0xe8] sm:$0xff]
    %v3903 = vld [vmem:[%s3872 + $0xf0] sm:$0xff]
    %v3904 = vld [vmem:[%s3872 + $0xf8] sm:$0xff]
    %3905 = vmatprep.subr.mxu0 0.0
    %3906 = vmatpush1.msra.mxu0 %v3873
    %3907 = vmatprep.subr.mxu0 0.0
    %3908 = vmatpush1.msra.mxu0 %v3874
    %3909 = vmatprep.subr.mxu0 0.0
    %3910 = vmatpush1.msra.mxu0 %v3875
    %3911 = vmatprep.subr.mxu0 0.0
    %3912 = vmatpush1.msra.mxu0 %v3876
    %3913 = vmatprep.subr.mxu0 0.0
    %3914 = vmatpush1.msra.mxu0 %v3877
    %3915 = vmatprep.subr.mxu0 0.0
    %3916 = vmatpush1.msra.mxu0 %v3878
    %3917 = vmatprep.subr.mxu0 0.0
    %3918 = vmatpush1.msra.mxu0 %v3879
    %3919 = vmatprep.subr.mxu0 0.0
    %3920 = vmatpush1.msra.mxu0 %v3880
    %3921 = vmatprep.subr.mxu0 0.0
    %3922 = vmatpush1.msra.mxu0 %v3881
    %3923 = vmatprep.subr.mxu0 0.0
    %3924 = vmatpush1.msra.mxu0 %v3882
    %3925 = vmatprep.subr.mxu0 0.0
    %3926 = vmatpush1.msra.mxu0 %v3883
    %3927 = vmatprep.subr.mxu0 0.0
    %3928 = vmatpush1.msra.mxu0 %v3884
    %3929 = vmatprep.subr.mxu0 0.0
    %3930 = vmatpush1.msra.mxu0 %v3885
    %3931 = vmatprep.subr.mxu0 0.0
    %3932 = vmatpush1.msra.mxu0 %v3886
    %3933 = vmatprep.subr.mxu0 0.0
    %3934 = vmatpush1.msra.mxu0 %v3887
    %3935 = vmatprep.subr.mxu0 0.0
    %3936 = vmatpush1.msra.mxu0 %v3888
    %3937 = vmatprep.subr.mxu0 0.0
    %3938 = vmatpush1.msra.mxu0 %v3889
    %3939 = vmatprep.subr.mxu0 0.0
    %3940 = vmatpush1.msra.mxu0 %v3890
    %3941 = vmatprep.subr.mxu0 0.0
    %3942 = vmatpush1.msra.mxu0 %v3891
    %3943 = vmatprep.subr.mxu0 0.0
    %3944 = vmatpush1.msra.mxu0 %v3892
    %3945 = vmatprep.subr.mxu0 0.0
    %3946 = vmatpush1.msra.mxu0 %v3893
    %3947 = vmatprep.subr.mxu0 0.0
    %3948 = vmatpush1.msra.mxu0 %v3894
    %3949 = vmatprep.subr.mxu0 0.0
    %3950 = vmatpush1.msra.mxu0 %v3895
    %3951 = vmatprep.subr.mxu0 0.0
    %3952 = vmatpush1.msra.mxu0 %v3896
    %3953 = vmatprep.subr.mxu0 0.0
    %3954 = vmatpush1.msra.mxu0 %v3897
    %3955 = vmatprep.subr.mxu0 0.0
    %3956 = vmatpush1.msra.mxu0 %v3898
    %3957 = vmatprep.subr.mxu0 0.0
    %3958 = vmatpush1.msra.mxu0 %v3899
    %3959 = vmatprep.subr.mxu0 0.0
    %3960 = vmatpush1.msra.mxu0 %v3900
    %3961 = vmatprep.subr.mxu0 0.0
    %3962 = vmatpush1.msra.mxu0 %v3901
    %3963 = vmatprep.subr.mxu0 0.0
    %3964 = vmatpush1.msra.mxu0 %v3902
    %3965 = vmatprep.subr.mxu0 0.0
    %3966 = vmatpush1.msra.mxu0 %v3903
    %3967 = vmatprep.subr.mxu0 0.0
    %3968 = vmatpush1.msra.mxu0 %v3904
    %3969 = vmatprep.mubr.f32.mxu0 %v3871
    %3970 = vmatmul.mubr.f32.gmra.mrb[0].mxu0 %v3870
    %v3971 = vpop.f32.mrb[0].mxu0
    %v3972 = vadd.f32 0.0, %v3971
    %v3973 = vpop.f32.mrb[0].mxu0
    %3974 = vdwg.mxu0
    %v3975 = vld [vmem:[%s7 + $0x5] sm:$0x1]
    %v3976 = vlaneseq
    %v3977 = vshrl.u32 %v3976, 7
    %v3978 = vsub.s32 0, %v3977
    %v3979 = vrot.slane %v3975, %v3978
    %v3980 = vmul.f32 %v3972, %v3979
    %v3981 = vld [vmem:[%s8 + $0x5] sm:$0x1]
    %v3982 = vlaneseq
    %v3983 = vshrl.u32 %v3982, 7
    %v3984 = vsub.s32 0, %v3983
    %v3985 = vrot.slane %v3981, %v3984
    %v3986 = vadd.f32 %v3980, %v3985
    %v3987 = vmax.f32 %v3986, 0.0
    %v3989 = vrot.slane %v3987, 2
    %v3991 = vrot.slane %v3987, 4
    %v3993 = vrot.slane %v3987, 6
    %v3995 = vrot.slane %v3989, 6
    %v3996 = vrot.slane %v3991, 6
    %v3997 = vrot.slane %v3993, 6
    %v4001 = vrot.slane %v3989, 4
    %v4002 = vrot.slane %v3991, 4
    %v4003 = vrot.slane %v3993, 4
    %v4007 = vrot.slane %v3989, 2
    %v4008 = vrot.slane %v3991, 2
    %v4009 = vrot.slane %v3993, 2
    %v4013 = vsel %vm328, 0.0, %v3993
    %v4014 = vsel %vm328, %v3987, %v3995
    %v4015 = vsel %vm328, %v3989, %v498
    %v4016 = vsel %vm328, 0.0, %v3996
    %v4017 = vsel %vm328, %v3991, %v3997
    %v4018 = vsel %vm328, %v3993, %v498
    %v4019 = vsel %vm331, %v522, %v3991
    %v4020 = vsel %vm331, %v522, %v4001
    %v4021 = vsel %vm331, %v4013, %v506
    %v4022 = vsel %vm331, %v4014, %v4002
    %v4023 = vsel %vm331, %v4015, %v4003
    %v4024 = vsel %vm331, %v4016, %v506
    %v4025 = vsel %vm331, %v4017, %v506
    %v4026 = vsel %vm331, %v4018, %v506
    %v4027 = vsel %vm335, %v529, %v3989
    %v4028 = vsel %vm335, %v4019, %v4007
    %v4029 = vsel %vm335, %v4020, %v515
    %v4030 = vsel %vm335, %v4021, %v4008
    %v4031 = vsel %vm335, %v4022, %v4009
    %v4032 = vsel %vm335, %v4023, %v515
    %v4033 = vsel %vm335, %v4024, %v515
    %v4034 = vsel %vm335, %v4025, %v515
    %v4035 = vsel %vm335, %v4026, %v515
    %s4036 = scalar_lea.vmem %s9, 5760
    %v4037 = vld [vmem:[%s4036] sm:$0xff]
    %v4038 = vld [vmem:[%s4036 + $0x8] sm:$0xff]
    %v4039 = vld [vmem:[%s4036 + $0x10] sm:$0xff]
    %v4040 = vld [vmem:[%s4036 + $0x18] sm:$0xff]
    %v4041 = vld [vmem:[%s4036 + $0x20] sm:$0xff]
    %v4042 = vld [vmem:[%s4036 + $0x28] sm:$0xff]
    %v4043 = vld [vmem:[%s4036 + $0x30] sm:$0xff]
    %v4044 = vld [vmem:[%s4036 + $0x38] sm:$0xff]
    %v4045 = vld [vmem:[%s4036 + $0x40] sm:$0xff]
    %v4046 = vld [vmem:[%s4036 + $0x48] sm:$0xff]
    %v4047 = vld [vmem:[%s4036 + $0x50] sm:$0xff]
    %v4048 = vld [vmem:[%s4036 + $0x58] sm:$0xff]
    %v4049 = vld [vmem:[%s4036 + $0x60] sm:$0xff]
    %v4050 = vld [vmem:[%s4036 + $0x68] sm:$0xff]
    %v4051 = vld [vmem:[%s4036 + $0x70] sm:$0xff]
    %v4052 = vld [vmem:[%s4036 + $0x78] sm:$0xff]
    %v4053 = vld [vmem:[%s4036 + $0x80] sm:$0xff]
    %v4054 = vld [vmem:[%s4036 + $0x88] sm:$0xff]
    %v4055 = vld [vmem:[%s4036 + $0x90] sm:$0xff]
    %v4056 = vld [vmem:[%s4036 + $0x98] sm:$0xff]
    %v4057 = vld [vmem:[%s4036 + $0xa0] sm:$0xff]
    %v4058 = vld [vmem:[%s4036 + $0xa8] sm:$0xff]
    %v4059 = vld [vmem:[%s4036 + $0xb0] sm:$0xff]
    %v4060 = vld [vmem:[%s4036 + $0xb8] sm:$0xff]
    %v4061 = vld [vmem:[%s4036 + $0xc0] sm:$0xff]
    %v4062 = vld [vmem:[%s4036 + $0xc8] sm:$0xff]
    %v4063 = vld [vmem:[%s4036 + $0xd0] sm:$0xff]
    %v4064 = vld [vmem:[%s4036 + $0xd8] sm:$0xff]
    %v4065 = vld [vmem:[%s4036 + $0xe0] sm:$0xff]
    %v4066 = vld [vmem:[%s4036 + $0xe8] sm:$0xff]
    %v4067 = vld [vmem:[%s4036 + $0xf0] sm:$0xff]
    %v4068 = vld [vmem:[%s4036 + $0xf8] sm:$0xff]
    %v4069 = vld [vmem:[%s4036 + $0x100] sm:$0xff]
    %v4070 = vld [vmem:[%s4036 + $0x108] sm:$0xff]
    %v4071 = vld [vmem:[%s4036 + $0x110] sm:$0xff]
    %v4072 = vld [vmem:[%s4036 + $0x118] sm:$0xff]
    %v4073 = vld [vmem:[%s4036 + $0x120] sm:$0xff]
    %v4074 = vld [vmem:[%s4036 + $0x128] sm:$0xff]
    %v4075 = vld [vmem:[%s4036 + $0x130] sm:$0xff]
    %v4076 = vld [vmem:[%s4036 + $0x138] sm:$0xff]
    %v4077 = vld [vmem:[%s4036 + $0x140] sm:$0xff]
    %v4078 = vld [vmem:[%s4036 + $0x148] sm:$0xff]
    %v4079 = vld [vmem:[%s4036 + $0x150] sm:$0xff]
    %v4080 = vld [vmem:[%s4036 + $0x158] sm:$0xff]
    %v4081 = vld [vmem:[%s4036 + $0x160] sm:$0xff]
    %v4082 = vld [vmem:[%s4036 + $0x168] sm:$0xff]
    %v4083 = vld [vmem:[%s4036 + $0x170] sm:$0xff]
    %v4084 = vld [vmem:[%s4036 + $0x178] sm:$0xff]
    %v4085 = vld [vmem:[%s4036 + $0x180] sm:$0xff]
    %v4086 = vld [vmem:[%s4036 + $0x188] sm:$0xff]
    %v4087 = vld [vmem:[%s4036 + $0x190] sm:$0xff]
    %v4088 = vld [vmem:[%s4036 + $0x198] sm:$0xff]
    %v4089 = vld [vmem:[%s4036 + $0x1a0] sm:$0xff]
    %v4090 = vld [vmem:[%s4036 + $0x1a8] sm:$0xff]
    %v4091 = vld [vmem:[%s4036 + $0x1b0] sm:$0xff]
    %v4092 = vld [vmem:[%s4036 + $0x1b8] sm:$0xff]
    %v4093 = vld [vmem:[%s4036 + $0x1c0] sm:$0xff]
    %v4094 = vld [vmem:[%s4036 + $0x1c8] sm:$0xff]
    %v4095 = vld [vmem:[%s4036 + $0x1d0] sm:$0xff]
    %v4096 = vld [vmem:[%s4036 + $0x1d8] sm:$0xff]
    %v4097 = vld [vmem:[%s4036 + $0x1e0] sm:$0xff]
    %v4098 = vld [vmem:[%s4036 + $0x1e8] sm:$0xff]
    %v4099 = vld [vmem:[%s4036 + $0x1f0] sm:$0xff]
    %v4100 = vld [vmem:[%s4036 + $0x1f8] sm:$0xff]
    %v4101 = vld [vmem:[%s4036 + $0x200] sm:$0xff]
    %v4102 = vld [vmem:[%s4036 + $0x208] sm:$0xff]
    %v4103 = vld [vmem:[%s4036 + $0x210] sm:$0xff]
    %v4104 = vld [vmem:[%s4036 + $0x218] sm:$0xff]
    %v4105 = vld [vmem:[%s4036 + $0x220] sm:$0xff]
    %v4106 = vld [vmem:[%s4036 + $0x228] sm:$0xff]
    %v4107 = vld [vmem:[%s4036 + $0x230] sm:$0xff]
    %v4108 = vld [vmem:[%s4036 + $0x238] sm:$0xff]
    %v4109 = vld [vmem:[%s4036 + $0x240] sm:$0xff]
    %v4110 = vld [vmem:[%s4036 + $0x248] sm:$0xff]
    %v4111 = vld [vmem:[%s4036 + $0x250] sm:$0xff]
    %v4112 = vld [vmem:[%s4036 + $0x258] sm:$0xff]
    %v4113 = vld [vmem:[%s4036 + $0x260] sm:$0xff]
    %v4114 = vld [vmem:[%s4036 + $0x268] sm:$0xff]
    %v4115 = vld [vmem:[%s4036 + $0x270] sm:$0xff]
    %v4116 = vld [vmem:[%s4036 + $0x278] sm:$0xff]
    %v4117 = vld [vmem:[%s4036 + $0x280] sm:$0xff]
    %v4118 = vld [vmem:[%s4036 + $0x288] sm:$0xff]
    %v4119 = vld [vmem:[%s4036 + $0x290] sm:$0xff]
    %v4120 = vld [vmem:[%s4036 + $0x298] sm:$0xff]
    %v4121 = vld [vmem:[%s4036 + $0x2a0] sm:$0xff]
    %v4122 = vld [vmem:[%s4036 + $0x2a8] sm:$0xff]
    %v4123 = vld [vmem:[%s4036 + $0x2b0] sm:$0xff]
    %v4124 = vld [vmem:[%s4036 + $0x2b8] sm:$0xff]
    %v4125 = vld [vmem:[%s4036 + $0x2c0] sm:$0xff]
    %v4126 = vld [vmem:[%s4036 + $0x2c8] sm:$0xff]
    %v4127 = vld [vmem:[%s4036 + $0x2d0] sm:$0xff]
    %v4128 = vld [vmem:[%s4036 + $0x2d8] sm:$0xff]
    %v4129 = vld [vmem:[%s4036 + $0x2e0] sm:$0xff]
    %v4130 = vld [vmem:[%s4036 + $0x2e8] sm:$0xff]
    %v4131 = vld [vmem:[%s4036 + $0x2f0] sm:$0xff]
    %v4132 = vld [vmem:[%s4036 + $0x2f8] sm:$0xff]
    %v4133 = vld [vmem:[%s4036 + $0x300] sm:$0xff]
    %v4134 = vld [vmem:[%s4036 + $0x308] sm:$0xff]
    %v4135 = vld [vmem:[%s4036 + $0x310] sm:$0xff]
    %v4136 = vld [vmem:[%s4036 + $0x318] sm:$0xff]
    %v4137 = vld [vmem:[%s4036 + $0x320] sm:$0xff]
    %v4138 = vld [vmem:[%s4036 + $0x328] sm:$0xff]
    %v4139 = vld [vmem:[%s4036 + $0x330] sm:$0xff]
    %v4140 = vld [vmem:[%s4036 + $0x338] sm:$0xff]
    %v4141 = vld [vmem:[%s4036 + $0x340] sm:$0xff]
    %v4142 = vld [vmem:[%s4036 + $0x348] sm:$0xff]
    %v4143 = vld [vmem:[%s4036 + $0x350] sm:$0xff]
    %v4144 = vld [vmem:[%s4036 + $0x358] sm:$0xff]
    %v4145 = vld [vmem:[%s4036 + $0x360] sm:$0xff]
    %v4146 = vld [vmem:[%s4036 + $0x368] sm:$0xff]
    %v4147 = vld [vmem:[%s4036 + $0x370] sm:$0xff]
    %v4148 = vld [vmem:[%s4036 + $0x378] sm:$0xff]
    %v4149 = vld [vmem:[%s4036 + $0x380] sm:$0xff]
    %v4150 = vld [vmem:[%s4036 + $0x388] sm:$0xff]
    %v4151 = vld [vmem:[%s4036 + $0x390] sm:$0xff]
    %v4152 = vld [vmem:[%s4036 + $0x398] sm:$0xff]
    %v4153 = vld [vmem:[%s4036 + $0x3a0] sm:$0xff]
    %v4154 = vld [vmem:[%s4036 + $0x3a8] sm:$0xff]
    %v4155 = vld [vmem:[%s4036 + $0x3b0] sm:$0xff]
    %v4156 = vld [vmem:[%s4036 + $0x3b8] sm:$0xff]
    %v4157 = vld [vmem:[%s4036 + $0x3c0] sm:$0xff]
    %v4158 = vld [vmem:[%s4036 + $0x3c8] sm:$0xff]
    %v4159 = vld [vmem:[%s4036 + $0x3d0] sm:$0xff]
    %v4160 = vld [vmem:[%s4036 + $0x3d8] sm:$0xff]
    %v4161 = vld [vmem:[%s4036 + $0x3e0] sm:$0xff]
    %v4162 = vld [vmem:[%s4036 + $0x3e8] sm:$0xff]
    %v4163 = vld [vmem:[%s4036 + $0x3f0] sm:$0xff]
    %v4164 = vld [vmem:[%s4036 + $0x3f8] sm:$0xff]
    %v4165 = vld [vmem:[%s4036 + $0x400] sm:$0xff]
    %v4166 = vld [vmem:[%s4036 + $0x408] sm:$0xff]
    %v4167 = vld [vmem:[%s4036 + $0x410] sm:$0xff]
    %v4168 = vld [vmem:[%s4036 + $0x418] sm:$0xff]
    %v4169 = vld [vmem:[%s4036 + $0x420] sm:$0xff]
    %v4170 = vld [vmem:[%s4036 + $0x428] sm:$0xff]
    %v4171 = vld [vmem:[%s4036 + $0x430] sm:$0xff]
    %v4172 = vld [vmem:[%s4036 + $0x438] sm:$0xff]
    %v4173 = vld [vmem:[%s4036 + $0x440] sm:$0xff]
    %v4174 = vld [vmem:[%s4036 + $0x448] sm:$0xff]
    %v4175 = vld [vmem:[%s4036 + $0x450] sm:$0xff]
    %v4176 = vld [vmem:[%s4036 + $0x458] sm:$0xff]
    %v4177 = vld [vmem:[%s4036 + $0x460] sm:$0xff]
    %v4178 = vld [vmem:[%s4036 + $0x468] sm:$0xff]
    %v4179 = vld [vmem:[%s4036 + $0x470] sm:$0xff]
    %v4180 = vld [vmem:[%s4036 + $0x478] sm:$0xff]
    %4181 = vmatprep.subr.mxu0 0.0
    %4182 = vmatpush1.msra.mxu0 %v4037
    %4183 = vmatprep.subr.mxu0 0.0
    %4184 = vmatpush1.msra.mxu0 %v4038
    %4185 = vmatprep.subr.mxu0 0.0
    %4186 = vmatpush1.msra.mxu0 %v4039
    %4187 = vmatprep.subr.mxu0 0.0
    %4188 = vmatpush1.msra.mxu0 %v4040
    %4189 = vmatprep.subr.mxu0 0.0
    %4190 = vmatpush1.msra.mxu0 %v4041
    %4191 = vmatprep.subr.mxu0 0.0
    %4192 = vmatpush1.msra.mxu0 %v4042
    %4193 = vmatprep.subr.mxu0 0.0
    %4194 = vmatpush1.msra.mxu0 %v4043
    %4195 = vmatprep.subr.mxu0 0.0
    %4196 = vmatpush1.msra.mxu0 %v4044
    %4197 = vmatprep.subr.mxu0 0.0
    %4198 = vmatpush1.msra.mxu0 %v4045
    %4199 = vmatprep.subr.mxu0 0.0
    %4200 = vmatpush1.msra.mxu0 %v4046
    %4201 = vmatprep.subr.mxu0 0.0
    %4202 = vmatpush1.msra.mxu0 %v4047
    %4203 = vmatprep.subr.mxu0 0.0
    %4204 = vmatpush1.msra.mxu0 %v4048
    %4205 = vmatprep.subr.mxu0 0.0
    %4206 = vmatpush1.msra.mxu0 %v4049
    %4207 = vmatprep.subr.mxu0 0.0
    %4208 = vmatpush1.msra.mxu0 %v4050
    %4209 = vmatprep.subr.mxu0 0.0
    %4210 = vmatpush1.msra.mxu0 %v4051
    %4211 = vmatprep.subr.mxu0 0.0
    %4212 = vmatpush1.msra.mxu0 %v4052
    %4213 = vmatprep.subr.mxu0 0.0
    %4214 = vmatpush1.msra.mxu0 %v4053
    %4215 = vmatprep.subr.mxu0 0.0
    %4216 = vmatpush1.msra.mxu0 %v4054
    %4217 = vmatprep.subr.mxu0 0.0
    %4218 = vmatpush1.msra.mxu0 %v4055
    %4219 = vmatprep.subr.mxu0 0.0
    %4220 = vmatpush1.msra.mxu0 %v4056
    %4221 = vmatprep.subr.mxu0 0.0
    %4222 = vmatpush1.msra.mxu0 %v4057
    %4223 = vmatprep.subr.mxu0 0.0
    %4224 = vmatpush1.msra.mxu0 %v4058
    %4225 = vmatprep.subr.mxu0 0.0
    %4226 = vmatpush1.msra.mxu0 %v4059
    %4227 = vmatprep.subr.mxu0 0.0
    %4228 = vmatpush1.msra.mxu0 %v4060
    %4229 = vmatprep.subr.mxu0 0.0
    %4230 = vmatpush1.msra.mxu0 %v4061
    %4231 = vmatprep.subr.mxu0 0.0
    %4232 = vmatpush1.msra.mxu0 %v4062
    %4233 = vmatprep.subr.mxu0 0.0
    %4234 = vmatpush1.msra.mxu0 %v4063
    %4235 = vmatprep.subr.mxu0 0.0
    %4236 = vmatpush1.msra.mxu0 %v4064
    %4237 = vmatprep.subr.mxu0 0.0
    %4238 = vmatpush1.msra.mxu0 %v4065
    %4239 = vmatprep.subr.mxu0 0.0
    %4240 = vmatpush1.msra.mxu0 %v4066
    %4241 = vmatprep.subr.mxu0 0.0
    %4242 = vmatpush1.msra.mxu0 %v4067
    %4243 = vmatprep.subr.mxu0 0.0
    %4244 = vmatpush1.msra.mxu0 %v4068
    %4245 = vmatprep.mubr.f32.mxu0 %v4028
    %4246 = vmatmul.mubr.f32.gmra.mrb[0].mxu0 %v4027
    %v4247 = vpop.f32.mrb[0].mxu0
    %v4248 = vadd.f32 0.0, %v4247
    %v4249 = vpop.f32.mrb[0].mxu0
    %4250 = vdwg.mxu0
    %4251 = vmatprep.subr.mxu0 0.0
    %4252 = vmatpush1.msra.mxu0 %v4069
    %4253 = vmatprep.subr.mxu0 0.0
    %4254 = vmatpush1.msra.mxu0 %v4070
    %4255 = vmatprep.subr.mxu0 0.0
    %4256 = vmatpush1.msra.mxu0 %v4071
    %4257 = vmatprep.subr.mxu0 0.0
    %4258 = vmatpush1.msra.mxu0 %v4072
    %4259 = vmatprep.subr.mxu0 0.0
    %4260 = vmatpush1.msra.mxu0 %v4073
    %4261 = vmatprep.subr.mxu0 0.0
    %4262 = vmatpush1.msra.mxu0 %v4074
    %4263 = vmatprep.subr.mxu0 0.0
    %4264 = vmatpush1.msra.mxu0 %v4075
    %4265 = vmatprep.subr.mxu0 0.0
    %4266 = vmatpush1.msra.mxu0 %v4076
    %4267 = vmatprep.subr.mxu0 0.0
    %4268 = vmatpush1.msra.mxu0 %v4077
    %4269 = vmatprep.subr.mxu0 0.0
    %4270 = vmatpush1.msra.mxu0 %v4078
    %4271 = vmatprep.subr.mxu0 0.0
    %4272 = vmatpush1.msra.mxu0 %v4079
    %4273 = vmatprep.subr.mxu0 0.0
    %4274 = vmatpush1.msra.mxu0 %v4080
    %4275 = vmatprep.subr.mxu0 0.0
    %4276 = vmatpush1.msra.mxu0 %v4081
    %4277 = vmatprep.subr.mxu0 0.0
    %4278 = vmatpush1.msra.mxu0 %v4082
    %4279 = vmatprep.subr.mxu0 0.0
    %4280 = vmatpush1.msra.mxu0 %v4083
    %4281 = vmatprep.subr.mxu0 0.0
    %4282 = vmatpush1.msra.mxu0 %v4084
    %4283 = vmatprep.subr.mxu0 0.0
    %4284 = vmatpush1.msra.mxu0 %v4085
    %4285 = vmatprep.subr.mxu0 0.0
    %4286 = vmatpush1.msra.mxu0 %v4086
    %4287 = vmatprep.subr.mxu0 0.0
    %4288 = vmatpush1.msra.mxu0 %v4087
    %4289 = vmatprep.subr.mxu0 0.0
    %4290 = vmatpush1.msra.mxu0 %v4088
    %4291 = vmatprep.subr.mxu0 0.0
    %4292 = vmatpush1.msra.mxu0 %v4089
    %4293 = vmatprep.subr.mxu0 0.0
    %4294 = vmatpush1.msra.mxu0 %v4090
    %4295 = vmatprep.subr.mxu0 0.0
    %4296 = vmatpush1.msra.mxu0 %v4091
    %4297 = vmatprep.subr.mxu0 0.0
    %4298 = vmatpush1.msra.mxu0 %v4092
    %4299 = vmatprep.subr.mxu0 0.0
    %4300 = vmatpush1.msra.mxu0 %v4093
    %4301 = vmatprep.subr.mxu0 0.0
    %4302 = vmatpush1.msra.mxu0 %v4094
    %4303 = vmatprep.subr.mxu0 0.0
    %4304 = vmatpush1.msra.mxu0 %v4095
    %4305 = vmatprep.subr.mxu0 0.0
    %4306 = vmatpush1.msra.mxu0 %v4096
    %4307 = vmatprep.subr.mxu0 0.0
    %4308 = vmatpush1.msra.mxu0 %v4097
    %4309 = vmatprep.subr.mxu0 0.0
    %4310 = vmatpush1.msra.mxu0 %v4098
    %4311 = vmatprep.subr.mxu0 0.0
    %4312 = vmatpush1.msra.mxu0 %v4099
    %4313 = vmatprep.subr.mxu0 0.0
    %4314 = vmatpush1.msra.mxu0 %v4100
    %4315 = vmatprep.mubr.f32.mxu0 %v4030
    %4316 = vmatmul.mubr.f32.gmra.mrb[0].mxu0 %v4029
    %v4317 = vpop.f32.mrb[0].mxu0
    %v4318 = vadd.f32 %v4248, %v4317
    %v4319 = vpop.f32.mrb[0].mxu0
    %4320 = vdwg.mxu0
    %4321 = vmatprep.subr.mxu0 0.0
    %4322 = vmatpush1.msra.mxu0 %v4101
    %4323 = vmatprep.subr.mxu0 0.0
    %4324 = vmatpush1.msra.mxu0 %v4102
    %4325 = vmatprep.subr.mxu0 0.0
    %4326 = vmatpush1.msra.mxu0 %v4103
    %4327 = vmatprep.subr.mxu0 0.0
    %4328 = vmatpush1.msra.mxu0 %v4104
    %4329 = vmatprep.subr.mxu0 0.0
    %4330 = vmatpush1.msra.mxu0 %v4105
    %4331 = vmatprep.subr.mxu0 0.0
    %4332 = vmatpush1.msra.mxu0 %v4106
    %4333 = vmatprep.subr.mxu0 0.0
    %4334 = vmatpush1.msra.mxu0 %v4107
    %4335 = vmatprep.subr.mxu0 0.0
    %4336 = vmatpush1.msra.mxu0 %v4108
    %4337 = vmatprep.subr.mxu0 0.0
    %4338 = vmatpush1.msra.mxu0 %v4109
    %4339 = vmatprep.subr.mxu0 0.0
    %4340 = vmatpush1.msra.mxu0 %v4110
    %4341 = vmatprep.subr.mxu0 0.0
    %4342 = vmatpush1.msra.mxu0 %v4111
    %4343 = vmatprep.subr.mxu0 0.0
    %4344 = vmatpush1.msra.mxu0 %v4112
    %4345 = vmatprep.subr.mxu0 0.0
    %4346 = vmatpush1.msra.mxu0 %v4113
    %4347 = vmatprep.subr.mxu0 0.0
    %4348 = vmatpush1.msra.mxu0 %v4114
    %4349 = vmatprep.subr.mxu0 0.0
    %4350 = vmatpush1.msra.mxu0 %v4115
    %4351 = vmatprep.subr.mxu0 0.0
    %4352 = vmatpush1.msra.mxu0 %v4116
    %4353 = vmatprep.subr.mxu0 0.0
    %4354 = vmatpush1.msra.mxu0 %v4117
    %4355 = vmatprep.subr.mxu0 0.0
    %4356 = vmatpush1.msra.mxu0 %v4118
    %4357 = vmatprep.subr.mxu0 0.0
    %4358 = vmatpush1.msra.mxu0 %v4119
    %4359 = vmatprep.subr.mxu0 0.0
    %4360 = vmatpush1.msra.mxu0 %v4120
    %4361 = vmatprep.subr.mxu0 0.0
    %4362 = vmatpush1.msra.mxu0 %v4121
    %4363 = vmatprep.subr.mxu0 0.0
    %4364 = vmatpush1.msra.mxu0 %v4122
    %4365 = vmatprep.subr.mxu0 0.0
    %4366 = vmatpush1.msra.mxu0 %v4123
    %4367 = vmatprep.subr.mxu0 0.0
    %4368 = vmatpush1.msra.mxu0 %v4124
    %4369 = vmatprep.subr.mxu0 0.0
    %4370 = vmatpush1.msra.mxu0 %v4125
    %4371 = vmatprep.subr.mxu0 0.0
    %4372 = vmatpush1.msra.mxu0 %v4126
    %4373 = vmatprep.subr.mxu0 0.0
    %4374 = vmatpush1.msra.mxu0 %v4127
    %4375 = vmatprep.subr.mxu0 0.0
    %4376 = vmatpush1.msra.mxu0 %v4128
    %4377 = vmatprep.subr.mxu0 0.0
    %4378 = vmatpush1.msra.mxu0 %v4129
    %4379 = vmatprep.subr.mxu0 0.0
    %4380 = vmatpush1.msra.mxu0 %v4130
    %4381 = vmatprep.subr.mxu0 0.0
    %4382 = vmatpush1.msra.mxu0 %v4131
    %4383 = vmatprep.subr.mxu0 0.0
    %4384 = vmatpush1.msra.mxu0 %v4132
    %4385 = vmatprep.mubr.f32.mxu0 %v4032
    %4386 = vmatmul.mubr.f32.gmra.mrb[0].mxu0 %v4031
    %v4387 = vpop.f32.mrb[0].mxu0
    %v4388 = vadd.f32 %v4318, %v4387
    %v4389 = vpop.f32.mrb[0].mxu0
    %4390 = vdwg.mxu0
    %4391 = vmatprep.subr.mxu0 0.0
    %4392 = vmatpush1.msra.mxu0 %v4133
    %4393 = vmatprep.subr.mxu0 0.0
    %4394 = vmatpush1.msra.mxu0 %v4134
    %4395 = vmatprep.subr.mxu0 0.0
    %4396 = vmatpush1.msra.mxu0 %v4135
    %4397 = vmatprep.subr.mxu0 0.0
    %4398 = vmatpush1.msra.mxu0 %v4136
    %4399 = vmatprep.subr.mxu0 0.0
    %4400 = vmatpush1.msra.mxu0 %v4137
    %4401 = vmatprep.subr.mxu0 0.0
    %4402 = vmatpush1.msra.mxu0 %v4138
    %4403 = vmatprep.subr.mxu0 0.0
    %4404 = vmatpush1.msra.mxu0 %v4139
    %4405 = vmatprep.subr.mxu0 0.0
    %4406 = vmatpush1.msra.mxu0 %v4140
    %4407 = vmatprep.subr.mxu0 0.0
    %4408 = vmatpush1.msra.mxu0 %v4141
    %4409 = vmatprep.subr.mxu0 0.0
    %4410 = vmatpush1.msra.mxu0 %v4142
    %4411 = vmatprep.subr.mxu0 0.0
    %4412 = vmatpush1.msra.mxu0 %v4143
    %4413 = vmatprep.subr.mxu0 0.0
    %4414 = vmatpush1.msra.mxu0 %v4144
    %4415 = vmatprep.subr.mxu0 0.0
    %4416 = vmatpush1.msra.mxu0 %v4145
    %4417 = vmatprep.subr.mxu0 0.0
    %4418 = vmatpush1.msra.mxu0 %v4146
    %4419 = vmatprep.subr.mxu0 0.0
    %4420 = vmatpush1.msra.mxu0 %v4147
    %4421 = vmatprep.subr.mxu0 0.0
    %4422 = vmatpush1.msra.mxu0 %v4148
    %4423 = vmatprep.subr.mxu0 0.0
    %4424 = vmatpush1.msra.mxu0 %v4149
    %4425 = vmatprep.subr.mxu0 0.0
    %4426 = vmatpush1.msra.mxu0 %v4150
    %4427 = vmatprep.subr.mxu0 0.0
    %4428 = vmatpush1.msra.mxu0 %v4151
    %4429 = vmatprep.subr.mxu0 0.0
    %4430 = vmatpush1.msra.mxu0 %v4152
    %4431 = vmatprep.subr.mxu0 0.0
    %4432 = vmatpush1.msra.mxu0 %v4153
    %4433 = vmatprep.subr.mxu0 0.0
    %4434 = vmatpush1.msra.mxu0 %v4154
    %4435 = vmatprep.subr.mxu0 0.0
    %4436 = vmatpush1.msra.mxu0 %v4155
    %4437 = vmatprep.subr.mxu0 0.0
    %4438 = vmatpush1.msra.mxu0 %v4156
    %4439 = vmatprep.subr.mxu0 0.0
    %4440 = vmatpush1.msra.mxu0 %v4157
    %4441 = vmatprep.subr.mxu0 0.0
    %4442 = vmatpush1.msra.mxu0 %v4158
    %4443 = vmatprep.subr.mxu0 0.0
    %4444 = vmatpush1.msra.mxu0 %v4159
    %4445 = vmatprep.subr.mxu0 0.0
    %4446 = vmatpush1.msra.mxu0 %v4160
    %4447 = vmatprep.subr.mxu0 0.0
    %4448 = vmatpush1.msra.mxu0 %v4161
    %4449 = vmatprep.subr.mxu0 0.0
    %4450 = vmatpush1.msra.mxu0 %v4162
    %4451 = vmatprep.subr.mxu0 0.0
    %4452 = vmatpush1.msra.mxu0 %v4163
    %4453 = vmatprep.subr.mxu0 0.0
    %4454 = vmatpush1.msra.mxu0 %v4164
    %4455 = vmatprep.mubr.f32.mxu0 %v4034
    %4456 = vmatmul.mubr.f32.gmra.mrb[0].mxu0 %v4033
    %v4457 = vpop.f32.mrb[0].mxu0
    %v4458 = vadd.f32 %v4388, %v4457
    %v4459 = vpop.f32.mrb[0].mxu0
    %4460 = vdwg.mxu0
    %4461 = vmatprep.subr.mxu0 0.0
    %4462 = vmatpush1.msra.mxu0 %v4165
    %4463 = vmatprep.subr.mxu0 0.0
    %4464 = vmatpush1.msra.mxu0 %v4166
    %4465 = vmatprep.subr.mxu0 0.0
    %4466 = vmatpush1.msra.mxu0 %v4167
    %4467 = vmatprep.subr.mxu0 0.0
    %4468 = vmatpush1.msra.mxu0 %v4168
    %4469 = vmatprep.subr.mxu0 0.0
    %4470 = vmatpush1.msra.mxu0 %v4169
    %4471 = vmatprep.subr.mxu0 0.0
    %4472 = vmatpush1.msra.mxu0 %v4170
    %4473 = vmatprep.subr.mxu0 0.0
    %4474 = vmatpush1.msra.mxu0 %v4171
    %4475 = vmatprep.subr.mxu0 0.0
    %4476 = vmatpush1.msra.mxu0 %v4172
    %4477 = vmatprep.subr.mxu0 0.0
    %4478 = vmatpush1.msra.mxu0 %v4173
    %4479 = vmatprep.subr.mxu0 0.0
    %4480 = vmatpush1.msra.mxu0 %v4174
    %4481 = vmatprep.subr.mxu0 0.0
    %4482 = vmatpush1.msra.mxu0 %v4175
    %4483 = vmatprep.subr.mxu0 0.0
    %4484 = vmatpush1.msra.mxu0 %v4176
    %4485 = vmatprep.subr.mxu0 0.0
    %4486 = vmatpush1.msra.mxu0 %v4177
    %4487 = vmatprep.subr.mxu0 0.0
    %4488 = vmatpush1.msra.mxu0 %v4178
    %4489 = vmatprep.subr.mxu0 0.0
    %4490 = vmatpush1.msra.mxu0 %v4179
    %4491 = vmatprep.subr.mxu0 0.0
    %4492 = vmatpush1.msra.mxu0 %v4180
    %4493 = vmatprep.subr.mxu0 0.0
    %4494 = vmatpush1.msra.mxu0 0.0
    %4495 = vmatprep.subr.mxu0 0.0
    %4496 = vmatpush1.msra.mxu0 0.0
    %4497 = vmatprep.subr.mxu0 0.0
    %4498 = vmatpush1.msra.mxu0 0.0
    %4499 = vmatprep.subr.mxu0 0.0
    %4500 = vmatpush1.msra.mxu0 0.0
    %4501 = vmatprep.subr.mxu0 0.0
    %4502 = vmatpush1.msra.mxu0 0.0
    %4503 = vmatprep.subr.mxu0 0.0
    %4504 = vmatpush1.msra.mxu0 0.0
    %4505 = vmatprep.subr.mxu0 0.0
    %4506 = vmatpush1.msra.mxu0 0.0
    %4507 = vmatprep.subr.mxu0 0.0
    %4508 = vmatpush1.msra.mxu0 0.0
    %4509 = vmatprep.subr.mxu0 0.0
    %4510 = vmatpush1.msra.mxu0 0.0
    %4511 = vmatprep.subr.mxu0 0.0
    %4512 = vmatpush1.msra.mxu0 0.0
    %4513 = vmatprep.subr.mxu0 0.0
    %4514 = vmatpush1.msra.mxu0 0.0
    %4515 = vmatprep.subr.mxu0 0.0
    %4516 = vmatpush1.msra.mxu0 0.0
    %4517 = vmatprep.subr.mxu0 0.0
    %4518 = vmatpush1.msra.mxu0 0.0
    %4519 = vmatprep.subr.mxu0 0.0
    %4520 = vmatpush1.msra.mxu0 0.0
    %4521 = vmatprep.subr.mxu0 0.0
    %4522 = vmatpush1.msra.mxu0 0.0
    %4523 = vmatprep.subr.mxu0 0.0
    %4524 = vmatpush1.msra.mxu0 0.0
    %4525 = vmatprep.mubr.f32.mxu0 0.0
    %4526 = vmatmul.mubr.f32.gmra.mrb[0].mxu0 %v4035
    %v4527 = vpop.f32.mrb[0].mxu0
    %v4528 = vadd.f32 %v4458, %v4527
    %v4529 = vpop.f32.mrb[0].mxu0
    %4530 = vdwg.mxu0
    %4532 = vrot.lane.b32.xlu0 %v4528, 96
    %v4533 = vpop.permute.xlu0 %4532
    %4535 = vst.msk [vmem:[#allocation2 + $0x8] sm:$0xff] %vm1744, %v4533
    %v4536 = vld [vmem:[#allocation2] sm:$0xff]
    %v4537 = vld [vmem:[#allocation2 + $0x8] sm:$0xff]
    %v4538 = vld [vmem:[%s10] sm:$0x3]
    %v4540 = vlaneseq
    %v4541 = vshrl.u32 %v4540, 7
    %v4542 = vsub.s32 0, %v4541
    %v4543 = vrot.slane %v4538, %v4542
    %v4544 = vlaneseq
    %v4545 = vshrl.u32 %v4544, 7
    %v4546 = vsub.s32 1, %v4545
    %v4547 = vrot.slane %v4538, %v4546
    %v4550 = vmul.f32 %v4536, %v4543
    %v4551 = vmul.f32 %v4537, %v4547
    %v4552 = vld [vmem:[%s11] sm:$0x3]
    %v4554 = vlaneseq
    %v4555 = vshrl.u32 %v4554, 7
    %v4556 = vsub.s32 0, %v4555
    %v4557 = vrot.slane %v4552, %v4556
    %v4558 = vlaneseq
    %v4559 = vshrl.u32 %v4558, 7
    %v4560 = vsub.s32 1, %v4559
    %v4561 = vrot.slane %v4552, %v4560
    %v4564 = vadd.f32 %v4550, %v4557
    %v4565 = vadd.f32 %v4551, %v4561
    %v4566 = vmax.f32 %v4564, 0.0
    %v4567 = vmax.f32 %v4565, 0.0
    %v4568 = vld [vmem:[%s12] sm:$0xff]
    %v4569 = vld [vmem:[%s12 + $0x8] sm:$0xff]
    %v4570 = vld [vmem:[%s12 + $0x10] sm:$0xff]
    %v4571 = vld [vmem:[%s12 + $0x18] sm:$0xff]
    %v4572 = vld [vmem:[%s12 + $0x20] sm:$0xff]
    %v4573 = vld [vmem:[%s12 + $0x28] sm:$0xff]
    %v4574 = vld [vmem:[%s12 + $0x30] sm:$0xff]
    %v4575 = vld [vmem:[%s12 + $0x38] sm:$0xff]
    %v4576 = vld [vmem:[%s12 + $0x40] sm:$0xff]
    %v4577 = vld [vmem:[%s12 + $0x48] sm:$0xff]
    %v4578 = vld [vmem:[%s12 + $0x50] sm:$0xff]
    %v4579 = vld [vmem:[%s12 + $0x58] sm:$0xff]
    %v4580 = vld [vmem:[%s12 + $0x60] sm:$0xff]
    %v4581 = vld [vmem:[%s12 + $0x68] sm:$0xff]
    %v4582 = vld [vmem:[%s12 + $0x70] sm:$0xff]
    %v4583 = vld [vmem:[%s12 + $0x78] sm:$0xff]
    %v4584 = vld [vmem:[%s12 + $0x80] sm:$0xff]
    %v4585 = vld [vmem:[%s12 + $0x88] sm:$0xff]
    %v4586 = vld [vmem:[%s12 + $0x90] sm:$0xff]
    %v4587 = vld [vmem:[%s12 + $0x98] sm:$0xff]
    %v4588 = vld [vmem:[%s12 + $0xa0] sm:$0xff]
    %v4589 = vld [vmem:[%s12 + $0xa8] sm:$0xff]
    %v4590 = vld [vmem:[%s12 + $0xb0] sm:$0xff]
    %v4591 = vld [vmem:[%s12 + $0xb8] sm:$0xff]
    %v4592 = vld [vmem:[%s12 + $0xc0] sm:$0xff]
    %v4593 = vld [vmem:[%s12 + $0xc8] sm:$0xff]
    %v4594 = vld [vmem:[%s12 + $0xd0] sm:$0xff]
    %v4595 = vld [vmem:[%s12 + $0xd8] sm:$0xff]
    %v4596 = vld [vmem:[%s12 + $0xe0] sm:$0xff]
    %v4597 = vld [vmem:[%s12 + $0xe8] sm:$0xff]
    %v4598 = vld [vmem:[%s12 + $0xf0] sm:$0xff]
    %v4599 = vld [vmem:[%s12 + $0xf8] sm:$0xff]
    %4600 = vmatprep.subr.mxu0 0.0
    %4601 = vmatpush1.msra.mxu0 %v4568
    %4602 = vmatprep.subr.mxu0 0.0
    %4603 = vmatpush1.msra.mxu0 %v4569
    %4604 = vmatprep.subr.mxu0 0.0
    %4605 = vmatpush1.msra.mxu0 %v4570
    %4606 = vmatprep.subr.mxu0 0.0
    %4607 = vmatpush1.msra.mxu0 %v4571
    %4608 = vmatprep.subr.mxu0 0.0
    %4609 = vmatpush1.msra.mxu0 %v4572
    %4610 = vmatprep.subr.mxu0 0.0
    %4611 = vmatpush1.msra.mxu0 %v4573
    %4612 = vmatprep.subr.mxu0 0.0
    %4613 = vmatpush1.msra.mxu0 %v4574
    %4614 = vmatprep.subr.mxu0 0.0
    %4615 = vmatpush1.msra.mxu0 %v4575
    %4616 = vmatprep.subr.mxu0 0.0
    %4617 = vmatpush1.msra.mxu0 %v4576
    %4618 = vmatprep.subr.mxu0 0.0
    %4619 = vmatpush1.msra.mxu0 %v4577
    %4620 = vmatprep.subr.mxu0 0.0
    %4621 = vmatpush1.msra.mxu0 %v4578
    %4622 = vmatprep.subr.mxu0 0.0
    %4623 = vmatpush1.msra.mxu0 %v4579
    %4624 = vmatprep.subr.mxu0 0.0
    %4625 = vmatpush1.msra.mxu0 %v4580
    %4626 = vmatprep.subr.mxu0 0.0
    %4627 = vmatpush1.msra.mxu0 %v4581
    %4628 = vmatprep.subr.mxu0 0.0
    %4629 = vmatpush1.msra.mxu0 %v4582
    %4630 = vmatprep.subr.mxu0 0.0
    %4631 = vmatpush1.msra.mxu0 %v4583
    %4632 = vmatprep.subr.mxu0 0.0
    %4633 = vmatpush1.msra.mxu0 %v4584
    %4634 = vmatprep.subr.mxu0 0.0
    %4635 = vmatpush1.msra.mxu0 %v4585
    %4636 = vmatprep.subr.mxu0 0.0
    %4637 = vmatpush1.msra.mxu0 %v4586
    %4638 = vmatprep.subr.mxu0 0.0
    %4639 = vmatpush1.msra.mxu0 %v4587
    %4640 = vmatprep.subr.mxu0 0.0
    %4641 = vmatpush1.msra.mxu0 %v4588
    %4642 = vmatprep.subr.mxu0 0.0
    %4643 = vmatpush1.msra.mxu0 %v4589
    %4644 = vmatprep.subr.mxu0 0.0
    %4645 = vmatpush1.msra.mxu0 %v4590
    %4646 = vmatprep.subr.mxu0 0.0
    %4647 = vmatpush1.msra.mxu0 %v4591
    %4648 = vmatprep.subr.mxu0 0.0
    %4649 = vmatpush1.msra.mxu0 %v4592
    %4650 = vmatprep.subr.mxu0 0.0
    %4651 = vmatpush1.msra.mxu0 %v4593
    %4652 = vmatprep.subr.mxu0 0.0
    %4653 = vmatpush1.msra.mxu0 %v4594
    %4654 = vmatprep.subr.mxu0 0.0
    %4655 = vmatpush1.msra.mxu0 %v4595
    %4656 = vmatprep.subr.mxu0 0.0
    %4657 = vmatpush1.msra.mxu0 %v4596
    %4658 = vmatprep.subr.mxu0 0.0
    %4659 = vmatpush1.msra.mxu0 %v4597
    %4660 = vmatprep.subr.mxu0 0.0
    %4661 = vmatpush1.msra.mxu0 %v4598
    %4662 = vmatprep.subr.mxu0 0.0
    %4663 = vmatpush1.msra.mxu0 %v4599
    %4664 = vmatprep.mubr.f32.mxu0 %v4567
    %4665 = vmatmul.mubr.f32.gmra.mrb[0].mxu0 %v4566
    %v4666 = vpop.f32.mrb[0].mxu0
    %v4667 = vadd.f32 0.0, %v4666
    %v4668 = vpop.f32.mrb[0].mxu0
    %4669 = vdwg.mxu0
    %v4671 = vrot.slane %v4667, 2
    %v4673 = vadd.f32 %v4667, %v4671
    %v4674 = vrot.slane %v4667, 4
    %v4676 = vadd.f32 %v4673, %v4674
    %v4677 = vrot.slane %v4667, 6
    %v4679 = vadd.f32 %v4676, %v4677
    %v4680 = vmul.f32 %v4679, 0.25
    %4681 = vst [vmem:[#allocation3] sm:$0xff] 0.0
    %4682 = vst [vmem:[#allocation3] sm:$0x3] %v4680
    %v4683 = vld [vmem:[#allocation3] sm:$0xff]
    %v4684 = vld [vmem:[%s13] ss:$8 sm:$0xf]
    %v4686 = vlaneseq
    %v4687 = vshrl.u32 %v4686, 7
    %v4688 = vsub.s32 0, %v4687
    %v4689 = vrot.slane %v4684, %v4688
    %v4690 = vlaneseq
    %v4691 = vshrl.u32 %v4690, 7
    %v4692 = vsub.s32 1, %v4691
    %v4693 = vrot.slane %v4684, %v4692
    %v4694 = vlaneseq
    %v4695 = vshrl.u32 %v4694, 7
    %v4696 = vsub.s32 2, %v4695
    %v4697 = vrot.slane %v4684, %v4696
    %v4698 = vlaneseq
    %v4699 = vshrl.u32 %v4698, 7
    %v4700 = vsub.s32 3, %v4699
    %v4701 = vrot.slane %v4684, %v4700
    %v4702 = vcombine.low %v4689, %v4693
    %v4703 = vcombine.low %v4697, %v4701
    %v4705 = vunpack.c.l.s4 1983009808
    %v4706 = vunpack.c.0.s8 %v4705
    %v4707 = vlaneseq
    %v4708 = vshrl.u32 %v4707, 7
    %v4709 = vsub.s32 %v4706, %v4708
    %v4710 = vrot.slane %v4702, %v4709
    %v4712 = vunpack.c.l.s4 1983009808
    %v4713 = vunpack.c.0.s8 %v4712
    %v4714 = vlaneseq
    %v4715 = vshrl.u32 %v4714, 7
    %v4716 = vsub.s32 %v4713, %v4715
    %v4717 = vrot.slane %v4703, %v4716
    %v4718 = vcombine.low %v4710, %v4717
    %v4720 = vmul.f32 %v4683, %v4718
    %v4721 = vld [vmem:[%s14] ss:$8 sm:$0xf]
    %v4723 = vlaneseq
    %v4724 = vshrl.u32 %v4723, 7
    %v4725 = vsub.s32 0, %v4724
    %v4726 = vrot.slane %v4721, %v4725
    %v4727 = vlaneseq
    %v4728 = vshrl.u32 %v4727, 7
    %v4729 = vsub.s32 1, %v4728
    %v4730 = vrot.slane %v4721, %v4729
    %v4731 = vlaneseq
    %v4732 = vshrl.u32 %v4731, 7
    %v4733 = vsub.s32 2, %v4732
    %v4734 = vrot.slane %v4721, %v4733
    %v4735 = vlaneseq
    %v4736 = vshrl.u32 %v4735, 7
    %v4737 = vsub.s32 3, %v4736
    %v4738 = vrot.slane %v4721, %v4737
    %v4739 = vcombine.low %v4726, %v4730
    %v4740 = vcombine.low %v4734, %v4738
    %v4742 = vunpack.c.l.s4 1983009808
    %v4743 = vunpack.c.0.s8 %v4742
    %v4744 = vlaneseq
    %v4745 = vshrl.u32 %v4744, 7
    %v4746 = vsub.s32 %v4743, %v4745
    %v4747 = vrot.slane %v4739, %v4746
    %v4749 = vunpack.c.l.s4 1983009808
    %v4750 = vunpack.c.0.s8 %v4749
    %v4751 = vlaneseq
    %v4752 = vshrl.u32 %v4751, 7
    %v4753 = vsub.s32 %v4750, %v4752
    %v4754 = vrot.slane %v4740, %v4753
    %v4755 = vcombine.low %v4747, %v4754
    %v4757 = vadd.f32 %v4720, %v4755
    %v4758 = vmax.f32 %v4757, 0.0
    %v4759 = vld [vmem:[%s15] sm:$0xff]
    %v4760 = vld [vmem:[%s15 + $0x8] sm:$0xff]
    %v4761 = vld [vmem:[%s15 + $0x10] sm:$0xff]
    %v4762 = vld [vmem:[%s15 + $0x18] sm:$0xff]
    %v4763 = vld [vmem:[%s15 + $0x20] sm:$0xff]
    %v4764 = vld [vmem:[%s15 + $0x28] sm:$0xff]
    %v4765 = vld [vmem:[%s15 + $0x30] sm:$0xff]
    %v4766 = vld [vmem:[%s15 + $0x38] sm:$0xff]
    %v4767 = vld [vmem:[%s15 + $0x40] sm:$0xff]
    %v4768 = vld [vmem:[%s15 + $0x48] sm:$0xff]
    %v4769 = vld [vmem:[%s15 + $0x50] sm:$0xff]
    %v4770 = vld [vmem:[%s15 + $0x58] sm:$0xff]
    %v4771 = vld [vmem:[%s15 + $0x60] sm:$0xff]
    %v4772 = vld [vmem:[%s15 + $0x68] sm:$0xff]
    %v4773 = vld [vmem:[%s15 + $0x70] sm:$0xff]
    %v4774 = vld [vmem:[%s15 + $0x78] sm:$0xff]
    %v4775 = vld [vmem:[%s15 + $0x80] sm:$0xff]
    %v4776 = vld [vmem:[%s15 + $0x88] sm:$0xff]
    %v4777 = vld [vmem:[%s15 + $0x90] sm:$0xff]
    %v4778 = vld [vmem:[%s15 + $0x98] sm:$0xff]
    %v4779 = vld [vmem:[%s15 + $0xa0] sm:$0xff]
    %v4780 = vld [vmem:[%s15 + $0xa8] sm:$0xff]
    %v4781 = vld [vmem:[%s15 + $0xb0] sm:$0xff]
    %v4782 = vld [vmem:[%s15 + $0xb8] sm:$0xff]
    %v4783 = vld [vmem:[%s15 + $0xc0] sm:$0xff]
    %v4784 = vld [vmem:[%s15 + $0xc8] sm:$0xff]
    %v4785 = vld [vmem:[%s15 + $0xd0] sm:$0xff]
    %v4786 = vld [vmem:[%s15 + $0xd8] sm:$0xff]
    %v4787 = vld [vmem:[%s15 + $0xe0] sm:$0xff]
    %v4788 = vld [vmem:[%s15 + $0xe8] sm:$0xff]
    %v4789 = vld [vmem:[%s15 + $0xf0] sm:$0xff]
    %v4790 = vld [vmem:[%s15 + $0xf8] sm:$0xff]
    %v4791 = vld [vmem:[%s15 + $0x100] sm:$0xff]
    %v4792 = vld [vmem:[%s15 + $0x108] sm:$0xff]
    %v4793 = vld [vmem:[%s15 + $0x110] sm:$0xff]
    %v4794 = vld [vmem:[%s15 + $0x118] sm:$0xff]
    %v4795 = vld [vmem:[%s15 + $0x120] sm:$0xff]
    %v4796 = vld [vmem:[%s15 + $0x128] sm:$0xff]
    %v4797 = vld [vmem:[%s15 + $0x130] sm:$0xff]
    %v4798 = vld [vmem:[%s15 + $0x138] sm:$0xff]
    %v4799 = vld [vmem:[%s15 + $0x140] sm:$0xff]
    %v4800 = vld [vmem:[%s15 + $0x148] sm:$0xff]
    %v4801 = vld [vmem:[%s15 + $0x150] sm:$0xff]
    %v4802 = vld [vmem:[%s15 + $0x158] sm:$0xff]
    %v4803 = vld [vmem:[%s15 + $0x160] sm:$0xff]
    %v4804 = vld [vmem:[%s15 + $0x168] sm:$0xff]
    %v4805 = vld [vmem:[%s15 + $0x170] sm:$0xff]
    %v4806 = vld [vmem:[%s15 + $0x178] sm:$0xff]
    %v4807 = vld [vmem:[%s15 + $0x180] sm:$0xff]
    %v4808 = vld [vmem:[%s15 + $0x188] sm:$0xff]
    %v4809 = vld [vmem:[%s15 + $0x190] sm:$0xff]
    %v4810 = vld [vmem:[%s15 + $0x198] sm:$0xff]
    %v4811 = vld [vmem:[%s15 + $0x1a0] sm:$0xff]
    %v4812 = vld [vmem:[%s15 + $0x1a8] sm:$0xff]
    %v4813 = vld [vmem:[%s15 + $0x1b0] sm:$0xff]
    %v4814 = vld [vmem:[%s15 + $0x1b8] sm:$0xff]
    %v4815 = vld [vmem:[%s15 + $0x1c0] sm:$0xff]
    %v4816 = vld [vmem:[%s15 + $0x1c8] sm:$0xff]
    %v4817 = vld [vmem:[%s15 + $0x1d0] sm:$0xff]
    %v4818 = vld [vmem:[%s15 + $0x1d8] sm:$0xff]
    %v4819 = vld [vmem:[%s15 + $0x1e0] sm:$0xff]
    %v4820 = vld [vmem:[%s15 + $0x1e8] sm:$0xff]
    %v4821 = vld [vmem:[%s15 + $0x1f0] sm:$0xff]
    %v4822 = vld [vmem:[%s15 + $0x1f8] sm:$0xff]
    %v4824 = vcombine.high %v4758, %v4758
    %v4826 = vunpack.c.l.s4 1983009808
    %v4827 = vunpack.c.0.s8 %v4826
    %v4828 = vlaneseq
    %v4829 = vshrl.u32 %v4828, 7
    %v4830 = vsub.s32 %v4827, %v4829
    %v4831 = vrot.slane %v4758, %v4830
    %v4833 = vunpack.c.l.s4 1983009808
    %v4834 = vunpack.c.0.s8 %v4833
    %v4835 = vlaneseq
    %v4836 = vshrl.u32 %v4835, 7
    %v4837 = vsub.s32 %v4834, %v4836
    %v4838 = vrot.slane %v4824, %v4837
    %v4839 = vcombine.high %v4831, %v4831
    %v4840 = vcombine.high %v4838, %v4838
    %4845 = vmatprep.subr.mxu0 0.0
    %4846 = vmatpush1.msra.mxu0 %v4759
    %4847 = vmatprep.subr.mxu0 0.0
    %4848 = vmatpush1.msra.mxu0 %v4760
    %4849 = vmatprep.subr.mxu0 0.0
    %4850 = vmatpush1.msra.mxu0 %v4761
    %4851 = vmatprep.subr.mxu0 0.0
    %4852 = vmatpush1.msra.mxu0 %v4762
    %4853 = vmatprep.subr.mxu0 0.0
    %4854 = vmatpush1.msra.mxu0 %v4763
    %4855 = vmatprep.subr.mxu0 0.0
    %4856 = vmatpush1.msra.mxu0 %v4764
    %4857 = vmatprep.subr.mxu0 0.0
    %4858 = vmatpush1.msra.mxu0 %v4765
    %4859 = vmatprep.subr.mxu0 0.0
    %4860 = vmatpush1.msra.mxu0 %v4766
    %4861 = vmatprep.subr.mxu0 0.0
    %4862 = vmatpush1.msra.mxu0 %v4767
    %4863 = vmatprep.subr.mxu0 0.0
    %4864 = vmatpush1.msra.mxu0 %v4768
    %4865 = vmatprep.subr.mxu0 0.0
    %4866 = vmatpush1.msra.mxu0 %v4769
    %4867 = vmatprep.subr.mxu0 0.0
    %4868 = vmatpush1.msra.mxu0 %v4770
    %4869 = vmatprep.subr.mxu0 0.0
    %4870 = vmatpush1.msra.mxu0 %v4771
    %4871 = vmatprep.subr.mxu0 0.0
    %4872 = vmatpush1.msra.mxu0 %v4772
    %4873 = vmatprep.subr.mxu0 0.0
    %4874 = vmatpush1.msra.mxu0 %v4773
    %4875 = vmatprep.subr.mxu0 0.0
    %4876 = vmatpush1.msra.mxu0 %v4774
    %4877 = vmatprep.subr.mxu0 0.0
    %4878 = vmatpush1.msra.mxu0 %v4775
    %4879 = vmatprep.subr.mxu0 0.0
    %4880 = vmatpush1.msra.mxu0 %v4776
    %4881 = vmatprep.subr.mxu0 0.0
    %4882 = vmatpush1.msra.mxu0 %v4777
    %4883 = vmatprep.subr.mxu0 0.0
    %4884 = vmatpush1.msra.mxu0 %v4778
    %4885 = vmatprep.subr.mxu0 0.0
    %4886 = vmatpush1.msra.mxu0 %v4779
    %4887 = vmatprep.subr.mxu0 0.0
    %4888 = vmatpush1.msra.mxu0 %v4780
    %4889 = vmatprep.subr.mxu0 0.0
    %4890 = vmatpush1.msra.mxu0 %v4781
    %4891 = vmatprep.subr.mxu0 0.0
    %4892 = vmatpush1.msra.mxu0 %v4782
    %4893 = vmatprep.subr.mxu0 0.0
    %4894 = vmatpush1.msra.mxu0 %v4783
    %4895 = vmatprep.subr.mxu0 0.0
    %4896 = vmatpush1.msra.mxu0 %v4784
    %4897 = vmatprep.subr.mxu0 0.0
    %4898 = vmatpush1.msra.mxu0 %v4785
    %4899 = vmatprep.subr.mxu0 0.0
    %4900 = vmatpush1.msra.mxu0 %v4786
    %4901 = vmatprep.subr.mxu0 0.0
    %4902 = vmatpush1.msra.mxu0 %v4787
    %4903 = vmatprep.subr.mxu0 0.0
    %4904 = vmatpush1.msra.mxu0 %v4788
    %4905 = vmatprep.subr.mxu0 0.0
    %4906 = vmatpush1.msra.mxu0 %v4789
    %4907 = vmatprep.subr.mxu0 0.0
    %4908 = vmatpush1.msra.mxu0 %v4790
    %4909 = vmatprep.mubr.f32.mxu0 %v4839
    %4910 = vmatmul.mubr.f32.gmra.mrb[0].mxu0 %v4831
    %v4911 = vpop.f32.mrb[0].mxu0
    %v4912 = vadd.f32 0.0, %v4911
    %v4913 = vpop.f32.mrb[0].mxu0
    %4914 = vdwg.mxu0
    %4915 = vmatprep.subr.mxu0 0.0
    %4916 = vmatpush1.msra.mxu0 %v4791
    %4917 = vmatprep.subr.mxu0 0.0
    %4918 = vmatpush1.msra.mxu0 %v4792
    %4919 = vmatprep.subr.mxu0 0.0
    %4920 = vmatpush1.msra.mxu0 %v4793
    %4921 = vmatprep.subr.mxu0 0.0
    %4922 = vmatpush1.msra.mxu0 %v4794
    %4923 = vmatprep.subr.mxu0 0.0
    %4924 = vmatpush1.msra.mxu0 %v4795
    %4925 = vmatprep.subr.mxu0 0.0
    %4926 = vmatpush1.msra.mxu0 %v4796
    %4927 = vmatprep.subr.mxu0 0.0
    %4928 = vmatpush1.msra.mxu0 %v4797
    %4929 = vmatprep.subr.mxu0 0.0
    %4930 = vmatpush1.msra.mxu0 %v4798
    %4931 = vmatprep.subr.mxu0 0.0
    %4932 = vmatpush1.msra.mxu0 %v4799
    %4933 = vmatprep.subr.mxu0 0.0
    %4934 = vmatpush1.msra.mxu0 %v4800
    %4935 = vmatprep.subr.mxu0 0.0
    %4936 = vmatpush1.msra.mxu0 %v4801
    %4937 = vmatprep.subr.mxu0 0.0
    %4938 = vmatpush1.msra.mxu0 %v4802
    %4939 = vmatprep.subr.mxu0 0.0
    %4940 = vmatpush1.msra.mxu0 %v4803
    %4941 = vmatprep.subr.mxu0 0.0
    %4942 = vmatpush1.msra.mxu0 %v4804
    %4943 = vmatprep.subr.mxu0 0.0
    %4944 = vmatpush1.msra.mxu0 %v4805
    %4945 = vmatprep.subr.mxu0 0.0
    %4946 = vmatpush1.msra.mxu0 %v4806
    %4947 = vmatprep.subr.mxu0 0.0
    %4948 = vmatpush1.msra.mxu0 %v4807
    %4949 = vmatprep.subr.mxu0 0.0
    %4950 = vmatpush1.msra.mxu0 %v4808
    %4951 = vmatprep.subr.mxu0 0.0
    %4952 = vmatpush1.msra.mxu0 %v4809
    %4953 = vmatprep.subr.mxu0 0.0
    %4954 = vmatpush1.msra.mxu0 %v4810
    %4955 = vmatprep.subr.mxu0 0.0
    %4956 = vmatpush1.msra.mxu0 %v4811
    %4957 = vmatprep.subr.mxu0 0.0
    %4958 = vmatpush1.msra.mxu0 %v4812
    %4959 = vmatprep.subr.mxu0 0.0
    %4960 = vmatpush1.msra.mxu0 %v4813
    %4961 = vmatprep.subr.mxu0 0.0
    %4962 = vmatpush1.msra.mxu0 %v4814
    %4963 = vmatprep.subr.mxu0 0.0
    %4964 = vmatpush1.msra.mxu0 %v4815
    %4965 = vmatprep.subr.mxu0 0.0
    %4966 = vmatpush1.msra.mxu0 %v4816
    %4967 = vmatprep.subr.mxu0 0.0
    %4968 = vmatpush1.msra.mxu0 %v4817
    %4969 = vmatprep.subr.mxu0 0.0
    %4970 = vmatpush1.msra.mxu0 %v4818
    %4971 = vmatprep.subr.mxu0 0.0
    %4972 = vmatpush1.msra.mxu0 %v4819
    %4973 = vmatprep.subr.mxu0 0.0
    %4974 = vmatpush1.msra.mxu0 %v4820
    %4975 = vmatprep.subr.mxu0 0.0
    %4976 = vmatpush1.msra.mxu0 %v4821
    %4977 = vmatprep.subr.mxu0 0.0
    %4978 = vmatpush1.msra.mxu0 %v4822
    %4979 = vmatprep.mubr.f32.mxu0 %v4840
    %4980 = vmatmul.mubr.f32.gmra.mrb[0].mxu0 %v4838
    %v4981 = vpop.f32.mrb[0].mxu0
    %v4982 = vadd.f32 %v4912, %v4981
    %v4983 = vpop.f32.mrb[0].mxu0
    %4984 = vdwg.mxu0
    %v4985 = vld [vmem:[%s16] sm:$0x1]
    %v4986 = vlaneseq
    %v4987 = vshrl.u32 %v4986, 7
    %v4988 = vsub.s32 0, %v4987
    %v4989 = vrot.slane %v4985, %v4988
    %v4990 = vmul.f32 %v4982, %v4989
    %v4991 = vld [vmem:[%s17] sm:$0x1]
    %v4992 = vlaneseq
    %v4993 = vshrl.u32 %v4992, 7
    %v4994 = vsub.s32 0, %v4993
    %v4995 = vrot.slane %v4991, %v4994
    %v4996 = vadd.f32 %v4990, %v4995
    %v4997 = vmax.f32 %v4996, 0.0
    %v4998 = vld [vmem:[%s18] sm:$0xff]
    %v4999 = vld [vmem:[%s18 + $0x8] sm:$0xff]
    %v5000 = vld [vmem:[%s18 + $0x10] sm:$0xff]
    %v5001 = vld [vmem:[%s18 + $0x18] sm:$0xff]
    %v5002 = vld [vmem:[%s18 + $0x20] sm:$0xff]
    %v5003 = vld [vmem:[%s18 + $0x28] sm:$0xff]
    %v5004 = vld [vmem:[%s18 + $0x30] sm:$0xff]
    %v5005 = vld [vmem:[%s18 + $0x38] sm:$0xff]
    %v5006 = vld [vmem:[%s18 + $0x40] sm:$0xff]
    %v5007 = vld [vmem:[%s18 + $0x48] sm:$0xff]
    %v5008 = vld [vmem:[%s18 + $0x50] sm:$0xff]
    %v5009 = vld [vmem:[%s18 + $0x58] sm:$0xff]
    %v5010 = vld [vmem:[%s18 + $0x60] sm:$0xff]
    %v5011 = vld [vmem:[%s18 + $0x68] sm:$0xff]
    %v5012 = vld [vmem:[%s18 + $0x70] sm:$0xff]
    %v5013 = vld [vmem:[%s18 + $0x78] sm:$0xff]
    %5014 = vmatprep.subr.mxu0 0.0
    %5015 = vmatpush1.msra.mxu0 %v4998
    %5016 = vmatprep.subr.mxu0 0.0
    %5017 = vmatpush1.msra.mxu0 %v4999
    %5018 = vmatprep.subr.mxu0 0.0
    %5019 = vmatpush1.msra.mxu0 %v5000
    %5020 = vmatprep.subr.mxu0 0.0
    %5021 = vmatpush1.msra.mxu0 %v5001
    %5022 = vmatprep.subr.mxu0 0.0
    %5023 = vmatpush1.msra.mxu0 %v5002
    %5024 = vmatprep.subr.mxu0 0.0
    %5025 = vmatpush1.msra.mxu0 %v5003
    %5026 = vmatprep.subr.mxu0 0.0
    %5027 = vmatpush1.msra.mxu0 %v5004
    %5028 = vmatprep.subr.mxu0 0.0
    %5029 = vmatpush1.msra.mxu0 %v5005
    %5030 = vmatprep.subr.mxu0 0.0
    %5031 = vmatpush1.msra.mxu0 %v5006
    %5032 = vmatprep.subr.mxu0 0.0
    %5033 = vmatpush1.msra.mxu0 %v5007
    %5034 = vmatprep.subr.mxu0 0.0
    %5035 = vmatpush1.msra.mxu0 %v5008
    %5036 = vmatprep.subr.mxu0 0.0
    %5037 = vmatpush1.msra.mxu0 %v5009
    %5038 = vmatprep.subr.mxu0 0.0
    %5039 = vmatpush1.msra.mxu0 %v5010
    %5040 = vmatprep.subr.mxu0 0.0
    %5041 = vmatpush1.msra.mxu0 %v5011
    %5042 = vmatprep.subr.mxu0 0.0
    %5043 = vmatpush1.msra.mxu0 %v5012
    %5044 = vmatprep.subr.mxu0 0.0
    %5045 = vmatpush1.msra.mxu0 %v5013
    %5046 = vmatprep.subr.mxu0 0.0
    %5047 = vmatpush1.msra.mxu0 0.0
    %5048 = vmatprep.subr.mxu0 0.0
    %5049 = vmatpush1.msra.mxu0 0.0
    %5050 = vmatprep.subr.mxu0 0.0
    %5051 = vmatpush1.msra.mxu0 0.0
    %5052 = vmatprep.subr.mxu0 0.0
    %5053 = vmatpush1.msra.mxu0 0.0
    %5054 = vmatprep.subr.mxu0 0.0
    %5055 = vmatpush1.msra.mxu0 0.0
    %5056 = vmatprep.subr.mxu0 0.0
    %5057 = vmatpush1.msra.mxu0 0.0
    %5058 = vmatprep.subr.mxu0 0.0
    %5059 = vmatpush1.msra.mxu0 0.0
    %5060 = vmatprep.subr.mxu0 0.0
    %5061 = vmatpush1.msra.mxu0 0.0
    %5062 = vmatprep.subr.mxu0 0.0
    %5063 = vmatpush1.msra.mxu0 0.0
    %5064 = vmatprep.subr.mxu0 0.0
    %5065 = vmatpush1.msra.mxu0 0.0
    %5066 = vmatprep.subr.mxu0 0.0
    %5067 = vmatpush1.msra.mxu0 0.0
    %5068 = vmatprep.subr.mxu0 0.0
    %5069 = vmatpush1.msra.mxu0 0.0
    %5070 = vmatprep.subr.mxu0 0.0
    %5071 = vmatpush1.msra.mxu0 0.0
    %5072 = vmatprep.subr.mxu0 0.0
    %5073 = vmatpush1.msra.mxu0 0.0
    %5074 = vmatprep.subr.mxu0 0.0
    %5075 = vmatpush1.msra.mxu0 0.0
    %5076 = vmatprep.subr.mxu0 0.0
    %5077 = vmatpush1.msra.mxu0 0.0
    %5078 = vmatprep.mubr.f32.mxu0 0.0
    %5079 = vmatmul.mubr.f32.gmra.mrb[0].mxu0 %v4997
    %v5080 = vpop.f32.mrb[0].mxu0
    %v5081 = vadd.f32 0.0, %v5080
    %v5082 = vpop.f32.mrb[0].mxu0
    %5083 = vdwg.mxu0
    %vm5084 = vcmask 254976
    %5085 = vst.msk [vmem:[#allocation3 + $0x2] sm:$0x3] %vm5084, %v5081
    %v5086 = vld [vmem:[#allocation3] sm:$0xff]
    %s5087 = scalar_lea.vmem %s13, 1
    %v5088 = vld [vmem:[%s5087] ss:$8 sm:$0xf]
    %v5090 = vlaneseq
    %v5091 = vshrl.u32 %v5090, 7
    %v5092 = vsub.s32 0, %v5091
    %v5093 = vrot.slane %v5088, %v5092
    %v5094 = vlaneseq
    %v5095 = vshrl.u32 %v5094, 7
    %v5096 = vsub.s32 1, %v5095
    %v5097 = vrot.slane %v5088, %v5096
    %v5098 = vlaneseq
    %v5099 = vshrl.u32 %v5098, 7
    %v5100 = vsub.s32 2, %v5099
    %v5101 = vrot.slane %v5088, %v5100
    %v5102 = vlaneseq
    %v5103 = vshrl.u32 %v5102, 7
    %v5104 = vsub.s32 3, %v5103
    %v5105 = vrot.slane %v5088, %v5104
    %v5106 = vcombine.low %v5093, %v5097
    %v5107 = vcombine.low %v5101, %v5105
    %v5109 = vunpack.c.l.s4 1983009808
    %v5110 = vunpack.c.0.s8 %v5109
    %v5111 = vlaneseq
    %v5112 = vshrl.u32 %v5111, 7
    %v5113 = vsub.s32 %v5110, %v5112
    %v5114 = vrot.slane %v5106, %v5113
    %v5116 = vunpack.c.l.s4 1983009808
    %v5117 = vunpack.c.0.s8 %v5116
    %v5118 = vlaneseq
    %v5119 = vshrl.u32 %v5118, 7
    %v5120 = vsub.s32 %v5117, %v5119
    %v5121 = vrot.slane %v5107, %v5120
    %v5122 = vcombine.low %v5114, %v5121
    %v5124 = vmul.f32 %v5086, %v5122
    %s5125 = scalar_lea.vmem %s14, 1
    %v5126 = vld [vmem:[%s5125] ss:$8 sm:$0xf]
    %v5128 = vlaneseq
    %v5129 = vshrl.u32 %v5128, 7
    %v5130 = vsub.s32 0, %v5129
    %v5131 = vrot.slane %v5126, %v5130
    %v5132 = vlaneseq
    %v5133 = vshrl.u32 %v5132, 7
    %v5134 = vsub.s32 1, %v5133
    %v5135 = vrot.slane %v5126, %v5134
    %v5136 = vlaneseq
    %v5137 = vshrl.u32 %v5136, 7
    %v5138 = vsub.s32 2, %v5137
    %v5139 = vrot.slane %v5126, %v5138
    %v5140 = vlaneseq
    %v5141 = vshrl.u32 %v5140, 7
    %v5142 = vsub.s32 3, %v5141
    %v5143 = vrot.slane %v5126, %v5142
    %v5144 = vcombine.low %v5131, %v5135
    %v5145 = vcombine.low %v5139, %v5143
    %v5147 = vunpack.c.l.s4 1983009808
    %v5148 = vunpack.c.0.s8 %v5147
    %v5149 = vlaneseq
    %v5150 = vshrl.u32 %v5149, 7
    %v5151 = vsub.s32 %v5148, %v5150
    %v5152 = vrot.slane %v5144, %v5151
    %v5154 = vunpack.c.l.s4 1983009808
    %v5155 = vunpack.c.0.s8 %v5154
    %v5156 = vlaneseq
    %v5157 = vshrl.u32 %v5156, 7
    %v5158 = vsub.s32 %v5155, %v5157
    %v5159 = vrot.slane %v5145, %v5158
    %v5160 = vcombine.low %v5152, %v5159
    %v5162 = vadd.f32 %v5124, %v5160
    %v5163 = vmax.f32 %v5162, 0.0
    %s5164 = scalar_lea.vmem %s15, 512
    %v5165 = vld [vmem:[%s5164] sm:$0xff]
    %v5166 = vld [vmem:[%s5164 + $0x8] sm:$0xff]
    %v5167 = vld [vmem:[%s5164 + $0x10] sm:$0xff]
    %v5168 = vld [vmem:[%s5164 + $0x18] sm:$0xff]
    %v5169 = vld [vmem:[%s5164 + $0x20] sm:$0xff]
    %v5170 = vld [vmem:[%s5164 + $0x28] sm:$0xff]
    %v5171 = vld [vmem:[%s5164 + $0x30] sm:$0xff]
    %v5172 = vld [vmem:[%s5164 + $0x38] sm:$0xff]
    %v5173 = vld [vmem:[%s5164 + $0x40] sm:$0xff]
    %v5174 = vld [vmem:[%s5164 + $0x48] sm:$0xff]
    %v5175 = vld [vmem:[%s5164 + $0x50] sm:$0xff]
    %v5176 = vld [vmem:[%s5164 + $0x58] sm:$0xff]
    %v5177 = vld [vmem:[%s5164 + $0x60] sm:$0xff]
    %v5178 = vld [vmem:[%s5164 + $0x68] sm:$0xff]
    %v5179 = vld [vmem:[%s5164 + $0x70] sm:$0xff]
    %v5180 = vld [vmem:[%s5164 + $0x78] sm:$0xff]
    %v5181 = vld [vmem:[%s5164 + $0x80] sm:$0xff]
    %v5182 = vld [vmem:[%s5164 + $0x88] sm:$0xff]
    %v5183 = vld [vmem:[%s5164 + $0x90] sm:$0xff]
    %v5184 = vld [vmem:[%s5164 + $0x98] sm:$0xff]
    %v5185 = vld [vmem:[%s5164 + $0xa0] sm:$0xff]
    %v5186 = vld [vmem:[%s5164 + $0xa8] sm:$0xff]
    %v5187 = vld [vmem:[%s5164 + $0xb0] sm:$0xff]
    %v5188 = vld [vmem:[%s5164 + $0xb8] sm:$0xff]
    %v5189 = vld [vmem:[%s5164 + $0xc0] sm:$0xff]
    %v5190 = vld [vmem:[%s5164 + $0xc8] sm:$0xff]
    %v5191 = vld [vmem:[%s5164 + $0xd0] sm:$0xff]
    %v5192 = vld [vmem:[%s5164 + $0xd8] sm:$0xff]
    %v5193 = vld [vmem:[%s5164 + $0xe0] sm:$0xff]
    %v5194 = vld [vmem:[%s5164 + $0xe8] sm:$0xff]
    %v5195 = vld [vmem:[%s5164 + $0xf0] sm:$0xff]
    %v5196 = vld [vmem:[%s5164 + $0xf8] sm:$0xff]
    %v5197 = vld [vmem:[%s5164 + $0x100] sm:$0xff]
    %v5198 = vld [vmem:[%s5164 + $0x108] sm:$0xff]
    %v5199 = vld [vmem:[%s5164 + $0x110] sm:$0xff]
    %v5200 = vld [vmem:[%s5164 + $0x118] sm:$0xff]
    %v5201 = vld [vmem:[%s5164 + $0x120] sm:$0xff]
    %v5202 = vld [vmem:[%s5164 + $0x128] sm:$0xff]
    %v5203 = vld [vmem:[%s5164 + $0x130] sm:$0xff]
    %v5204 = vld [vmem:[%s5164 + $0x138] sm:$0xff]
    %v5205 = vld [vmem:[%s5164 + $0x140] sm:$0xff]
    %v5206 = vld [vmem:[%s5164 + $0x148] sm:$0xff]
    %v5207 = vld [vmem:[%s5164 + $0x150] sm:$0xff]
    %v5208 = vld [vmem:[%s5164 + $0x158] sm:$0xff]
    %v5209 = vld [vmem:[%s5164 + $0x160] sm:$0xff]
    %v5210 = vld [vmem:[%s5164 + $0x168] sm:$0xff]
    %v5211 = vld [vmem:[%s5164 + $0x170] sm:$0xff]
    %v5212 = vld [vmem:[%s5164 + $0x178] sm:$0xff]
    %v5213 = vld [vmem:[%s5164 + $0x180] sm:$0xff]
    %v5214 = vld [vmem:[%s5164 + $0x188] sm:$0xff]
    %v5215 = vld [vmem:[%s5164 + $0x190] sm:$0xff]
    %v5216 = vld [vmem:[%s5164 + $0x198] sm:$0xff]
    %v5217 = vld [vmem:[%s5164 + $0x1a0] sm:$0xff]
    %v5218 = vld [vmem:[%s5164 + $0x1a8] sm:$0xff]
    %v5219 = vld [vmem:[%s5164 + $0x1b0] sm:$0xff]
    %v5220 = vld [vmem:[%s5164 + $0x1b8] sm:$0xff]
    %v5221 = vld [vmem:[%s5164 + $0x1c0] sm:$0xff]
    %v5222 = vld [vmem:[%s5164 + $0x1c8] sm:$0xff]
    %v5223 = vld [vmem:[%s5164 + $0x1d0] sm:$0xff]
    %v5224 = vld [vmem:[%s5164 + $0x1d8] sm:$0xff]
    %v5225 = vld [vmem:[%s5164 + $0x1e0] sm:$0xff]
    %v5226 = vld [vmem:[%s5164 + $0x1e8] sm:$0xff]
    %v5227 = vld [vmem:[%s5164 + $0x1f0] sm:$0xff]
    %v5228 = vld [vmem:[%s5164 + $0x1f8] sm:$0xff]
    %v5230 = vcombine.high %v5163, %v5163
    %v5232 = vunpack.c.l.s4 1983009808
    %v5233 = vunpack.c.0.s8 %v5232
    %v5234 = vlaneseq
    %v5235 = vshrl.u32 %v5234, 7
    %v5236 = vsub.s32 %v5233, %v5235
    %v5237 = vrot.slane %v5163, %v5236
    %v5239 = vunpack.c.l.s4 1983009808
    %v5240 = vunpack.c.0.s8 %v5239
    %v5241 = vlaneseq
    %v5242 = vshrl.u32 %v5241, 7
    %v5243 = vsub.s32 %v5240, %v5242
    %v5244 = vrot.slane %v5230, %v5243
    %v5245 = vcombine.high %v5237, %v5237
    %v5246 = vcombine.high %v5244, %v5244
    %5251 = vmatprep.subr.mxu0 0.0
    %5252 = vmatpush1.msra.mxu0 %v5165
    %5253 = vmatprep.subr.mxu0 0.0
    %5254 = vmatpush1.msra.mxu0 %v5166
    %5255 = vmatprep.subr.mxu0 0.0
    %5256 = vmatpush1.msra.mxu0 %v5167
    %5257 = vmatprep.subr.mxu0 0.0
    %5258 = vmatpush1.msra.mxu0 %v5168
    %5259 = vmatprep.subr.mxu0 0.0
    %5260 = vmatpush1.msra.mxu0 %v5169
    %5261 = vmatprep.subr.mxu0 0.0
    %5262 = vmatpush1.msra.mxu0 %v5170
    %5263 = vmatprep.subr.mxu0 0.0
    %5264 = vmatpush1.msra.mxu0 %v5171
    %5265 = vmatprep.subr.mxu0 0.0
    %5266 = vmatpush1.msra.mxu0 %v5172
    %5267 = vmatprep.subr.mxu0 0.0
    %5268 = vmatpush1.msra.mxu0 %v5173
    %5269 = vmatprep.subr.mxu0 0.0
    %5270 = vmatpush1.msra.mxu0 %v5174
    %5271 = vmatprep.subr.mxu0 0.0
    %5272 = vmatpush1.msra.mxu0 %v5175
    %5273 = vmatprep.subr.mxu0 0.0
    %5274 = vmatpush1.msra.mxu0 %v5176
    %5275 = vmatprep.subr.mxu0 0.0
    %5276 = vmatpush1.msra.mxu0 %v5177
    %5277 = vmatprep.subr.mxu0 0.0
    %5278 = vmatpush1.msra.mxu0 %v5178
    %5279 = vmatprep.subr.mxu0 0.0
    %5280 = vmatpush1.msra.mxu0 %v5179
    %5281 = vmatprep.subr.mxu0 0.0
    %5282 = vmatpush1.msra.mxu0 %v5180
    %5283 = vmatprep.subr.mxu0 0.0
    %5284 = vmatpush1.msra.mxu0 %v5181
    %5285 = vmatprep.subr.mxu0 0.0
    %5286 = vmatpush1.msra.mxu0 %v5182
    %5287 = vmatprep.subr.mxu0 0.0
    %5288 = vmatpush1.msra.mxu0 %v5183
    %5289 = vmatprep.subr.mxu0 0.0
    %5290 = vmatpush1.msra.mxu0 %v5184
    %5291 = vmatprep.subr.mxu0 0.0
    %5292 = vmatpush1.msra.mxu0 %v5185
    %5293 = vmatprep.subr.mxu0 0.0
    %5294 = vmatpush1.msra.mxu0 %v5186
    %5295 = vmatprep.subr.mxu0 0.0
    %5296 = vmatpush1.msra.mxu0 %v5187
    %5297 = vmatprep.subr.mxu0 0.0
    %5298 = vmatpush1.msra.mxu0 %v5188
    %5299 = vmatprep.subr.mxu0 0.0
    %5300 = vmatpush1.msra.mxu0 %v5189
    %5301 = vmatprep.subr.mxu0 0.0
    %5302 = vmatpush1.msra.mxu0 %v5190
    %5303 = vmatprep.subr.mxu0 0.0
    %5304 = vmatpush1.msra.mxu0 %v5191
    %5305 = vmatprep.subr.mxu0 0.0
    %5306 = vmatpush1.msra.mxu0 %v5192
    %5307 = vmatprep.subr.mxu0 0.0
    %5308 = vmatpush1.msra.mxu0 %v5193
    %5309 = vmatprep.subr.mxu0 0.0
    %5310 = vmatpush1.msra.mxu0 %v5194
    %5311 = vmatprep.subr.mxu0 0.0
    %5312 = vmatpush1.msra.mxu0 %v5195
    %5313 = vmatprep.subr.mxu0 0.0
    %5314 = vmatpush1.msra.mxu0 %v5196
    %5315 = vmatprep.mubr.f32.mxu0 %v5245
    %5316 = vmatmul.mubr.f32.gmra.mrb[0].mxu0 %v5237
    %v5317 = vpop.f32.mrb[0].mxu0
    %v5318 = vadd.f32 0.0, %v5317
    %v5319 = vpop.f32.mrb[0].mxu0
    %5320 = vdwg.mxu0
    %5321 = vmatprep.subr.mxu0 0.0
    %5322 = vmatpush1.msra.mxu0 %v5197
    %5323 = vmatprep.subr.mxu0 0.0
    %5324 = vmatpush1.msra.mxu0 %v5198
    %5325 = vmatprep.subr.mxu0 0.0
    %5326 = vmatpush1.msra.mxu0 %v5199
    %5327 = vmatprep.subr.mxu0 0.0
    %5328 = vmatpush1.msra.mxu0 %v5200
    %5329 = vmatprep.subr.mxu0 0.0
    %5330 = vmatpush1.msra.mxu0 %v5201
    %5331 = vmatprep.subr.mxu0 0.0
    %5332 = vmatpush1.msra.mxu0 %v5202
    %5333 = vmatprep.subr.mxu0 0.0
    %5334 = vmatpush1.msra.mxu0 %v5203
    %5335 = vmatprep.subr.mxu0 0.0
    %5336 = vmatpush1.msra.mxu0 %v5204
    %5337 = vmatprep.subr.mxu0 0.0
    %5338 = vmatpush1.msra.mxu0 %v5205
    %5339 = vmatprep.subr.mxu0 0.0
    %5340 = vmatpush1.msra.mxu0 %v5206
    %5341 = vmatprep.subr.mxu0 0.0
    %5342 = vmatpush1.msra.mxu0 %v5207
    %5343 = vmatprep.subr.mxu0 0.0
    %5344 = vmatpush1.msra.mxu0 %v5208
    %5345 = vmatprep.subr.mxu0 0.0
    %5346 = vmatpush1.msra.mxu0 %v5209
    %5347 = vmatprep.subr.mxu0 0.0
    %5348 = vmatpush1.msra.mxu0 %v5210
    %5349 = vmatprep.subr.mxu0 0.0
    %5350 = vmatpush1.msra.mxu0 %v5211
    %5351 = vmatprep.subr.mxu0 0.0
    %5352 = vmatpush1.msra.mxu0 %v5212
    %5353 = vmatprep.subr.mxu0 0.0
    %5354 = vmatpush1.msra.mxu0 %v5213
    %5355 = vmatprep.subr.mxu0 0.0
    %5356 = vmatpush1.msra.mxu0 %v5214
    %5357 = vmatprep.subr.mxu0 0.0
    %5358 = vmatpush1.msra.mxu0 %v5215
    %5359 = vmatprep.subr.mxu0 0.0
    %5360 = vmatpush1.msra.mxu0 %v5216
    %5361 = vmatprep.subr.mxu0 0.0
    %5362 = vmatpush1.msra.mxu0 %v5217
    %5363 = vmatprep.subr.mxu0 0.0
    %5364 = vmatpush1.msra.mxu0 %v5218
    %5365 = vmatprep.subr.mxu0 0.0
    %5366 = vmatpush1.msra.mxu0 %v5219
    %5367 = vmatprep.subr.mxu0 0.0
    %5368 = vmatpush1.msra.mxu0 %v5220
    %5369 = vmatprep.subr.mxu0 0.0
    %5370 = vmatpush1.msra.mxu0 %v5221
    %5371 = vmatprep.subr.mxu0 0.0
    %5372 = vmatpush1.msra.mxu0 %v5222
    %5373 = vmatprep.subr.mxu0 0.0
    %5374 = vmatpush1.msra.mxu0 %v5223
    %5375 = vmatprep.subr.mxu0 0.0
    %5376 = vmatpush1.msra.mxu0 %v5224
    %5377 = vmatprep.subr.mxu0 0.0
    %5378 = vmatpush1.msra.mxu0 %v5225
    %5379 = vmatprep.subr.mxu0 0.0
    %5380 = vmatpush1.msra.mxu0 %v5226
    %5381 = vmatprep.subr.mxu0 0.0
    %5382 = vmatpush1.msra.mxu0 %v5227
    %5383 = vmatprep.subr.mxu0 0.0
    %5384 = vmatpush1.msra.mxu0 %v5228
    %5385 = vmatprep.mubr.f32.mxu0 %v5246
    %5386 = vmatmul.mubr.f32.gmra.mrb[0].mxu0 %v5244
    %v5387 = vpop.f32.mrb[0].mxu0
    %v5388 = vadd.f32 %v5318, %v5387
    %v5389 = vpop.f32.mrb[0].mxu0
    %5390 = vdwg.mxu0
    %v5391 = vld [vmem:[%s16 + $0x1] sm:$0x1]
    %v5392 = vlaneseq
    %v5393 = vshrl.u32 %v5392, 7
    %v5394 = vsub.s32 0, %v5393
    %v5395 = vrot.slane %v5391, %v5394
    %v5396 = vmul.f32 %v5388, %v5395
    %v5397 = vld [vmem:[%s17 + $0x1] sm:$0x1]
    %v5398 = vlaneseq
    %v5399 = vshrl.u32 %v5398, 7
    %v5400 = vsub.s32 0, %v5399
    %v5401 = vrot.slane %v5397, %v5400
    %v5402 = vadd.f32 %v5396, %v5401
    %v5403 = vmax.f32 %v5402, 0.0
    %s5404 = scalar_lea.vmem %s18, 128
    %v5405 = vld [vmem:[%s5404] sm:$0xff]
    %v5406 = vld [vmem:[%s5404 + $0x8] sm:$0xff]
    %v5407 = vld [vmem:[%s5404 + $0x10] sm:$0xff]
    %v5408 = vld [vmem:[%s5404 + $0x18] sm:$0xff]
    %v5409 = vld [vmem:[%s5404 + $0x20] sm:$0xff]
    %v5410 = vld [vmem:[%s5404 + $0x28] sm:$0xff]
    %v5411 = vld [vmem:[%s5404 + $0x30] sm:$0xff]
    %v5412 = vld [vmem:[%s5404 + $0x38] sm:$0xff]
    %v5413 = vld [vmem:[%s5404 + $0x40] sm:$0xff]
    %v5414 = vld [vmem:[%s5404 + $0x48] sm:$0xff]
    %v5415 = vld [vmem:[%s5404 + $0x50] sm:$0xff]
    %v5416 = vld [vmem:[%s5404 + $0x58] sm:$0xff]
    %v5417 = vld [vmem:[%s5404 + $0x60] sm:$0xff]
    %v5418 = vld [vmem:[%s5404 + $0x68] sm:$0xff]
    %v5419 = vld [vmem:[%s5404 + $0x70] sm:$0xff]
    %v5420 = vld [vmem:[%s5404 + $0x78] sm:$0xff]
    %5421 = vmatprep.subr.mxu0 0.0
    %5422 = vmatpush1.msra.mxu0 %v5405
    %5423 = vmatprep.subr.mxu0 0.0
    %5424 = vmatpush1.msra.mxu0 %v5406
    %5425 = vmatprep.subr.mxu0 0.0
    %5426 = vmatpush1.msra.mxu0 %v5407
    %5427 = vmatprep.subr.mxu0 0.0
    %5428 = vmatpush1.msra.mxu0 %v5408
    %5429 = vmatprep.subr.mxu0 0.0
    %5430 = vmatpush1.msra.mxu0 %v5409
    %5431 = vmatprep.subr.mxu0 0.0
    %5432 = vmatpush1.msra.mxu0 %v5410
    %5433 = vmatprep.subr.mxu0 0.0
    %5434 = vmatpush1.msra.mxu0 %v5411
    %5435 = vmatprep.subr.mxu0 0.0
    %5436 = vmatpush1.msra.mxu0 %v5412
    %5437 = vmatprep.subr.mxu0 0.0
    %5438 = vmatpush1.msra.mxu0 %v5413
    %5439 = vmatprep.subr.mxu0 0.0
    %5440 = vmatpush1.msra.mxu0 %v5414
    %5441 = vmatprep.subr.mxu0 0.0
    %5442 = vmatpush1.msra.mxu0 %v5415
    %5443 = vmatprep.subr.mxu0 0.0
    %5444 = vmatpush1.msra.mxu0 %v5416
    %5445 = vmatprep.subr.mxu0 0.0
    %5446 = vmatpush1.msra.mxu0 %v5417
    %5447 = vmatprep.subr.mxu0 0.0
    %5448 = vmatpush1.msra.mxu0 %v5418
    %5449 = vmatprep.subr.mxu0 0.0
    %5450 = vmatpush1.msra.mxu0 %v5419
    %5451 = vmatprep.subr.mxu0 0.0
    %5452 = vmatpush1.msra.mxu0 %v5420
    %5453 = vmatprep.subr.mxu0 0.0
    %5454 = vmatpush1.msra.mxu0 0.0
    %5455 = vmatprep.subr.mxu0 0.0
    %5456 = vmatpush1.msra.mxu0 0.0
    %5457 = vmatprep.subr.mxu0 0.0
    %5458 = vmatpush1.msra.mxu0 0.0
    %5459 = vmatprep.subr.mxu0 0.0
    %5460 = vmatpush1.msra.mxu0 0.0
    %5461 = vmatprep.subr.mxu0 0.0
    %5462 = vmatpush1.msra.mxu0 0.0
    %5463 = vmatprep.subr.mxu0 0.0
    %5464 = vmatpush1.msra.mxu0 0.0
    %5465 = vmatprep.subr.mxu0 0.0
    %5466 = vmatpush1.msra.mxu0 0.0
    %5467 = vmatprep.subr.mxu0 0.0
    %5468 = vmatpush1.msra.mxu0 0.0
    %5469 = vmatprep.subr.mxu0 0.0
    %5470 = vmatpush1.msra.mxu0 0.0
    %5471 = vmatprep.subr.mxu0 0.0
    %5472 = vmatpush1.msra.mxu0 0.0
    %5473 = vmatprep.subr.mxu0 0.0
    %5474 = vmatpush1.msra.mxu0 0.0
    %5475 = vmatprep.subr.mxu0 0.0
    %5476 = vmatpush1.msra.mxu0 0.0
    %5477 = vmatprep.subr.mxu0 0.0
    %5478 = vmatpush1.msra.mxu0 0.0
    %5479 = vmatprep.subr.mxu0 0.0
    %5480 = vmatpush1.msra.mxu0 0.0
    %5481 = vmatprep.subr.mxu0 0.0
    %5482 = vmatpush1.msra.mxu0 0.0
    %5483 = vmatprep.subr.mxu0 0.0
    %5484 = vmatpush1.msra.mxu0 0.0
    %5485 = vmatprep.mubr.f32.mxu0 0.0
    %5486 = vmatmul.mubr.f32.gmra.mrb[0].mxu0 %v5403
    %v5487 = vpop.f32.mrb[0].mxu0
    %v5488 = vadd.f32 0.0, %v5487
    %v5489 = vpop.f32.mrb[0].mxu0
    %5490 = vdwg.mxu0
    %v5493 = vunpack.c.l.s4 1983009808
    %v5494 = vunpack.c.0.s8 %v5493
    %v5495 = vlaneseq
    %v5496 = vshrl.u32 %v5495, 7
    %v5497 = vsub.s32 %v5494, %v5496
    %v5498 = vrot.slane %v5488, %v5497
    %5499 = vrot.lane.b32.xlu0 %v5498, 32
    %v5500 = vpop.permute.xlu0 %5499
    %vm5502 = vcmask 517376
    %5503 = vst.msk [vmem:[#allocation3 + $0x2] sm:$0x3] %vm5502, %v5500
    %v5504 = vld [vmem:[#allocation3] sm:$0xff]
    %s5505 = scalar_lea.vmem %s13, 2
    %v5506 = vld [vmem:[%s5505] ss:$8 sm:$0xf]
    %v5508 = vlaneseq
    %v5509 = vshrl.u32 %v5508, 7
    %v5510 = vsub.s32 0, %v5509
    %v5511 = vrot.slane %v5506, %v5510
    %v5512 = vlaneseq
    %v5513 = vshrl.u32 %v5512, 7
    %v5514 = vsub.s32 1, %v5513
    %v5515 = vrot.slane %v5506, %v5514
    %v5516 = vlaneseq
    %v5517 = vshrl.u32 %v5516, 7
    %v5518 = vsub.s32 2, %v5517
    %v5519 = vrot.slane %v5506, %v5518
    %v5520 = vlaneseq
    %v5521 = vshrl.u32 %v5520, 7
    %v5522 = vsub.s32 3, %v5521
    %v5523 = vrot.slane %v5506, %v5522
    %v5524 = vcombine.low %v5511, %v5515
    %v5525 = vcombine.low %v5519, %v5523
    %v5527 = vunpack.c.l.s4 1983009808
    %v5528 = vunpack.c.0.s8 %v5527
    %v5529 = vlaneseq
    %v5530 = vshrl.u32 %v5529, 7
    %v5531 = vsub.s32 %v5528, %v5530
    %v5532 = vrot.slane %v5524, %v5531
    %v5534 = vunpack.c.l.s4 1983009808
    %v5535 = vunpack.c.0.s8 %v5534
    %v5536 = vlaneseq
    %v5537 = vshrl.u32 %v5536, 7
    %v5538 = vsub.s32 %v5535, %v5537
    %v5539 = vrot.slane %v5525, %v5538
    %v5540 = vcombine.low %v5532, %v5539
    %v5542 = vmul.f32 %v5504, %v5540
    %s5543 = scalar_lea.vmem %s14, 2
    %v5544 = vld [vmem:[%s5543] ss:$8 sm:$0xf]
    %v5546 = vlaneseq
    %v5547 = vshrl.u32 %v5546, 7
    %v5548 = vsub.s32 0, %v5547
    %v5549 = vrot.slane %v5544, %v5548
    %v5550 = vlaneseq
    %v5551 = vshrl.u32 %v5550, 7
    %v5552 = vsub.s32 1, %v5551
    %v5553 = vrot.slane %v5544, %v5552
    %v5554 = vlaneseq
    %v5555 = vshrl.u32 %v5554, 7
    %v5556 = vsub.s32 2, %v5555
    %v5557 = vrot.slane %v5544, %v5556
    %v5558 = vlaneseq
    %v5559 = vshrl.u32 %v5558, 7
    %v5560 = vsub.s32 3, %v5559
    %v5561 = vrot.slane %v5544, %v5560
    %v5562 = vcombine.low %v5549, %v5553
    %v5563 = vcombine.low %v5557, %v5561
    %v5565 = vunpack.c.l.s4 1983009808
    %v5566 = vunpack.c.0.s8 %v5565
    %v5567 = vlaneseq
    %v5568 = vshrl.u32 %v5567, 7
    %v5569 = vsub.s32 %v5566, %v5568
    %v5570 = vrot.slane %v5562, %v5569
    %v5572 = vunpack.c.l.s4 1983009808
    %v5573 = vunpack.c.0.s8 %v5572
    %v5574 = vlaneseq
    %v5575 = vshrl.u32 %v5574, 7
    %v5576 = vsub.s32 %v5573, %v5575
    %v5577 = vrot.slane %v5563, %v5576
    %v5578 = vcombine.low %v5570, %v5577
    %v5580 = vadd.f32 %v5542, %v5578
    %v5581 = vmax.f32 %v5580, 0.0
    %s5582 = scalar_lea.vmem %s15, 1024
    %v5583 = vld [vmem:[%s5582] sm:$0xff]
    %v5584 = vld [vmem:[%s5582 + $0x8] sm:$0xff]
    %v5585 = vld [vmem:[%s5582 + $0x10] sm:$0xff]
    %v5586 = vld [vmem:[%s5582 + $0x18] sm:$0xff]
    %v5587 = vld [vmem:[%s5582 + $0x20] sm:$0xff]
    %v5588 = vld [vmem:[%s5582 + $0x28] sm:$0xff]
    %v5589 = vld [vmem:[%s5582 + $0x30] sm:$0xff]
    %v5590 = vld [vmem:[%s5582 + $0x38] sm:$0xff]
    %v5591 = vld [vmem:[%s5582 + $0x40] sm:$0xff]
    %v5592 = vld [vmem:[%s5582 + $0x48] sm:$0xff]
    %v5593 = vld [vmem:[%s5582 + $0x50] sm:$0xff]
    %v5594 = vld [vmem:[%s5582 + $0x58] sm:$0xff]
    %v5595 = vld [vmem:[%s5582 + $0x60] sm:$0xff]
    %v5596 = vld [vmem:[%s5582 + $0x68] sm:$0xff]
    %v5597 = vld [vmem:[%s5582 + $0x70] sm:$0xff]
    %v5598 = vld [vmem:[%s5582 + $0x78] sm:$0xff]
    %v5599 = vld [vmem:[%s5582 + $0x80] sm:$0xff]
    %v5600 = vld [vmem:[%s5582 + $0x88] sm:$0xff]
    %v5601 = vld [vmem:[%s5582 + $0x90] sm:$0xff]
    %v5602 = vld [vmem:[%s5582 + $0x98] sm:$0xff]
    %v5603 = vld [vmem:[%s5582 + $0xa0] sm:$0xff]
    %v5604 = vld [vmem:[%s5582 + $0xa8] sm:$0xff]
    %v5605 = vld [vmem:[%s5582 + $0xb0] sm:$0xff]
    %v5606 = vld [vmem:[%s5582 + $0xb8] sm:$0xff]
    %v5607 = vld [vmem:[%s5582 + $0xc0] sm:$0xff]
    %v5608 = vld [vmem:[%s5582 + $0xc8] sm:$0xff]
    %v5609 = vld [vmem:[%s5582 + $0xd0] sm:$0xff]
    %v5610 = vld [vmem:[%s5582 + $0xd8] sm:$0xff]
    %v5611 = vld [vmem:[%s5582 + $0xe0] sm:$0xff]
    %v5612 = vld [vmem:[%s5582 + $0xe8] sm:$0xff]
    %v5613 = vld [vmem:[%s5582 + $0xf0] sm:$0xff]
    %v5614 = vld [vmem:[%s5582 + $0xf8] sm:$0xff]
    %v5615 = vld [vmem:[%s5582 + $0x100] sm:$0xff]
    %v5616 = vld [vmem:[%s5582 + $0x108] sm:$0xff]
    %v5617 = vld [vmem:[%s5582 + $0x110] sm:$0xff]
    %v5618 = vld [vmem:[%s5582 + $0x118] sm:$0xff]
    %v5619 = vld [vmem:[%s5582 + $0x120] sm:$0xff]
    %v5620 = vld [vmem:[%s5582 + $0x128] sm:$0xff]
    %v5621 = vld [vmem:[%s5582 + $0x130] sm:$0xff]
    %v5622 = vld [vmem:[%s5582 + $0x138] sm:$0xff]
    %v5623 = vld [vmem:[%s5582 + $0x140] sm:$0xff]
    %v5624 = vld [vmem:[%s5582 + $0x148] sm:$0xff]
    %v5625 = vld [vmem:[%s5582 + $0x150] sm:$0xff]
    %v5626 = vld [vmem:[%s5582 + $0x158] sm:$0xff]
    %v5627 = vld [vmem:[%s5582 + $0x160] sm:$0xff]
    %v5628 = vld [vmem:[%s5582 + $0x168] sm:$0xff]
    %v5629 = vld [vmem:[%s5582 + $0x170] sm:$0xff]
    %v5630 = vld [vmem:[%s5582 + $0x178] sm:$0xff]
    %v5631 = vld [vmem:[%s5582 + $0x180] sm:$0xff]
    %v5632 = vld [vmem:[%s5582 + $0x188] sm:$0xff]
    %v5633 = vld [vmem:[%s5582 + $0x190] sm:$0xff]
    %v5634 = vld [vmem:[%s5582 + $0x198] sm:$0xff]
    %v5635 = vld [vmem:[%s5582 + $0x1a0] sm:$0xff]
    %v5636 = vld [vmem:[%s5582 + $0x1a8] sm:$0xff]
    %v5637 = vld [vmem:[%s5582 + $0x1b0] sm:$0xff]
    %v5638 = vld [vmem:[%s5582 + $0x1b8] sm:$0xff]
    %v5639 = vld [vmem:[%s5582 + $0x1c0] sm:$0xff]
    %v5640 = vld [vmem:[%s5582 + $0x1c8] sm:$0xff]
    %v5641 = vld [vmem:[%s5582 + $0x1d0] sm:$0xff]
    %v5642 = vld [vmem:[%s5582 + $0x1d8] sm:$0xff]
    %v5643 = vld [vmem:[%s5582 + $0x1e0] sm:$0xff]
    %v5644 = vld [vmem:[%s5582 + $0x1e8] sm:$0xff]
    %v5645 = vld [vmem:[%s5582 + $0x1f0] sm:$0xff]
    %v5646 = vld [vmem:[%s5582 + $0x1f8] sm:$0xff]
    %v5648 = vcombine.high %v5581, %v5581
    %v5650 = vunpack.c.l.s4 1983009808
    %v5651 = vunpack.c.0.s8 %v5650
    %v5652 = vlaneseq
    %v5653 = vshrl.u32 %v5652, 7
    %v5654 = vsub.s32 %v5651, %v5653
    %v5655 = vrot.slane %v5581, %v5654
    %v5657 = vunpack.c.l.s4 1983009808
    %v5658 = vunpack.c.0.s8 %v5657
    %v5659 = vlaneseq
    %v5660 = vshrl.u32 %v5659, 7
    %v5661 = vsub.s32 %v5658, %v5660
    %v5662 = vrot.slane %v5648, %v5661
    %v5663 = vcombine.high %v5655, %v5655
    %v5664 = vcombine.high %v5662, %v5662
    %5669 = vmatprep.subr.mxu0 0.0
    %5670 = vmatpush1.msra.mxu0 %v5583
    %5671 = vmatprep.subr.mxu0 0.0
    %5672 = vmatpush1.msra.mxu0 %v5584
    %5673 = vmatprep.subr.mxu0 0.0
    %5674 = vmatpush1.msra.mxu0 %v5585
    %5675 = vmatprep.subr.mxu0 0.0
    %5676 = vmatpush1.msra.mxu0 %v5586
    %5677 = vmatprep.subr.mxu0 0.0
    %5678 = vmatpush1.msra.mxu0 %v5587
    %5679 = vmatprep.subr.mxu0 0.0
    %5680 = vmatpush1.msra.mxu0 %v5588
    %5681 = vmatprep.subr.mxu0 0.0
    %5682 = vmatpush1.msra.mxu0 %v5589
    %5683 = vmatprep.subr.mxu0 0.0
    %5684 = vmatpush1.msra.mxu0 %v5590
    %5685 = vmatprep.subr.mxu0 0.0
    %5686 = vmatpush1.msra.mxu0 %v5591
    %5687 = vmatprep.subr.mxu0 0.0
    %5688 = vmatpush1.msra.mxu0 %v5592
    %5689 = vmatprep.subr.mxu0 0.0
    %5690 = vmatpush1.msra.mxu0 %v5593
    %5691 = vmatprep.subr.mxu0 0.0
    %5692 = vmatpush1.msra.mxu0 %v5594
    %5693 = vmatprep.subr.mxu0 0.0
    %5694 = vmatpush1.msra.mxu0 %v5595
    %5695 = vmatprep.subr.mxu0 0.0
    %5696 = vmatpush1.msra.mxu0 %v5596
    %5697 = vmatprep.subr.mxu0 0.0
    %5698 = vmatpush1.msra.mxu0 %v5597
    %5699 = vmatprep.subr.mxu0 0.0
    %5700 = vmatpush1.msra.mxu0 %v5598
    %5701 = vmatprep.subr.mxu0 0.0
    %5702 = vmatpush1.msra.mxu0 %v5599
    %5703 = vmatprep.subr.mxu0 0.0
    %5704 = vmatpush1.msra.mxu0 %v5600
    %5705 = vmatprep.subr.mxu0 0.0
    %5706 = vmatpush1.msra.mxu0 %v5601
    %5707 = vmatprep.subr.mxu0 0.0
    %5708 = vmatpush1.msra.mxu0 %v5602
    %5709 = vmatprep.subr.mxu0 0.0
    %5710 = vmatpush1.msra.mxu0 %v5603
    %5711 = vmatprep.subr.mxu0 0.0
    %5712 = vmatpush1.msra.mxu0 %v5604
    %5713 = vmatprep.subr.mxu0 0.0
    %5714 = vmatpush1.msra.mxu0 %v5605
    %5715 = vmatprep.subr.mxu0 0.0
    %5716 = vmatpush1.msra.mxu0 %v5606
    %5717 = vmatprep.subr.mxu0 0.0
    %5718 = vmatpush1.msra.mxu0 %v5607
    %5719 = vmatprep.subr.mxu0 0.0
    %5720 = vmatpush1.msra.mxu0 %v5608
    %5721 = vmatprep.subr.mxu0 0.0
    %5722 = vmatpush1.msra.mxu0 %v5609
    %5723 = vmatprep.subr.mxu0 0.0
    %5724 = vmatpush1.msra.mxu0 %v5610
    %5725 = vmatprep.subr.mxu0 0.0
    %5726 = vmatpush1.msra.mxu0 %v5611
    %5727 = vmatprep.subr.mxu0 0.0
    %5728 = vmatpush1.msra.mxu0 %v5612
    %5729 = vmatprep.subr.mxu0 0.0
    %5730 = vmatpush1.msra.mxu0 %v5613
    %5731 = vmatprep.subr.mxu0 0.0
    %5732 = vmatpush1.msra.mxu0 %v5614
    %5733 = vmatprep.mubr.f32.mxu0 %v5663
    %5734 = vmatmul.mubr.f32.gmra.mrb[0].mxu0 %v5655
    %v5735 = vpop.f32.mrb[0].mxu0
    %v5736 = vadd.f32 0.0, %v5735
    %v5737 = vpop.f32.mrb[0].mxu0
    %5738 = vdwg.mxu0
    %5739 = vmatprep.subr.mxu0 0.0
    %5740 = vmatpush1.msra.mxu0 %v5615
    %5741 = vmatprep.subr.mxu0 0.0
    %5742 = vmatpush1.msra.mxu0 %v5616
    %5743 = vmatprep.subr.mxu0 0.0
    %5744 = vmatpush1.msra.mxu0 %v5617
    %5745 = vmatprep.subr.mxu0 0.0
    %5746 = vmatpush1.msra.mxu0 %v5618
    %5747 = vmatprep.subr.mxu0 0.0
    %5748 = vmatpush1.msra.mxu0 %v5619
    %5749 = vmatprep.subr.mxu0 0.0
    %5750 = vmatpush1.msra.mxu0 %v5620
    %5751 = vmatprep.subr.mxu0 0.0
    %5752 = vmatpush1.msra.mxu0 %v5621
    %5753 = vmatprep.subr.mxu0 0.0
    %5754 = vmatpush1.msra.mxu0 %v5622
    %5755 = vmatprep.subr.mxu0 0.0
    %5756 = vmatpush1.msra.mxu0 %v5623
    %5757 = vmatprep.subr.mxu0 0.0
    %5758 = vmatpush1.msra.mxu0 %v5624
    %5759 = vmatprep.subr.mxu0 0.0
    %5760 = vmatpush1.msra.mxu0 %v5625
    %5761 = vmatprep.subr.mxu0 0.0
    %5762 = vmatpush1.msra.mxu0 %v5626
    %5763 = vmatprep.subr.mxu0 0.0
    %5764 = vmatpush1.msra.mxu0 %v5627
    %5765 = vmatprep.subr.mxu0 0.0
    %5766 = vmatpush1.msra.mxu0 %v5628
    %5767 = vmatprep.subr.mxu0 0.0
    %5768 = vmatpush1.msra.mxu0 %v5629
    %5769 = vmatprep.subr.mxu0 0.0
    %5770 = vmatpush1.msra.mxu0 %v5630
    %5771 = vmatprep.subr.mxu0 0.0
    %5772 = vmatpush1.msra.mxu0 %v5631
    %5773 = vmatprep.subr.mxu0 0.0
    %5774 = vmatpush1.msra.mxu0 %v5632
    %5775 = vmatprep.subr.mxu0 0.0
    %5776 = vmatpush1.msra.mxu0 %v5633
    %5777 = vmatprep.subr.mxu0 0.0
    %5778 = vmatpush1.msra.mxu0 %v5634
    %5779 = vmatprep.subr.mxu0 0.0
    %5780 = vmatpush1.msra.mxu0 %v5635
    %5781 = vmatprep.subr.mxu0 0.0
    %5782 = vmatpush1.msra.mxu0 %v5636
    %5783 = vmatprep.subr.mxu0 0.0
    %5784 = vmatpush1.msra.mxu0 %v5637
    %5785 = vmatprep.subr.mxu0 0.0
    %5786 = vmatpush1.msra.mxu0 %v5638
    %5787 = vmatprep.subr.mxu0 0.0
    %5788 = vmatpush1.msra.mxu0 %v5639
    %5789 = vmatprep.subr.mxu0 0.0
    %5790 = vmatpush1.msra.mxu0 %v5640
    %5791 = vmatprep.subr.mxu0 0.0
    %5792 = vmatpush1.msra.mxu0 %v5641
    %5793 = vmatprep.subr.mxu0 0.0
    %5794 = vmatpush1.msra.mxu0 %v5642
    %5795 = vmatprep.subr.mxu0 0.0
    %5796 = vmatpush1.msra.mxu0 %v5643
    %5797 = vmatprep.subr.mxu0 0.0
    %5798 = vmatpush1.msra.mxu0 %v5644
    %5799 = vmatprep.subr.mxu0 0.0
    %5800 = vmatpush1.msra.mxu0 %v5645
    %5801 = vmatprep.subr.mxu0 0.0
    %5802 = vmatpush1.msra.mxu0 %v5646
    %5803 = vmatprep.mubr.f32.mxu0 %v5664
    %5804 = vmatmul.mubr.f32.gmra.mrb[0].mxu0 %v5662
    %v5805 = vpop.f32.mrb[0].mxu0
    %v5806 = vadd.f32 %v5736, %v5805
    %v5807 = vpop.f32.mrb[0].mxu0
    %5808 = vdwg.mxu0
    %v5809 = vld [vmem:[%s16 + $0x2] sm:$0x1]
    %v5810 = vlaneseq
    %v5811 = vshrl.u32 %v5810, 7
    %v5812 = vsub.s32 0, %v5811
    %v5813 = vrot.slane %v5809, %v5812
    %v5814 = vmul.f32 %v5806, %v5813
    %v5815 = vld [vmem:[%s17 + $0x2] sm:$0x1]
    %v5816 = vlaneseq
    %v5817 = vshrl.u32 %v5816, 7
    %v5818 = vsub.s32 0, %v5817
    %v5819 = vrot.slane %v5815, %v5818
    %v5820 = vadd.f32 %v5814, %v5819
    %v5821 = vmax.f32 %v5820, 0.0
    %s5822 = scalar_lea.vmem %s18, 256
    %v5823 = vld [vmem:[%s5822] sm:$0xff]
    %v5824 = vld [vmem:[%s5822 + $0x8] sm:$0xff]
    %v5825 = vld [vmem:[%s5822 + $0x10] sm:$0xff]
    %v5826 = vld [vmem:[%s5822 + $0x18] sm:$0xff]
    %v5827 = vld [vmem:[%s5822 + $0x20] sm:$0xff]
    %v5828 = vld [vmem:[%s5822 + $0x28] sm:$0xff]
    %v5829 = vld [vmem:[%s5822 + $0x30] sm:$0xff]
    %v5830 = vld [vmem:[%s5822 + $0x38] sm:$0xff]
    %v5831 = vld [vmem:[%s5822 + $0x40] sm:$0xff]
    %v5832 = vld [vmem:[%s5822 + $0x48] sm:$0xff]
    %v5833 = vld [vmem:[%s5822 + $0x50] sm:$0xff]
    %v5834 = vld [vmem:[%s5822 + $0x58] sm:$0xff]
    %v5835 = vld [vmem:[%s5822 + $0x60] sm:$0xff]
    %v5836 = vld [vmem:[%s5822 + $0x68] sm:$0xff]
    %v5837 = vld [vmem:[%s5822 + $0x70] sm:$0xff]
    %v5838 = vld [vmem:[%s5822 + $0x78] sm:$0xff]
    %5839 = vmatprep.subr.mxu0 0.0
    %5840 = vmatpush1.msra.mxu0 %v5823
    %5841 = vmatprep.subr.mxu0 0.0
    %5842 = vmatpush1.msra.mxu0 %v5824
    %5843 = vmatprep.subr.mxu0 0.0
    %5844 = vmatpush1.msra.mxu0 %v5825
    %5845 = vmatprep.subr.mxu0 0.0
    %5846 = vmatpush1.msra.mxu0 %v5826
    %5847 = vmatprep.subr.mxu0 0.0
    %5848 = vmatpush1.msra.mxu0 %v5827
    %5849 = vmatprep.subr.mxu0 0.0
    %5850 = vmatpush1.msra.mxu0 %v5828
    %5851 = vmatprep.subr.mxu0 0.0
    %5852 = vmatpush1.msra.mxu0 %v5829
    %5853 = vmatprep.subr.mxu0 0.0
    %5854 = vmatpush1.msra.mxu0 %v5830
    %5855 = vmatprep.subr.mxu0 0.0
    %5856 = vmatpush1.msra.mxu0 %v5831
    %5857 = vmatprep.subr.mxu0 0.0
    %5858 = vmatpush1.msra.mxu0 %v5832
    %5859 = vmatprep.subr.mxu0 0.0
    %5860 = vmatpush1.msra.mxu0 %v5833
    %5861 = vmatprep.subr.mxu0 0.0
    %5862 = vmatpush1.msra.mxu0 %v5834
    %5863 = vmatprep.subr.mxu0 0.0
    %5864 = vmatpush1.msra.mxu0 %v5835
    %5865 = vmatprep.subr.mxu0 0.0
    %5866 = vmatpush1.msra.mxu0 %v5836
    %5867 = vmatprep.subr.mxu0 0.0
    %5868 = vmatpush1.msra.mxu0 %v5837
    %5869 = vmatprep.subr.mxu0 0.0
    %5870 = vmatpush1.msra.mxu0 %v5838
    %5871 = vmatprep.subr.mxu0 0.0
    %5872 = vmatpush1.msra.mxu0 0.0
    %5873 = vmatprep.subr.mxu0 0.0
    %5874 = vmatpush1.msra.mxu0 0.0
    %5875 = vmatprep.subr.mxu0 0.0
    %5876 = vmatpush1.msra.mxu0 0.0
    %5877 = vmatprep.subr.mxu0 0.0
    %5878 = vmatpush1.msra.mxu0 0.0
    %5879 = vmatprep.subr.mxu0 0.0
    %5880 = vmatpush1.msra.mxu0 0.0
    %5881 = vmatprep.subr.mxu0 0.0
    %5882 = vmatpush1.msra.mxu0 0.0
    %5883 = vmatprep.subr.mxu0 0.0
    %5884 = vmatpush1.msra.mxu0 0.0
    %5885 = vmatprep.subr.mxu0 0.0
    %5886 = vmatpush1.msra.mxu0 0.0
    %5887 = vmatprep.subr.mxu0 0.0
    %5888 = vmatpush1.msra.mxu0 0.0
    %5889 = vmatprep.subr.mxu0 0.0
    %5890 = vmatpush1.msra.mxu0 0.0
    %5891 = vmatprep.subr.mxu0 0.0
    %5892 = vmatpush1.msra.mxu0 0.0
    %5893 = vmatprep.subr.mxu0 0.0
    %5894 = vmatpush1.msra.mxu0 0.0
    %5895 = vmatprep.subr.mxu0 0.0
    %5896 = vmatpush1.msra.mxu0 0.0
    %5897 = vmatprep.subr.mxu0 0.0
    %5898 = vmatpush1.msra.mxu0 0.0
    %5899 = vmatprep.subr.mxu0 0.0
    %5900 = vmatpush1.msra.mxu0 0.0
    %5901 = vmatprep.subr.mxu0 0.0
    %5902 = vmatpush1.msra.mxu0 0.0
    %5903 = vmatprep.mubr.f32.mxu0 0.0
    %5904 = vmatmul.mubr.f32.gmra.mrb[0].mxu0 %v5821
    %v5905 = vpop.f32.mrb[0].mxu0
    %v5906 = vadd.f32 0.0, %v5905
    %v5907 = vpop.f32.mrb[0].mxu0
    %5908 = vdwg.mxu0
    %v5911 = vunpack.c.l.s4 1983009808
    %v5912 = vunpack.c.0.s8 %v5911
    %v5913 = vlaneseq
    %v5914 = vshrl.u32 %v5913, 7
    %v5915 = vsub.s32 %v5912, %v5914
    %v5916 = vrot.slane %v5906, %v5915
    %5917 = vrot.lane.b32.xlu0 %v5916, 64
    %v5918 = vpop.permute.xlu0 %5917
    %vm5920 = vcmask 779776
    %5921 = vst.msk [vmem:[#allocation3 + $0x2] sm:$0x3] %vm5920, %v5918
    %v5922 = vld [vmem:[#allocation3] sm:$0xff]
    %s5923 = scalar_lea.vmem %s13, 3
    %v5924 = vld [vmem:[%s5923] ss:$8 sm:$0xf]
    %v5926 = vlaneseq
    %v5927 = vshrl.u32 %v5926, 7
    %v5928 = vsub.s32 0, %v5927
    %v5929 = vrot.slane %v5924, %v5928
    %v5930 = vlaneseq
    %v5931 = vshrl.u32 %v5930, 7
    %v5932 = vsub.s32 1, %v5931
    %v5933 = vrot.slane %v5924, %v5932
    %v5934 = vlaneseq
    %v5935 = vshrl.u32 %v5934, 7
    %v5936 = vsub.s32 2, %v5935
    %v5937 = vrot.slane %v5924, %v5936
    %v5938 = vlaneseq
    %v5939 = vshrl.u32 %v5938, 7
    %v5940 = vsub.s32 3, %v5939
    %v5941 = vrot.slane %v5924, %v5940
    %v5942 = vcombine.low %v5929, %v5933
    %v5943 = vcombine.low %v5937, %v5941
    %v5945 = vunpack.c.l.s4 1983009808
    %v5946 = vunpack.c.0.s8 %v5945
    %v5947 = vlaneseq
    %v5948 = vshrl.u32 %v5947, 7
    %v5949 = vsub.s32 %v5946, %v5948
    %v5950 = vrot.slane %v5942, %v5949
    %v5952 = vunpack.c.l.s4 1983009808
    %v5953 = vunpack.c.0.s8 %v5952
    %v5954 = vlaneseq
    %v5955 = vshrl.u32 %v5954, 7
    %v5956 = vsub.s32 %v5953, %v5955
    %v5957 = vrot.slane %v5943, %v5956
    %v5958 = vcombine.low %v5950, %v5957
    %v5960 = vmul.f32 %v5922, %v5958
    %s5961 = scalar_lea.vmem %s14, 3
    %v5962 = vld [vmem:[%s5961] ss:$8 sm:$0xf]
    %v5964 = vlaneseq
    %v5965 = vshrl.u32 %v5964, 7
    %v5966 = vsub.s32 0, %v5965
    %v5967 = vrot.slane %v5962, %v5966
    %v5968 = vlaneseq
    %v5969 = vshrl.u32 %v5968, 7
    %v5970 = vsub.s32 1, %v5969
    %v5971 = vrot.slane %v5962, %v5970
    %v5972 = vlaneseq
    %v5973 = vshrl.u32 %v5972, 7
    %v5974 = vsub.s32 2, %v5973
    %v5975 = vrot.slane %v5962, %v5974
    %v5976 = vlaneseq
    %v5977 = vshrl.u32 %v5976, 7
    %v5978 = vsub.s32 3, %v5977
    %v5979 = vrot.slane %v5962, %v5978
    %v5980 = vcombine.low %v5967, %v5971
    %v5981 = vcombine.low %v5975, %v5979
    %v5983 = vunpack.c.l.s4 1983009808
    %v5984 = vunpack.c.0.s8 %v5983
    %v5985 = vlaneseq
    %v5986 = vshrl.u32 %v5985, 7
    %v5987 = vsub.s32 %v5984, %v5986
    %v5988 = vrot.slane %v5980, %v5987
    %v5990 = vunpack.c.l.s4 1983009808
    %v5991 = vunpack.c.0.s8 %v5990
    %v5992 = vlaneseq
    %v5993 = vshrl.u32 %v5992, 7
    %v5994 = vsub.s32 %v5991, %v5993
    %v5995 = vrot.slane %v5981, %v5994
    %v5996 = vcombine.low %v5988, %v5995
    %v5998 = vadd.f32 %v5960, %v5996
    %v5999 = vmax.f32 %v5998, 0.0
    %s6000 = scalar_lea.vmem %s15, 1536
    %v6001 = vld [vmem:[%s6000] sm:$0xff]
    %v6002 = vld [vmem:[%s6000 + $0x8] sm:$0xff]
    %v6003 = vld [vmem:[%s6000 + $0x10] sm:$0xff]
    %v6004 = vld [vmem:[%s6000 + $0x18] sm:$0xff]
    %v6005 = vld [vmem:[%s6000 + $0x20] sm:$0xff]
    %v6006 = vld [vmem:[%s6000 + $0x28] sm:$0xff]
    %v6007 = vld [vmem:[%s6000 + $0x30] sm:$0xff]
    %v6008 = vld [vmem:[%s6000 + $0x38] sm:$0xff]
    %v6009 = vld [vmem:[%s6000 + $0x40] sm:$0xff]
    %v6010 = vld [vmem:[%s6000 + $0x48] sm:$0xff]
    %v6011 = vld [vmem:[%s6000 + $0x50] sm:$0xff]
    %v6012 = vld [vmem:[%s6000 + $0x58] sm:$0xff]
    %v6013 = vld [vmem:[%s6000 + $0x60] sm:$0xff]
    %v6014 = vld [vmem:[%s6000 + $0x68] sm:$0xff]
    %v6015 = vld [vmem:[%s6000 + $0x70] sm:$0xff]
    %v6016 = vld [vmem:[%s6000 + $0x78] sm:$0xff]
    %v6017 = vld [vmem:[%s6000 + $0x80] sm:$0xff]
    %v6018 = vld [vmem:[%s6000 + $0x88] sm:$0xff]
    %v6019 = vld [vmem:[%s6000 + $0x90] sm:$0xff]
    %v6020 = vld [vmem:[%s6000 + $0x98] sm:$0xff]
    %v6021 = vld [vmem:[%s6000 + $0xa0] sm:$0xff]
    %v6022 = vld [vmem:[%s6000 + $0xa8] sm:$0xff]
    %v6023 = vld [vmem:[%s6000 + $0xb0] sm:$0xff]
    %v6024 = vld [vmem:[%s6000 + $0xb8] sm:$0xff]
    %v6025 = vld [vmem:[%s6000 + $0xc0] sm:$0xff]
    %v6026 = vld [vmem:[%s6000 + $0xc8] sm:$0xff]
    %v6027 = vld [vmem:[%s6000 + $0xd0] sm:$0xff]
    %v6028 = vld [vmem:[%s6000 + $0xd8] sm:$0xff]
    %v6029 = vld [vmem:[%s6000 + $0xe0] sm:$0xff]
    %v6030 = vld [vmem:[%s6000 + $0xe8] sm:$0xff]
    %v6031 = vld [vmem:[%s6000 + $0xf0] sm:$0xff]
    %v6032 = vld [vmem:[%s6000 + $0xf8] sm:$0xff]
    %v6033 = vld [vmem:[%s6000 + $0x100] sm:$0xff]
    %v6034 = vld [vmem:[%s6000 + $0x108] sm:$0xff]
    %v6035 = vld [vmem:[%s6000 + $0x110] sm:$0xff]
    %v6036 = vld [vmem:[%s6000 + $0x118] sm:$0xff]
    %v6037 = vld [vmem:[%s6000 + $0x120] sm:$0xff]
    %v6038 = vld [vmem:[%s6000 + $0x128] sm:$0xff]
    %v6039 = vld [vmem:[%s6000 + $0x130] sm:$0xff]
    %v6040 = vld [vmem:[%s6000 + $0x138] sm:$0xff]
    %v6041 = vld [vmem:[%s6000 + $0x140] sm:$0xff]
    %v6042 = vld [vmem:[%s6000 + $0x148] sm:$0xff]
    %v6043 = vld [vmem:[%s6000 + $0x150] sm:$0xff]
    %v6044 = vld [vmem:[%s6000 + $0x158] sm:$0xff]
    %v6045 = vld [vmem:[%s6000 + $0x160] sm:$0xff]
    %v6046 = vld [vmem:[%s6000 + $0x168] sm:$0xff]
    %v6047 = vld [vmem:[%s6000 + $0x170] sm:$0xff]
    %v6048 = vld [vmem:[%s6000 + $0x178] sm:$0xff]
    %v6049 = vld [vmem:[%s6000 + $0x180] sm:$0xff]
    %v6050 = vld [vmem:[%s6000 + $0x188] sm:$0xff]
    %v6051 = vld [vmem:[%s6000 + $0x190] sm:$0xff]
    %v6052 = vld [vmem:[%s6000 + $0x198] sm:$0xff]
    %v6053 = vld [vmem:[%s6000 + $0x1a0] sm:$0xff]
    %v6054 = vld [vmem:[%s6000 + $0x1a8] sm:$0xff]
    %v6055 = vld [vmem:[%s6000 + $0x1b0] sm:$0xff]
    %v6056 = vld [vmem:[%s6000 + $0x1b8] sm:$0xff]
    %v6057 = vld [vmem:[%s6000 + $0x1c0] sm:$0xff]
    %v6058 = vld [vmem:[%s6000 + $0x1c8] sm:$0xff]
    %v6059 = vld [vmem:[%s6000 + $0x1d0] sm:$0xff]
    %v6060 = vld [vmem:[%s6000 + $0x1d8] sm:$0xff]
    %v6061 = vld [vmem:[%s6000 + $0x1e0] sm:$0xff]
    %v6062 = vld [vmem:[%s6000 + $0x1e8] sm:$0xff]
    %v6063 = vld [vmem:[%s6000 + $0x1f0] sm:$0xff]
    %v6064 = vld [vmem:[%s6000 + $0x1f8] sm:$0xff]
    %v6066 = vcombine.high %v5999, %v5999
    %v6068 = vunpack.c.l.s4 1983009808
    %v6069 = vunpack.c.0.s8 %v6068
    %v6070 = vlaneseq
    %v6071 = vshrl.u32 %v6070, 7
    %v6072 = vsub.s32 %v6069, %v6071
    %v6073 = vrot.slane %v5999, %v6072
    %v6075 = vunpack.c.l.s4 1983009808
    %v6076 = vunpack.c.0.s8 %v6075
    %v6077 = vlaneseq
    %v6078 = vshrl.u32 %v6077, 7
    %v6079 = vsub.s32 %v6076, %v6078
    %v6080 = vrot.slane %v6066, %v6079
    %v6081 = vcombine.high %v6073, %v6073
    %v6082 = vcombine.high %v6080, %v6080
    %6087 = vmatprep.subr.mxu0 0.0
    %6088 = vmatpush1.msra.mxu0 %v6001
    %6089 = vmatprep.subr.mxu0 0.0
    %6090 = vmatpush1.msra.mxu0 %v6002
    %6091 = vmatprep.subr.mxu0 0.0
    %6092 = vmatpush1.msra.mxu0 %v6003
    %6093 = vmatprep.subr.mxu0 0.0
    %6094 = vmatpush1.msra.mxu0 %v6004
    %6095 = vmatprep.subr.mxu0 0.0
    %6096 = vmatpush1.msra.mxu0 %v6005
    %6097 = vmatprep.subr.mxu0 0.0
    %6098 = vmatpush1.msra.mxu0 %v6006
    %6099 = vmatprep.subr.mxu0 0.0
    %6100 = vmatpush1.msra.mxu0 %v6007
    %6101 = vmatprep.subr.mxu0 0.0
    %6102 = vmatpush1.msra.mxu0 %v6008
    %6103 = vmatprep.subr.mxu0 0.0
    %6104 = vmatpush1.msra.mxu0 %v6009
    %6105 = vmatprep.subr.mxu0 0.0
    %6106 = vmatpush1.msra.mxu0 %v6010
    %6107 = vmatprep.subr.mxu0 0.0
    %6108 = vmatpush1.msra.mxu0 %v6011
    %6109 = vmatprep.subr.mxu0 0.0
    %6110 = vmatpush1.msra.mxu0 %v6012
    %6111 = vmatprep.subr.mxu0 0.0
    %6112 = vmatpush1.msra.mxu0 %v6013
    %6113 = vmatprep.subr.mxu0 0.0
    %6114 = vmatpush1.msra.mxu0 %v6014
    %6115 = vmatprep.subr.mxu0 0.0
    %6116 = vmatpush1.msra.mxu0 %v6015
    %6117 = vmatprep.subr.mxu0 0.0
    %6118 = vmatpush1.msra.mxu0 %v6016
    %6119 = vmatprep.subr.mxu0 0.0
    %6120 = vmatpush1.msra.mxu0 %v6017
    %6121 = vmatprep.subr.mxu0 0.0
    %6122 = vmatpush1.msra.mxu0 %v6018
    %6123 = vmatprep.subr.mxu0 0.0
    %6124 = vmatpush1.msra.mxu0 %v6019
    %6125 = vmatprep.subr.mxu0 0.0
    %6126 = vmatpush1.msra.mxu0 %v6020
    %6127 = vmatprep.subr.mxu0 0.0
    %6128 = vmatpush1.msra.mxu0 %v6021
    %6129 = vmatprep.subr.mxu0 0.0
    %6130 = vmatpush1.msra.mxu0 %v6022
    %6131 = vmatprep.subr.mxu0 0.0
    %6132 = vmatpush1.msra.mxu0 %v6023
    %6133 = vmatprep.subr.mxu0 0.0
    %6134 = vmatpush1.msra.mxu0 %v6024
    %6135 = vmatprep.subr.mxu0 0.0
    %6136 = vmatpush1.msra.mxu0 %v6025
    %6137 = vmatprep.subr.mxu0 0.0
    %6138 = vmatpush1.msra.mxu0 %v6026
    %6139 = vmatprep.subr.mxu0 0.0
    %6140 = vmatpush1.msra.mxu0 %v6027
    %6141 = vmatprep.subr.mxu0 0.0
    %6142 = vmatpush1.msra.mxu0 %v6028
    %6143 = vmatprep.subr.mxu0 0.0
    %6144 = vmatpush1.msra.mxu0 %v6029
    %6145 = vmatprep.subr.mxu0 0.0
    %6146 = vmatpush1.msra.mxu0 %v6030
    %6147 = vmatprep.subr.mxu0 0.0
    %6148 = vmatpush1.msra.mxu0 %v6031
    %6149 = vmatprep.subr.mxu0 0.0
    %6150 = vmatpush1.msra.mxu0 %v6032
    %6151 = vmatprep.mubr.f32.mxu0 %v6081
    %6152 = vmatmul.mubr.f32.gmra.mrb[0].mxu0 %v6073
    %v6153 = vpop.f32.mrb[0].mxu0
    %v6154 = vadd.f32 0.0, %v6153
    %v6155 = vpop.f32.mrb[0].mxu0
    %6156 = vdwg.mxu0
    %6157 = vmatprep.subr.mxu0 0.0
    %6158 = vmatpush1.msra.mxu0 %v6033
    %6159 = vmatprep.subr.mxu0 0.0
    %6160 = vmatpush1.msra.mxu0 %v6034
    %6161 = vmatprep.subr.mxu0 0.0
    %6162 = vmatpush1.msra.mxu0 %v6035
    %6163 = vmatprep.subr.mxu0 0.0
    %6164 = vmatpush1.msra.mxu0 %v6036
    %6165 = vmatprep.subr.mxu0 0.0
    %6166 = vmatpush1.msra.mxu0 %v6037
    %6167 = vmatprep.subr.mxu0 0.0
    %6168 = vmatpush1.msra.mxu0 %v6038
    %6169 = vmatprep.subr.mxu0 0.0
    %6170 = vmatpush1.msra.mxu0 %v6039
    %6171 = vmatprep.subr.mxu0 0.0
    %6172 = vmatpush1.msra.mxu0 %v6040
    %6173 = vmatprep.subr.mxu0 0.0
    %6174 = vmatpush1.msra.mxu0 %v6041
    %6175 = vmatprep.subr.mxu0 0.0
    %6176 = vmatpush1.msra.mxu0 %v6042
    %6177 = vmatprep.subr.mxu0 0.0
    %6178 = vmatpush1.msra.mxu0 %v6043
    %6179 = vmatprep.subr.mxu0 0.0
    %6180 = vmatpush1.msra.mxu0 %v6044
    %6181 = vmatprep.subr.mxu0 0.0
    %6182 = vmatpush1.msra.mxu0 %v6045
    %6183 = vmatprep.subr.mxu0 0.0
    %6184 = vmatpush1.msra.mxu0 %v6046
    %6185 = vmatprep.subr.mxu0 0.0
    %6186 = vmatpush1.msra.mxu0 %v6047
    %6187 = vmatprep.subr.mxu0 0.0
    %6188 = vmatpush1.msra.mxu0 %v6048
    %6189 = vmatprep.subr.mxu0 0.0
    %6190 = vmatpush1.msra.mxu0 %v6049
    %6191 = vmatprep.subr.mxu0 0.0
    %6192 = vmatpush1.msra.mxu0 %v6050
    %6193 = vmatprep.subr.mxu0 0.0
    %6194 = vmatpush1.msra.mxu0 %v6051
    %6195 = vmatprep.subr.mxu0 0.0
    %6196 = vmatpush1.msra.mxu0 %v6052
    %6197 = vmatprep.subr.mxu0 0.0
    %6198 = vmatpush1.msra.mxu0 %v6053
    %6199 = vmatprep.subr.mxu0 0.0
    %6200 = vmatpush1.msra.mxu0 %v6054
    %6201 = vmatprep.subr.mxu0 0.0
    %6202 = vmatpush1.msra.mxu0 %v6055
    %6203 = vmatprep.subr.mxu0 0.0
    %6204 = vmatpush1.msra.mxu0 %v6056
    %6205 = vmatprep.subr.mxu0 0.0
    %6206 = vmatpush1.msra.mxu0 %v6057
    %6207 = vmatprep.subr.mxu0 0.0
    %6208 = vmatpush1.msra.mxu0 %v6058
    %6209 = vmatprep.subr.mxu0 0.0
    %6210 = vmatpush1.msra.mxu0 %v6059
    %6211 = vmatprep.subr.mxu0 0.0
    %6212 = vmatpush1.msra.mxu0 %v6060
    %6213 = vmatprep.subr.mxu0 0.0
    %6214 = vmatpush1.msra.mxu0 %v6061
    %6215 = vmatprep.subr.mxu0 0.0
    %6216 = vmatpush1.msra.mxu0 %v6062
    %6217 = vmatprep.subr.mxu0 0.0
    %6218 = vmatpush1.msra.mxu0 %v6063
    %6219 = vmatprep.subr.mxu0 0.0
    %6220 = vmatpush1.msra.mxu0 %v6064
    %6221 = vmatprep.mubr.f32.mxu0 %v6082
    %6222 = vmatmul.mubr.f32.gmra.mrb[0].mxu0 %v6080
    %v6223 = vpop.f32.mrb[0].mxu0
    %v6224 = vadd.f32 %v6154, %v6223
    %v6225 = vpop.f32.mrb[0].mxu0
    %6226 = vdwg.mxu0
    %v6227 = vld [vmem:[%s16 + $0x3] sm:$0x1]
    %v6228 = vlaneseq
    %v6229 = vshrl.u32 %v6228, 7
    %v6230 = vsub.s32 0, %v6229
    %v6231 = vrot.slane %v6227, %v6230
    %v6232 = vmul.f32 %v6224, %v6231
    %v6233 = vld [vmem:[%s17 + $0x3] sm:$0x1]
    %v6234 = vlaneseq
    %v6235 = vshrl.u32 %v6234, 7
    %v6236 = vsub.s32 0, %v6235
    %v6237 = vrot.slane %v6233, %v6236
    %v6238 = vadd.f32 %v6232, %v6237
    %v6239 = vmax.f32 %v6238, 0.0
    %s6240 = scalar_lea.vmem %s18, 384
    %v6241 = vld [vmem:[%s6240] sm:$0xff]
    %v6242 = vld [vmem:[%s6240 + $0x8] sm:$0xff]
    %v6243 = vld [vmem:[%s6240 + $0x10] sm:$0xff]
    %v6244 = vld [vmem:[%s6240 + $0x18] sm:$0xff]
    %v6245 = vld [vmem:[%s6240 + $0x20] sm:$0xff]
    %v6246 = vld [vmem:[%s6240 + $0x28] sm:$0xff]
    %v6247 = vld [vmem:[%s6240 + $0x30] sm:$0xff]
    %v6248 = vld [vmem:[%s6240 + $0x38] sm:$0xff]
    %v6249 = vld [vmem:[%s6240 + $0x40] sm:$0xff]
    %v6250 = vld [vmem:[%s6240 + $0x48] sm:$0xff]
    %v6251 = vld [vmem:[%s6240 + $0x50] sm:$0xff]
    %v6252 = vld [vmem:[%s6240 + $0x58] sm:$0xff]
    %v6253 = vld [vmem:[%s6240 + $0x60] sm:$0xff]
    %v6254 = vld [vmem:[%s6240 + $0x68] sm:$0xff]
    %v6255 = vld [vmem:[%s6240 + $0x70] sm:$0xff]
    %v6256 = vld [vmem:[%s6240 + $0x78] sm:$0xff]
    %6257 = vmatprep.subr.mxu0 0.0
    %6258 = vmatpush1.msra.mxu0 %v6241
    %6259 = vmatprep.subr.mxu0 0.0
    %6260 = vmatpush1.msra.mxu0 %v6242
    %6261 = vmatprep.subr.mxu0 0.0
    %6262 = vmatpush1.msra.mxu0 %v6243
    %6263 = vmatprep.subr.mxu0 0.0
    %6264 = vmatpush1.msra.mxu0 %v6244
    %6265 = vmatprep.subr.mxu0 0.0
    %6266 = vmatpush1.msra.mxu0 %v6245
    %6267 = vmatprep.subr.mxu0 0.0
    %6268 = vmatpush1.msra.mxu0 %v6246
    %6269 = vmatprep.subr.mxu0 0.0
    %6270 = vmatpush1.msra.mxu0 %v6247
    %6271 = vmatprep.subr.mxu0 0.0
    %6272 = vmatpush1.msra.mxu0 %v6248
    %6273 = vmatprep.subr.mxu0 0.0
    %6274 = vmatpush1.msra.mxu0 %v6249
    %6275 = vmatprep.subr.mxu0 0.0
    %6276 = vmatpush1.msra.mxu0 %v6250
    %6277 = vmatprep.subr.mxu0 0.0
    %6278 = vmatpush1.msra.mxu0 %v6251
    %6279 = vmatprep.subr.mxu0 0.0
    %6280 = vmatpush1.msra.mxu0 %v6252
    %6281 = vmatprep.subr.mxu0 0.0
    %6282 = vmatpush1.msra.mxu0 %v6253
    %6283 = vmatprep.subr.mxu0 0.0
    %6284 = vmatpush1.msra.mxu0 %v6254
    %6285 = vmatprep.subr.mxu0 0.0
    %6286 = vmatpush1.msra.mxu0 %v6255
    %6287 = vmatprep.subr.mxu0 0.0
    %6288 = vmatpush1.msra.mxu0 %v6256
    %6289 = vmatprep.subr.mxu0 0.0
    %6290 = vmatpush1.msra.mxu0 0.0
    %6291 = vmatprep.subr.mxu0 0.0
    %6292 = vmatpush1.msra.mxu0 0.0
    %6293 = vmatprep.subr.mxu0 0.0
    %6294 = vmatpush1.msra.mxu0 0.0
    %6295 = vmatprep.subr.mxu0 0.0
    %6296 = vmatpush1.msra.mxu0 0.0
    %6297 = vmatprep.subr.mxu0 0.0
    %6298 = vmatpush1.msra.mxu0 0.0
    %6299 = vmatprep.subr.mxu0 0.0
    %6300 = vmatpush1.msra.mxu0 0.0
    %6301 = vmatprep.subr.mxu0 0.0
    %6302 = vmatpush1.msra.mxu0 0.0
    %6303 = vmatprep.subr.mxu0 0.0
    %6304 = vmatpush1.msra.mxu0 0.0
    %6305 = vmatprep.subr.mxu0 0.0
    %6306 = vmatpush1.msra.mxu0 0.0
    %6307 = vmatprep.subr.mxu0 0.0
    %6308 = vmatpush1.msra.mxu0 0.0
    %6309 = vmatprep.subr.mxu0 0.0
    %6310 = vmatpush1.msra.mxu0 0.0
    %6311 = vmatprep.subr.mxu0 0.0
    %6312 = vmatpush1.msra.mxu0 0.0
    %6313 = vmatprep.subr.mxu0 0.0
    %6314 = vmatpush1.msra.mxu0 0.0
    %6315 = vmatprep.subr.mxu0 0.0
    %6316 = vmatpush1.msra.mxu0 0.0
    %6317 = vmatprep.subr.mxu0 0.0
    %6318 = vmatpush1.msra.mxu0 0.0
    %6319 = vmatprep.subr.mxu0 0.0
    %6320 = vmatpush1.msra.mxu0 0.0
    %6321 = vmatprep.mubr.f32.mxu0 0.0
    %6322 = vmatmul.mubr.f32.gmra.mrb[0].mxu0 %v6239
    %v6323 = vpop.f32.mrb[0].mxu0
    %v6324 = vadd.f32 0.0, %v6323
    %v6325 = vpop.f32.mrb[0].mxu0
    %6326 = vdwg.mxu0
    %v6329 = vunpack.c.l.s4 1983009808
    %v6330 = vunpack.c.0.s8 %v6329
    %v6331 = vlaneseq
    %v6332 = vshrl.u32 %v6331, 7
    %v6333 = vsub.s32 %v6330, %v6332
    %v6334 = vrot.slane %v6324, %v6333
    %6335 = vrot.lane.b32.xlu0 %v6334, 96
    %v6336 = vpop.permute.xlu0 %6335
    %vm6338 = vcmask 1042176
    %6339 = vst.msk [vmem:[#allocation3 + $0x2] sm:$0x3] %vm6338, %v6336
    %v6340 = vld [vmem:[#allocation3] sm:$0xff]
    %s6341 = scalar_lea.vmem %s13, 4
    %v6342 = vld [vmem:[%s6341] ss:$8 sm:$0xf]
    %v6344 = vlaneseq
    %v6345 = vshrl.u32 %v6344, 7
    %v6346 = vsub.s32 0, %v6345
    %v6347 = vrot.slane %v6342, %v6346
    %v6348 = vlaneseq
    %v6349 = vshrl.u32 %v6348, 7
    %v6350 = vsub.s32 1, %v6349
    %v6351 = vrot.slane %v6342, %v6350
    %v6352 = vlaneseq
    %v6353 = vshrl.u32 %v6352, 7
    %v6354 = vsub.s32 2, %v6353
    %v6355 = vrot.slane %v6342, %v6354
    %v6356 = vlaneseq
    %v6357 = vshrl.u32 %v6356, 7
    %v6358 = vsub.s32 3, %v6357
    %v6359 = vrot.slane %v6342, %v6358
    %v6360 = vcombine.low %v6347, %v6351
    %v6361 = vcombine.low %v6355, %v6359
    %v6363 = vunpack.c.l.s4 1983009808
    %v6364 = vunpack.c.0.s8 %v6363
    %v6365 = vlaneseq
    %v6366 = vshrl.u32 %v6365, 7
    %v6367 = vsub.s32 %v6364, %v6366
    %v6368 = vrot.slane %v6360, %v6367
    %v6370 = vunpack.c.l.s4 1983009808
    %v6371 = vunpack.c.0.s8 %v6370
    %v6372 = vlaneseq
    %v6373 = vshrl.u32 %v6372, 7
    %v6374 = vsub.s32 %v6371, %v6373
    %v6375 = vrot.slane %v6361, %v6374
    %v6376 = vcombine.low %v6368, %v6375
    %v6378 = vmul.f32 %v6340, %v6376
    %s6379 = scalar_lea.vmem %s14, 4
    %v6380 = vld [vmem:[%s6379] ss:$8 sm:$0xf]
    %v6382 = vlaneseq
    %v6383 = vshrl.u32 %v6382, 7
    %v6384 = vsub.s32 0, %v6383
    %v6385 = vrot.slane %v6380, %v6384
    %v6386 = vlaneseq
    %v6387 = vshrl.u32 %v6386, 7
    %v6388 = vsub.s32 1, %v6387
    %v6389 = vrot.slane %v6380, %v6388
    %v6390 = vlaneseq
    %v6391 = vshrl.u32 %v6390, 7
    %v6392 = vsub.s32 2, %v6391
    %v6393 = vrot.slane %v6380, %v6392
    %v6394 = vlaneseq
    %v6395 = vshrl.u32 %v6394, 7
    %v6396 = vsub.s32 3, %v6395
    %v6397 = vrot.slane %v6380, %v6396
    %v6398 = vcombine.low %v6385, %v6389
    %v6399 = vcombine.low %v6393, %v6397
    %v6401 = vunpack.c.l.s4 1983009808
    %v6402 = vunpack.c.0.s8 %v6401
    %v6403 = vlaneseq
    %v6404 = vshrl.u32 %v6403, 7
    %v6405 = vsub.s32 %v6402, %v6404
    %v6406 = vrot.slane %v6398, %v6405
    %v6408 = vunpack.c.l.s4 1983009808
    %v6409 = vunpack.c.0.s8 %v6408
    %v6410 = vlaneseq
    %v6411 = vshrl.u32 %v6410, 7
    %v6412 = vsub.s32 %v6409, %v6411
    %v6413 = vrot.slane %v6399, %v6412
    %v6414 = vcombine.low %v6406, %v6413
    %v6416 = vadd.f32 %v6378, %v6414
    %v6417 = vmax.f32 %v6416, 0.0
    %s6418 = scalar_lea.vmem %s15, 2048
    %v6419 = vld [vmem:[%s6418] sm:$0xff]
    %v6420 = vld [vmem:[%s6418 + $0x8] sm:$0xff]
    %v6421 = vld [vmem:[%s6418 + $0x10] sm:$0xff]
    %v6422 = vld [vmem:[%s6418 + $0x18] sm:$0xff]
    %v6423 = vld [vmem:[%s6418 + $0x20] sm:$0xff]
    %v6424 = vld [vmem:[%s6418 + $0x28] sm:$0xff]
    %v6425 = vld [vmem:[%s6418 + $0x30] sm:$0xff]
    %v6426 = vld [vmem:[%s6418 + $0x38] sm:$0xff]
    %v6427 = vld [vmem:[%s6418 + $0x40] sm:$0xff]
    %v6428 = vld [vmem:[%s6418 + $0x48] sm:$0xff]
    %v6429 = vld [vmem:[%s6418 + $0x50] sm:$0xff]
    %v6430 = vld [vmem:[%s6418 + $0x58] sm:$0xff]
    %v6431 = vld [vmem:[%s6418 + $0x60] sm:$0xff]
    %v6432 = vld [vmem:[%s6418 + $0x68] sm:$0xff]
    %v6433 = vld [vmem:[%s6418 + $0x70] sm:$0xff]
    %v6434 = vld [vmem:[%s6418 + $0x78] sm:$0xff]
    %v6435 = vld [vmem:[%s6418 + $0x80] sm:$0xff]
    %v6436 = vld [vmem:[%s6418 + $0x88] sm:$0xff]
    %v6437 = vld [vmem:[%s6418 + $0x90] sm:$0xff]
    %v6438 = vld [vmem:[%s6418 + $0x98] sm:$0xff]
    %v6439 = vld [vmem:[%s6418 + $0xa0] sm:$0xff]
    %v6440 = vld [vmem:[%s6418 + $0xa8] sm:$0xff]
    %v6441 = vld [vmem:[%s6418 + $0xb0] sm:$0xff]
    %v6442 = vld [vmem:[%s6418 + $0xb8] sm:$0xff]
    %v6443 = vld [vmem:[%s6418 + $0xc0] sm:$0xff]
    %v6444 = vld [vmem:[%s6418 + $0xc8] sm:$0xff]
    %v6445 = vld [vmem:[%s6418 + $0xd0] sm:$0xff]
    %v6446 = vld [vmem:[%s6418 + $0xd8] sm:$0xff]
    %v6447 = vld [vmem:[%s6418 + $0xe0] sm:$0xff]
    %v6448 = vld [vmem:[%s6418 + $0xe8] sm:$0xff]
    %v6449 = vld [vmem:[%s6418 + $0xf0] sm:$0xff]
    %v6450 = vld [vmem:[%s6418 + $0xf8] sm:$0xff]
    %v6451 = vld [vmem:[%s6418 + $0x100] sm:$0xff]
    %v6452 = vld [vmem:[%s6418 + $0x108] sm:$0xff]
    %v6453 = vld [vmem:[%s6418 + $0x110] sm:$0xff]
    %v6454 = vld [vmem:[%s6418 + $0x118] sm:$0xff]
    %v6455 = vld [vmem:[%s6418 + $0x120] sm:$0xff]
    %v6456 = vld [vmem:[%s6418 + $0x128] sm:$0xff]
    %v6457 = vld [vmem:[%s6418 + $0x130] sm:$0xff]
    %v6458 = vld [vmem:[%s6418 + $0x138] sm:$0xff]
    %v6459 = vld [vmem:[%s6418 + $0x140] sm:$0xff]
    %v6460 = vld [vmem:[%s6418 + $0x148] sm:$0xff]
    %v6461 = vld [vmem:[%s6418 + $0x150] sm:$0xff]
    %v6462 = vld [vmem:[%s6418 + $0x158] sm:$0xff]
    %v6463 = vld [vmem:[%s6418 + $0x160] sm:$0xff]
    %v6464 = vld [vmem:[%s6418 + $0x168] sm:$0xff]
    %v6465 = vld [vmem:[%s6418 + $0x170] sm:$0xff]
    %v6466 = vld [vmem:[%s6418 + $0x178] sm:$0xff]
    %v6467 = vld [vmem:[%s6418 + $0x180] sm:$0xff]
    %v6468 = vld [vmem:[%s6418 + $0x188] sm:$0xff]
    %v6469 = vld [vmem:[%s6418 + $0x190] sm:$0xff]
    %v6470 = vld [vmem:[%s6418 + $0x198] sm:$0xff]
    %v6471 = vld [vmem:[%s6418 + $0x1a0] sm:$0xff]
    %v6472 = vld [vmem:[%s6418 + $0x1a8] sm:$0xff]
    %v6473 = vld [vmem:[%s6418 + $0x1b0] sm:$0xff]
    %v6474 = vld [vmem:[%s6418 + $0x1b8] sm:$0xff]
    %v6475 = vld [vmem:[%s6418 + $0x1c0] sm:$0xff]
    %v6476 = vld [vmem:[%s6418 + $0x1c8] sm:$0xff]
    %v6477 = vld [vmem:[%s6418 + $0x1d0] sm:$0xff]
    %v6478 = vld [vmem:[%s6418 + $0x1d8] sm:$0xff]
    %v6479 = vld [vmem:[%s6418 + $0x1e0] sm:$0xff]
    %v6480 = vld [vmem:[%s6418 + $0x1e8] sm:$0xff]
    %v6481 = vld [vmem:[%s6418 + $0x1f0] sm:$0xff]
    %v6482 = vld [vmem:[%s6418 + $0x1f8] sm:$0xff]
    %v6484 = vcombine.high %v6417, %v6417
    %v6486 = vunpack.c.l.s4 1983009808
    %v6487 = vunpack.c.0.s8 %v6486
    %v6488 = vlaneseq
    %v6489 = vshrl.u32 %v6488, 7
    %v6490 = vsub.s32 %v6487, %v6489
    %v6491 = vrot.slane %v6417, %v6490
    %v6493 = vunpack.c.l.s4 1983009808
    %v6494 = vunpack.c.0.s8 %v6493
    %v6495 = vlaneseq
    %v6496 = vshrl.u32 %v6495, 7
    %v6497 = vsub.s32 %v6494, %v6496
    %v6498 = vrot.slane %v6484, %v6497
    %v6499 = vcombine.high %v6491, %v6491
    %v6500 = vcombine.high %v6498, %v6498
    %6505 = vmatprep.subr.mxu0 0.0
    %6506 = vmatpush1.msra.mxu0 %v6419
    %6507 = vmatprep.subr.mxu0 0.0
    %6508 = vmatpush1.msra.mxu0 %v6420
    %6509 = vmatprep.subr.mxu0 0.0
    %6510 = vmatpush1.msra.mxu0 %v6421
    %6511 = vmatprep.subr.mxu0 0.0
    %6512 = vmatpush1.msra.mxu0 %v6422
    %6513 = vmatprep.subr.mxu0 0.0
    %6514 = vmatpush1.msra.mxu0 %v6423
    %6515 = vmatprep.subr.mxu0 0.0
    %6516 = vmatpush1.msra.mxu0 %v6424
    %6517 = vmatprep.subr.mxu0 0.0
    %6518 = vmatpush1.msra.mxu0 %v6425
    %6519 = vmatprep.subr.mxu0 0.0
    %6520 = vmatpush1.msra.mxu0 %v6426
    %6521 = vmatprep.subr.mxu0 0.0
    %6522 = vmatpush1.msra.mxu0 %v6427
    %6523 = vmatprep.subr.mxu0 0.0
    %6524 = vmatpush1.msra.mxu0 %v6428
    %6525 = vmatprep.subr.mxu0 0.0
    %6526 = vmatpush1.msra.mxu0 %v6429
    %6527 = vmatprep.subr.mxu0 0.0
    %6528 = vmatpush1.msra.mxu0 %v6430
    %6529 = vmatprep.subr.mxu0 0.0
    %6530 = vmatpush1.msra.mxu0 %v6431
    %6531 = vmatprep.subr.mxu0 0.0
    %6532 = vmatpush1.msra.mxu0 %v6432
    %6533 = vmatprep.subr.mxu0 0.0
    %6534 = vmatpush1.msra.mxu0 %v6433
    %6535 = vmatprep.subr.mxu0 0.0
    %6536 = vmatpush1.msra.mxu0 %v6434
    %6537 = vmatprep.subr.mxu0 0.0
    %6538 = vmatpush1.msra.mxu0 %v6435
    %6539 = vmatprep.subr.mxu0 0.0
    %6540 = vmatpush1.msra.mxu0 %v6436
    %6541 = vmatprep.subr.mxu0 0.0
    %6542 = vmatpush1.msra.mxu0 %v6437
    %6543 = vmatprep.subr.mxu0 0.0
    %6544 = vmatpush1.msra.mxu0 %v6438
    %6545 = vmatprep.subr.mxu0 0.0
    %6546 = vmatpush1.msra.mxu0 %v6439
    %6547 = vmatprep.subr.mxu0 0.0
    %6548 = vmatpush1.msra.mxu0 %v6440
    %6549 = vmatprep.subr.mxu0 0.0
    %6550 = vmatpush1.msra.mxu0 %v6441
    %6551 = vmatprep.subr.mxu0 0.0
    %6552 = vmatpush1.msra.mxu0 %v6442
    %6553 = vmatprep.subr.mxu0 0.0
    %6554 = vmatpush1.msra.mxu0 %v6443
    %6555 = vmatprep.subr.mxu0 0.0
    %6556 = vmatpush1.msra.mxu0 %v6444
    %6557 = vmatprep.subr.mxu0 0.0
    %6558 = vmatpush1.msra.mxu0 %v6445
    %6559 = vmatprep.subr.mxu0 0.0
    %6560 = vmatpush1.msra.mxu0 %v6446
    %6561 = vmatprep.subr.mxu0 0.0
    %6562 = vmatpush1.msra.mxu0 %v6447
    %6563 = vmatprep.subr.mxu0 0.0
    %6564 = vmatpush1.msra.mxu0 %v6448
    %6565 = vmatprep.subr.mxu0 0.0
    %6566 = vmatpush1.msra.mxu0 %v6449
    %6567 = vmatprep.subr.mxu0 0.0
    %6568 = vmatpush1.msra.mxu0 %v6450
    %6569 = vmatprep.mubr.f32.mxu0 %v6499
    %6570 = vmatmul.mubr.f32.gmra.mrb[0].mxu0 %v6491
    %v6571 = vpop.f32.mrb[0].mxu0
    %v6572 = vadd.f32 0.0, %v6571
    %v6573 = vpop.f32.mrb[0].mxu0
    %6574 = vdwg.mxu0
    %6575 = vmatprep.subr.mxu0 0.0
    %6576 = vmatpush1.msra.mxu0 %v6451
    %6577 = vmatprep.subr.mxu0 0.0
    %6578 = vmatpush1.msra.mxu0 %v6452
    %6579 = vmatprep.subr.mxu0 0.0
    %6580 = vmatpush1.msra.mxu0 %v6453
    %6581 = vmatprep.subr.mxu0 0.0
    %6582 = vmatpush1.msra.mxu0 %v6454
    %6583 = vmatprep.subr.mxu0 0.0
    %6584 = vmatpush1.msra.mxu0 %v6455
    %6585 = vmatprep.subr.mxu0 0.0
    %6586 = vmatpush1.msra.mxu0 %v6456
    %6587 = vmatprep.subr.mxu0 0.0
    %6588 = vmatpush1.msra.mxu0 %v6457
    %6589 = vmatprep.subr.mxu0 0.0
    %6590 = vmatpush1.msra.mxu0 %v6458
    %6591 = vmatprep.subr.mxu0 0.0
    %6592 = vmatpush1.msra.mxu0 %v6459
    %6593 = vmatprep.subr.mxu0 0.0
    %6594 = vmatpush1.msra.mxu0 %v6460
    %6595 = vmatprep.subr.mxu0 0.0
    %6596 = vmatpush1.msra.mxu0 %v6461
    %6597 = vmatprep.subr.mxu0 0.0
    %6598 = vmatpush1.msra.mxu0 %v6462
    %6599 = vmatprep.subr.mxu0 0.0
    %6600 = vmatpush1.msra.mxu0 %v6463
    %6601 = vmatprep.subr.mxu0 0.0
    %6602 = vmatpush1.msra.mxu0 %v6464
    %6603 = vmatprep.subr.mxu0 0.0
    %6604 = vmatpush1.msra.mxu0 %v6465
    %6605 = vmatprep.subr.mxu0 0.0
    %6606 = vmatpush1.msra.mxu0 %v6466
    %6607 = vmatprep.subr.mxu0 0.0
    %6608 = vmatpush1.msra.mxu0 %v6467
    %6609 = vmatprep.subr.mxu0 0.0
    %6610 = vmatpush1.msra.mxu0 %v6468
    %6611 = vmatprep.subr.mxu0 0.0
    %6612 = vmatpush1.msra.mxu0 %v6469
    %6613 = vmatprep.subr.mxu0 0.0
    %6614 = vmatpush1.msra.mxu0 %v6470
    %6615 = vmatprep.subr.mxu0 0.0
    %6616 = vmatpush1.msra.mxu0 %v6471
    %6617 = vmatprep.subr.mxu0 0.0
    %6618 = vmatpush1.msra.mxu0 %v6472
    %6619 = vmatprep.subr.mxu0 0.0
    %6620 = vmatpush1.msra.mxu0 %v6473
    %6621 = vmatprep.subr.mxu0 0.0
    %6622 = vmatpush1.msra.mxu0 %v6474
    %6623 = vmatprep.subr.mxu0 0.0
    %6624 = vmatpush1.msra.mxu0 %v6475
    %6625 = vmatprep.subr.mxu0 0.0
    %6626 = vmatpush1.msra.mxu0 %v6476
    %6627 = vmatprep.subr.mxu0 0.0
    %6628 = vmatpush1.msra.mxu0 %v6477
    %6629 = vmatprep.subr.mxu0 0.0
    %6630 = vmatpush1.msra.mxu0 %v6478
    %6631 = vmatprep.subr.mxu0 0.0
    %6632 = vmatpush1.msra.mxu0 %v6479
    %6633 = vmatprep.subr.mxu0 0.0
    %6634 = vmatpush1.msra.mxu0 %v6480
    %6635 = vmatprep.subr.mxu0 0.0
    %6636 = vmatpush1.msra.mxu0 %v6481
    %6637 = vmatprep.subr.mxu0 0.0
    %6638 = vmatpush1.msra.mxu0 %v6482
    %6639 = vmatprep.mubr.f32.mxu0 %v6500
    %6640 = vmatmul.mubr.f32.gmra.mrb[0].mxu0 %v6498
    %v6641 = vpop.f32.mrb[0].mxu0
    %v6642 = vadd.f32 %v6572, %v6641
    %v6643 = vpop.f32.mrb[0].mxu0
    %6644 = vdwg.mxu0
    %v6645 = vld [vmem:[%s16 + $0x4] sm:$0x1]
    %v6646 = vlaneseq
    %v6647 = vshrl.u32 %v6646, 7
    %v6648 = vsub.s32 0, %v6647
    %v6649 = vrot.slane %v6645, %v6648
    %v6650 = vmul.f32 %v6642, %v6649
    %v6651 = vld [vmem:[%s17 + $0x4] sm:$0x1]
    %v6652 = vlaneseq
    %v6653 = vshrl.u32 %v6652, 7
    %v6654 = vsub.s32 0, %v6653
    %v6655 = vrot.slane %v6651, %v6654
    %v6656 = vadd.f32 %v6650, %v6655
    %v6657 = vmax.f32 %v6656, 0.0
    %s6658 = scalar_lea.vmem %s18, 512
    %v6659 = vld [vmem:[%s6658] sm:$0xff]
    %v6660 = vld [vmem:[%s6658 + $0x8] sm:$0xff]
    %v6661 = vld [vmem:[%s6658 + $0x10] sm:$0xff]
    %v6662 = vld [vmem:[%s6658 + $0x18] sm:$0xff]
    %v6663 = vld [vmem:[%s6658 + $0x20] sm:$0xff]
    %v6664 = vld [vmem:[%s6658 + $0x28] sm:$0xff]
    %v6665 = vld [vmem:[%s6658 + $0x30] sm:$0xff]
    %v6666 = vld [vmem:[%s6658 + $0x38] sm:$0xff]
    %v6667 = vld [vmem:[%s6658 + $0x40] sm:$0xff]
    %v6668 = vld [vmem:[%s6658 + $0x48] sm:$0xff]
    %v6669 = vld [vmem:[%s6658 + $0x50] sm:$0xff]
    %v6670 = vld [vmem:[%s6658 + $0x58] sm:$0xff]
    %v6671 = vld [vmem:[%s6658 + $0x60] sm:$0xff]
    %v6672 = vld [vmem:[%s6658 + $0x68] sm:$0xff]
    %v6673 = vld [vmem:[%s6658 + $0x70] sm:$0xff]
    %v6674 = vld [vmem:[%s6658 + $0x78] sm:$0xff]
    %6675 = vmatprep.subr.mxu0 0.0
    %6676 = vmatpush1.msra.mxu0 %v6659
    %6677 = vmatprep.subr.mxu0 0.0
    %6678 = vmatpush1.msra.mxu0 %v6660
    %6679 = vmatprep.subr.mxu0 0.0
    %6680 = vmatpush1.msra.mxu0 %v6661
    %6681 = vmatprep.subr.mxu0 0.0
    %6682 = vmatpush1.msra.mxu0 %v6662
    %6683 = vmatprep.subr.mxu0 0.0
    %6684 = vmatpush1.msra.mxu0 %v6663
    %6685 = vmatprep.subr.mxu0 0.0
    %6686 = vmatpush1.msra.mxu0 %v6664
    %6687 = vmatprep.subr.mxu0 0.0
    %6688 = vmatpush1.msra.mxu0 %v6665
    %6689 = vmatprep.subr.mxu0 0.0
    %6690 = vmatpush1.msra.mxu0 %v6666
    %6691 = vmatprep.subr.mxu0 0.0
    %6692 = vmatpush1.msra.mxu0 %v6667
    %6693 = vmatprep.subr.mxu0 0.0
    %6694 = vmatpush1.msra.mxu0 %v6668
    %6695 = vmatprep.subr.mxu0 0.0
    %6696 = vmatpush1.msra.mxu0 %v6669
    %6697 = vmatprep.subr.mxu0 0.0
    %6698 = vmatpush1.msra.mxu0 %v6670
    %6699 = vmatprep.subr.mxu0 0.0
    %6700 = vmatpush1.msra.mxu0 %v6671
    %6701 = vmatprep.subr.mxu0 0.0
    %6702 = vmatpush1.msra.mxu0 %v6672
    %6703 = vmatprep.subr.mxu0 0.0
    %6704 = vmatpush1.msra.mxu0 %v6673
    %6705 = vmatprep.subr.mxu0 0.0
    %6706 = vmatpush1.msra.mxu0 %v6674
    %6707 = vmatprep.subr.mxu0 0.0
    %6708 = vmatpush1.msra.mxu0 0.0
    %6709 = vmatprep.subr.mxu0 0.0
    %6710 = vmatpush1.msra.mxu0 0.0
    %6711 = vmatprep.subr.mxu0 0.0
    %6712 = vmatpush1.msra.mxu0 0.0
    %6713 = vmatprep.subr.mxu0 0.0
    %6714 = vmatpush1.msra.mxu0 0.0
    %6715 = vmatprep.subr.mxu0 0.0
    %6716 = vmatpush1.msra.mxu0 0.0
    %6717 = vmatprep.subr.mxu0 0.0
    %6718 = vmatpush1.msra.mxu0 0.0
    %6719 = vmatprep.subr.mxu0 0.0
    %6720 = vmatpush1.msra.mxu0 0.0
    %6721 = vmatprep.subr.mxu0 0.0
    %6722 = vmatpush1.msra.mxu0 0.0
    %6723 = vmatprep.subr.mxu0 0.0
    %6724 = vmatpush1.msra.mxu0 0.0
    %6725 = vmatprep.subr.mxu0 0.0
    %6726 = vmatpush1.msra.mxu0 0.0
    %6727 = vmatprep.subr.mxu0 0.0
    %6728 = vmatpush1.msra.mxu0 0.0
    %6729 = vmatprep.subr.mxu0 0.0
    %6730 = vmatpush1.msra.mxu0 0.0
    %6731 = vmatprep.subr.mxu0 0.0
    %6732 = vmatpush1.msra.mxu0 0.0
    %6733 = vmatprep.subr.mxu0 0.0
    %6734 = vmatpush1.msra.mxu0 0.0
    %6735 = vmatprep.subr.mxu0 0.0
    %6736 = vmatpush1.msra.mxu0 0.0
    %6737 = vmatprep.subr.mxu0 0.0
    %6738 = vmatpush1.msra.mxu0 0.0
    %6739 = vmatprep.mubr.f32.mxu0 0.0
    %6740 = vmatmul.mubr.f32.gmra.mrb[0].mxu0 %v6657
    %v6741 = vpop.f32.mrb[0].mxu0
    %v6742 = vadd.f32 0.0, %v6741
    %v6743 = vpop.f32.mrb[0].mxu0
    %6744 = vdwg.mxu0
    %6745 = vst.msk [vmem:[#allocation3 + $0x4] sm:$0x3] %vm5084, %v6742
    %v6746 = vld [vmem:[#allocation3] sm:$0xff]
    %s6747 = scalar_lea.vmem %s13, 5
    %v6748 = vld [vmem:[%s6747] ss:$8 sm:$0xf]
    %v6750 = vlaneseq
    %v6751 = vshrl.u32 %v6750, 7
    %v6752 = vsub.s32 0, %v6751
    %v6753 = vrot.slane %v6748, %v6752
    %v6754 = vlaneseq
    %v6755 = vshrl.u32 %v6754, 7
    %v6756 = vsub.s32 1, %v6755
    %v6757 = vrot.slane %v6748, %v6756
    %v6758 = vlaneseq
    %v6759 = vshrl.u32 %v6758, 7
    %v6760 = vsub.s32 2, %v6759
    %v6761 = vrot.slane %v6748, %v6760
    %v6762 = vlaneseq
    %v6763 = vshrl.u32 %v6762, 7
    %v6764 = vsub.s32 3, %v6763
    %v6765 = vrot.slane %v6748, %v6764
    %v6766 = vcombine.low %v6753, %v6757
    %v6767 = vcombine.low %v6761, %v6765
    %v6769 = vunpack.c.l.s4 1983009808
    %v6770 = vunpack.c.0.s8 %v6769
    %v6771 = vlaneseq
    %v6772 = vshrl.u32 %v6771, 7
    %v6773 = vsub.s32 %v6770, %v6772
    %v6774 = vrot.slane %v6766, %v6773
    %v6776 = vunpack.c.l.s4 1983009808
    %v6777 = vunpack.c.0.s8 %v6776
    %v6778 = vlaneseq
    %v6779 = vshrl.u32 %v6778, 7
    %v6780 = vsub.s32 %v6777, %v6779
    %v6781 = vrot.slane %v6767, %v6780
    %v6782 = vcombine.low %v6774, %v6781
    %v6784 = vmul.f32 %v6746, %v6782
    %s6785 = scalar_lea.vmem %s14, 5
    %v6786 = vld [vmem:[%s6785] ss:$8 sm:$0xf]
    %v6788 = vlaneseq
    %v6789 = vshrl.u32 %v6788, 7
    %v6790 = vsub.s32 0, %v6789
    %v6791 = vrot.slane %v6786, %v6790
    %v6792 = vlaneseq
    %v6793 = vshrl.u32 %v6792, 7
    %v6794 = vsub.s32 1, %v6793
    %v6795 = vrot.slane %v6786, %v6794
    %v6796 = vlaneseq
    %v6797 = vshrl.u32 %v6796, 7
    %v6798 = vsub.s32 2, %v6797
    %v6799 = vrot.slane %v6786, %v6798
    %v6800 = vlaneseq
    %v6801 = vshrl.u32 %v6800, 7
    %v6802 = vsub.s32 3, %v6801
    %v6803 = vrot.slane %v6786, %v6802
    %v6804 = vcombine.low %v6791, %v6795
    %v6805 = vcombine.low %v6799, %v6803
    %v6807 = vunpack.c.l.s4 1983009808
    %v6808 = vunpack.c.0.s8 %v6807
    %v6809 = vlaneseq
    %v6810 = vshrl.u32 %v6809, 7
    %v6811 = vsub.s32 %v6808, %v6810
    %v6812 = vrot.slane %v6804, %v6811
    %v6814 = vunpack.c.l.s4 1983009808
    %v6815 = vunpack.c.0.s8 %v6814
    %v6816 = vlaneseq
    %v6817 = vshrl.u32 %v6816, 7
    %v6818 = vsub.s32 %v6815, %v6817
    %v6819 = vrot.slane %v6805, %v6818
    %v6820 = vcombine.low %v6812, %v6819
    %v6822 = vadd.f32 %v6784, %v6820
    %v6823 = vmax.f32 %v6822, 0.0
    %s6824 = scalar_lea.vmem %s15, 2560
    %v6825 = vld [vmem:[%s6824] sm:$0xff]
    %v6826 = vld [vmem:[%s6824 + $0x8] sm:$0xff]
    %v6827 = vld [vmem:[%s6824 + $0x10] sm:$0xff]
    %v6828 = vld [vmem:[%s6824 + $0x18] sm:$0xff]
    %v6829 = vld [vmem:[%s6824 + $0x20] sm:$0xff]
    %v6830 = vld [vmem:[%s6824 + $0x28] sm:$0xff]
    %v6831 = vld [vmem:[%s6824 + $0x30] sm:$0xff]
    %v6832 = vld [vmem:[%s6824 + $0x38] sm:$0xff]
    %v6833 = vld [vmem:[%s6824 + $0x40] sm:$0xff]
    %v6834 = vld [vmem:[%s6824 + $0x48] sm:$0xff]
    %v6835 = vld [vmem:[%s6824 + $0x50] sm:$0xff]
    %v6836 = vld [vmem:[%s6824 + $0x58] sm:$0xff]
    %v6837 = vld [vmem:[%s6824 + $0x60] sm:$0xff]
    %v6838 = vld [vmem:[%s6824 + $0x68] sm:$0xff]
    %v6839 = vld [vmem:[%s6824 + $0x70] sm:$0xff]
    %v6840 = vld [vmem:[%s6824 + $0x78] sm:$0xff]
    %v6841 = vld [vmem:[%s6824 + $0x80] sm:$0xff]
    %v6842 = vld [vmem:[%s6824 + $0x88] sm:$0xff]
    %v6843 = vld [vmem:[%s6824 + $0x90] sm:$0xff]
    %v6844 = vld [vmem:[%s6824 + $0x98] sm:$0xff]
    %v6845 = vld [vmem:[%s6824 + $0xa0] sm:$0xff]
    %v6846 = vld [vmem:[%s6824 + $0xa8] sm:$0xff]
    %v6847 = vld [vmem:[%s6824 + $0xb0] sm:$0xff]
    %v6848 = vld [vmem:[%s6824 + $0xb8] sm:$0xff]
    %v6849 = vld [vmem:[%s6824 + $0xc0] sm:$0xff]
    %v6850 = vld [vmem:[%s6824 + $0xc8] sm:$0xff]
    %v6851 = vld [vmem:[%s6824 + $0xd0] sm:$0xff]
    %v6852 = vld [vmem:[%s6824 + $0xd8] sm:$0xff]
    %v6853 = vld [vmem:[%s6824 + $0xe0] sm:$0xff]
    %v6854 = vld [vmem:[%s6824 + $0xe8] sm:$0xff]
    %v6855 = vld [vmem:[%s6824 + $0xf0] sm:$0xff]
    %v6856 = vld [vmem:[%s6824 + $0xf8] sm:$0xff]
    %v6857 = vld [vmem:[%s6824 + $0x100] sm:$0xff]
    %v6858 = vld [vmem:[%s6824 + $0x108] sm:$0xff]
    %v6859 = vld [vmem:[%s6824 + $0x110] sm:$0xff]
    %v6860 = vld [vmem:[%s6824 + $0x118] sm:$0xff]
    %v6861 = vld [vmem:[%s6824 + $0x120] sm:$0xff]
    %v6862 = vld [vmem:[%s6824 + $0x128] sm:$0xff]
    %v6863 = vld [vmem:[%s6824 + $0x130] sm:$0xff]
    %v6864 = vld [vmem:[%s6824 + $0x138] sm:$0xff]
    %v6865 = vld [vmem:[%s6824 + $0x140] sm:$0xff]
    %v6866 = vld [vmem:[%s6824 + $0x148] sm:$0xff]
    %v6867 = vld [vmem:[%s6824 + $0x150] sm:$0xff]
    %v6868 = vld [vmem:[%s6824 + $0x158] sm:$0xff]
    %v6869 = vld [vmem:[%s6824 + $0x160] sm:$0xff]
    %v6870 = vld [vmem:[%s6824 + $0x168] sm:$0xff]
    %v6871 = vld [vmem:[%s6824 + $0x170] sm:$0xff]
    %v6872 = vld [vmem:[%s6824 + $0x178] sm:$0xff]
    %v6873 = vld [vmem:[%s6824 + $0x180] sm:$0xff]
    %v6874 = vld [vmem:[%s6824 + $0x188] sm:$0xff]
    %v6875 = vld [vmem:[%s6824 + $0x190] sm:$0xff]
    %v6876 = vld [vmem:[%s6824 + $0x198] sm:$0xff]
    %v6877 = vld [vmem:[%s6824 + $0x1a0] sm:$0xff]
    %v6878 = vld [vmem:[%s6824 + $0x1a8] sm:$0xff]
    %v6879 = vld [vmem:[%s6824 + $0x1b0] sm:$0xff]
    %v6880 = vld [vmem:[%s6824 + $0x1b8] sm:$0xff]
    %v6881 = vld [vmem:[%s6824 + $0x1c0] sm:$0xff]
    %v6882 = vld [vmem:[%s6824 + $0x1c8] sm:$0xff]
    %v6883 = vld [vmem:[%s6824 + $0x1d0] sm:$0xff]
    %v6884 = vld [vmem:[%s6824 + $0x1d8] sm:$0xff]
    %v6885 = vld [vmem:[%s6824 + $0x1e0] sm:$0xff]
    %v6886 = vld [vmem:[%s6824 + $0x1e8] sm:$0xff]
    %v6887 = vld [vmem:[%s6824 + $0x1f0] sm:$0xff]
    %v6888 = vld [vmem:[%s6824 + $0x1f8] sm:$0xff]
    %v6890 = vcombine.high %v6823, %v6823
    %v6892 = vunpack.c.l.s4 1983009808
    %v6893 = vunpack.c.0.s8 %v6892
    %v6894 = vlaneseq
    %v6895 = vshrl.u32 %v6894, 7
    %v6896 = vsub.s32 %v6893, %v6895
    %v6897 = vrot.slane %v6823, %v6896
    %v6899 = vunpack.c.l.s4 1983009808
    %v6900 = vunpack.c.0.s8 %v6899
    %v6901 = vlaneseq
    %v6902 = vshrl.u32 %v6901, 7
    %v6903 = vsub.s32 %v6900, %v6902
    %v6904 = vrot.slane %v6890, %v6903
    %v6905 = vcombine.high %v6897, %v6897
    %v6906 = vcombine.high %v6904, %v6904
    %6911 = vmatprep.subr.mxu0 0.0
    %6912 = vmatpush1.msra.mxu0 %v6825
    %6913 = vmatprep.subr.mxu0 0.0
    %6914 = vmatpush1.msra.mxu0 %v6826
    %6915 = vmatprep.subr.mxu0 0.0
    %6916 = vmatpush1.msra.mxu0 %v6827
    %6917 = vmatprep.subr.mxu0 0.0
    %6918 = vmatpush1.msra.mxu0 %v6828
    %6919 = vmatprep.subr.mxu0 0.0
    %6920 = vmatpush1.msra.mxu0 %v6829
    %6921 = vmatprep.subr.mxu0 0.0
    %6922 = vmatpush1.msra.mxu0 %v6830
    %6923 = vmatprep.subr.mxu0 0.0
    %6924 = vmatpush1.msra.mxu0 %v6831
    %6925 = vmatprep.subr.mxu0 0.0
    %6926 = vmatpush1.msra.mxu0 %v6832
    %6927 = vmatprep.subr.mxu0 0.0
    %6928 = vmatpush1.msra.mxu0 %v6833
    %6929 = vmatprep.subr.mxu0 0.0
    %6930 = vmatpush1.msra.mxu0 %v6834
    %6931 = vmatprep.subr.mxu0 0.0
    %6932 = vmatpush1.msra.mxu0 %v6835
    %6933 = vmatprep.subr.mxu0 0.0
    %6934 = vmatpush1.msra.mxu0 %v6836
    %6935 = vmatprep.subr.mxu0 0.0
    %6936 = vmatpush1.msra.mxu0 %v6837
    %6937 = vmatprep.subr.mxu0 0.0
    %6938 = vmatpush1.msra.mxu0 %v6838
    %6939 = vmatprep.subr.mxu0 0.0
    %6940 = vmatpush1.msra.mxu0 %v6839
    %6941 = vmatprep.subr.mxu0 0.0
    %6942 = vmatpush1.msra.mxu0 %v6840
    %6943 = vmatprep.subr.mxu0 0.0
    %6944 = vmatpush1.msra.mxu0 %v6841
    %6945 = vmatprep.subr.mxu0 0.0
    %6946 = vmatpush1.msra.mxu0 %v6842
    %6947 = vmatprep.subr.mxu0 0.0
    %6948 = vmatpush1.msra.mxu0 %v6843
    %6949 = vmatprep.subr.mxu0 0.0
    %6950 = vmatpush1.msra.mxu0 %v6844
    %6951 = vmatprep.subr.mxu0 0.0
    %6952 = vmatpush1.msra.mxu0 %v6845
    %6953 = vmatprep.subr.mxu0 0.0
    %6954 = vmatpush1.msra.mxu0 %v6846
    %6955 = vmatprep.subr.mxu0 0.0
    %6956 = vmatpush1.msra.mxu0 %v6847
    %6957 = vmatprep.subr.mxu0 0.0
    %6958 = vmatpush1.msra.mxu0 %v6848
    %6959 = vmatprep.subr.mxu0 0.0
    %6960 = vmatpush1.msra.mxu0 %v6849
    %6961 = vmatprep.subr.mxu0 0.0
    %6962 = vmatpush1.msra.mxu0 %v6850
    %6963 = vmatprep.subr.mxu0 0.0
    %6964 = vmatpush1.msra.mxu0 %v6851
    %6965 = vmatprep.subr.mxu0 0.0
    %6966 = vmatpush1.msra.mxu0 %v6852
    %6967 = vmatprep.subr.mxu0 0.0
    %6968 = vmatpush1.msra.mxu0 %v6853
    %6969 = vmatprep.subr.mxu0 0.0
    %6970 = vmatpush1.msra.mxu0 %v6854
    %6971 = vmatprep.subr.mxu0 0.0
    %6972 = vmatpush1.msra.mxu0 %v6855
    %6973 = vmatprep.subr.mxu0 0.0
    %6974 = vmatpush1.msra.mxu0 %v6856
    %6975 = vmatprep.mubr.f32.mxu0 %v6905
    %6976 = vmatmul.mubr.f32.gmra.mrb[0].mxu0 %v6897
    %v6977 = vpop.f32.mrb[0].mxu0
    %v6978 = vadd.f32 0.0, %v6977
    %v6979 = vpop.f32.mrb[0].mxu0
    %6980 = vdwg.mxu0
    %6981 = vmatprep.subr.mxu0 0.0
    %6982 = vmatpush1.msra.mxu0 %v6857
    %6983 = vmatprep.subr.mxu0 0.0
    %6984 = vmatpush1.msra.mxu0 %v6858
    %6985 = vmatprep.subr.mxu0 0.0
    %6986 = vmatpush1.msra.mxu0 %v6859
    %6987 = vmatprep.subr.mxu0 0.0
    %6988 = vmatpush1.msra.mxu0 %v6860
    %6989 = vmatprep.subr.mxu0 0.0
    %6990 = vmatpush1.msra.mxu0 %v6861
    %6991 = vmatprep.subr.mxu0 0.0
    %6992 = vmatpush1.msra.mxu0 %v6862
    %6993 = vmatprep.subr.mxu0 0.0
    %6994 = vmatpush1.msra.mxu0 %v6863
    %6995 = vmatprep.subr.mxu0 0.0
    %6996 = vmatpush1.msra.mxu0 %v6864
    %6997 = vmatprep.subr.mxu0 0.0
    %6998 = vmatpush1.msra.mxu0 %v6865
    %6999 = vmatprep.subr.mxu0 0.0
    %7000 = vmatpush1.msra.mxu0 %v6866
    %7001 = vmatprep.subr.mxu0 0.0
    %7002 = vmatpush1.msra.mxu0 %v6867
    %7003 = vmatprep.subr.mxu0 0.0
    %7004 = vmatpush1.msra.mxu0 %v6868
    %7005 = vmatprep.subr.mxu0 0.0
    %7006 = vmatpush1.msra.mxu0 %v6869
    %7007 = vmatprep.subr.mxu0 0.0
    %7008 = vmatpush1.msra.mxu0 %v6870
    %7009 = vmatprep.subr.mxu0 0.0
    %7010 = vmatpush1.msra.mxu0 %v6871
    %7011 = vmatprep.subr.mxu0 0.0
    %7012 = vmatpush1.msra.mxu0 %v6872
    %7013 = vmatprep.subr.mxu0 0.0
    %7014 = vmatpush1.msra.mxu0 %v6873
    %7015 = vmatprep.subr.mxu0 0.0
    %7016 = vmatpush1.msra.mxu0 %v6874
    %7017 = vmatprep.subr.mxu0 0.0
    %7018 = vmatpush1.msra.mxu0 %v6875
    %7019 = vmatprep.subr.mxu0 0.0
    %7020 = vmatpush1.msra.mxu0 %v6876
    %7021 = vmatprep.subr.mxu0 0.0
    %7022 = vmatpush1.msra.mxu0 %v6877
    %7023 = vmatprep.subr.mxu0 0.0
    %7024 = vmatpush1.msra.mxu0 %v6878
    %7025 = vmatprep.subr.mxu0 0.0
    %7026 = vmatpush1.msra.mxu0 %v6879
    %7027 = vmatprep.subr.mxu0 0.0
    %7028 = vmatpush1.msra.mxu0 %v6880
    %7029 = vmatprep.subr.mxu0 0.0
    %7030 = vmatpush1.msra.mxu0 %v6881
    %7031 = vmatprep.subr.mxu0 0.0
    %7032 = vmatpush1.msra.mxu0 %v6882
    %7033 = vmatprep.subr.mxu0 0.0
    %7034 = vmatpush1.msra.mxu0 %v6883
    %7035 = vmatprep.subr.mxu0 0.0
    %7036 = vmatpush1.msra.mxu0 %v6884
    %7037 = vmatprep.subr.mxu0 0.0
    %7038 = vmatpush1.msra.mxu0 %v6885
    %7039 = vmatprep.subr.mxu0 0.0
    %7040 = vmatpush1.msra.mxu0 %v6886
    %7041 = vmatprep.subr.mxu0 0.0
    %7042 = vmatpush1.msra.mxu0 %v6887
    %7043 = vmatprep.subr.mxu0 0.0
    %7044 = vmatpush1.msra.mxu0 %v6888
    %7045 = vmatprep.mubr.f32.mxu0 %v6906
    %7046 = vmatmul.mubr.f32.gmra.mrb[0].mxu0 %v6904
    %v7047 = vpop.f32.mrb[0].mxu0
    %v7048 = vadd.f32 %v6978, %v7047
    %v7049 = vpop.f32.mrb[0].mxu0
    %7050 = vdwg.mxu0
    %v7051 = vld [vmem:[%s16 + $0x5] sm:$0x1]
    %v7052 = vlaneseq
    %v7053 = vshrl.u32 %v7052, 7
    %v7054 = vsub.s32 0, %v7053
    %v7055 = vrot.slane %v7051, %v7054
    %v7056 = vmul.f32 %v7048, %v7055
    %v7057 = vld [vmem:[%s17 + $0x5] sm:$0x1]
    %v7058 = vlaneseq
    %v7059 = vshrl.u32 %v7058, 7
    %v7060 = vsub.s32 0, %v7059
    %v7061 = vrot.slane %v7057, %v7060
    %v7062 = vadd.f32 %v7056, %v7061
    %v7063 = vmax.f32 %v7062, 0.0
    %s7064 = scalar_lea.vmem %s18, 640
    %v7065 = vld [vmem:[%s7064] sm:$0xff]
    %v7066 = vld [vmem:[%s7064 + $0x8] sm:$0xff]
    %v7067 = vld [vmem:[%s7064 + $0x10] sm:$0xff]
    %v7068 = vld [vmem:[%s7064 + $0x18] sm:$0xff]
    %v7069 = vld [vmem:[%s7064 + $0x20] sm:$0xff]
    %v7070 = vld [vmem:[%s7064 + $0x28] sm:$0xff]
    %v7071 = vld [vmem:[%s7064 + $0x30] sm:$0xff]
    %v7072 = vld [vmem:[%s7064 + $0x38] sm:$0xff]
    %v7073 = vld [vmem:[%s7064 + $0x40] sm:$0xff]
    %v7074 = vld [vmem:[%s7064 + $0x48] sm:$0xff]
    %v7075 = vld [vmem:[%s7064 + $0x50] sm:$0xff]
    %v7076 = vld [vmem:[%s7064 + $0x58] sm:$0xff]
    %v7077 = vld [vmem:[%s7064 + $0x60] sm:$0xff]
    %v7078 = vld [vmem:[%s7064 + $0x68] sm:$0xff]
    %v7079 = vld [vmem:[%s7064 + $0x70] sm:$0xff]
    %v7080 = vld [vmem:[%s7064 + $0x78] sm:$0xff]
    %7081 = vmatprep.subr.mxu0 0.0
    %7082 = vmatpush1.msra.mxu0 %v7065
    %7083 = vmatprep.subr.mxu0 0.0
    %7084 = vmatpush1.msra.mxu0 %v7066
    %7085 = vmatprep.subr.mxu0 0.0
    %7086 = vmatpush1.msra.mxu0 %v7067
    %7087 = vmatprep.subr.mxu0 0.0
    %7088 = vmatpush1.msra.mxu0 %v7068
    %7089 = vmatprep.subr.mxu0 0.0
    %7090 = vmatpush1.msra.mxu0 %v7069
    %7091 = vmatprep.subr.mxu0 0.0
    %7092 = vmatpush1.msra.mxu0 %v7070
    %7093 = vmatprep.subr.mxu0 0.0
    %7094 = vmatpush1.msra.mxu0 %v7071
    %7095 = vmatprep.subr.mxu0 0.0
    %7096 = vmatpush1.msra.mxu0 %v7072
    %7097 = vmatprep.subr.mxu0 0.0
    %7098 = vmatpush1.msra.mxu0 %v7073
    %7099 = vmatprep.subr.mxu0 0.0
    %7100 = vmatpush1.msra.mxu0 %v7074
    %7101 = vmatprep.subr.mxu0 0.0
    %7102 = vmatpush1.msra.mxu0 %v7075
    %7103 = vmatprep.subr.mxu0 0.0
    %7104 = vmatpush1.msra.mxu0 %v7076
    %7105 = vmatprep.subr.mxu0 0.0
    %7106 = vmatpush1.msra.mxu0 %v7077
    %7107 = vmatprep.subr.mxu0 0.0
    %7108 = vmatpush1.msra.mxu0 %v7078
    %7109 = vmatprep.subr.mxu0 0.0
    %7110 = vmatpush1.msra.mxu0 %v7079
    %7111 = vmatprep.subr.mxu0 0.0
    %7112 = vmatpush1.msra.mxu0 %v7080
    %7113 = vmatprep.subr.mxu0 0.0
    %7114 = vmatpush1.msra.mxu0 0.0
    %7115 = vmatprep.subr.mxu0 0.0
    %7116 = vmatpush1.msra.mxu0 0.0
    %7117 = vmatprep.subr.mxu0 0.0
    %7118 = vmatpush1.msra.mxu0 0.0
    %7119 = vmatprep.subr.mxu0 0.0
    %7120 = vmatpush1.msra.mxu0 0.0
    %7121 = vmatprep.subr.mxu0 0.0
    %7122 = vmatpush1.msra.mxu0 0.0
    %7123 = vmatprep.subr.mxu0 0.0
    %7124 = vmatpush1.msra.mxu0 0.0
    %7125 = vmatprep.subr.mxu0 0.0
    %7126 = vmatpush1.msra.mxu0 0.0
    %7127 = vmatprep.subr.mxu0 0.0
    %7128 = vmatpush1.msra.mxu0 0.0
    %7129 = vmatprep.subr.mxu0 0.0
    %7130 = vmatpush1.msra.mxu0 0.0
    %7131 = vmatprep.subr.mxu0 0.0
    %7132 = vmatpush1.msra.mxu0 0.0
    %7133 = vmatprep.subr.mxu0 0.0
    %7134 = vmatpush1.msra.mxu0 0.0
    %7135 = vmatprep.subr.mxu0 0.0
    %7136 = vmatpush1.msra.mxu0 0.0
    %7137 = vmatprep.subr.mxu0 0.0
    %7138 = vmatpush1.msra.mxu0 0.0
    %7139 = vmatprep.subr.mxu0 0.0
    %7140 = vmatpush1.msra.mxu0 0.0
    %7141 = vmatprep.subr.mxu0 0.0
    %7142 = vmatpush1.msra.mxu0 0.0
    %7143 = vmatprep.subr.mxu0 0.0
    %7144 = vmatpush1.msra.mxu0 0.0
    %7145 = vmatprep.mubr.f32.mxu0 0.0
    %7146 = vmatmul.mubr.f32.gmra.mrb[0].mxu0 %v7063
    %v7147 = vpop.f32.mrb[0].mxu0
    %v7148 = vadd.f32 0.0, %v7147
    %v7149 = vpop.f32.mrb[0].mxu0
    %7150 = vdwg.mxu0
    %v7153 = vunpack.c.l.s4 1983009808
    %v7154 = vunpack.c.0.s8 %v7153
    %v7155 = vlaneseq
    %v7156 = vshrl.u32 %v7155, 7
    %v7157 = vsub.s32 %v7154, %v7156
    %v7158 = vrot.slane %v7148, %v7157
    %7159 = vrot.lane.b32.xlu0 %v7158, 32
    %v7160 = vpop.permute.xlu0 %7159
    %7162 = vst.msk [vmem:[#allocation3 + $0x4] sm:$0x3] %vm5502, %v7160
    %v7163 = vld [vmem:[#allocation3] sm:$0xff]
    %s7164 = scalar_lea.vmem %s13, 6
    %v7165 = vld [vmem:[%s7164] ss:$8 sm:$0xf]
    %v7167 = vlaneseq
    %v7168 = vshrl.u32 %v7167, 7
    %v7169 = vsub.s32 0, %v7168
    %v7170 = vrot.slane %v7165, %v7169
    %v7171 = vlaneseq
    %v7172 = vshrl.u32 %v7171, 7
    %v7173 = vsub.s32 1, %v7172
    %v7174 = vrot.slane %v7165, %v7173
    %v7175 = vlaneseq
    %v7176 = vshrl.u32 %v7175, 7
    %v7177 = vsub.s32 2, %v7176
    %v7178 = vrot.slane %v7165, %v7177
    %v7179 = vlaneseq
    %v7180 = vshrl.u32 %v7179, 7
    %v7181 = vsub.s32 3, %v7180
    %v7182 = vrot.slane %v7165, %v7181
    %v7183 = vcombine.low %v7170, %v7174
    %v7184 = vcombine.low %v7178, %v7182
    %v7186 = vunpack.c.l.s4 1983009808
    %v7187 = vunpack.c.0.s8 %v7186
    %v7188 = vlaneseq
    %v7189 = vshrl.u32 %v7188, 7
    %v7190 = vsub.s32 %v7187, %v7189
    %v7191 = vrot.slane %v7183, %v7190
    %v7193 = vunpack.c.l.s4 1983009808
    %v7194 = vunpack.c.0.s8 %v7193
    %v7195 = vlaneseq
    %v7196 = vshrl.u32 %v7195, 7
    %v7197 = vsub.s32 %v7194, %v7196
    %v7198 = vrot.slane %v7184, %v7197
    %v7199 = vcombine.low %v7191, %v7198
    %v7201 = vmul.f32 %v7163, %v7199
    %s7202 = scalar_lea.vmem %s14, 6
    %v7203 = vld [vmem:[%s7202] ss:$8 sm:$0xf]
    %v7205 = vlaneseq
    %v7206 = vshrl.u32 %v7205, 7
    %v7207 = vsub.s32 0, %v7206
    %v7208 = vrot.slane %v7203, %v7207
    %v7209 = vlaneseq
    %v7210 = vshrl.u32 %v7209, 7
    %v7211 = vsub.s32 1, %v7210
    %v7212 = vrot.slane %v7203, %v7211
    %v7213 = vlaneseq
    %v7214 = vshrl.u32 %v7213, 7
    %v7215 = vsub.s32 2, %v7214
    %v7216 = vrot.slane %v7203, %v7215
    %v7217 = vlaneseq
    %v7218 = vshrl.u32 %v7217, 7
    %v7219 = vsub.s32 3, %v7218
    %v7220 = vrot.slane %v7203, %v7219
    %v7221 = vcombine.low %v7208, %v7212
    %v7222 = vcombine.low %v7216, %v7220
    %v7224 = vunpack.c.l.s4 1983009808
    %v7225 = vunpack.c.0.s8 %v7224
    %v7226 = vlaneseq
    %v7227 = vshrl.u32 %v7226, 7
    %v7228 = vsub.s32 %v7225, %v7227
    %v7229 = vrot.slane %v7221, %v7228
    %v7231 = vunpack.c.l.s4 1983009808
    %v7232 = vunpack.c.0.s8 %v7231
    %v7233 = vlaneseq
    %v7234 = vshrl.u32 %v7233, 7
    %v7235 = vsub.s32 %v7232, %v7234
    %v7236 = vrot.slane %v7222, %v7235
    %v7237 = vcombine.low %v7229, %v7236
    %v7239 = vadd.f32 %v7201, %v7237
    %v7240 = vmax.f32 %v7239, 0.0
    %s7241 = scalar_lea.vmem %s15, 3072
    %v7242 = vld [vmem:[%s7241] sm:$0xff]
    %v7243 = vld [vmem:[%s7241 + $0x8] sm:$0xff]
    %v7244 = vld [vmem:[%s7241 + $0x10] sm:$0xff]
    %v7245 = vld [vmem:[%s7241 + $0x18] sm:$0xff]
    %v7246 = vld [vmem:[%s7241 + $0x20] sm:$0xff]
    %v7247 = vld [vmem:[%s7241 + $0x28] sm:$0xff]
    %v7248 = vld [vmem:[%s7241 + $0x30] sm:$0xff]
    %v7249 = vld [vmem:[%s7241 + $0x38] sm:$0xff]
    %v7250 = vld [vmem:[%s7241 + $0x40] sm:$0xff]
    %v7251 = vld [vmem:[%s7241 + $0x48] sm:$0xff]
    %v7252 = vld [vmem:[%s7241 + $0x50] sm:$0xff]
    %v7253 = vld [vmem:[%s7241 + $0x58] sm:$0xff]
    %v7254 = vld [vmem:[%s7241 + $0x60] sm:$0xff]
    %v7255 = vld [vmem:[%s7241 + $0x68] sm:$0xff]
    %v7256 = vld [vmem:[%s7241 + $0x70] sm:$0xff]
    %v7257 = vld [vmem:[%s7241 + $0x78] sm:$0xff]
    %v7258 = vld [vmem:[%s7241 + $0x80] sm:$0xff]
    %v7259 = vld [vmem:[%s7241 + $0x88] sm:$0xff]
    %v7260 = vld [vmem:[%s7241 + $0x90] sm:$0xff]
    %v7261 = vld [vmem:[%s7241 + $0x98] sm:$0xff]
    %v7262 = vld [vmem:[%s7241 + $0xa0] sm:$0xff]
    %v7263 = vld [vmem:[%s7241 + $0xa8] sm:$0xff]
    %v7264 = vld [vmem:[%s7241 + $0xb0] sm:$0xff]
    %v7265 = vld [vmem:[%s7241 + $0xb8] sm:$0xff]
    %v7266 = vld [vmem:[%s7241 + $0xc0] sm:$0xff]
    %v7267 = vld [vmem:[%s7241 + $0xc8] sm:$0xff]
    %v7268 = vld [vmem:[%s7241 + $0xd0] sm:$0xff]
    %v7269 = vld [vmem:[%s7241 + $0xd8] sm:$0xff]
    %v7270 = vld [vmem:[%s7241 + $0xe0] sm:$0xff]
    %v7271 = vld [vmem:[%s7241 + $0xe8] sm:$0xff]
    %v7272 = vld [vmem:[%s7241 + $0xf0] sm:$0xff]
    %v7273 = vld [vmem:[%s7241 + $0xf8] sm:$0xff]
    %v7274 = vld [vmem:[%s7241 + $0x100] sm:$0xff]
    %v7275 = vld [vmem:[%s7241 + $0x108] sm:$0xff]
    %v7276 = vld [vmem:[%s7241 + $0x110] sm:$0xff]
    %v7277 = vld [vmem:[%s7241 + $0x118] sm:$0xff]
    %v7278 = vld [vmem:[%s7241 + $0x120] sm:$0xff]
    %v7279 = vld [vmem:[%s7241 + $0x128] sm:$0xff]
    %v7280 = vld [vmem:[%s7241 + $0x130] sm:$0xff]
    %v7281 = vld [vmem:[%s7241 + $0x138] sm:$0xff]
    %v7282 = vld [vmem:[%s7241 + $0x140] sm:$0xff]
    %v7283 = vld [vmem:[%s7241 + $0x148] sm:$0xff]
    %v7284 = vld [vmem:[%s7241 + $0x150] sm:$0xff]
    %v7285 = vld [vmem:[%s7241 + $0x158] sm:$0xff]
    %v7286 = vld [vmem:[%s7241 + $0x160] sm:$0xff]
    %v7287 = vld [vmem:[%s7241 + $0x168] sm:$0xff]
    %v7288 = vld [vmem:[%s7241 + $0x170] sm:$0xff]
    %v7289 = vld [vmem:[%s7241 + $0x178] sm:$0xff]
    %v7290 = vld [vmem:[%s7241 + $0x180] sm:$0xff]
    %v7291 = vld [vmem:[%s7241 + $0x188] sm:$0xff]
    %v7292 = vld [vmem:[%s7241 + $0x190] sm:$0xff]
    %v7293 = vld [vmem:[%s7241 + $0x198] sm:$0xff]
    %v7294 = vld [vmem:[%s7241 + $0x1a0] sm:$0xff]
    %v7295 = vld [vmem:[%s7241 + $0x1a8] sm:$0xff]
    %v7296 = vld [vmem:[%s7241 + $0x1b0] sm:$0xff]
    %v7297 = vld [vmem:[%s7241 + $0x1b8] sm:$0xff]
    %v7298 = vld [vmem:[%s7241 + $0x1c0] sm:$0xff]
    %v7299 = vld [vmem:[%s7241 + $0x1c8] sm:$0xff]
    %v7300 = vld [vmem:[%s7241 + $0x1d0] sm:$0xff]
    %v7301 = vld [vmem:[%s7241 + $0x1d8] sm:$0xff]
    %v7302 = vld [vmem:[%s7241 + $0x1e0] sm:$0xff]
    %v7303 = vld [vmem:[%s7241 + $0x1e8] sm:$0xff]
    %v7304 = vld [vmem:[%s7241 + $0x1f0] sm:$0xff]
    %v7305 = vld [vmem:[%s7241 + $0x1f8] sm:$0xff]
    %v7307 = vcombine.high %v7240, %v7240
    %v7309 = vunpack.c.l.s4 1983009808
    %v7310 = vunpack.c.0.s8 %v7309
    %v7311 = vlaneseq
    %v7312 = vshrl.u32 %v7311, 7
    %v7313 = vsub.s32 %v7310, %v7312
    %v7314 = vrot.slane %v7240, %v7313
    %v7316 = vunpack.c.l.s4 1983009808
    %v7317 = vunpack.c.0.s8 %v7316
    %v7318 = vlaneseq
    %v7319 = vshrl.u32 %v7318, 7
    %v7320 = vsub.s32 %v7317, %v7319
    %v7321 = vrot.slane %v7307, %v7320
    %v7322 = vcombine.high %v7314, %v7314
    %v7323 = vcombine.high %v7321, %v7321
    %7328 = vmatprep.subr.mxu0 0.0
    %7329 = vmatpush1.msra.mxu0 %v7242
    %7330 = vmatprep.subr.mxu0 0.0
    %7331 = vmatpush1.msra.mxu0 %v7243
    %7332 = vmatprep.subr.mxu0 0.0
    %7333 = vmatpush1.msra.mxu0 %v7244
    %7334 = vmatprep.subr.mxu0 0.0
    %7335 = vmatpush1.msra.mxu0 %v7245
    %7336 = vmatprep.subr.mxu0 0.0
    %7337 = vmatpush1.msra.mxu0 %v7246
    %7338 = vmatprep.subr.mxu0 0.0
    %7339 = vmatpush1.msra.mxu0 %v7247
    %7340 = vmatprep.subr.mxu0 0.0
    %7341 = vmatpush1.msra.mxu0 %v7248
    %7342 = vmatprep.subr.mxu0 0.0
    %7343 = vmatpush1.msra.mxu0 %v7249
    %7344 = vmatprep.subr.mxu0 0.0
    %7345 = vmatpush1.msra.mxu0 %v7250
    %7346 = vmatprep.subr.mxu0 0.0
    %7347 = vmatpush1.msra.mxu0 %v7251
    %7348 = vmatprep.subr.mxu0 0.0
    %7349 = vmatpush1.msra.mxu0 %v7252
    %7350 = vmatprep.subr.mxu0 0.0
    %7351 = vmatpush1.msra.mxu0 %v7253
    %7352 = vmatprep.subr.mxu0 0.0
    %7353 = vmatpush1.msra.mxu0 %v7254
    %7354 = vmatprep.subr.mxu0 0.0
    %7355 = vmatpush1.msra.mxu0 %v7255
    %7356 = vmatprep.subr.mxu0 0.0
    %7357 = vmatpush1.msra.mxu0 %v7256
    %7358 = vmatprep.subr.mxu0 0.0
    %7359 = vmatpush1.msra.mxu0 %v7257
    %7360 = vmatprep.subr.mxu0 0.0
    %7361 = vmatpush1.msra.mxu0 %v7258
    %7362 = vmatprep.subr.mxu0 0.0
    %7363 = vmatpush1.msra.mxu0 %v7259
    %7364 = vmatprep.subr.mxu0 0.0
    %7365 = vmatpush1.msra.mxu0 %v7260
    %7366 = vmatprep.subr.mxu0 0.0
    %7367 = vmatpush1.msra.mxu0 %v7261
    %7368 = vmatprep.subr.mxu0 0.0
    %7369 = vmatpush1.msra.mxu0 %v7262
    %7370 = vmatprep.subr.mxu0 0.0
    %7371 = vmatpush1.msra.mxu0 %v7263
    %7372 = vmatprep.subr.mxu0 0.0
    %7373 = vmatpush1.msra.mxu0 %v7264
    %7374 = vmatprep.subr.mxu0 0.0
    %7375 = vmatpush1.msra.mxu0 %v7265
    %7376 = vmatprep.subr.mxu0 0.0
    %7377 = vmatpush1.msra.mxu0 %v7266
    %7378 = vmatprep.subr.mxu0 0.0
    %7379 = vmatpush1.msra.mxu0 %v7267
    %7380 = vmatprep.subr.mxu0 0.0
    %7381 = vmatpush1.msra.mxu0 %v7268
    %7382 = vmatprep.subr.mxu0 0.0
    %7383 = vmatpush1.msra.mxu0 %v7269
    %7384 = vmatprep.subr.mxu0 0.0
    %7385 = vmatpush1.msra.mxu0 %v7270
    %7386 = vmatprep.subr.mxu0 0.0
    %7387 = vmatpush1.msra.mxu0 %v7271
    %7388 = vmatprep.subr.mxu0 0.0
    %7389 = vmatpush1.msra.mxu0 %v7272
    %7390 = vmatprep.subr.mxu0 0.0
    %7391 = vmatpush1.msra.mxu0 %v7273
    %7392 = vmatprep.mubr.f32.mxu0 %v7322
    %7393 = vmatmul.mubr.f32.gmra.mrb[0].mxu0 %v7314
    %v7394 = vpop.f32.mrb[0].mxu0
    %v7395 = vadd.f32 0.0, %v7394
    %v7396 = vpop.f32.mrb[0].mxu0
    %7397 = vdwg.mxu0
    %7398 = vmatprep.subr.mxu0 0.0
    %7399 = vmatpush1.msra.mxu0 %v7274
    %7400 = vmatprep.subr.mxu0 0.0
    %7401 = vmatpush1.msra.mxu0 %v7275
    %7402 = vmatprep.subr.mxu0 0.0
    %7403 = vmatpush1.msra.mxu0 %v7276
    %7404 = vmatprep.subr.mxu0 0.0
    %7405 = vmatpush1.msra.mxu0 %v7277
    %7406 = vmatprep.subr.mxu0 0.0
    %7407 = vmatpush1.msra.mxu0 %v7278
    %7408 = vmatprep.subr.mxu0 0.0
    %7409 = vmatpush1.msra.mxu0 %v7279
    %7410 = vmatprep.subr.mxu0 0.0
    %7411 = vmatpush1.msra.mxu0 %v7280
    %7412 = vmatprep.subr.mxu0 0.0
    %7413 = vmatpush1.msra.mxu0 %v7281
    %7414 = vmatprep.subr.mxu0 0.0
    %7415 = vmatpush1.msra.mxu0 %v7282
    %7416 = vmatprep.subr.mxu0 0.0
    %7417 = vmatpush1.msra.mxu0 %v7283
    %7418 = vmatprep.subr.mxu0 0.0
    %7419 = vmatpush1.msra.mxu0 %v7284
    %7420 = vmatprep.subr.mxu0 0.0
    %7421 = vmatpush1.msra.mxu0 %v7285
    %7422 = vmatprep.subr.mxu0 0.0
    %7423 = vmatpush1.msra.mxu0 %v7286
    %7424 = vmatprep.subr.mxu0 0.0
    %7425 = vmatpush1.msra.mxu0 %v7287
    %7426 = vmatprep.subr.mxu0 0.0
    %7427 = vmatpush1.msra.mxu0 %v7288
    %7428 = vmatprep.subr.mxu0 0.0
    %7429 = vmatpush1.msra.mxu0 %v7289
    %7430 = vmatprep.subr.mxu0 0.0
    %7431 = vmatpush1.msra.mxu0 %v7290
    %7432 = vmatprep.subr.mxu0 0.0
    %7433 = vmatpush1.msra.mxu0 %v7291
    %7434 = vmatprep.subr.mxu0 0.0
    %7435 = vmatpush1.msra.mxu0 %v7292
    %7436 = vmatprep.subr.mxu0 0.0
    %7437 = vmatpush1.msra.mxu0 %v7293
    %7438 = vmatprep.subr.mxu0 0.0
    %7439 = vmatpush1.msra.mxu0 %v7294
    %7440 = vmatprep.subr.mxu0 0.0
    %7441 = vmatpush1.msra.mxu0 %v7295
    %7442 = vmatprep.subr.mxu0 0.0
    %7443 = vmatpush1.msra.mxu0 %v7296
    %7444 = vmatprep.subr.mxu0 0.0
    %7445 = vmatpush1.msra.mxu0 %v7297
    %7446 = vmatprep.subr.mxu0 0.0
    %7447 = vmatpush1.msra.mxu0 %v7298
    %7448 = vmatprep.subr.mxu0 0.0
    %7449 = vmatpush1.msra.mxu0 %v7299
    %7450 = vmatprep.subr.mxu0 0.0
    %7451 = vmatpush1.msra.mxu0 %v7300
    %7452 = vmatprep.subr.mxu0 0.0
    %7453 = vmatpush1.msra.mxu0 %v7301
    %7454 = vmatprep.subr.mxu0 0.0
    %7455 = vmatpush1.msra.mxu0 %v7302
    %7456 = vmatprep.subr.mxu0 0.0
    %7457 = vmatpush1.msra.mxu0 %v7303
    %7458 = vmatprep.subr.mxu0 0.0
    %7459 = vmatpush1.msra.mxu0 %v7304
    %7460 = vmatprep.subr.mxu0 0.0
    %7461 = vmatpush1.msra.mxu0 %v7305
    %7462 = vmatprep.mubr.f32.mxu0 %v7323
    %7463 = vmatmul.mubr.f32.gmra.mrb[0].mxu0 %v7321
    %v7464 = vpop.f32.mrb[0].mxu0
    %v7465 = vadd.f32 %v7395, %v7464
    %v7466 = vpop.f32.mrb[0].mxu0
    %7467 = vdwg.mxu0
    %v7468 = vld [vmem:[%s16 + $0x6] sm:$0x1]
    %v7469 = vlaneseq
    %v7470 = vshrl.u32 %v7469, 7
    %v7471 = vsub.s32 0, %v7470
    %v7472 = vrot.slane %v7468, %v7471
    %v7473 = vmul.f32 %v7465, %v7472
    %v7474 = vld [vmem:[%s17 + $0x6] sm:$0x1]
    %v7475 = vlaneseq
    %v7476 = vshrl.u32 %v7475, 7
    %v7477 = vsub.s32 0, %v7476
    %v7478 = vrot.slane %v7474, %v7477
    %v7479 = vadd.f32 %v7473, %v7478
    %v7480 = vmax.f32 %v7479, 0.0
    %s7481 = scalar_lea.vmem %s18, 768
    %v7482 = vld [vmem:[%s7481] sm:$0xff]
    %v7483 = vld [vmem:[%s7481 + $0x8] sm:$0xff]
    %v7484 = vld [vmem:[%s7481 + $0x10] sm:$0xff]
    %v7485 = vld [vmem:[%s7481 + $0x18] sm:$0xff]
    %v7486 = vld [vmem:[%s7481 + $0x20] sm:$0xff]
    %v7487 = vld [vmem:[%s7481 + $0x28] sm:$0xff]
    %v7488 = vld [vmem:[%s7481 + $0x30] sm:$0xff]
    %v7489 = vld [vmem:[%s7481 + $0x38] sm:$0xff]
    %v7490 = vld [vmem:[%s7481 + $0x40] sm:$0xff]
    %v7491 = vld [vmem:[%s7481 + $0x48] sm:$0xff]
    %v7492 = vld [vmem:[%s7481 + $0x50] sm:$0xff]
    %v7493 = vld [vmem:[%s7481 + $0x58] sm:$0xff]
    %v7494 = vld [vmem:[%s7481 + $0x60] sm:$0xff]
    %v7495 = vld [vmem:[%s7481 + $0x68] sm:$0xff]
    %v7496 = vld [vmem:[%s7481 + $0x70] sm:$0xff]
    %v7497 = vld [vmem:[%s7481 + $0x78] sm:$0xff]
    %7498 = vmatprep.subr.mxu0 0.0
    %7499 = vmatpush1.msra.mxu0 %v7482
    %7500 = vmatprep.subr.mxu0 0.0
    %7501 = vmatpush1.msra.mxu0 %v7483
    %7502 = vmatprep.subr.mxu0 0.0
    %7503 = vmatpush1.msra.mxu0 %v7484
    %7504 = vmatprep.subr.mxu0 0.0
    %7505 = vmatpush1.msra.mxu0 %v7485
    %7506 = vmatprep.subr.mxu0 0.0
    %7507 = vmatpush1.msra.mxu0 %v7486
    %7508 = vmatprep.subr.mxu0 0.0
    %7509 = vmatpush1.msra.mxu0 %v7487
    %7510 = vmatprep.subr.mxu0 0.0
    %7511 = vmatpush1.msra.mxu0 %v7488
    %7512 = vmatprep.subr.mxu0 0.0
    %7513 = vmatpush1.msra.mxu0 %v7489
    %7514 = vmatprep.subr.mxu0 0.0
    %7515 = vmatpush1.msra.mxu0 %v7490
    %7516 = vmatprep.subr.mxu0 0.0
    %7517 = vmatpush1.msra.mxu0 %v7491
    %7518 = vmatprep.subr.mxu0 0.0
    %7519 = vmatpush1.msra.mxu0 %v7492
    %7520 = vmatprep.subr.mxu0 0.0
    %7521 = vmatpush1.msra.mxu0 %v7493
    %7522 = vmatprep.subr.mxu0 0.0
    %7523 = vmatpush1.msra.mxu0 %v7494
    %7524 = vmatprep.subr.mxu0 0.0
    %7525 = vmatpush1.msra.mxu0 %v7495
    %7526 = vmatprep.subr.mxu0 0.0
    %7527 = vmatpush1.msra.mxu0 %v7496
    %7528 = vmatprep.subr.mxu0 0.0
    %7529 = vmatpush1.msra.mxu0 %v7497
    %7530 = vmatprep.subr.mxu0 0.0
    %7531 = vmatpush1.msra.mxu0 0.0
    %7532 = vmatprep.subr.mxu0 0.0
    %7533 = vmatpush1.msra.mxu0 0.0
    %7534 = vmatprep.subr.mxu0 0.0
    %7535 = vmatpush1.msra.mxu0 0.0
    %7536 = vmatprep.subr.mxu0 0.0
    %7537 = vmatpush1.msra.mxu0 0.0
    %7538 = vmatprep.subr.mxu0 0.0
    %7539 = vmatpush1.msra.mxu0 0.0
    %7540 = vmatprep.subr.mxu0 0.0
    %7541 = vmatpush1.msra.mxu0 0.0
    %7542 = vmatprep.subr.mxu0 0.0
    %7543 = vmatpush1.msra.mxu0 0.0
    %7544 = vmatprep.subr.mxu0 0.0
    %7545 = vmatpush1.msra.mxu0 0.0
    %7546 = vmatprep.subr.mxu0 0.0
    %7547 = vmatpush1.msra.mxu0 0.0
    %7548 = vmatprep.subr.mxu0 0.0
    %7549 = vmatpush1.msra.mxu0 0.0
    %7550 = vmatprep.subr.mxu0 0.0
    %7551 = vmatpush1.msra.mxu0 0.0
    %7552 = vmatprep.subr.mxu0 0.0
    %7553 = vmatpush1.msra.mxu0 0.0
    %7554 = vmatprep.subr.mxu0 0.0
    %7555 = vmatpush1.msra.mxu0 0.0
    %7556 = vmatprep.subr.mxu0 0.0
    %7557 = vmatpush1.msra.mxu0 0.0
    %7558 = vmatprep.subr.mxu0 0.0
    %7559 = vmatpush1.msra.mxu0 0.0
    %7560 = vmatprep.subr.mxu0 0.0
    %7561 = vmatpush1.msra.mxu0 0.0
    %7562 = vmatprep.mubr.f32.mxu0 0.0
    %7563 = vmatmul.mubr.f32.gmra.mrb[0].mxu0 %v7480
    %v7564 = vpop.f32.mrb[0].mxu0
    %v7565 = vadd.f32 0.0, %v7564
    %v7566 = vpop.f32.mrb[0].mxu0
    %7567 = vdwg.mxu0
    %v7570 = vunpack.c.l.s4 1983009808
    %v7571 = vunpack.c.0.s8 %v7570
    %v7572 = vlaneseq
    %v7573 = vshrl.u32 %v7572, 7
    %v7574 = vsub.s32 %v7571, %v7573
    %v7575 = vrot.slane %v7565, %v7574
    %7576 = vrot.lane.b32.xlu0 %v7575, 64
    %v7577 = vpop.permute.xlu0 %7576
    %7579 = vst.msk [vmem:[#allocation3 + $0x4] sm:$0x3] %vm5920, %v7577
    %v7580 = vld [vmem:[#allocation3] sm:$0xff]
    %s7581 = scalar_lea.vmem %s13, 7
    %v7582 = vld [vmem:[%s7581] ss:$8 sm:$0xf]
    %v7584 = vlaneseq
    %v7585 = vshrl.u32 %v7584, 7
    %v7586 = vsub.s32 0, %v7585
    %v7587 = vrot.slane %v7582, %v7586
    %v7588 = vlaneseq
    %v7589 = vshrl.u32 %v7588, 7
    %v7590 = vsub.s32 1, %v7589
    %v7591 = vrot.slane %v7582, %v7590
    %v7592 = vlaneseq
    %v7593 = vshrl.u32 %v7592, 7
    %v7594 = vsub.s32 2, %v7593
    %v7595 = vrot.slane %v7582, %v7594
    %v7596 = vlaneseq
    %v7597 = vshrl.u32 %v7596, 7
    %v7598 = vsub.s32 3, %v7597
    %v7599 = vrot.slane %v7582, %v7598
    %v7600 = vcombine.low %v7587, %v7591
    %v7601 = vcombine.low %v7595, %v7599
    %v7603 = vunpack.c.l.s4 1983009808
    %v7604 = vunpack.c.0.s8 %v7603
    %v7605 = vlaneseq
    %v7606 = vshrl.u32 %v7605, 7
    %v7607 = vsub.s32 %v7604, %v7606
    %v7608 = vrot.slane %v7600, %v7607
    %v7610 = vunpack.c.l.s4 1983009808
    %v7611 = vunpack.c.0.s8 %v7610
    %v7612 = vlaneseq
    %v7613 = vshrl.u32 %v7612, 7
    %v7614 = vsub.s32 %v7611, %v7613
    %v7615 = vrot.slane %v7601, %v7614
    %v7616 = vcombine.low %v7608, %v7615
    %v7618 = vmul.f32 %v7580, %v7616
    %s7619 = scalar_lea.vmem %s14, 7
    %v7620 = vld [vmem:[%s7619] ss:$8 sm:$0xf]
    %v7622 = vlaneseq
    %v7623 = vshrl.u32 %v7622, 7
    %v7624 = vsub.s32 0, %v7623
    %v7625 = vrot.slane %v7620, %v7624
    %v7626 = vlaneseq
    %v7627 = vshrl.u32 %v7626, 7
    %v7628 = vsub.s32 1, %v7627
    %v7629 = vrot.slane %v7620, %v7628
    %v7630 = vlaneseq
    %v7631 = vshrl.u32 %v7630, 7
    %v7632 = vsub.s32 2, %v7631
    %v7633 = vrot.slane %v7620, %v7632
    %v7634 = vlaneseq
    %v7635 = vshrl.u32 %v7634, 7
    %v7636 = vsub.s32 3, %v7635
    %v7637 = vrot.slane %v7620, %v7636
    %v7638 = vcombine.low %v7625, %v7629
    %v7639 = vcombine.low %v7633, %v7637
    %v7641 = vunpack.c.l.s4 1983009808
    %v7642 = vunpack.c.0.s8 %v7641
    %v7643 = vlaneseq
    %v7644 = vshrl.u32 %v7643, 7
    %v7645 = vsub.s32 %v7642, %v7644
    %v7646 = vrot.slane %v7638, %v7645
    %v7648 = vunpack.c.l.s4 1983009808
    %v7649 = vunpack.c.0.s8 %v7648
    %v7650 = vlaneseq
    %v7651 = vshrl.u32 %v7650, 7
    %v7652 = vsub.s32 %v7649, %v7651
    %v7653 = vrot.slane %v7639, %v7652
    %v7654 = vcombine.low %v7646, %v7653
    %v7656 = vadd.f32 %v7618, %v7654
    %v7657 = vmax.f32 %v7656, 0.0
    %s7658 = scalar_lea.vmem %s15, 3584
    %v7659 = vld [vmem:[%s7658] sm:$0xff]
    %v7660 = vld [vmem:[%s7658 + $0x8] sm:$0xff]
    %v7661 = vld [vmem:[%s7658 + $0x10] sm:$0xff]
    %v7662 = vld [vmem:[%s7658 + $0x18] sm:$0xff]
    %v7663 = vld [vmem:[%s7658 + $0x20] sm:$0xff]
    %v7664 = vld [vmem:[%s7658 + $0x28] sm:$0xff]
    %v7665 = vld [vmem:[%s7658 + $0x30] sm:$0xff]
    %v7666 = vld [vmem:[%s7658 + $0x38] sm:$0xff]
    %v7667 = vld [vmem:[%s7658 + $0x40] sm:$0xff]
    %v7668 = vld [vmem:[%s7658 + $0x48] sm:$0xff]
    %v7669 = vld [vmem:[%s7658 + $0x50] sm:$0xff]
    %v7670 = vld [vmem:[%s7658 + $0x58] sm:$0xff]
    %v7671 = vld [vmem:[%s7658 + $0x60] sm:$0xff]
    %v7672 = vld [vmem:[%s7658 + $0x68] sm:$0xff]
    %v7673 = vld [vmem:[%s7658 + $0x70] sm:$0xff]
    %v7674 = vld [vmem:[%s7658 + $0x78] sm:$0xff]
    %v7675 = vld [vmem:[%s7658 + $0x80] sm:$0xff]
    %v7676 = vld [vmem:[%s7658 + $0x88] sm:$0xff]
    %v7677 = vld [vmem:[%s7658 + $0x90] sm:$0xff]
    %v7678 = vld [vmem:[%s7658 + $0x98] sm:$0xff]
    %v7679 = vld [vmem:[%s7658 + $0xa0] sm:$0xff]
    %v7680 = vld [vmem:[%s7658 + $0xa8] sm:$0xff]
    %v7681 = vld [vmem:[%s7658 + $0xb0] sm:$0xff]
    %v7682 = vld [vmem:[%s7658 + $0xb8] sm:$0xff]
    %v7683 = vld [vmem:[%s7658 + $0xc0] sm:$0xff]
    %v7684 = vld [vmem:[%s7658 + $0xc8] sm:$0xff]
    %v7685 = vld [vmem:[%s7658 + $0xd0] sm:$0xff]
    %v7686 = vld [vmem:[%s7658 + $0xd8] sm:$0xff]
    %v7687 = vld [vmem:[%s7658 + $0xe0] sm:$0xff]
    %v7688 = vld [vmem:[%s7658 + $0xe8] sm:$0xff]
    %v7689 = vld [vmem:[%s7658 + $0xf0] sm:$0xff]
    %v7690 = vld [vmem:[%s7658 + $0xf8] sm:$0xff]
    %v7691 = vld [vmem:[%s7658 + $0x100] sm:$0xff]
    %v7692 = vld [vmem:[%s7658 + $0x108] sm:$0xff]
    %v7693 = vld [vmem:[%s7658 + $0x110] sm:$0xff]
    %v7694 = vld [vmem:[%s7658 + $0x118] sm:$0xff]
    %v7695 = vld [vmem:[%s7658 + $0x120] sm:$0xff]
    %v7696 = vld [vmem:[%s7658 + $0x128] sm:$0xff]
    %v7697 = vld [vmem:[%s7658 + $0x130] sm:$0xff]
    %v7698 = vld [vmem:[%s7658 + $0x138] sm:$0xff]
    %v7699 = vld [vmem:[%s7658 + $0x140] sm:$0xff]
    %v7700 = vld [vmem:[%s7658 + $0x148] sm:$0xff]
    %v7701 = vld [vmem:[%s7658 + $0x150] sm:$0xff]
    %v7702 = vld [vmem:[%s7658 + $0x158] sm:$0xff]
    %v7703 = vld [vmem:[%s7658 + $0x160] sm:$0xff]
    %v7704 = vld [vmem:[%s7658 + $0x168] sm:$0xff]
    %v7705 = vld [vmem:[%s7658 + $0x170] sm:$0xff]
    %v7706 = vld [vmem:[%s7658 + $0x178] sm:$0xff]
    %v7707 = vld [vmem:[%s7658 + $0x180] sm:$0xff]
    %v7708 = vld [vmem:[%s7658 + $0x188] sm:$0xff]
    %v7709 = vld [vmem:[%s7658 + $0x190] sm:$0xff]
    %v7710 = vld [vmem:[%s7658 + $0x198] sm:$0xff]
    %v7711 = vld [vmem:[%s7658 + $0x1a0] sm:$0xff]
    %v7712 = vld [vmem:[%s7658 + $0x1a8] sm:$0xff]
    %v7713 = vld [vmem:[%s7658 + $0x1b0] sm:$0xff]
    %v7714 = vld [vmem:[%s7658 + $0x1b8] sm:$0xff]
    %v7715 = vld [vmem:[%s7658 + $0x1c0] sm:$0xff]
    %v7716 = vld [vmem:[%s7658 + $0x1c8] sm:$0xff]
    %v7717 = vld [vmem:[%s7658 + $0x1d0] sm:$0xff]
    %v7718 = vld [vmem:[%s7658 + $0x1d8] sm:$0xff]
    %v7719 = vld [vmem:[%s7658 + $0x1e0] sm:$0xff]
    %v7720 = vld [vmem:[%s7658 + $0x1e8] sm:$0xff]
    %v7721 = vld [vmem:[%s7658 + $0x1f0] sm:$0xff]
    %v7722 = vld [vmem:[%s7658 + $0x1f8] sm:$0xff]
    %v7724 = vcombine.high %v7657, %v7657
    %v7726 = vunpack.c.l.s4 1983009808
    %v7727 = vunpack.c.0.s8 %v7726
    %v7728 = vlaneseq
    %v7729 = vshrl.u32 %v7728, 7
    %v7730 = vsub.s32 %v7727, %v7729
    %v7731 = vrot.slane %v7657, %v7730
    %v7733 = vunpack.c.l.s4 1983009808
    %v7734 = vunpack.c.0.s8 %v7733
    %v7735 = vlaneseq
    %v7736 = vshrl.u32 %v7735, 7
    %v7737 = vsub.s32 %v7734, %v7736
    %v7738 = vrot.slane %v7724, %v7737
    %v7739 = vcombine.high %v7731, %v7731
    %v7740 = vcombine.high %v7738, %v7738
    %7745 = vmatprep.subr.mxu0 0.0
    %7746 = vmatpush1.msra.mxu0 %v7659
    %7747 = vmatprep.subr.mxu0 0.0
    %7748 = vmatpush1.msra.mxu0 %v7660
    %7749 = vmatprep.subr.mxu0 0.0
    %7750 = vmatpush1.msra.mxu0 %v7661
    %7751 = vmatprep.subr.mxu0 0.0
    %7752 = vmatpush1.msra.mxu0 %v7662
    %7753 = vmatprep.subr.mxu0 0.0
    %7754 = vmatpush1.msra.mxu0 %v7663
    %7755 = vmatprep.subr.mxu0 0.0
    %7756 = vmatpush1.msra.mxu0 %v7664
    %7757 = vmatprep.subr.mxu0 0.0
    %7758 = vmatpush1.msra.mxu0 %v7665
    %7759 = vmatprep.subr.mxu0 0.0
    %7760 = vmatpush1.msra.mxu0 %v7666
    %7761 = vmatprep.subr.mxu0 0.0
    %7762 = vmatpush1.msra.mxu0 %v7667
    %7763 = vmatprep.subr.mxu0 0.0
    %7764 = vmatpush1.msra.mxu0 %v7668
    %7765 = vmatprep.subr.mxu0 0.0
    %7766 = vmatpush1.msra.mxu0 %v7669
    %7767 = vmatprep.subr.mxu0 0.0
    %7768 = vmatpush1.msra.mxu0 %v7670
    %7769 = vmatprep.subr.mxu0 0.0
    %7770 = vmatpush1.msra.mxu0 %v7671
    %7771 = vmatprep.subr.mxu0 0.0
    %7772 = vmatpush1.msra.mxu0 %v7672
    %7773 = vmatprep.subr.mxu0 0.0
    %7774 = vmatpush1.msra.mxu0 %v7673
    %7775 = vmatprep.subr.mxu0 0.0
    %7776 = vmatpush1.msra.mxu0 %v7674
    %7777 = vmatprep.subr.mxu0 0.0
    %7778 = vmatpush1.msra.mxu0 %v7675
    %7779 = vmatprep.subr.mxu0 0.0
    %7780 = vmatpush1.msra.mxu0 %v7676
    %7781 = vmatprep.subr.mxu0 0.0
    %7782 = vmatpush1.msra.mxu0 %v7677
    %7783 = vmatprep.subr.mxu0 0.0
    %7784 = vmatpush1.msra.mxu0 %v7678
    %7785 = vmatprep.subr.mxu0 0.0
    %7786 = vmatpush1.msra.mxu0 %v7679
    %7787 = vmatprep.subr.mxu0 0.0
    %7788 = vmatpush1.msra.mxu0 %v7680
    %7789 = vmatprep.subr.mxu0 0.0
    %7790 = vmatpush1.msra.mxu0 %v7681
    %7791 = vmatprep.subr.mxu0 0.0
    %7792 = vmatpush1.msra.mxu0 %v7682
    %7793 = vmatprep.subr.mxu0 0.0
    %7794 = vmatpush1.msra.mxu0 %v7683
    %7795 = vmatprep.subr.mxu0 0.0
    %7796 = vmatpush1.msra.mxu0 %v7684
    %7797 = vmatprep.subr.mxu0 0.0
    %7798 = vmatpush1.msra.mxu0 %v7685
    %7799 = vmatprep.subr.mxu0 0.0
    %7800 = vmatpush1.msra.mxu0 %v7686
    %7801 = vmatprep.subr.mxu0 0.0
    %7802 = vmatpush1.msra.mxu0 %v7687
    %7803 = vmatprep.subr.mxu0 0.0
    %7804 = vmatpush1.msra.mxu0 %v7688
    %7805 = vmatprep.subr.mxu0 0.0
    %7806 = vmatpush1.msra.mxu0 %v7689
    %7807 = vmatprep.subr.mxu0 0.0
    %7808 = vmatpush1.msra.mxu0 %v7690
    %7809 = vmatprep.mubr.f32.mxu0 %v7739
    %7810 = vmatmul.mubr.f32.gmra.mrb[0].mxu0 %v7731
    %v7811 = vpop.f32.mrb[0].mxu0
    %v7812 = vadd.f32 0.0, %v7811
    %v7813 = vpop.f32.mrb[0].mxu0
    %7814 = vdwg.mxu0
    %7815 = vmatprep.subr.mxu0 0.0
    %7816 = vmatpush1.msra.mxu0 %v7691
    %7817 = vmatprep.subr.mxu0 0.0
    %7818 = vmatpush1.msra.mxu0 %v7692
    %7819 = vmatprep.subr.mxu0 0.0
    %7820 = vmatpush1.msra.mxu0 %v7693
    %7821 = vmatprep.subr.mxu0 0.0
    %7822 = vmatpush1.msra.mxu0 %v7694
    %7823 = vmatprep.subr.mxu0 0.0
    %7824 = vmatpush1.msra.mxu0 %v7695
    %7825 = vmatprep.subr.mxu0 0.0
    %7826 = vmatpush1.msra.mxu0 %v7696
    %7827 = vmatprep.subr.mxu0 0.0
    %7828 = vmatpush1.msra.mxu0 %v7697
    %7829 = vmatprep.subr.mxu0 0.0
    %7830 = vmatpush1.msra.mxu0 %v7698
    %7831 = vmatprep.subr.mxu0 0.0
    %7832 = vmatpush1.msra.mxu0 %v7699
    %7833 = vmatprep.subr.mxu0 0.0
    %7834 = vmatpush1.msra.mxu0 %v7700
    %7835 = vmatprep.subr.mxu0 0.0
    %7836 = vmatpush1.msra.mxu0 %v7701
    %7837 = vmatprep.subr.mxu0 0.0
    %7838 = vmatpush1.msra.mxu0 %v7702
    %7839 = vmatprep.subr.mxu0 0.0
    %7840 = vmatpush1.msra.mxu0 %v7703
    %7841 = vmatprep.subr.mxu0 0.0
    %7842 = vmatpush1.msra.mxu0 %v7704
    %7843 = vmatprep.subr.mxu0 0.0
    %7844 = vmatpush1.msra.mxu0 %v7705
    %7845 = vmatprep.subr.mxu0 0.0
    %7846 = vmatpush1.msra.mxu0 %v7706
    %7847 = vmatprep.subr.mxu0 0.0
    %7848 = vmatpush1.msra.mxu0 %v7707
    %7849 = vmatprep.subr.mxu0 0.0
    %7850 = vmatpush1.msra.mxu0 %v7708
    %7851 = vmatprep.subr.mxu0 0.0
    %7852 = vmatpush1.msra.mxu0 %v7709
    %7853 = vmatprep.subr.mxu0 0.0
    %7854 = vmatpush1.msra.mxu0 %v7710
    %7855 = vmatprep.subr.mxu0 0.0
    %7856 = vmatpush1.msra.mxu0 %v7711
    %7857 = vmatprep.subr.mxu0 0.0
    %7858 = vmatpush1.msra.mxu0 %v7712
    %7859 = vmatprep.subr.mxu0 0.0
    %7860 = vmatpush1.msra.mxu0 %v7713
    %7861 = vmatprep.subr.mxu0 0.0
    %7862 = vmatpush1.msra.mxu0 %v7714
    %7863 = vmatprep.subr.mxu0 0.0
    %7864 = vmatpush1.msra.mxu0 %v7715
    %7865 = vmatprep.subr.mxu0 0.0
    %7866 = vmatpush1.msra.mxu0 %v7716
    %7867 = vmatprep.subr.mxu0 0.0
    %7868 = vmatpush1.msra.mxu0 %v7717
    %7869 = vmatprep.subr.mxu0 0.0
    %7870 = vmatpush1.msra.mxu0 %v7718
    %7871 = vmatprep.subr.mxu0 0.0
    %7872 = vmatpush1.msra.mxu0 %v7719
    %7873 = vmatprep.subr.mxu0 0.0
    %7874 = vmatpush1.msra.mxu0 %v7720
    %7875 = vmatprep.subr.mxu0 0.0
    %7876 = vmatpush1.msra.mxu0 %v7721
    %7877 = vmatprep.subr.mxu0 0.0
    %7878 = vmatpush1.msra.mxu0 %v7722
    %7879 = vmatprep.mubr.f32.mxu0 %v7740
    %7880 = vmatmul.mubr.f32.gmra.mrb[0].mxu0 %v7738
    %v7881 = vpop.f32.mrb[0].mxu0
    %v7882 = vadd.f32 %v7812, %v7881
    %v7883 = vpop.f32.mrb[0].mxu0
    %7884 = vdwg.mxu0
    %v7885 = vld [vmem:[%s16 + $0x7] sm:$0x1]
    %v7886 = vlaneseq
    %v7887 = vshrl.u32 %v7886, 7
    %v7888 = vsub.s32 0, %v7887
    %v7889 = vrot.slane %v7885, %v7888
    %v7890 = vmul.f32 %v7882, %v7889
    %v7891 = vld [vmem:[%s17 + $0x7] sm:$0x1]
    %v7892 = vlaneseq
    %v7893 = vshrl.u32 %v7892, 7
    %v7894 = vsub.s32 0, %v7893
    %v7895 = vrot.slane %v7891, %v7894
    %v7896 = vadd.f32 %v7890, %v7895
    %v7897 = vmax.f32 %v7896, 0.0
    %s7898 = scalar_lea.vmem %s18, 896
    %v7899 = vld [vmem:[%s7898] sm:$0xff]
    %v7900 = vld [vmem:[%s7898 + $0x8] sm:$0xff]
    %v7901 = vld [vmem:[%s7898 + $0x10] sm:$0xff]
    %v7902 = vld [vmem:[%s7898 + $0x18] sm:$0xff]
    %v7903 = vld [vmem:[%s7898 + $0x20] sm:$0xff]
    %v7904 = vld [vmem:[%s7898 + $0x28] sm:$0xff]
    %v7905 = vld [vmem:[%s7898 + $0x30] sm:$0xff]
    %v7906 = vld [vmem:[%s7898 + $0x38] sm:$0xff]
    %v7907 = vld [vmem:[%s7898 + $0x40] sm:$0xff]
    %v7908 = vld [vmem:[%s7898 + $0x48] sm:$0xff]
    %v7909 = vld [vmem:[%s7898 + $0x50] sm:$0xff]
    %v7910 = vld [vmem:[%s7898 + $0x58] sm:$0xff]
    %v7911 = vld [vmem:[%s7898 + $0x60] sm:$0xff]
    %v7912 = vld [vmem:[%s7898 + $0x68] sm:$0xff]
    %v7913 = vld [vmem:[%s7898 + $0x70] sm:$0xff]
    %v7914 = vld [vmem:[%s7898 + $0x78] sm:$0xff]
    %7915 = vmatprep.subr.mxu0 0.0
    %7916 = vmatpush1.msra.mxu0 %v7899
    %7917 = vmatprep.subr.mxu0 0.0
    %7918 = vmatpush1.msra.mxu0 %v7900
    %7919 = vmatprep.subr.mxu0 0.0
    %7920 = vmatpush1.msra.mxu0 %v7901
    %7921 = vmatprep.subr.mxu0 0.0
    %7922 = vmatpush1.msra.mxu0 %v7902
    %7923 = vmatprep.subr.mxu0 0.0
    %7924 = vmatpush1.msra.mxu0 %v7903
    %7925 = vmatprep.subr.mxu0 0.0
    %7926 = vmatpush1.msra.mxu0 %v7904
    %7927 = vmatprep.subr.mxu0 0.0
    %7928 = vmatpush1.msra.mxu0 %v7905
    %7929 = vmatprep.subr.mxu0 0.0
    %7930 = vmatpush1.msra.mxu0 %v7906
    %7931 = vmatprep.subr.mxu0 0.0
    %7932 = vmatpush1.msra.mxu0 %v7907
    %7933 = vmatprep.subr.mxu0 0.0
    %7934 = vmatpush1.msra.mxu0 %v7908
    %7935 = vmatprep.subr.mxu0 0.0
    %7936 = vmatpush1.msra.mxu0 %v7909
    %7937 = vmatprep.subr.mxu0 0.0
    %7938 = vmatpush1.msra.mxu0 %v7910
    %7939 = vmatprep.subr.mxu0 0.0
    %7940 = vmatpush1.msra.mxu0 %v7911
    %7941 = vmatprep.subr.mxu0 0.0
    %7942 = vmatpush1.msra.mxu0 %v7912
    %7943 = vmatprep.subr.mxu0 0.0
    %7944 = vmatpush1.msra.mxu0 %v7913
    %7945 = vmatprep.subr.mxu0 0.0
    %7946 = vmatpush1.msra.mxu0 %v7914
    %7947 = vmatprep.subr.mxu0 0.0
    %7948 = vmatpush1.msra.mxu0 0.0
    %7949 = vmatprep.subr.mxu0 0.0
    %7950 = vmatpush1.msra.mxu0 0.0
    %7951 = vmatprep.subr.mxu0 0.0
    %7952 = vmatpush1.msra.mxu0 0.0
    %7953 = vmatprep.subr.mxu0 0.0
    %7954 = vmatpush1.msra.mxu0 0.0
    %7955 = vmatprep.subr.mxu0 0.0
    %7956 = vmatpush1.msra.mxu0 0.0
    %7957 = vmatprep.subr.mxu0 0.0
    %7958 = vmatpush1.msra.mxu0 0.0
    %7959 = vmatprep.subr.mxu0 0.0
    %7960 = vmatpush1.msra.mxu0 0.0
    %7961 = vmatprep.subr.mxu0 0.0
    %7962 = vmatpush1.msra.mxu0 0.0
    %7963 = vmatprep.subr.mxu0 0.0
    %7964 = vmatpush1.msra.mxu0 0.0
    %7965 = vmatprep.subr.mxu0 0.0
    %7966 = vmatpush1.msra.mxu0 0.0
    %7967 = vmatprep.subr.mxu0 0.0
    %7968 = vmatpush1.msra.mxu0 0.0
    %7969 = vmatprep.subr.mxu0 0.0
    %7970 = vmatpush1.msra.mxu0 0.0
    %7971 = vmatprep.subr.mxu0 0.0
    %7972 = vmatpush1.msra.mxu0 0.0
    %7973 = vmatprep.subr.mxu0 0.0
    %7974 = vmatpush1.msra.mxu0 0.0
    %7975 = vmatprep.subr.mxu0 0.0
    %7976 = vmatpush1.msra.mxu0 0.0
    %7977 = vmatprep.subr.mxu0 0.0
    %7978 = vmatpush1.msra.mxu0 0.0
    %7979 = vmatprep.mubr.f32.mxu0 0.0
    %7980 = vmatmul.mubr.f32.gmra.mrb[0].mxu0 %v7897
    %v7981 = vpop.f32.mrb[0].mxu0
    %v7982 = vadd.f32 0.0, %v7981
    %v7983 = vpop.f32.mrb[0].mxu0
    %7984 = vdwg.mxu0
    %v7987 = vunpack.c.l.s4 1983009808
    %v7988 = vunpack.c.0.s8 %v7987
    %v7989 = vlaneseq
    %v7990 = vshrl.u32 %v7989, 7
    %v7991 = vsub.s32 %v7988, %v7990
    %v7992 = vrot.slane %v7982, %v7991
    %7993 = vrot.lane.b32.xlu0 %v7992, 96
    %v7994 = vpop.permute.xlu0 %7993
    %7996 = vst.msk [vmem:[#allocation3 + $0x4] sm:$0x3] %vm6338, %v7994
    %v7997 = vld [vmem:[#allocation3] sm:$0xff]
    %s7998 = scalar_lea.vmem %s13, 32
    %v7999 = vld [vmem:[%s7998] ss:$8 sm:$0xf]
    %v8001 = vlaneseq
    %v8002 = vshrl.u32 %v8001, 7
    %v8003 = vsub.s32 0, %v8002
    %v8004 = vrot.slane %v7999, %v8003
    %v8005 = vlaneseq
    %v8006 = vshrl.u32 %v8005, 7
    %v8007 = vsub.s32 1, %v8006
    %v8008 = vrot.slane %v7999, %v8007
    %v8009 = vlaneseq
    %v8010 = vshrl.u32 %v8009, 7
    %v8011 = vsub.s32 2, %v8010
    %v8012 = vrot.slane %v7999, %v8011
    %v8013 = vlaneseq
    %v8014 = vshrl.u32 %v8013, 7
    %v8015 = vsub.s32 3, %v8014
    %v8016 = vrot.slane %v7999, %v8015
    %v8017 = vcombine.low %v8004, %v8008
    %v8018 = vcombine.low %v8012, %v8016
    %v8020 = vunpack.c.l.s4 1983009808
    %v8021 = vunpack.c.0.s8 %v8020
    %v8022 = vlaneseq
    %v8023 = vshrl.u32 %v8022, 7
    %v8024 = vsub.s32 %v8021, %v8023
    %v8025 = vrot.slane %v8017, %v8024
    %v8027 = vunpack.c.l.s4 1983009808
    %v8028 = vunpack.c.0.s8 %v8027
    %v8029 = vlaneseq
    %v8030 = vshrl.u32 %v8029, 7
    %v8031 = vsub.s32 %v8028, %v8030
    %v8032 = vrot.slane %v8018, %v8031
    %v8033 = vcombine.low %v8025, %v8032
    %v8035 = vmul.f32 %v7997, %v8033
    %s8036 = scalar_lea.vmem %s14, 32
    %v8037 = vld [vmem:[%s8036] ss:$8 sm:$0xf]
    %v8039 = vlaneseq
    %v8040 = vshrl.u32 %v8039, 7
    %v8041 = vsub.s32 0, %v8040
    %v8042 = vrot.slane %v8037, %v8041
    %v8043 = vlaneseq
    %v8044 = vshrl.u32 %v8043, 7
    %v8045 = vsub.s32 1, %v8044
    %v8046 = vrot.slane %v8037, %v8045
    %v8047 = vlaneseq
    %v8048 = vshrl.u32 %v8047, 7
    %v8049 = vsub.s32 2, %v8048
    %v8050 = vrot.slane %v8037, %v8049
    %v8051 = vlaneseq
    %v8052 = vshrl.u32 %v8051, 7
    %v8053 = vsub.s32 3, %v8052
    %v8054 = vrot.slane %v8037, %v8053
    %v8055 = vcombine.low %v8042, %v8046
    %v8056 = vcombine.low %v8050, %v8054
    %v8058 = vunpack.c.l.s4 1983009808
    %v8059 = vunpack.c.0.s8 %v8058
    %v8060 = vlaneseq
    %v8061 = vshrl.u32 %v8060, 7
    %v8062 = vsub.s32 %v8059, %v8061
    %v8063 = vrot.slane %v8055, %v8062
    %v8065 = vunpack.c.l.s4 1983009808
    %v8066 = vunpack.c.0.s8 %v8065
    %v8067 = vlaneseq
    %v8068 = vshrl.u32 %v8067, 7
    %v8069 = vsub.s32 %v8066, %v8068
    %v8070 = vrot.slane %v8056, %v8069
    %v8071 = vcombine.low %v8063, %v8070
    %v8073 = vadd.f32 %v8035, %v8071
    %v8074 = vmax.f32 %v8073, 0.0
    %s8075 = scalar_lea.vmem %s15, 4096
    %v8076 = vld [vmem:[%s8075] sm:$0xff]
    %v8077 = vld [vmem:[%s8075 + $0x8] sm:$0xff]
    %v8078 = vld [vmem:[%s8075 + $0x10] sm:$0xff]
    %v8079 = vld [vmem:[%s8075 + $0x18] sm:$0xff]
    %v8080 = vld [vmem:[%s8075 + $0x20] sm:$0xff]
    %v8081 = vld [vmem:[%s8075 + $0x28] sm:$0xff]
    %v8082 = vld [vmem:[%s8075 + $0x30] sm:$0xff]
    %v8083 = vld [vmem:[%s8075 + $0x38] sm:$0xff]
    %v8084 = vld [vmem:[%s8075 + $0x40] sm:$0xff]
    %v8085 = vld [vmem:[%s8075 + $0x48] sm:$0xff]
    %v8086 = vld [vmem:[%s8075 + $0x50] sm:$0xff]
    %v8087 = vld [vmem:[%s8075 + $0x58] sm:$0xff]
    %v8088 = vld [vmem:[%s8075 + $0x60] sm:$0xff]
    %v8089 = vld [vmem:[%s8075 + $0x68] sm:$0xff]
    %v8090 = vld [vmem:[%s8075 + $0x70] sm:$0xff]
    %v8091 = vld [vmem:[%s8075 + $0x78] sm:$0xff]
    %v8092 = vld [vmem:[%s8075 + $0x80] sm:$0xff]
    %v8093 = vld [vmem:[%s8075 + $0x88] sm:$0xff]
    %v8094 = vld [vmem:[%s8075 + $0x90] sm:$0xff]
    %v8095 = vld [vmem:[%s8075 + $0x98] sm:$0xff]
    %v8096 = vld [vmem:[%s8075 + $0xa0] sm:$0xff]
    %v8097 = vld [vmem:[%s8075 + $0xa8] sm:$0xff]
    %v8098 = vld [vmem:[%s8075 + $0xb0] sm:$0xff]
    %v8099 = vld [vmem:[%s8075 + $0xb8] sm:$0xff]
    %v8100 = vld [vmem:[%s8075 + $0xc0] sm:$0xff]
    %v8101 = vld [vmem:[%s8075 + $0xc8] sm:$0xff]
    %v8102 = vld [vmem:[%s8075 + $0xd0] sm:$0xff]
    %v8103 = vld [vmem:[%s8075 + $0xd8] sm:$0xff]
    %v8104 = vld [vmem:[%s8075 + $0xe0] sm:$0xff]
    %v8105 = vld [vmem:[%s8075 + $0xe8] sm:$0xff]
    %v8106 = vld [vmem:[%s8075 + $0xf0] sm:$0xff]
    %v8107 = vld [vmem:[%s8075 + $0xf8] sm:$0xff]
    %v8108 = vld [vmem:[%s8075 + $0x100] sm:$0xff]
    %v8109 = vld [vmem:[%s8075 + $0x108] sm:$0xff]
    %v8110 = vld [vmem:[%s8075 + $0x110] sm:$0xff]
    %v8111 = vld [vmem:[%s8075 + $0x118] sm:$0xff]
    %v8112 = vld [vmem:[%s8075 + $0x120] sm:$0xff]
    %v8113 = vld [vmem:[%s8075 + $0x128] sm:$0xff]
    %v8114 = vld [vmem:[%s8075 + $0x130] sm:$0xff]
    %v8115 = vld [vmem:[%s8075 + $0x138] sm:$0xff]
    %v8116 = vld [vmem:[%s8075 + $0x140] sm:$0xff]
    %v8117 = vld [vmem:[%s8075 + $0x148] sm:$0xff]
    %v8118 = vld [vmem:[%s8075 + $0x150] sm:$0xff]
    %v8119 = vld [vmem:[%s8075 + $0x158] sm:$0xff]
    %v8120 = vld [vmem:[%s8075 + $0x160] sm:$0xff]
    %v8121 = vld [vmem:[%s8075 + $0x168] sm:$0xff]
    %v8122 = vld [vmem:[%s8075 + $0x170] sm:$0xff]
    %v8123 = vld [vmem:[%s8075 + $0x178] sm:$0xff]
    %v8124 = vld [vmem:[%s8075 + $0x180] sm:$0xff]
    %v8125 = vld [vmem:[%s8075 + $0x188] sm:$0xff]
    %v8126 = vld [vmem:[%s8075 + $0x190] sm:$0xff]
    %v8127 = vld [vmem:[%s8075 + $0x198] sm:$0xff]
    %v8128 = vld [vmem:[%s8075 + $0x1a0] sm:$0xff]
    %v8129 = vld [vmem:[%s8075 + $0x1a8] sm:$0xff]
    %v8130 = vld [vmem:[%s8075 + $0x1b0] sm:$0xff]
    %v8131 = vld [vmem:[%s8075 + $0x1b8] sm:$0xff]
    %v8132 = vld [vmem:[%s8075 + $0x1c0] sm:$0xff]
    %v8133 = vld [vmem:[%s8075 + $0x1c8] sm:$0xff]
    %v8134 = vld [vmem:[%s8075 + $0x1d0] sm:$0xff]
    %v8135 = vld [vmem:[%s8075 + $0x1d8] sm:$0xff]
    %v8136 = vld [vmem:[%s8075 + $0x1e0] sm:$0xff]
    %v8137 = vld [vmem:[%s8075 + $0x1e8] sm:$0xff]
    %v8138 = vld [vmem:[%s8075 + $0x1f0] sm:$0xff]
    %v8139 = vld [vmem:[%s8075 + $0x1f8] sm:$0xff]
    %v8141 = vcombine.high %v8074, %v8074
    %v8143 = vunpack.c.l.s4 1983009808
    %v8144 = vunpack.c.0.s8 %v8143
    %v8145 = vlaneseq
    %v8146 = vshrl.u32 %v8145, 7
    %v8147 = vsub.s32 %v8144, %v8146
    %v8148 = vrot.slane %v8074, %v8147
    %v8150 = vunpack.c.l.s4 1983009808
    %v8151 = vunpack.c.0.s8 %v8150
    %v8152 = vlaneseq
    %v8153 = vshrl.u32 %v8152, 7
    %v8154 = vsub.s32 %v8151, %v8153
    %v8155 = vrot.slane %v8141, %v8154
    %v8156 = vcombine.high %v8148, %v8148
    %v8157 = vcombine.high %v8155, %v8155
    %8162 = vmatprep.subr.mxu0 0.0
    %8163 = vmatpush1.msra.mxu0 %v8076
    %8164 = vmatprep.subr.mxu0 0.0
    %8165 = vmatpush1.msra.mxu0 %v8077
    %8166 = vmatprep.subr.mxu0 0.0
    %8167 = vmatpush1.msra.mxu0 %v8078
    %8168 = vmatprep.subr.mxu0 0.0
    %8169 = vmatpush1.msra.mxu0 %v8079
    %8170 = vmatprep.subr.mxu0 0.0
    %8171 = vmatpush1.msra.mxu0 %v8080
    %8172 = vmatprep.subr.mxu0 0.0
    %8173 = vmatpush1.msra.mxu0 %v8081
    %8174 = vmatprep.subr.mxu0 0.0
    %8175 = vmatpush1.msra.mxu0 %v8082
    %8176 = vmatprep.subr.mxu0 0.0
    %8177 = vmatpush1.msra.mxu0 %v8083
    %8178 = vmatprep.subr.mxu0 0.0
    %8179 = vmatpush1.msra.mxu0 %v8084
    %8180 = vmatprep.subr.mxu0 0.0
    %8181 = vmatpush1.msra.mxu0 %v8085
    %8182 = vmatprep.subr.mxu0 0.0
    %8183 = vmatpush1.msra.mxu0 %v8086
    %8184 = vmatprep.subr.mxu0 0.0
    %8185 = vmatpush1.msra.mxu0 %v8087
    %8186 = vmatprep.subr.mxu0 0.0
    %8187 = vmatpush1.msra.mxu0 %v8088
    %8188 = vmatprep.subr.mxu0 0.0
    %8189 = vmatpush1.msra.mxu0 %v8089
    %8190 = vmatprep.subr.mxu0 0.0
    %8191 = vmatpush1.msra.mxu0 %v8090
    %8192 = vmatprep.subr.mxu0 0.0
    %8193 = vmatpush1.msra.mxu0 %v8091
    %8194 = vmatprep.subr.mxu0 0.0
    %8195 = vmatpush1.msra.mxu0 %v8092
    %8196 = vmatprep.subr.mxu0 0.0
    %8197 = vmatpush1.msra.mxu0 %v8093
    %8198 = vmatprep.subr.mxu0 0.0
    %8199 = vmatpush1.msra.mxu0 %v8094
    %8200 = vmatprep.subr.mxu0 0.0
    %8201 = vmatpush1.msra.mxu0 %v8095
    %8202 = vmatprep.subr.mxu0 0.0
    %8203 = vmatpush1.msra.mxu0 %v8096
    %8204 = vmatprep.subr.mxu0 0.0
    %8205 = vmatpush1.msra.mxu0 %v8097
    %8206 = vmatprep.subr.mxu0 0.0
    %8207 = vmatpush1.msra.mxu0 %v8098
    %8208 = vmatprep.subr.mxu0 0.0
    %8209 = vmatpush1.msra.mxu0 %v8099
    %8210 = vmatprep.subr.mxu0 0.0
    %8211 = vmatpush1.msra.mxu0 %v8100
    %8212 = vmatprep.subr.mxu0 0.0
    %8213 = vmatpush1.msra.mxu0 %v8101
    %8214 = vmatprep.subr.mxu0 0.0
    %8215 = vmatpush1.msra.mxu0 %v8102
    %8216 = vmatprep.subr.mxu0 0.0
    %8217 = vmatpush1.msra.mxu0 %v8103
    %8218 = vmatprep.subr.mxu0 0.0
    %8219 = vmatpush1.msra.mxu0 %v8104
    %8220 = vmatprep.subr.mxu0 0.0
    %8221 = vmatpush1.msra.mxu0 %v8105
    %8222 = vmatprep.subr.mxu0 0.0
    %8223 = vmatpush1.msra.mxu0 %v8106
    %8224 = vmatprep.subr.mxu0 0.0
    %8225 = vmatpush1.msra.mxu0 %v8107
    %8226 = vmatprep.mubr.f32.mxu0 %v8156
    %8227 = vmatmul.mubr.f32.gmra.mrb[0].mxu0 %v8148
    %v8228 = vpop.f32.mrb[0].mxu0
    %v8229 = vadd.f32 0.0, %v8228
    %v8230 = vpop.f32.mrb[0].mxu0
    %8231 = vdwg.mxu0
    %8232 = vmatprep.subr.mxu0 0.0
    %8233 = vmatpush1.msra.mxu0 %v8108
    %8234 = vmatprep.subr.mxu0 0.0
    %8235 = vmatpush1.msra.mxu0 %v8109
    %8236 = vmatprep.subr.mxu0 0.0
    %8237 = vmatpush1.msra.mxu0 %v8110
    %8238 = vmatprep.subr.mxu0 0.0
    %8239 = vmatpush1.msra.mxu0 %v8111
    %8240 = vmatprep.subr.mxu0 0.0
    %8241 = vmatpush1.msra.mxu0 %v8112
    %8242 = vmatprep.subr.mxu0 0.0
    %8243 = vmatpush1.msra.mxu0 %v8113
    %8244 = vmatprep.subr.mxu0 0.0
    %8245 = vmatpush1.msra.mxu0 %v8114
    %8246 = vmatprep.subr.mxu0 0.0
    %8247 = vmatpush1.msra.mxu0 %v8115
    %8248 = vmatprep.subr.mxu0 0.0
    %8249 = vmatpush1.msra.mxu0 %v8116
    %8250 = vmatprep.subr.mxu0 0.0
    %8251 = vmatpush1.msra.mxu0 %v8117
    %8252 = vmatprep.subr.mxu0 0.0
    %8253 = vmatpush1.msra.mxu0 %v8118
    %8254 = vmatprep.subr.mxu0 0.0
    %8255 = vmatpush1.msra.mxu0 %v8119
    %8256 = vmatprep.subr.mxu0 0.0
    %8257 = vmatpush1.msra.mxu0 %v8120
    %8258 = vmatprep.subr.mxu0 0.0
    %8259 = vmatpush1.msra.mxu0 %v8121
    %8260 = vmatprep.subr.mxu0 0.0
    %8261 = vmatpush1.msra.mxu0 %v8122
    %8262 = vmatprep.subr.mxu0 0.0
    %8263 = vmatpush1.msra.mxu0 %v8123
    %8264 = vmatprep.subr.mxu0 0.0
    %8265 = vmatpush1.msra.mxu0 %v8124
    %8266 = vmatprep.subr.mxu0 0.0
    %8267 = vmatpush1.msra.mxu0 %v8125
    %8268 = vmatprep.subr.mxu0 0.0
    %8269 = vmatpush1.msra.mxu0 %v8126
    %8270 = vmatprep.subr.mxu0 0.0
    %8271 = vmatpush1.msra.mxu0 %v8127
    %8272 = vmatprep.subr.mxu0 0.0
    %8273 = vmatpush1.msra.mxu0 %v8128
    %8274 = vmatprep.subr.mxu0 0.0
    %8275 = vmatpush1.msra.mxu0 %v8129
    %8276 = vmatprep.subr.mxu0 0.0
    %8277 = vmatpush1.msra.mxu0 %v8130
    %8278 = vmatprep.subr.mxu0 0.0
    %8279 = vmatpush1.msra.mxu0 %v8131
    %8280 = vmatprep.subr.mxu0 0.0
    %8281 = vmatpush1.msra.mxu0 %v8132
    %8282 = vmatprep.subr.mxu0 0.0
    %8283 = vmatpush1.msra.mxu0 %v8133
    %8284 = vmatprep.subr.mxu0 0.0
    %8285 = vmatpush1.msra.mxu0 %v8134
    %8286 = vmatprep.subr.mxu0 0.0
    %8287 = vmatpush1.msra.mxu0 %v8135
    %8288 = vmatprep.subr.mxu0 0.0
    %8289 = vmatpush1.msra.mxu0 %v8136
    %8290 = vmatprep.subr.mxu0 0.0
    %8291 = vmatpush1.msra.mxu0 %v8137
    %8292 = vmatprep.subr.mxu0 0.0
    %8293 = vmatpush1.msra.mxu0 %v8138
    %8294 = vmatprep.subr.mxu0 0.0
    %8295 = vmatpush1.msra.mxu0 %v8139
    %8296 = vmatprep.mubr.f32.mxu0 %v8157
    %8297 = vmatmul.mubr.f32.gmra.mrb[0].mxu0 %v8155
    %v8298 = vpop.f32.mrb[0].mxu0
    %v8299 = vadd.f32 %v8229, %v8298
    %v8300 = vpop.f32.mrb[0].mxu0
    %8301 = vdwg.mxu0
    %v8302 = vld [vmem:[%s16 + $0x8] sm:$0x1]
    %v8303 = vlaneseq
    %v8304 = vshrl.u32 %v8303, 7
    %v8305 = vsub.s32 0, %v8304
    %v8306 = vrot.slane %v8302, %v8305
    %v8307 = vmul.f32 %v8299, %v8306
    %v8308 = vld [vmem:[%s17 + $0x8] sm:$0x1]
    %v8309 = vlaneseq
    %v8310 = vshrl.u32 %v8309, 7
    %v8311 = vsub.s32 0, %v8310
    %v8312 = vrot.slane %v8308, %v8311
    %v8313 = vadd.f32 %v8307, %v8312
    %v8314 = vmax.f32 %v8313, 0.0
    %s8315 = scalar_lea.vmem %s18, 1024
    %v8316 = vld [vmem:[%s8315] sm:$0xff]
    %v8317 = vld [vmem:[%s8315 + $0x8] sm:$0xff]
    %v8318 = vld [vmem:[%s8315 + $0x10] sm:$0xff]
    %v8319 = vld [vmem:[%s8315 + $0x18] sm:$0xff]
    %v8320 = vld [vmem:[%s8315 + $0x20] sm:$0xff]
    %v8321 = vld [vmem:[%s8315 + $0x28] sm:$0xff]
    %v8322 = vld [vmem:[%s8315 + $0x30] sm:$0xff]
    %v8323 = vld [vmem:[%s8315 + $0x38] sm:$0xff]
    %v8324 = vld [vmem:[%s8315 + $0x40] sm:$0xff]
    %v8325 = vld [vmem:[%s8315 + $0x48] sm:$0xff]
    %v8326 = vld [vmem:[%s8315 + $0x50] sm:$0xff]
    %v8327 = vld [vmem:[%s8315 + $0x58] sm:$0xff]
    %v8328 = vld [vmem:[%s8315 + $0x60] sm:$0xff]
    %v8329 = vld [vmem:[%s8315 + $0x68] sm:$0xff]
    %v8330 = vld [vmem:[%s8315 + $0x70] sm:$0xff]
    %v8331 = vld [vmem:[%s8315 + $0x78] sm:$0xff]
    %8332 = vmatprep.subr.mxu0 0.0
    %8333 = vmatpush1.msra.mxu0 %v8316
    %8334 = vmatprep.subr.mxu0 0.0
    %8335 = vmatpush1.msra.mxu0 %v8317
    %8336 = vmatprep.subr.mxu0 0.0
    %8337 = vmatpush1.msra.mxu0 %v8318
    %8338 = vmatprep.subr.mxu0 0.0
    %8339 = vmatpush1.msra.mxu0 %v8319
    %8340 = vmatprep.subr.mxu0 0.0
    %8341 = vmatpush1.msra.mxu0 %v8320
    %8342 = vmatprep.subr.mxu0 0.0
    %8343 = vmatpush1.msra.mxu0 %v8321
    %8344 = vmatprep.subr.mxu0 0.0
    %8345 = vmatpush1.msra.mxu0 %v8322
    %8346 = vmatprep.subr.mxu0 0.0
    %8347 = vmatpush1.msra.mxu0 %v8323
    %8348 = vmatprep.subr.mxu0 0.0
    %8349 = vmatpush1.msra.mxu0 %v8324
    %8350 = vmatprep.subr.mxu0 0.0
    %8351 = vmatpush1.msra.mxu0 %v8325
    %8352 = vmatprep.subr.mxu0 0.0
    %8353 = vmatpush1.msra.mxu0 %v8326
    %8354 = vmatprep.subr.mxu0 0.0
    %8355 = vmatpush1.msra.mxu0 %v8327
    %8356 = vmatprep.subr.mxu0 0.0
    %8357 = vmatpush1.msra.mxu0 %v8328
    %8358 = vmatprep.subr.mxu0 0.0
    %8359 = vmatpush1.msra.mxu0 %v8329
    %8360 = vmatprep.subr.mxu0 0.0
    %8361 = vmatpush1.msra.mxu0 %v8330
    %8362 = vmatprep.subr.mxu0 0.0
    %8363 = vmatpush1.msra.mxu0 %v8331
    %8364 = vmatprep.subr.mxu0 0.0
    %8365 = vmatpush1.msra.mxu0 0.0
    %8366 = vmatprep.subr.mxu0 0.0
    %8367 = vmatpush1.msra.mxu0 0.0
    %8368 = vmatprep.subr.mxu0 0.0
    %8369 = vmatpush1.msra.mxu0 0.0
    %8370 = vmatprep.subr.mxu0 0.0
    %8371 = vmatpush1.msra.mxu0 0.0
    %8372 = vmatprep.subr.mxu0 0.0
    %8373 = vmatpush1.msra.mxu0 0.0
    %8374 = vmatprep.subr.mxu0 0.0
    %8375 = vmatpush1.msra.mxu0 0.0
    %8376 = vmatprep.subr.mxu0 0.0
    %8377 = vmatpush1.msra.mxu0 0.0
    %8378 = vmatprep.subr.mxu0 0.0
    %8379 = vmatpush1.msra.mxu0 0.0
    %8380 = vmatprep.subr.mxu0 0.0
    %8381 = vmatpush1.msra.mxu0 0.0
    %8382 = vmatprep.subr.mxu0 0.0
    %8383 = vmatpush1.msra.mxu0 0.0
    %8384 = vmatprep.subr.mxu0 0.0
    %8385 = vmatpush1.msra.mxu0 0.0
    %8386 = vmatprep.subr.mxu0 0.0
    %8387 = vmatpush1.msra.mxu0 0.0
    %8388 = vmatprep.subr.mxu0 0.0
    %8389 = vmatpush1.msra.mxu0 0.0
    %8390 = vmatprep.subr.mxu0 0.0
    %8391 = vmatpush1.msra.mxu0 0.0
    %8392 = vmatprep.subr.mxu0 0.0
    %8393 = vmatpush1.msra.mxu0 0.0
    %8394 = vmatprep.subr.mxu0 0.0
    %8395 = vmatpush1.msra.mxu0 0.0
    %8396 = vmatprep.mubr.f32.mxu0 0.0
    %8397 = vmatmul.mubr.f32.gmra.mrb[0].mxu0 %v8314
    %v8398 = vpop.f32.mrb[0].mxu0
    %v8399 = vadd.f32 0.0, %v8398
    %v8400 = vpop.f32.mrb[0].mxu0
    %8401 = vdwg.mxu0
    %8402 = vst.msk [vmem:[#allocation3 + $0x6] sm:$0x3] %vm5084, %v8399
    %v8403 = vld [vmem:[#allocation3] sm:$0xff]
    %s8404 = scalar_lea.vmem %s13, 33
    %v8405 = vld [vmem:[%s8404] ss:$8 sm:$0xf]
    %v8407 = vlaneseq
    %v8408 = vshrl.u32 %v8407, 7
    %v8409 = vsub.s32 0, %v8408
    %v8410 = vrot.slane %v8405, %v8409
    %v8411 = vlaneseq
    %v8412 = vshrl.u32 %v8411, 7
    %v8413 = vsub.s32 1, %v8412
    %v8414 = vrot.slane %v8405, %v8413
    %v8415 = vlaneseq
    %v8416 = vshrl.u32 %v8415, 7
    %v8417 = vsub.s32 2, %v8416
    %v8418 = vrot.slane %v8405, %v8417
    %v8419 = vlaneseq
    %v8420 = vshrl.u32 %v8419, 7
    %v8421 = vsub.s32 3, %v8420
    %v8422 = vrot.slane %v8405, %v8421
    %v8423 = vcombine.low %v8410, %v8414
    %v8424 = vcombine.low %v8418, %v8422
    %v8426 = vunpack.c.l.s4 1983009808
    %v8427 = vunpack.c.0.s8 %v8426
    %v8428 = vlaneseq
    %v8429 = vshrl.u32 %v8428, 7
    %v8430 = vsub.s32 %v8427, %v8429
    %v8431 = vrot.slane %v8423, %v8430
    %v8433 = vunpack.c.l.s4 1983009808
    %v8434 = vunpack.c.0.s8 %v8433
    %v8435 = vlaneseq
    %v8436 = vshrl.u32 %v8435, 7
    %v8437 = vsub.s32 %v8434, %v8436
    %v8438 = vrot.slane %v8424, %v8437
    %v8439 = vcombine.low %v8431, %v8438
    %v8441 = vmul.f32 %v8403, %v8439
    %s8442 = scalar_lea.vmem %s14, 33
    %v8443 = vld [vmem:[%s8442] ss:$8 sm:$0xf]
    %v8445 = vlaneseq
    %v8446 = vshrl.u32 %v8445, 7
    %v8447 = vsub.s32 0, %v8446
    %v8448 = vrot.slane %v8443, %v8447
    %v8449 = vlaneseq
    %v8450 = vshrl.u32 %v8449, 7
    %v8451 = vsub.s32 1, %v8450
    %v8452 = vrot.slane %v8443, %v8451
    %v8453 = vlaneseq
    %v8454 = vshrl.u32 %v8453, 7
    %v8455 = vsub.s32 2, %v8454
    %v8456 = vrot.slane %v8443, %v8455
    %v8457 = vlaneseq
    %v8458 = vshrl.u32 %v8457, 7
    %v8459 = vsub.s32 3, %v8458
    %v8460 = vrot.slane %v8443, %v8459
    %v8461 = vcombine.low %v8448, %v8452
    %v8462 = vcombine.low %v8456, %v8460
    %v8464 = vunpack.c.l.s4 1983009808
    %v8465 = vunpack.c.0.s8 %v8464
    %v8466 = vlaneseq
    %v8467 = vshrl.u32 %v8466, 7
    %v8468 = vsub.s32 %v8465, %v8467
    %v8469 = vrot.slane %v8461, %v8468
    %v8471 = vunpack.c.l.s4 1983009808
    %v8472 = vunpack.c.0.s8 %v8471
    %v8473 = vlaneseq
    %v8474 = vshrl.u32 %v8473, 7
    %v8475 = vsub.s32 %v8472, %v8474
    %v8476 = vrot.slane %v8462, %v8475
    %v8477 = vcombine.low %v8469, %v8476
    %v8479 = vadd.f32 %v8441, %v8477
    %v8480 = vmax.f32 %v8479, 0.0
    %s8481 = scalar_lea.vmem %s15, 4608
    %v8482 = vld [vmem:[%s8481] sm:$0xff]
    %v8483 = vld [vmem:[%s8481 + $0x8] sm:$0xff]
    %v8484 = vld [vmem:[%s8481 + $0x10] sm:$0xff]
    %v8485 = vld [vmem:[%s8481 + $0x18] sm:$0xff]
    %v8486 = vld [vmem:[%s8481 + $0x20] sm:$0xff]
    %v8487 = vld [vmem:[%s8481 + $0x28] sm:$0xff]
    %v8488 = vld [vmem:[%s8481 + $0x30] sm:$0xff]
    %v8489 = vld [vmem:[%s8481 + $0x38] sm:$0xff]
    %v8490 = vld [vmem:[%s8481 + $0x40] sm:$0xff]
    %v8491 = vld [vmem:[%s8481 + $0x48] sm:$0xff]
    %v8492 = vld [vmem:[%s8481 + $0x50] sm:$0xff]
    %v8493 = vld [vmem:[%s8481 + $0x58] sm:$0xff]
    %v8494 = vld [vmem:[%s8481 + $0x60] sm:$0xff]
    %v8495 = vld [vmem:[%s8481 + $0x68] sm:$0xff]
    %v8496 = vld [vmem:[%s8481 + $0x70] sm:$0xff]
    %v8497 = vld [vmem:[%s8481 + $0x78] sm:$0xff]
    %v8498 = vld [vmem:[%s8481 + $0x80] sm:$0xff]
    %v8499 = vld [vmem:[%s8481 + $0x88] sm:$0xff]
    %v8500 = vld [vmem:[%s8481 + $0x90] sm:$0xff]
    %v8501 = vld [vmem:[%s8481 + $0x98] sm:$0xff]
    %v8502 = vld [vmem:[%s8481 + $0xa0] sm:$0xff]
    %v8503 = vld [vmem:[%s8481 + $0xa8] sm:$0xff]
    %v8504 = vld [vmem:[%s8481 + $0xb0] sm:$0xff]
    %v8505 = vld [vmem:[%s8481 + $0xb8] sm:$0xff]
    %v8506 = vld [vmem:[%s8481 + $0xc0] sm:$0xff]
    %v8507 = vld [vmem:[%s8481 + $0xc8] sm:$0xff]
    %v8508 = vld [vmem:[%s8481 + $0xd0] sm:$0xff]
    %v8509 = vld [vmem:[%s8481 + $0xd8] sm:$0xff]
    %v8510 = vld [vmem:[%s8481 + $0xe0] sm:$0xff]
    %v8511 = vld [vmem:[%s8481 + $0xe8] sm:$0xff]
    %v8512 = vld [vmem:[%s8481 + $0xf0] sm:$0xff]
    %v8513 = vld [vmem:[%s8481 + $0xf8] sm:$0xff]
    %v8514 = vld [vmem:[%s8481 + $0x100] sm:$0xff]
    %v8515 = vld [vmem:[%s8481 + $0x108] sm:$0xff]
    %v8516 = vld [vmem:[%s8481 + $0x110] sm:$0xff]
    %v8517 = vld [vmem:[%s8481 + $0x118] sm:$0xff]
    %v8518 = vld [vmem:[%s8481 + $0x120] sm:$0xff]
    %v8519 = vld [vmem:[%s8481 + $0x128] sm:$0xff]
    %v8520 = vld [vmem:[%s8481 + $0x130] sm:$0xff]
    %v8521 = vld [vmem:[%s8481 + $0x138] sm:$0xff]
    %v8522 = vld [vmem:[%s8481 + $0x140] sm:$0xff]
    %v8523 = vld [vmem:[%s8481 + $0x148] sm:$0xff]
    %v8524 = vld [vmem:[%s8481 + $0x150] sm:$0xff]
    %v8525 = vld [vmem:[%s8481 + $0x158] sm:$0xff]
    %v8526 = vld [vmem:[%s8481 + $0x160] sm:$0xff]
    %v8527 = vld [vmem:[%s8481 + $0x168] sm:$0xff]
    %v8528 = vld [vmem:[%s8481 + $0x170] sm:$0xff]
    %v8529 = vld [vmem:[%s8481 + $0x178] sm:$0xff]
    %v8530 = vld [vmem:[%s8481 + $0x180] sm:$0xff]
    %v8531 = vld [vmem:[%s8481 + $0x188] sm:$0xff]
    %v8532 = vld [vmem:[%s8481 + $0x190] sm:$0xff]
    %v8533 = vld [vmem:[%s8481 + $0x198] sm:$0xff]
    %v8534 = vld [vmem:[%s8481 + $0x1a0] sm:$0xff]
    %v8535 = vld [vmem:[%s8481 + $0x1a8] sm:$0xff]
    %v8536 = vld [vmem:[%s8481 + $0x1b0] sm:$0xff]
    %v8537 = vld [vmem:[%s8481 + $0x1b8] sm:$0xff]
    %v8538 = vld [vmem:[%s8481 + $0x1c0] sm:$0xff]
    %v8539 = vld [vmem:[%s8481 + $0x1c8] sm:$0xff]
    %v8540 = vld [vmem:[%s8481 + $0x1d0] sm:$0xff]
    %v8541 = vld [vmem:[%s8481 + $0x1d8] sm:$0xff]
    %v8542 = vld [vmem:[%s8481 + $0x1e0] sm:$0xff]
    %v8543 = vld [vmem:[%s8481 + $0x1e8] sm:$0xff]
    %v8544 = vld [vmem:[%s8481 + $0x1f0] sm:$0xff]
    %v8545 = vld [vmem:[%s8481 + $0x1f8] sm:$0xff]
    %v8547 = vcombine.high %v8480, %v8480
    %v8549 = vunpack.c.l.s4 1983009808
    %v8550 = vunpack.c.0.s8 %v8549
    %v8551 = vlaneseq
    %v8552 = vshrl.u32 %v8551, 7
    %v8553 = vsub.s32 %v8550, %v8552
    %v8554 = vrot.slane %v8480, %v8553
    %v8556 = vunpack.c.l.s4 1983009808
    %v8557 = vunpack.c.0.s8 %v8556
    %v8558 = vlaneseq
    %v8559 = vshrl.u32 %v8558, 7
    %v8560 = vsub.s32 %v8557, %v8559
    %v8561 = vrot.slane %v8547, %v8560
    %v8562 = vcombine.high %v8554, %v8554
    %v8563 = vcombine.high %v8561, %v8561
    %8568 = vmatprep.subr.mxu0 0.0
    %8569 = vmatpush1.msra.mxu0 %v8482
    %8570 = vmatprep.subr.mxu0 0.0
    %8571 = vmatpush1.msra.mxu0 %v8483
    %8572 = vmatprep.subr.mxu0 0.0
    %8573 = vmatpush1.msra.mxu0 %v8484
    %8574 = vmatprep.subr.mxu0 0.0
    %8575 = vmatpush1.msra.mxu0 %v8485
    %8576 = vmatprep.subr.mxu0 0.0
    %8577 = vmatpush1.msra.mxu0 %v8486
    %8578 = vmatprep.subr.mxu0 0.0
    %8579 = vmatpush1.msra.mxu0 %v8487
    %8580 = vmatprep.subr.mxu0 0.0
    %8581 = vmatpush1.msra.mxu0 %v8488
    %8582 = vmatprep.subr.mxu0 0.0
    %8583 = vmatpush1.msra.mxu0 %v8489
    %8584 = vmatprep.subr.mxu0 0.0
    %8585 = vmatpush1.msra.mxu0 %v8490
    %8586 = vmatprep.subr.mxu0 0.0
    %8587 = vmatpush1.msra.mxu0 %v8491
    %8588 = vmatprep.subr.mxu0 0.0
    %8589 = vmatpush1.msra.mxu0 %v8492
    %8590 = vmatprep.subr.mxu0 0.0
    %8591 = vmatpush1.msra.mxu0 %v8493
    %8592 = vmatprep.subr.mxu0 0.0
    %8593 = vmatpush1.msra.mxu0 %v8494
    %8594 = vmatprep.subr.mxu0 0.0
    %8595 = vmatpush1.msra.mxu0 %v8495
    %8596 = vmatprep.subr.mxu0 0.0
    %8597 = vmatpush1.msra.mxu0 %v8496
    %8598 = vmatprep.subr.mxu0 0.0
    %8599 = vmatpush1.msra.mxu0 %v8497
    %8600 = vmatprep.subr.mxu0 0.0
    %8601 = vmatpush1.msra.mxu0 %v8498
    %8602 = vmatprep.subr.mxu0 0.0
    %8603 = vmatpush1.msra.mxu0 %v8499
    %8604 = vmatprep.subr.mxu0 0.0
    %8605 = vmatpush1.msra.mxu0 %v8500
    %8606 = vmatprep.subr.mxu0 0.0
    %8607 = vmatpush1.msra.mxu0 %v8501
    %8608 = vmatprep.subr.mxu0 0.0
    %8609 = vmatpush1.msra.mxu0 %v8502
    %8610 = vmatprep.subr.mxu0 0.0
    %8611 = vmatpush1.msra.mxu0 %v8503
    %8612 = vmatprep.subr.mxu0 0.0
    %8613 = vmatpush1.msra.mxu0 %v8504
    %8614 = vmatprep.subr.mxu0 0.0
    %8615 = vmatpush1.msra.mxu0 %v8505
    %8616 = vmatprep.subr.mxu0 0.0
    %8617 = vmatpush1.msra.mxu0 %v8506
    %8618 = vmatprep.subr.mxu0 0.0
    %8619 = vmatpush1.msra.mxu0 %v8507
    %8620 = vmatprep.subr.mxu0 0.0
    %8621 = vmatpush1.msra.mxu0 %v8508
    %8622 = vmatprep.subr.mxu0 0.0
    %8623 = vmatpush1.msra.mxu0 %v8509
    %8624 = vmatprep.subr.mxu0 0.0
    %8625 = vmatpush1.msra.mxu0 %v8510
    %8626 = vmatprep.subr.mxu0 0.0
    %8627 = vmatpush1.msra.mxu0 %v8511
    %8628 = vmatprep.subr.mxu0 0.0
    %8629 = vmatpush1.msra.mxu0 %v8512
    %8630 = vmatprep.subr.mxu0 0.0
    %8631 = vmatpush1.msra.mxu0 %v8513
    %8632 = vmatprep.mubr.f32.mxu0 %v8562
    %8633 = vmatmul.mubr.f32.gmra.mrb[0].mxu0 %v8554
    %v8634 = vpop.f32.mrb[0].mxu0
    %v8635 = vadd.f32 0.0, %v8634
    %v8636 = vpop.f32.mrb[0].mxu0
    %8637 = vdwg.mxu0
    %8638 = vmatprep.subr.mxu0 0.0
    %8639 = vmatpush1.msra.mxu0 %v8514
    %8640 = vmatprep.subr.mxu0 0.0
    %8641 = vmatpush1.msra.mxu0 %v8515
    %8642 = vmatprep.subr.mxu0 0.0
    %8643 = vmatpush1.msra.mxu0 %v8516
    %8644 = vmatprep.subr.mxu0 0.0
    %8645 = vmatpush1.msra.mxu0 %v8517
    %8646 = vmatprep.subr.mxu0 0.0
    %8647 = vmatpush1.msra.mxu0 %v8518
    %8648 = vmatprep.subr.mxu0 0.0
    %8649 = vmatpush1.msra.mxu0 %v8519
    %8650 = vmatprep.subr.mxu0 0.0
    %8651 = vmatpush1.msra.mxu0 %v8520
    %8652 = vmatprep.subr.mxu0 0.0
    %8653 = vmatpush1.msra.mxu0 %v8521
    %8654 = vmatprep.subr.mxu0 0.0
    %8655 = vmatpush1.msra.mxu0 %v8522
    %8656 = vmatprep.subr.mxu0 0.0
    %8657 = vmatpush1.msra.mxu0 %v8523
    %8658 = vmatprep.subr.mxu0 0.0
    %8659 = vmatpush1.msra.mxu0 %v8524
    %8660 = vmatprep.subr.mxu0 0.0
    %8661 = vmatpush1.msra.mxu0 %v8525
    %8662 = vmatprep.subr.mxu0 0.0
    %8663 = vmatpush1.msra.mxu0 %v8526
    %8664 = vmatprep.subr.mxu0 0.0
    %8665 = vmatpush1.msra.mxu0 %v8527
    %8666 = vmatprep.subr.mxu0 0.0
    %8667 = vmatpush1.msra.mxu0 %v8528
    %8668 = vmatprep.subr.mxu0 0.0
    %8669 = vmatpush1.msra.mxu0 %v8529
    %8670 = vmatprep.subr.mxu0 0.0
    %8671 = vmatpush1.msra.mxu0 %v8530
    %8672 = vmatprep.subr.mxu0 0.0
    %8673 = vmatpush1.msra.mxu0 %v8531
    %8674 = vmatprep.subr.mxu0 0.0
    %8675 = vmatpush1.msra.mxu0 %v8532
    %8676 = vmatprep.subr.mxu0 0.0
    %8677 = vmatpush1.msra.mxu0 %v8533
    %8678 = vmatprep.subr.mxu0 0.0
    %8679 = vmatpush1.msra.mxu0 %v8534
    %8680 = vmatprep.subr.mxu0 0.0
    %8681 = vmatpush1.msra.mxu0 %v8535
    %8682 = vmatprep.subr.mxu0 0.0
    %8683 = vmatpush1.msra.mxu0 %v8536
    %8684 = vmatprep.subr.mxu0 0.0
    %8685 = vmatpush1.msra.mxu0 %v8537
    %8686 = vmatprep.subr.mxu0 0.0
    %8687 = vmatpush1.msra.mxu0 %v8538
    %8688 = vmatprep.subr.mxu0 0.0
    %8689 = vmatpush1.msra.mxu0 %v8539
    %8690 = vmatprep.subr.mxu0 0.0
    %8691 = vmatpush1.msra.mxu0 %v8540
    %8692 = vmatprep.subr.mxu0 0.0
    %8693 = vmatpush1.msra.mxu0 %v8541
    %8694 = vmatprep.subr.mxu0 0.0
    %8695 = vmatpush1.msra.mxu0 %v8542
    %8696 = vmatprep.subr.mxu0 0.0
    %8697 = vmatpush1.msra.mxu0 %v8543
    %8698 = vmatprep.subr.mxu0 0.0
    %8699 = vmatpush1.msra.mxu0 %v8544
    %8700 = vmatprep.subr.mxu0 0.0
    %8701 = vmatpush1.msra.mxu0 %v8545
    %8702 = vmatprep.mubr.f32.mxu0 %v8563
    %8703 = vmatmul.mubr.f32.gmra.mrb[0].mxu0 %v8561
    %v8704 = vpop.f32.mrb[0].mxu0
    %v8705 = vadd.f32 %v8635, %v8704
    %v8706 = vpop.f32.mrb[0].mxu0
    %8707 = vdwg.mxu0
    %v8708 = vld [vmem:[%s16 + $0x9] sm:$0x1]
    %v8709 = vlaneseq
    %v8710 = vshrl.u32 %v8709, 7
    %v8711 = vsub.s32 0, %v8710
    %v8712 = vrot.slane %v8708, %v8711
    %v8713 = vmul.f32 %v8705, %v8712
    %v8714 = vld [vmem:[%s17 + $0x9] sm:$0x1]
    %v8715 = vlaneseq
    %v8716 = vshrl.u32 %v8715, 7
    %v8717 = vsub.s32 0, %v8716
    %v8718 = vrot.slane %v8714, %v8717
    %v8719 = vadd.f32 %v8713, %v8718
    %v8720 = vmax.f32 %v8719, 0.0
    %s8721 = scalar_lea.vmem %s18, 1152
    %v8722 = vld [vmem:[%s8721] sm:$0xff]
    %v8723 = vld [vmem:[%s8721 + $0x8] sm:$0xff]
    %v8724 = vld [vmem:[%s8721 + $0x10] sm:$0xff]
    %v8725 = vld [vmem:[%s8721 + $0x18] sm:$0xff]
    %v8726 = vld [vmem:[%s8721 + $0x20] sm:$0xff]
    %v8727 = vld [vmem:[%s8721 + $0x28] sm:$0xff]
    %v8728 = vld [vmem:[%s8721 + $0x30] sm:$0xff]
    %v8729 = vld [vmem:[%s8721 + $0x38] sm:$0xff]
    %v8730 = vld [vmem:[%s8721 + $0x40] sm:$0xff]
    %v8731 = vld [vmem:[%s8721 + $0x48] sm:$0xff]
    %v8732 = vld [vmem:[%s8721 + $0x50] sm:$0xff]
    %v8733 = vld [vmem:[%s8721 + $0x58] sm:$0xff]
    %v8734 = vld [vmem:[%s8721 + $0x60] sm:$0xff]
    %v8735 = vld [vmem:[%s8721 + $0x68] sm:$0xff]
    %v8736 = vld [vmem:[%s8721 + $0x70] sm:$0xff]
    %v8737 = vld [vmem:[%s8721 + $0x78] sm:$0xff]
    %8738 = vmatprep.subr.mxu0 0.0
    %8739 = vmatpush1.msra.mxu0 %v8722
    %8740 = vmatprep.subr.mxu0 0.0
    %8741 = vmatpush1.msra.mxu0 %v8723
    %8742 = vmatprep.subr.mxu0 0.0
    %8743 = vmatpush1.msra.mxu0 %v8724
    %8744 = vmatprep.subr.mxu0 0.0
    %8745 = vmatpush1.msra.mxu0 %v8725
    %8746 = vmatprep.subr.mxu0 0.0
    %8747 = vmatpush1.msra.mxu0 %v8726
    %8748 = vmatprep.subr.mxu0 0.0
    %8749 = vmatpush1.msra.mxu0 %v8727
    %8750 = vmatprep.subr.mxu0 0.0
    %8751 = vmatpush1.msra.mxu0 %v8728
    %8752 = vmatprep.subr.mxu0 0.0
    %8753 = vmatpush1.msra.mxu0 %v8729
    %8754 = vmatprep.subr.mxu0 0.0
    %8755 = vmatpush1.msra.mxu0 %v8730
    %8756 = vmatprep.subr.mxu0 0.0
    %8757 = vmatpush1.msra.mxu0 %v8731
    %8758 = vmatprep.subr.mxu0 0.0
    %8759 = vmatpush1.msra.mxu0 %v8732
    %8760 = vmatprep.subr.mxu0 0.0
    %8761 = vmatpush1.msra.mxu0 %v8733
    %8762 = vmatprep.subr.mxu0 0.0
    %8763 = vmatpush1.msra.mxu0 %v8734
    %8764 = vmatprep.subr.mxu0 0.0
    %8765 = vmatpush1.msra.mxu0 %v8735
    %8766 = vmatprep.subr.mxu0 0.0
    %8767 = vmatpush1.msra.mxu0 %v8736
    %8768 = vmatprep.subr.mxu0 0.0
    %8769 = vmatpush1.msra.mxu0 %v8737
    %8770 = vmatprep.subr.mxu0 0.0
    %8771 = vmatpush1.msra.mxu0 0.0
    %8772 = vmatprep.subr.mxu0 0.0
    %8773 = vmatpush1.msra.mxu0 0.0
    %8774 = vmatprep.subr.mxu0 0.0
    %8775 = vmatpush1.msra.mxu0 0.0
    %8776 = vmatprep.subr.mxu0 0.0
    %8777 = vmatpush1.msra.mxu0 0.0
    %8778 = vmatprep.subr.mxu0 0.0
    %8779 = vmatpush1.msra.mxu0 0.0
    %8780 = vmatprep.subr.mxu0 0.0
    %8781 = vmatpush1.msra.mxu0 0.0
    %8782 = vmatprep.subr.mxu0 0.0
    %8783 = vmatpush1.msra.mxu0 0.0
    %8784 = vmatprep.subr.mxu0 0.0
    %8785 = vmatpush1.msra.mxu0 0.0
    %8786 = vmatprep.subr.mxu0 0.0
    %8787 = vmatpush1.msra.mxu0 0.0
    %8788 = vmatprep.subr.mxu0 0.0
    %8789 = vmatpush1.msra.mxu0 0.0
    %8790 = vmatprep.subr.mxu0 0.0
    %8791 = vmatpush1.msra.mxu0 0.0
    %8792 = vmatprep.subr.mxu0 0.0
    %8793 = vmatpush1.msra.mxu0 0.0
    %8794 = vmatprep.subr.mxu0 0.0
    %8795 = vmatpush1.msra.mxu0 0.0
    %8796 = vmatprep.subr.mxu0 0.0
    %8797 = vmatpush1.msra.mxu0 0.0
    %8798 = vmatprep.subr.mxu0 0.0
    %8799 = vmatpush1.msra.mxu0 0.0
    %8800 = vmatprep.subr.mxu0 0.0
    %8801 = vmatpush1.msra.mxu0 0.0
    %8802 = vmatprep.mubr.f32.mxu0 0.0
    %8803 = vmatmul.mubr.f32.gmra.mrb[0].mxu0 %v8720
    %v8804 = vpop.f32.mrb[0].mxu0
    %v8805 = vadd.f32 0.0, %v8804
    %v8806 = vpop.f32.mrb[0].mxu0
    %8807 = vdwg.mxu0
    %v8810 = vunpack.c.l.s4 1983009808
    %v8811 = vunpack.c.0.s8 %v8810
    %v8812 = vlaneseq
    %v8813 = vshrl.u32 %v8812, 7
    %v8814 = vsub.s32 %v8811, %v8813
    %v8815 = vrot.slane %v8805, %v8814
    %8816 = vrot.lane.b32.xlu0 %v8815, 32
    %v8817 = vpop.permute.xlu0 %8816
    %8819 = vst.msk [vmem:[#allocation3 + $0x6] sm:$0x3] %vm5502, %v8817
    %v8820 = vld [vmem:[#allocation3] sm:$0xff]
    %s8821 = scalar_lea.vmem %s13, 34
    %v8822 = vld [vmem:[%s8821] ss:$8 sm:$0xf]
    %v8824 = vlaneseq
    %v8825 = vshrl.u32 %v8824, 7
    %v8826 = vsub.s32 0, %v8825
    %v8827 = vrot.slane %v8822, %v8826
    %v8828 = vlaneseq
    %v8829 = vshrl.u32 %v8828, 7
    %v8830 = vsub.s32 1, %v8829
    %v8831 = vrot.slane %v8822, %v8830
    %v8832 = vlaneseq
    %v8833 = vshrl.u32 %v8832, 7
    %v8834 = vsub.s32 2, %v8833
    %v8835 = vrot.slane %v8822, %v8834
    %v8836 = vlaneseq
    %v8837 = vshrl.u32 %v8836, 7
    %v8838 = vsub.s32 3, %v8837
    %v8839 = vrot.slane %v8822, %v8838
    %v8840 = vcombine.low %v8827, %v8831
    %v8841 = vcombine.low %v8835, %v8839
    %v8843 = vunpack.c.l.s4 1983009808
    %v8844 = vunpack.c.0.s8 %v8843
    %v8845 = vlaneseq
    %v8846 = vshrl.u32 %v8845, 7
    %v8847 = vsub.s32 %v8844, %v8846
    %v8848 = vrot.slane %v8840, %v8847
    %v8850 = vunpack.c.l.s4 1983009808
    %v8851 = vunpack.c.0.s8 %v8850
    %v8852 = vlaneseq
    %v8853 = vshrl.u32 %v8852, 7
    %v8854 = vsub.s32 %v8851, %v8853
    %v8855 = vrot.slane %v8841, %v8854
    %v8856 = vcombine.low %v8848, %v8855
    %v8858 = vmul.f32 %v8820, %v8856
    %s8859 = scalar_lea.vmem %s14, 34
    %v8860 = vld [vmem:[%s8859] ss:$8 sm:$0xf]
    %v8862 = vlaneseq
    %v8863 = vshrl.u32 %v8862, 7
    %v8864 = vsub.s32 0, %v8863
    %v8865 = vrot.slane %v8860, %v8864
    %v8866 = vlaneseq
    %v8867 = vshrl.u32 %v8866, 7
    %v8868 = vsub.s32 1, %v8867
    %v8869 = vrot.slane %v8860, %v8868
    %v8870 = vlaneseq
    %v8871 = vshrl.u32 %v8870, 7
    %v8872 = vsub.s32 2, %v8871
    %v8873 = vrot.slane %v8860, %v8872
    %v8874 = vlaneseq
    %v8875 = vshrl.u32 %v8874, 7
    %v8876 = vsub.s32 3, %v8875
    %v8877 = vrot.slane %v8860, %v8876
    %v8878 = vcombine.low %v8865, %v8869
    %v8879 = vcombine.low %v8873, %v8877
    %v8881 = vunpack.c.l.s4 1983009808
    %v8882 = vunpack.c.0.s8 %v8881
    %v8883 = vlaneseq
    %v8884 = vshrl.u32 %v8883, 7
    %v8885 = vsub.s32 %v8882, %v8884
    %v8886 = vrot.slane %v8878, %v8885
    %v8888 = vunpack.c.l.s4 1983009808
    %v8889 = vunpack.c.0.s8 %v8888
    %v8890 = vlaneseq
    %v8891 = vshrl.u32 %v8890, 7
    %v8892 = vsub.s32 %v8889, %v8891
    %v8893 = vrot.slane %v8879, %v8892
    %v8894 = vcombine.low %v8886, %v8893
    %v8896 = vadd.f32 %v8858, %v8894
    %v8897 = vmax.f32 %v8896, 0.0
    %s8898 = scalar_lea.vmem %s15, 5120
    %v8899 = vld [vmem:[%s8898] sm:$0xff]
    %v8900 = vld [vmem:[%s8898 + $0x8] sm:$0xff]
    %v8901 = vld [vmem:[%s8898 + $0x10] sm:$0xff]
    %v8902 = vld [vmem:[%s8898 + $0x18] sm:$0xff]
    %v8903 = vld [vmem:[%s8898 + $0x20] sm:$0xff]
    %v8904 = vld [vmem:[%s8898 + $0x28] sm:$0xff]
    %v8905 = vld [vmem:[%s8898 + $0x30] sm:$0xff]
    %v8906 = vld [vmem:[%s8898 + $0x38] sm:$0xff]
    %v8907 = vld [vmem:[%s8898 + $0x40] sm:$0xff]
    %v8908 = vld [vmem:[%s8898 + $0x48] sm:$0xff]
    %v8909 = vld [vmem:[%s8898 + $0x50] sm:$0xff]
    %v8910 = vld [vmem:[%s8898 + $0x58] sm:$0xff]
    %v8911 = vld [vmem:[%s8898 + $0x60] sm:$0xff]
    %v8912 = vld [vmem:[%s8898 + $0x68] sm:$0xff]
    %v8913 = vld [vmem:[%s8898 + $0x70] sm:$0xff]
    %v8914 = vld [vmem:[%s8898 + $0x78] sm:$0xff]
    %v8915 = vld [vmem:[%s8898 + $0x80] sm:$0xff]
    %v8916 = vld [vmem:[%s8898 + $0x88] sm:$0xff]
    %v8917 = vld [vmem:[%s8898 + $0x90] sm:$0xff]
    %v8918 = vld [vmem:[%s8898 + $0x98] sm:$0xff]
    %v8919 = vld [vmem:[%s8898 + $0xa0] sm:$0xff]
    %v8920 = vld [vmem:[%s8898 + $0xa8] sm:$0xff]
    %v8921 = vld [vmem:[%s8898 + $0xb0] sm:$0xff]
    %v8922 = vld [vmem:[%s8898 + $0xb8] sm:$0xff]
    %v8923 = vld [vmem:[%s8898 + $0xc0] sm:$0xff]
    %v8924 = vld [vmem:[%s8898 + $0xc8] sm:$0xff]
    %v8925 = vld [vmem:[%s8898 + $0xd0] sm:$0xff]
    %v8926 = vld [vmem:[%s8898 + $0xd8] sm:$0xff]
    %v8927 = vld [vmem:[%s8898 + $0xe0] sm:$0xff]
    %v8928 = vld [vmem:[%s8898 + $0xe8] sm:$0xff]
    %v8929 = vld [vmem:[%s8898 + $0xf0] sm:$0xff]
    %v8930 = vld [vmem:[%s8898 + $0xf8] sm:$0xff]
    %v8931 = vld [vmem:[%s8898 + $0x100] sm:$0xff]
    %v8932 = vld [vmem:[%s8898 + $0x108] sm:$0xff]
    %v8933 = vld [vmem:[%s8898 + $0x110] sm:$0xff]
    %v8934 = vld [vmem:[%s8898 + $0x118] sm:$0xff]
    %v8935 = vld [vmem:[%s8898 + $0x120] sm:$0xff]
    %v8936 = vld [vmem:[%s8898 + $0x128] sm:$0xff]
    %v8937 = vld [vmem:[%s8898 + $0x130] sm:$0xff]
    %v8938 = vld [vmem:[%s8898 + $0x138] sm:$0xff]
    %v8939 = vld [vmem:[%s8898 + $0x140] sm:$0xff]
    %v8940 = vld [vmem:[%s8898 + $0x148] sm:$0xff]
    %v8941 = vld [vmem:[%s8898 + $0x150] sm:$0xff]
    %v8942 = vld [vmem:[%s8898 + $0x158] sm:$0xff]
    %v8943 = vld [vmem:[%s8898 + $0x160] sm:$0xff]
    %v8944 = vld [vmem:[%s8898 + $0x168] sm:$0xff]
    %v8945 = vld [vmem:[%s8898 + $0x170] sm:$0xff]
    %v8946 = vld [vmem:[%s8898 + $0x178] sm:$0xff]
    %v8947 = vld [vmem:[%s8898 + $0x180] sm:$0xff]
    %v8948 = vld [vmem:[%s8898 + $0x188] sm:$0xff]
    %v8949 = vld [vmem:[%s8898 + $0x190] sm:$0xff]
    %v8950 = vld [vmem:[%s8898 + $0x198] sm:$0xff]
    %v8951 = vld [vmem:[%s8898 + $0x1a0] sm:$0xff]
    %v8952 = vld [vmem:[%s8898 + $0x1a8] sm:$0xff]
    %v8953 = vld [vmem:[%s8898 + $0x1b0] sm:$0xff]
    %v8954 = vld [vmem:[%s8898 + $0x1b8] sm:$0xff]
    %v8955 = vld [vmem:[%s8898 + $0x1c0] sm:$0xff]
    %v8956 = vld [vmem:[%s8898 + $0x1c8] sm:$0xff]
    %v8957 = vld [vmem:[%s8898 + $0x1d0] sm:$0xff]
    %v8958 = vld [vmem:[%s8898 + $0x1d8] sm:$0xff]
    %v8959 = vld [vmem:[%s8898 + $0x1e0] sm:$0xff]
    %v8960 = vld [vmem:[%s8898 + $0x1e8] sm:$0xff]
    %v8961 = vld [vmem:[%s8898 + $0x1f0] sm:$0xff]
    %v8962 = vld [vmem:[%s8898 + $0x1f8] sm:$0xff]
    %v8964 = vcombine.high %v8897, %v8897
    %v8966 = vunpack.c.l.s4 1983009808
    %v8967 = vunpack.c.0.s8 %v8966
    %v8968 = vlaneseq
    %v8969 = vshrl.u32 %v8968, 7
    %v8970 = vsub.s32 %v8967, %v8969
    %v8971 = vrot.slane %v8897, %v8970
    %v8973 = vunpack.c.l.s4 1983009808
    %v8974 = vunpack.c.0.s8 %v8973
    %v8975 = vlaneseq
    %v8976 = vshrl.u32 %v8975, 7
    %v8977 = vsub.s32 %v8974, %v8976
    %v8978 = vrot.slane %v8964, %v8977
    %v8979 = vcombine.high %v8971, %v8971
    %v8980 = vcombine.high %v8978, %v8978
    %8985 = vmatprep.subr.mxu0 0.0
    %8986 = vmatpush1.msra.mxu0 %v8899
    %8987 = vmatprep.subr.mxu0 0.0
    %8988 = vmatpush1.msra.mxu0 %v8900
    %8989 = vmatprep.subr.mxu0 0.0
    %8990 = vmatpush1.msra.mxu0 %v8901
    %8991 = vmatprep.subr.mxu0 0.0
    %8992 = vmatpush1.msra.mxu0 %v8902
    %8993 = vmatprep.subr.mxu0 0.0
    %8994 = vmatpush1.msra.mxu0 %v8903
    %8995 = vmatprep.subr.mxu0 0.0
    %8996 = vmatpush1.msra.mxu0 %v8904
    %8997 = vmatprep.subr.mxu0 0.0
    %8998 = vmatpush1.msra.mxu0 %v8905
    %8999 = vmatprep.subr.mxu0 0.0
    %9000 = vmatpush1.msra.mxu0 %v8906
    %9001 = vmatprep.subr.mxu0 0.0
    %9002 = vmatpush1.msra.mxu0 %v8907
    %9003 = vmatprep.subr.mxu0 0.0
    %9004 = vmatpush1.msra.mxu0 %v8908
    %9005 = vmatprep.subr.mxu0 0.0
    %9006 = vmatpush1.msra.mxu0 %v8909
    %9007 = vmatprep.subr.mxu0 0.0
    %9008 = vmatpush1.msra.mxu0 %v8910
    %9009 = vmatprep.subr.mxu0 0.0
    %9010 = vmatpush1.msra.mxu0 %v8911
    %9011 = vmatprep.subr.mxu0 0.0
    %9012 = vmatpush1.msra.mxu0 %v8912
    %9013 = vmatprep.subr.mxu0 0.0
    %9014 = vmatpush1.msra.mxu0 %v8913
    %9015 = vmatprep.subr.mxu0 0.0
    %9016 = vmatpush1.msra.mxu0 %v8914
    %9017 = vmatprep.subr.mxu0 0.0
    %9018 = vmatpush1.msra.mxu0 %v8915
    %9019 = vmatprep.subr.mxu0 0.0
    %9020 = vmatpush1.msra.mxu0 %v8916
    %9021 = vmatprep.subr.mxu0 0.0
    %9022 = vmatpush1.msra.mxu0 %v8917
    %9023 = vmatprep.subr.mxu0 0.0
    %9024 = vmatpush1.msra.mxu0 %v8918
    %9025 = vmatprep.subr.mxu0 0.0
    %9026 = vmatpush1.msra.mxu0 %v8919
    %9027 = vmatprep.subr.mxu0 0.0
    %9028 = vmatpush1.msra.mxu0 %v8920
    %9029 = vmatprep.subr.mxu0 0.0
    %9030 = vmatpush1.msra.mxu0 %v8921
    %9031 = vmatprep.subr.mxu0 0.0
    %9032 = vmatpush1.msra.mxu0 %v8922
    %9033 = vmatprep.subr.mxu0 0.0
    %9034 = vmatpush1.msra.mxu0 %v8923
    %9035 = vmatprep.subr.mxu0 0.0
    %9036 = vmatpush1.msra.mxu0 %v8924
    %9037 = vmatprep.subr.mxu0 0.0
    %9038 = vmatpush1.msra.mxu0 %v8925
    %9039 = vmatprep.subr.mxu0 0.0
    %9040 = vmatpush1.msra.mxu0 %v8926
    %9041 = vmatprep.subr.mxu0 0.0
    %9042 = vmatpush1.msra.mxu0 %v8927
    %9043 = vmatprep.subr.mxu0 0.0
    %9044 = vmatpush1.msra.mxu0 %v8928
    %9045 = vmatprep.subr.mxu0 0.0
    %9046 = vmatpush1.msra.mxu0 %v8929
    %9047 = vmatprep.subr.mxu0 0.0
    %9048 = vmatpush1.msra.mxu0 %v8930
    %9049 = vmatprep.mubr.f32.mxu0 %v8979
    %9050 = vmatmul.mubr.f32.gmra.mrb[0].mxu0 %v8971
    %v9051 = vpop.f32.mrb[0].mxu0
    %v9052 = vadd.f32 0.0, %v9051
    %v9053 = vpop.f32.mrb[0].mxu0
    %9054 = vdwg.mxu0
    %9055 = vmatprep.subr.mxu0 0.0
    %9056 = vmatpush1.msra.mxu0 %v8931
    %9057 = vmatprep.subr.mxu0 0.0
    %9058 = vmatpush1.msra.mxu0 %v8932
    %9059 = vmatprep.subr.mxu0 0.0
    %9060 = vmatpush1.msra.mxu0 %v8933
    %9061 = vmatprep.subr.mxu0 0.0
    %9062 = vmatpush1.msra.mxu0 %v8934
    %9063 = vmatprep.subr.mxu0 0.0
    %9064 = vmatpush1.msra.mxu0 %v8935
    %9065 = vmatprep.subr.mxu0 0.0
    %9066 = vmatpush1.msra.mxu0 %v8936
    %9067 = vmatprep.subr.mxu0 0.0
    %9068 = vmatpush1.msra.mxu0 %v8937
    %9069 = vmatprep.subr.mxu0 0.0
    %9070 = vmatpush1.msra.mxu0 %v8938
    %9071 = vmatprep.subr.mxu0 0.0
    %9072 = vmatpush1.msra.mxu0 %v8939
    %9073 = vmatprep.subr.mxu0 0.0
    %9074 = vmatpush1.msra.mxu0 %v8940
    %9075 = vmatprep.subr.mxu0 0.0
    %9076 = vmatpush1.msra.mxu0 %v8941
    %9077 = vmatprep.subr.mxu0 0.0
    %9078 = vmatpush1.msra.mxu0 %v8942
    %9079 = vmatprep.subr.mxu0 0.0
    %9080 = vmatpush1.msra.mxu0 %v8943
    %9081 = vmatprep.subr.mxu0 0.0
    %9082 = vmatpush1.msra.mxu0 %v8944
    %9083 = vmatprep.subr.mxu0 0.0
    %9084 = vmatpush1.msra.mxu0 %v8945
    %9085 = vmatprep.subr.mxu0 0.0
    %9086 = vmatpush1.msra.mxu0 %v8946
    %9087 = vmatprep.subr.mxu0 0.0
    %9088 = vmatpush1.msra.mxu0 %v8947
    %9089 = vmatprep.subr.mxu0 0.0
    %9090 = vmatpush1.msra.mxu0 %v8948
    %9091 = vmatprep.subr.mxu0 0.0
    %9092 = vmatpush1.msra.mxu0 %v8949
    %9093 = vmatprep.subr.mxu0 0.0
    %9094 = vmatpush1.msra.mxu0 %v8950
    %9095 = vmatprep.subr.mxu0 0.0
    %9096 = vmatpush1.msra.mxu0 %v8951
    %9097 = vmatprep.subr.mxu0 0.0
    %9098 = vmatpush1.msra.mxu0 %v8952
    %9099 = vmatprep.subr.mxu0 0.0
    %9100 = vmatpush1.msra.mxu0 %v8953
    %9101 = vmatprep.subr.mxu0 0.0
    %9102 = vmatpush1.msra.mxu0 %v8954
    %9103 = vmatprep.subr.mxu0 0.0
    %9104 = vmatpush1.msra.mxu0 %v8955
    %9105 = vmatprep.subr.mxu0 0.0
    %9106 = vmatpush1.msra.mxu0 %v8956
    %9107 = vmatprep.subr.mxu0 0.0
    %9108 = vmatpush1.msra.mxu0 %v8957
    %9109 = vmatprep.subr.mxu0 0.0
    %9110 = vmatpush1.msra.mxu0 %v8958
    %9111 = vmatprep.subr.mxu0 0.0
    %9112 = vmatpush1.msra.mxu0 %v8959
    %9113 = vmatprep.subr.mxu0 0.0
    %9114 = vmatpush1.msra.mxu0 %v8960
    %9115 = vmatprep.subr.mxu0 0.0
    %9116 = vmatpush1.msra.mxu0 %v8961
    %9117 = vmatprep.subr.mxu0 0.0
    %9118 = vmatpush1.msra.mxu0 %v8962
    %9119 = vmatprep.mubr.f32.mxu0 %v8980
    %9120 = vmatmul.mubr.f32.gmra.mrb[0].mxu0 %v8978
    %v9121 = vpop.f32.mrb[0].mxu0
    %v9122 = vadd.f32 %v9052, %v9121
    %v9123 = vpop.f32.mrb[0].mxu0
    %9124 = vdwg.mxu0
    %v9125 = vld [vmem:[%s16 + $0xa] sm:$0x1]
    %v9126 = vlaneseq
    %v9127 = vshrl.u32 %v9126, 7
    %v9128 = vsub.s32 0, %v9127
    %v9129 = vrot.slane %v9125, %v9128
    %v9130 = vmul.f32 %v9122, %v9129
    %v9131 = vld [vmem:[%s17 + $0xa] sm:$0x1]
    %v9132 = vlaneseq
    %v9133 = vshrl.u32 %v9132, 7
    %v9134 = vsub.s32 0, %v9133
    %v9135 = vrot.slane %v9131, %v9134
    %v9136 = vadd.f32 %v9130, %v9135
    %v9137 = vmax.f32 %v9136, 0.0
    %s9138 = scalar_lea.vmem %s18, 1280
    %v9139 = vld [vmem:[%s9138] sm:$0xff]
    %v9140 = vld [vmem:[%s9138 + $0x8] sm:$0xff]
    %v9141 = vld [vmem:[%s9138 + $0x10] sm:$0xff]
    %v9142 = vld [vmem:[%s9138 + $0x18] sm:$0xff]
    %v9143 = vld [vmem:[%s9138 + $0x20] sm:$0xff]
    %v9144 = vld [vmem:[%s9138 + $0x28] sm:$0xff]
    %v9145 = vld [vmem:[%s9138 + $0x30] sm:$0xff]
    %v9146 = vld [vmem:[%s9138 + $0x38] sm:$0xff]
    %v9147 = vld [vmem:[%s9138 + $0x40] sm:$0xff]
    %v9148 = vld [vmem:[%s9138 + $0x48] sm:$0xff]
    %v9149 = vld [vmem:[%s9138 + $0x50] sm:$0xff]
    %v9150 = vld [vmem:[%s9138 + $0x58] sm:$0xff]
    %v9151 = vld [vmem:[%s9138 + $0x60] sm:$0xff]
    %v9152 = vld [vmem:[%s9138 + $0x68] sm:$0xff]
    %v9153 = vld [vmem:[%s9138 + $0x70] sm:$0xff]
    %v9154 = vld [vmem:[%s9138 + $0x78] sm:$0xff]
    %9155 = vmatprep.subr.mxu0 0.0
    %9156 = vmatpush1.msra.mxu0 %v9139
    %9157 = vmatprep.subr.mxu0 0.0
    %9158 = vmatpush1.msra.mxu0 %v9140
    %9159 = vmatprep.subr.mxu0 0.0
    %9160 = vmatpush1.msra.mxu0 %v9141
    %9161 = vmatprep.subr.mxu0 0.0
    %9162 = vmatpush1.msra.mxu0 %v9142
    %9163 = vmatprep.subr.mxu0 0.0
    %9164 = vmatpush1.msra.mxu0 %v9143
    %9165 = vmatprep.subr.mxu0 0.0
    %9166 = vmatpush1.msra.mxu0 %v9144
    %9167 = vmatprep.subr.mxu0 0.0
    %9168 = vmatpush1.msra.mxu0 %v9145
    %9169 = vmatprep.subr.mxu0 0.0
    %9170 = vmatpush1.msra.mxu0 %v9146
    %9171 = vmatprep.subr.mxu0 0.0
    %9172 = vmatpush1.msra.mxu0 %v9147
    %9173 = vmatprep.subr.mxu0 0.0
    %9174 = vmatpush1.msra.mxu0 %v9148
    %9175 = vmatprep.subr.mxu0 0.0
    %9176 = vmatpush1.msra.mxu0 %v9149
    %9177 = vmatprep.subr.mxu0 0.0
    %9178 = vmatpush1.msra.mxu0 %v9150
    %9179 = vmatprep.subr.mxu0 0.0
    %9180 = vmatpush1.msra.mxu0 %v9151
    %9181 = vmatprep.subr.mxu0 0.0
    %9182 = vmatpush1.msra.mxu0 %v9152
    %9183 = vmatprep.subr.mxu0 0.0
    %9184 = vmatpush1.msra.mxu0 %v9153
    %9185 = vmatprep.subr.mxu0 0.0
    %9186 = vmatpush1.msra.mxu0 %v9154
    %9187 = vmatprep.subr.mxu0 0.0
    %9188 = vmatpush1.msra.mxu0 0.0
    %9189 = vmatprep.subr.mxu0 0.0
    %9190 = vmatpush1.msra.mxu0 0.0
    %9191 = vmatprep.subr.mxu0 0.0
    %9192 = vmatpush1.msra.mxu0 0.0
    %9193 = vmatprep.subr.mxu0 0.0
    %9194 = vmatpush1.msra.mxu0 0.0
    %9195 = vmatprep.subr.mxu0 0.0
    %9196 = vmatpush1.msra.mxu0 0.0
    %9197 = vmatprep.subr.mxu0 0.0
    %9198 = vmatpush1.msra.mxu0 0.0
    %9199 = vmatprep.subr.mxu0 0.0
    %9200 = vmatpush1.msra.mxu0 0.0
    %9201 = vmatprep.subr.mxu0 0.0
    %9202 = vmatpush1.msra.mxu0 0.0
    %9203 = vmatprep.subr.mxu0 0.0
    %9204 = vmatpush1.msra.mxu0 0.0
    %9205 = vmatprep.subr.mxu0 0.0
    %9206 = vmatpush1.msra.mxu0 0.0
    %9207 = vmatprep.subr.mxu0 0.0
    %9208 = vmatpush1.msra.mxu0 0.0
    %9209 = vmatprep.subr.mxu0 0.0
    %9210 = vmatpush1.msra.mxu0 0.0
    %9211 = vmatprep.subr.mxu0 0.0
    %9212 = vmatpush1.msra.mxu0 0.0
    %9213 = vmatprep.subr.mxu0 0.0
    %9214 = vmatpush1.msra.mxu0 0.0
    %9215 = vmatprep.subr.mxu0 0.0
    %9216 = vmatpush1.msra.mxu0 0.0
    %9217 = vmatprep.subr.mxu0 0.0
    %9218 = vmatpush1.msra.mxu0 0.0
    %9219 = vmatprep.mubr.f32.mxu0 0.0
    %9220 = vmatmul.mubr.f32.gmra.mrb[0].mxu0 %v9137
    %v9221 = vpop.f32.mrb[0].mxu0
    %v9222 = vadd.f32 0.0, %v9221
    %v9223 = vpop.f32.mrb[0].mxu0
    %9224 = vdwg.mxu0
    %v9227 = vunpack.c.l.s4 1983009808
    %v9228 = vunpack.c.0.s8 %v9227
    %v9229 = vlaneseq
    %v9230 = vshrl.u32 %v9229, 7
    %v9231 = vsub.s32 %v9228, %v9230
    %v9232 = vrot.slane %v9222, %v9231
    %9233 = vrot.lane.b32.xlu0 %v9232, 64
    %v9234 = vpop.permute.xlu0 %9233
    %9236 = vst.msk [vmem:[#allocation3 + $0x6] sm:$0x3] %vm5920, %v9234
    %v9237 = vld [vmem:[#allocation3] sm:$0xff]
    %s9238 = scalar_lea.vmem %s13, 35
    %v9239 = vld [vmem:[%s9238] ss:$8 sm:$0xf]
    %v9241 = vlaneseq
    %v9242 = vshrl.u32 %v9241, 7
    %v9243 = vsub.s32 0, %v9242
    %v9244 = vrot.slane %v9239, %v9243
    %v9245 = vlaneseq
    %v9246 = vshrl.u32 %v9245, 7
    %v9247 = vsub.s32 1, %v9246
    %v9248 = vrot.slane %v9239, %v9247
    %v9249 = vlaneseq
    %v9250 = vshrl.u32 %v9249, 7
    %v9251 = vsub.s32 2, %v9250
    %v9252 = vrot.slane %v9239, %v9251
    %v9253 = vlaneseq
    %v9254 = vshrl.u32 %v9253, 7
    %v9255 = vsub.s32 3, %v9254
    %v9256 = vrot.slane %v9239, %v9255
    %v9257 = vcombine.low %v9244, %v9248
    %v9258 = vcombine.low %v9252, %v9256
    %v9260 = vunpack.c.l.s4 1983009808
    %v9261 = vunpack.c.0.s8 %v9260
    %v9262 = vlaneseq
    %v9263 = vshrl.u32 %v9262, 7
    %v9264 = vsub.s32 %v9261, %v9263
    %v9265 = vrot.slane %v9257, %v9264
    %v9267 = vunpack.c.l.s4 1983009808
    %v9268 = vunpack.c.0.s8 %v9267
    %v9269 = vlaneseq
    %v9270 = vshrl.u32 %v9269, 7
    %v9271 = vsub.s32 %v9268, %v9270
    %v9272 = vrot.slane %v9258, %v9271
    %v9273 = vcombine.low %v9265, %v9272
    %v9275 = vmul.f32 %v9237, %v9273
    %s9276 = scalar_lea.vmem %s14, 35
    %v9277 = vld [vmem:[%s9276] ss:$8 sm:$0xf]
    %v9279 = vlaneseq
    %v9280 = vshrl.u32 %v9279, 7
    %v9281 = vsub.s32 0, %v9280
    %v9282 = vrot.slane %v9277, %v9281
    %v9283 = vlaneseq
    %v9284 = vshrl.u32 %v9283, 7
    %v9285 = vsub.s32 1, %v9284
    %v9286 = vrot.slane %v9277, %v9285
    %v9287 = vlaneseq
    %v9288 = vshrl.u32 %v9287, 7
    %v9289 = vsub.s32 2, %v9288
    %v9290 = vrot.slane %v9277, %v9289
    %v9291 = vlaneseq
    %v9292 = vshrl.u32 %v9291, 7
    %v9293 = vsub.s32 3, %v9292
    %v9294 = vrot.slane %v9277, %v9293
    %v9295 = vcombine.low %v9282, %v9286
    %v9296 = vcombine.low %v9290, %v9294
    %v9298 = vunpack.c.l.s4 1983009808
    %v9299 = vunpack.c.0.s8 %v9298
    %v9300 = vlaneseq
    %v9301 = vshrl.u32 %v9300, 7
    %v9302 = vsub.s32 %v9299, %v9301
    %v9303 = vrot.slane %v9295, %v9302
    %v9305 = vunpack.c.l.s4 1983009808
    %v9306 = vunpack.c.0.s8 %v9305
    %v9307 = vlaneseq
    %v9308 = vshrl.u32 %v9307, 7
    %v9309 = vsub.s32 %v9306, %v9308
    %v9310 = vrot.slane %v9296, %v9309
    %v9311 = vcombine.low %v9303, %v9310
    %v9313 = vadd.f32 %v9275, %v9311
    %v9314 = vmax.f32 %v9313, 0.0
    %s9315 = scalar_lea.vmem %s15, 5632
    %v9316 = vld [vmem:[%s9315] sm:$0xff]
    %v9317 = vld [vmem:[%s9315 + $0x8] sm:$0xff]
    %v9318 = vld [vmem:[%s9315 + $0x10] sm:$0xff]
    %v9319 = vld [vmem:[%s9315 + $0x18] sm:$0xff]
    %v9320 = vld [vmem:[%s9315 + $0x20] sm:$0xff]
    %v9321 = vld [vmem:[%s9315 + $0x28] sm:$0xff]
    %v9322 = vld [vmem:[%s9315 + $0x30] sm:$0xff]
    %v9323 = vld [vmem:[%s9315 + $0x38] sm:$0xff]
    %v9324 = vld [vmem:[%s9315 + $0x40] sm:$0xff]
    %v9325 = vld [vmem:[%s9315 + $0x48] sm:$0xff]
    %v9326 = vld [vmem:[%s9315 + $0x50] sm:$0xff]
    %v9327 = vld [vmem:[%s9315 + $0x58] sm:$0xff]
    %v9328 = vld [vmem:[%s9315 + $0x60] sm:$0xff]
    %v9329 = vld [vmem:[%s9315 + $0x68] sm:$0xff]
    %v9330 = vld [vmem:[%s9315 + $0x70] sm:$0xff]
    %v9331 = vld [vmem:[%s9315 + $0x78] sm:$0xff]
    %v9332 = vld [vmem:[%s9315 + $0x80] sm:$0xff]
    %v9333 = vld [vmem:[%s9315 + $0x88] sm:$0xff]
    %v9334 = vld [vmem:[%s9315 + $0x90] sm:$0xff]
    %v9335 = vld [vmem:[%s9315 + $0x98] sm:$0xff]
    %v9336 = vld [vmem:[%s9315 + $0xa0] sm:$0xff]
    %v9337 = vld [vmem:[%s9315 + $0xa8] sm:$0xff]
    %v9338 = vld [vmem:[%s9315 + $0xb0] sm:$0xff]
    %v9339 = vld [vmem:[%s9315 + $0xb8] sm:$0xff]
    %v9340 = vld [vmem:[%s9315 + $0xc0] sm:$0xff]
    %v9341 = vld [vmem:[%s9315 + $0xc8] sm:$0xff]
    %v9342 = vld [vmem:[%s9315 + $0xd0] sm:$0xff]
    %v9343 = vld [vmem:[%s9315 + $0xd8] sm:$0xff]
    %v9344 = vld [vmem:[%s9315 + $0xe0] sm:$0xff]
    %v9345 = vld [vmem:[%s9315 + $0xe8] sm:$0xff]
    %v9346 = vld [vmem:[%s9315 + $0xf0] sm:$0xff]
    %v9347 = vld [vmem:[%s9315 + $0xf8] sm:$0xff]
    %v9348 = vld [vmem:[%s9315 + $0x100] sm:$0xff]
    %v9349 = vld [vmem:[%s9315 + $0x108] sm:$0xff]
    %v9350 = vld [vmem:[%s9315 + $0x110] sm:$0xff]
    %v9351 = vld [vmem:[%s9315 + $0x118] sm:$0xff]
    %v9352 = vld [vmem:[%s9315 + $0x120] sm:$0xff]
    %v9353 = vld [vmem:[%s9315 + $0x128] sm:$0xff]
    %v9354 = vld [vmem:[%s9315 + $0x130] sm:$0xff]
    %v9355 = vld [vmem:[%s9315 + $0x138] sm:$0xff]
    %v9356 = vld [vmem:[%s9315 + $0x140] sm:$0xff]
    %v9357 = vld [vmem:[%s9315 + $0x148] sm:$0xff]
    %v9358 = vld [vmem:[%s9315 + $0x150] sm:$0xff]
    %v9359 = vld [vmem:[%s9315 + $0x158] sm:$0xff]
    %v9360 = vld [vmem:[%s9315 + $0x160] sm:$0xff]
    %v9361 = vld [vmem:[%s9315 + $0x168] sm:$0xff]
    %v9362 = vld [vmem:[%s9315 + $0x170] sm:$0xff]
    %v9363 = vld [vmem:[%s9315 + $0x178] sm:$0xff]
    %v9364 = vld [vmem:[%s9315 + $0x180] sm:$0xff]
    %v9365 = vld [vmem:[%s9315 + $0x188] sm:$0xff]
    %v9366 = vld [vmem:[%s9315 + $0x190] sm:$0xff]
    %v9367 = vld [vmem:[%s9315 + $0x198] sm:$0xff]
    %v9368 = vld [vmem:[%s9315 + $0x1a0] sm:$0xff]
    %v9369 = vld [vmem:[%s9315 + $0x1a8] sm:$0xff]
    %v9370 = vld [vmem:[%s9315 + $0x1b0] sm:$0xff]
    %v9371 = vld [vmem:[%s9315 + $0x1b8] sm:$0xff]
    %v9372 = vld [vmem:[%s9315 + $0x1c0] sm:$0xff]
    %v9373 = vld [vmem:[%s9315 + $0x1c8] sm:$0xff]
    %v9374 = vld [vmem:[%s9315 + $0x1d0] sm:$0xff]
    %v9375 = vld [vmem:[%s9315 + $0x1d8] sm:$0xff]
    %v9376 = vld [vmem:[%s9315 + $0x1e0] sm:$0xff]
    %v9377 = vld [vmem:[%s9315 + $0x1e8] sm:$0xff]
    %v9378 = vld [vmem:[%s9315 + $0x1f0] sm:$0xff]
    %v9379 = vld [vmem:[%s9315 + $0x1f8] sm:$0xff]
    %v9381 = vcombine.high %v9314, %v9314
    %v9383 = vunpack.c.l.s4 1983009808
    %v9384 = vunpack.c.0.s8 %v9383
    %v9385 = vlaneseq
    %v9386 = vshrl.u32 %v9385, 7
    %v9387 = vsub.s32 %v9384, %v9386
    %v9388 = vrot.slane %v9314, %v9387
    %v9390 = vunpack.c.l.s4 1983009808
    %v9391 = vunpack.c.0.s8 %v9390
    %v9392 = vlaneseq
    %v9393 = vshrl.u32 %v9392, 7
    %v9394 = vsub.s32 %v9391, %v9393
    %v9395 = vrot.slane %v9381, %v9394
    %v9396 = vcombine.high %v9388, %v9388
    %v9397 = vcombine.high %v9395, %v9395
    %9402 = vmatprep.subr.mxu0 0.0
    %9403 = vmatpush1.msra.mxu0 %v9316
    %9404 = vmatprep.subr.mxu0 0.0
    %9405 = vmatpush1.msra.mxu0 %v9317
    %9406 = vmatprep.subr.mxu0 0.0
    %9407 = vmatpush1.msra.mxu0 %v9318
    %9408 = vmatprep.subr.mxu0 0.0
    %9409 = vmatpush1.msra.mxu0 %v9319
    %9410 = vmatprep.subr.mxu0 0.0
    %9411 = vmatpush1.msra.mxu0 %v9320
    %9412 = vmatprep.subr.mxu0 0.0
    %9413 = vmatpush1.msra.mxu0 %v9321
    %9414 = vmatprep.subr.mxu0 0.0
    %9415 = vmatpush1.msra.mxu0 %v9322
    %9416 = vmatprep.subr.mxu0 0.0
    %9417 = vmatpush1.msra.mxu0 %v9323
    %9418 = vmatprep.subr.mxu0 0.0
    %9419 = vmatpush1.msra.mxu0 %v9324
    %9420 = vmatprep.subr.mxu0 0.0
    %9421 = vmatpush1.msra.mxu0 %v9325
    %9422 = vmatprep.subr.mxu0 0.0
    %9423 = vmatpush1.msra.mxu0 %v9326
    %9424 = vmatprep.subr.mxu0 0.0
    %9425 = vmatpush1.msra.mxu0 %v9327
    %9426 = vmatprep.subr.mxu0 0.0
    %9427 = vmatpush1.msra.mxu0 %v9328
    %9428 = vmatprep.subr.mxu0 0.0
    %9429 = vmatpush1.msra.mxu0 %v9329
    %9430 = vmatprep.subr.mxu0 0.0
    %9431 = vmatpush1.msra.mxu0 %v9330
    %9432 = vmatprep.subr.mxu0 0.0
    %9433 = vmatpush1.msra.mxu0 %v9331
    %9434 = vmatprep.subr.mxu0 0.0
    %9435 = vmatpush1.msra.mxu0 %v9332
    %9436 = vmatprep.subr.mxu0 0.0
    %9437 = vmatpush1.msra.mxu0 %v9333
    %9438 = vmatprep.subr.mxu0 0.0
    %9439 = vmatpush1.msra.mxu0 %v9334
    %9440 = vmatprep.subr.mxu0 0.0
    %9441 = vmatpush1.msra.mxu0 %v9335
    %9442 = vmatprep.subr.mxu0 0.0
    %9443 = vmatpush1.msra.mxu0 %v9336
    %9444 = vmatprep.subr.mxu0 0.0
    %9445 = vmatpush1.msra.mxu0 %v9337
    %9446 = vmatprep.subr.mxu0 0.0
    %9447 = vmatpush1.msra.mxu0 %v9338
    %9448 = vmatprep.subr.mxu0 0.0
    %9449 = vmatpush1.msra.mxu0 %v9339
    %9450 = vmatprep.subr.mxu0 0.0
    %9451 = vmatpush1.msra.mxu0 %v9340
    %9452 = vmatprep.subr.mxu0 0.0
    %9453 = vmatpush1.msra.mxu0 %v9341
    %9454 = vmatprep.subr.mxu0 0.0
    %9455 = vmatpush1.msra.mxu0 %v9342
    %9456 = vmatprep.subr.mxu0 0.0
    %9457 = vmatpush1.msra.mxu0 %v9343
    %9458 = vmatprep.subr.mxu0 0.0
    %9459 = vmatpush1.msra.mxu0 %v9344
    %9460 = vmatprep.subr.mxu0 0.0
    %9461 = vmatpush1.msra.mxu0 %v9345
    %9462 = vmatprep.subr.mxu0 0.0
    %9463 = vmatpush1.msra.mxu0 %v9346
    %9464 = vmatprep.subr.mxu0 0.0
    %9465 = vmatpush1.msra.mxu0 %v9347
    %9466 = vmatprep.mubr.f32.mxu0 %v9396
    %9467 = vmatmul.mubr.f32.gmra.mrb[0].mxu0 %v9388
    %v9468 = vpop.f32.mrb[0].mxu0
    %v9469 = vadd.f32 0.0, %v9468
    %v9470 = vpop.f32.mrb[0].mxu0
    %9471 = vdwg.mxu0
    %9472 = vmatprep.subr.mxu0 0.0
    %9473 = vmatpush1.msra.mxu0 %v9348
    %9474 = vmatprep.subr.mxu0 0.0
    %9475 = vmatpush1.msra.mxu0 %v9349
    %9476 = vmatprep.subr.mxu0 0.0
    %9477 = vmatpush1.msra.mxu0 %v9350
    %9478 = vmatprep.subr.mxu0 0.0
    %9479 = vmatpush1.msra.mxu0 %v9351
    %9480 = vmatprep.subr.mxu0 0.0
    %9481 = vmatpush1.msra.mxu0 %v9352
    %9482 = vmatprep.subr.mxu0 0.0
    %9483 = vmatpush1.msra.mxu0 %v9353
    %9484 = vmatprep.subr.mxu0 0.0
    %9485 = vmatpush1.msra.mxu0 %v9354
    %9486 = vmatprep.subr.mxu0 0.0
    %9487 = vmatpush1.msra.mxu0 %v9355
    %9488 = vmatprep.subr.mxu0 0.0
    %9489 = vmatpush1.msra.mxu0 %v9356
    %9490 = vmatprep.subr.mxu0 0.0
    %9491 = vmatpush1.msra.mxu0 %v9357
    %9492 = vmatprep.subr.mxu0 0.0
    %9493 = vmatpush1.msra.mxu0 %v9358
    %9494 = vmatprep.subr.mxu0 0.0
    %9495 = vmatpush1.msra.mxu0 %v9359
    %9496 = vmatprep.subr.mxu0 0.0
    %9497 = vmatpush1.msra.mxu0 %v9360
    %9498 = vmatprep.subr.mxu0 0.0
    %9499 = vmatpush1.msra.mxu0 %v9361
    %9500 = vmatprep.subr.mxu0 0.0
    %9501 = vmatpush1.msra.mxu0 %v9362
    %9502 = vmatprep.subr.mxu0 0.0
    %9503 = vmatpush1.msra.mxu0 %v9363
    %9504 = vmatprep.subr.mxu0 0.0
    %9505 = vmatpush1.msra.mxu0 %v9364
    %9506 = vmatprep.subr.mxu0 0.0
    %9507 = vmatpush1.msra.mxu0 %v9365
    %9508 = vmatprep.subr.mxu0 0.0
    %9509 = vmatpush1.msra.mxu0 %v9366
    %9510 = vmatprep.subr.mxu0 0.0
    %9511 = vmatpush1.msra.mxu0 %v9367
    %9512 = vmatprep.subr.mxu0 0.0
    %9513 = vmatpush1.msra.mxu0 %v9368
    %9514 = vmatprep.subr.mxu0 0.0
    %9515 = vmatpush1.msra.mxu0 %v9369
    %9516 = vmatprep.subr.mxu0 0.0
    %9517 = vmatpush1.msra.mxu0 %v9370
    %9518 = vmatprep.subr.mxu0 0.0
    %9519 = vmatpush1.msra.mxu0 %v9371
    %9520 = vmatprep.subr.mxu0 0.0
    %9521 = vmatpush1.msra.mxu0 %v9372
    %9522 = vmatprep.subr.mxu0 0.0
    %9523 = vmatpush1.msra.mxu0 %v9373
    %9524 = vmatprep.subr.mxu0 0.0
    %9525 = vmatpush1.msra.mxu0 %v9374
    %9526 = vmatprep.subr.mxu0 0.0
    %9527 = vmatpush1.msra.mxu0 %v9375
    %9528 = vmatprep.subr.mxu0 0.0
    %9529 = vmatpush1.msra.mxu0 %v9376
    %9530 = vmatprep.subr.mxu0 0.0
    %9531 = vmatpush1.msra.mxu0 %v9377
    %9532 = vmatprep.subr.mxu0 0.0
    %9533 = vmatpush1.msra.mxu0 %v9378
    %9534 = vmatprep.subr.mxu0 0.0
    %9535 = vmatpush1.msra.mxu0 %v9379
    %9536 = vmatprep.mubr.f32.mxu0 %v9397
    %9537 = vmatmul.mubr.f32.gmra.mrb[0].mxu0 %v9395
    %v9538 = vpop.f32.mrb[0].mxu0
    %v9539 = vadd.f32 %v9469, %v9538
    %v9540 = vpop.f32.mrb[0].mxu0
    %9541 = vdwg.mxu0
    %v9542 = vld [vmem:[%s16 + $0xb] sm:$0x1]
    %v9543 = vlaneseq
    %v9544 = vshrl.u32 %v9543, 7
    %v9545 = vsub.s32 0, %v9544
    %v9546 = vrot.slane %v9542, %v9545
    %v9547 = vmul.f32 %v9539, %v9546
    %v9548 = vld [vmem:[%s17 + $0xb] sm:$0x1]
    %v9549 = vlaneseq
    %v9550 = vshrl.u32 %v9549, 7
    %v9551 = vsub.s32 0, %v9550
    %v9552 = vrot.slane %v9548, %v9551
    %v9553 = vadd.f32 %v9547, %v9552
    %v9554 = vmax.f32 %v9553, 0.0
    %s9555 = scalar_lea.vmem %s18, 1408
    %v9556 = vld [vmem:[%s9555] sm:$0xff]
    %v9557 = vld [vmem:[%s9555 + $0x8] sm:$0xff]
    %v9558 = vld [vmem:[%s9555 + $0x10] sm:$0xff]
    %v9559 = vld [vmem:[%s9555 + $0x18] sm:$0xff]
    %v9560 = vld [vmem:[%s9555 + $0x20] sm:$0xff]
    %v9561 = vld [vmem:[%s9555 + $0x28] sm:$0xff]
    %v9562 = vld [vmem:[%s9555 + $0x30] sm:$0xff]
    %v9563 = vld [vmem:[%s9555 + $0x38] sm:$0xff]
    %v9564 = vld [vmem:[%s9555 + $0x40] sm:$0xff]
    %v9565 = vld [vmem:[%s9555 + $0x48] sm:$0xff]
    %v9566 = vld [vmem:[%s9555 + $0x50] sm:$0xff]
    %v9567 = vld [vmem:[%s9555 + $0x58] sm:$0xff]
    %v9568 = vld [vmem:[%s9555 + $0x60] sm:$0xff]
    %v9569 = vld [vmem:[%s9555 + $0x68] sm:$0xff]
    %v9570 = vld [vmem:[%s9555 + $0x70] sm:$0xff]
    %v9571 = vld [vmem:[%s9555 + $0x78] sm:$0xff]
    %9572 = vmatprep.subr.mxu0 0.0
    %9573 = vmatpush1.msra.mxu0 %v9556
    %9574 = vmatprep.subr.mxu0 0.0
    %9575 = vmatpush1.msra.mxu0 %v9557
    %9576 = vmatprep.subr.mxu0 0.0
    %9577 = vmatpush1.msra.mxu0 %v9558
    %9578 = vmatprep.subr.mxu0 0.0
    %9579 = vmatpush1.msra.mxu0 %v9559
    %9580 = vmatprep.subr.mxu0 0.0
    %9581 = vmatpush1.msra.mxu0 %v9560
    %9582 = vmatprep.subr.mxu0 0.0
    %9583 = vmatpush1.msra.mxu0 %v9561
    %9584 = vmatprep.subr.mxu0 0.0
    %9585 = vmatpush1.msra.mxu0 %v9562
    %9586 = vmatprep.subr.mxu0 0.0
    %9587 = vmatpush1.msra.mxu0 %v9563
    %9588 = vmatprep.subr.mxu0 0.0
    %9589 = vmatpush1.msra.mxu0 %v9564
    %9590 = vmatprep.subr.mxu0 0.0
    %9591 = vmatpush1.msra.mxu0 %v9565
    %9592 = vmatprep.subr.mxu0 0.0
    %9593 = vmatpush1.msra.mxu0 %v9566
    %9594 = vmatprep.subr.mxu0 0.0
    %9595 = vmatpush1.msra.mxu0 %v9567
    %9596 = vmatprep.subr.mxu0 0.0
    %9597 = vmatpush1.msra.mxu0 %v9568
    %9598 = vmatprep.subr.mxu0 0.0
    %9599 = vmatpush1.msra.mxu0 %v9569
    %9600 = vmatprep.subr.mxu0 0.0
    %9601 = vmatpush1.msra.mxu0 %v9570
    %9602 = vmatprep.subr.mxu0 0.0
    %9603 = vmatpush1.msra.mxu0 %v9571
    %9604 = vmatprep.subr.mxu0 0.0
    %9605 = vmatpush1.msra.mxu0 0.0
    %9606 = vmatprep.subr.mxu0 0.0
    %9607 = vmatpush1.msra.mxu0 0.0
    %9608 = vmatprep.subr.mxu0 0.0
    %9609 = vmatpush1.msra.mxu0 0.0
    %9610 = vmatprep.subr.mxu0 0.0
    %9611 = vmatpush1.msra.mxu0 0.0
    %9612 = vmatprep.subr.mxu0 0.0
    %9613 = vmatpush1.msra.mxu0 0.0
    %9614 = vmatprep.subr.mxu0 0.0
    %9615 = vmatpush1.msra.mxu0 0.0
    %9616 = vmatprep.subr.mxu0 0.0
    %9617 = vmatpush1.msra.mxu0 0.0
    %9618 = vmatprep.subr.mxu0 0.0
    %9619 = vmatpush1.msra.mxu0 0.0
    %9620 = vmatprep.subr.mxu0 0.0
    %9621 = vmatpush1.msra.mxu0 0.0
    %9622 = vmatprep.subr.mxu0 0.0
    %9623 = vmatpush1.msra.mxu0 0.0
    %9624 = vmatprep.subr.mxu0 0.0
    %9625 = vmatpush1.msra.mxu0 0.0
    %9626 = vmatprep.subr.mxu0 0.0
    %9627 = vmatpush1.msra.mxu0 0.0
    %9628 = vmatprep.subr.mxu0 0.0
    %9629 = vmatpush1.msra.mxu0 0.0
    %9630 = vmatprep.subr.mxu0 0.0
    %9631 = vmatpush1.msra.mxu0 0.0
    %9632 = vmatprep.subr.mxu0 0.0
    %9633 = vmatpush1.msra.mxu0 0.0
    %9634 = vmatprep.subr.mxu0 0.0
    %9635 = vmatpush1.msra.mxu0 0.0
    %9636 = vmatprep.mubr.f32.mxu0 0.0
    %9637 = vmatmul.mubr.f32.gmra.mrb[0].mxu0 %v9554
    %v9638 = vpop.f32.mrb[0].mxu0
    %v9639 = vadd.f32 0.0, %v9638
    %v9640 = vpop.f32.mrb[0].mxu0
    %9641 = vdwg.mxu0
    %v9644 = vunpack.c.l.s4 1983009808
    %v9645 = vunpack.c.0.s8 %v9644
    %v9646 = vlaneseq
    %v9647 = vshrl.u32 %v9646, 7
    %v9648 = vsub.s32 %v9645, %v9647
    %v9649 = vrot.slane %v9639, %v9648
    %9650 = vrot.lane.b32.xlu0 %v9649, 96
    %v9651 = vpop.permute.xlu0 %9650
    %9653 = vst.msk [vmem:[#allocation3 + $0x6] sm:$0x3] %vm6338, %v9651
    %v9654 = vld [vmem:[#allocation3] sm:$0xff]
    %v9655 = vld [vmem:[%s19] sm:$0xf]
    %v9657 = vlaneseq
    %v9658 = vshrl.u32 %v9657, 7
    %v9659 = vsub.s32 0, %v9658
    %v9660 = vrot.slane %v9655, %v9659
    %v9661 = vlaneseq
    %v9662 = vshrl.u32 %v9661, 7
    %v9663 = vsub.s32 1, %v9662
    %v9664 = vrot.slane %v9655, %v9663
    %v9665 = vlaneseq
    %v9666 = vshrl.u32 %v9665, 7
    %v9667 = vsub.s32 2, %v9666
    %v9668 = vrot.slane %v9655, %v9667
    %v9669 = vlaneseq
    %v9670 = vshrl.u32 %v9669, 7
    %v9671 = vsub.s32 3, %v9670
    %v9672 = vrot.slane %v9655, %v9671
    %v9673 = vcombine.low %v9660, %v9664
    %v9674 = vcombine.low %v9668, %v9672
    %v9676 = vunpack.c.l.s4 1983009808
    %v9677 = vunpack.c.0.s8 %v9676
    %v9678 = vlaneseq
    %v9679 = vshrl.u32 %v9678, 7
    %v9680 = vsub.s32 %v9677, %v9679
    %v9681 = vrot.slane %v9673, %v9680
    %v9683 = vunpack.c.l.s4 1983009808
    %v9684 = vunpack.c.0.s8 %v9683
    %v9685 = vlaneseq
    %v9686 = vshrl.u32 %v9685, 7
    %v9687 = vsub.s32 %v9684, %v9686
    %v9688 = vrot.slane %v9674, %v9687
    %v9689 = vcombine.low %v9681, %v9688
    %v9691 = vmul.f32 %v9654, %v9689
    %v9692 = vld [vmem:[%s20] sm:$0xf]
    %v9694 = vlaneseq
    %v9695 = vshrl.u32 %v9694, 7
    %v9696 = vsub.s32 0, %v9695
    %v9697 = vrot.slane %v9692, %v9696
    %v9698 = vlaneseq
    %v9699 = vshrl.u32 %v9698, 7
    %v9700 = vsub.s32 1, %v9699
    %v9701 = vrot.slane %v9692, %v9700
    %v9702 = vlaneseq
    %v9703 = vshrl.u32 %v9702, 7
    %v9704 = vsub.s32 2, %v9703
    %v9705 = vrot.slane %v9692, %v9704
    %v9706 = vlaneseq
    %v9707 = vshrl.u32 %v9706, 7
    %v9708 = vsub.s32 3, %v9707
    %v9709 = vrot.slane %v9692, %v9708
    %v9710 = vcombine.low %v9697, %v9701
    %v9711 = vcombine.low %v9705, %v9709
    %v9713 = vunpack.c.l.s4 1983009808
    %v9714 = vunpack.c.0.s8 %v9713
    %v9715 = vlaneseq
    %v9716 = vshrl.u32 %v9715, 7
    %v9717 = vsub.s32 %v9714, %v9716
    %v9718 = vrot.slane %v9710, %v9717
    %v9720 = vunpack.c.l.s4 1983009808
    %v9721 = vunpack.c.0.s8 %v9720
    %v9722 = vlaneseq
    %v9723 = vshrl.u32 %v9722, 7
    %v9724 = vsub.s32 %v9721, %v9723
    %v9725 = vrot.slane %v9711, %v9724
    %v9726 = vcombine.low %v9718, %v9725
    %v9728 = vadd.f32 %v9691, %v9726
    %v9729 = vmax.f32 %v9728, 0.0
    %v9730 = vld [vmem:[%s21] sm:$0xff]
    %v9731 = vld [vmem:[%s21 + $0x8] sm:$0xff]
    %v9732 = vld [vmem:[%s21 + $0x10] sm:$0xff]
    %v9733 = vld [vmem:[%s21 + $0x18] sm:$0xff]
    %v9734 = vld [vmem:[%s21 + $0x20] sm:$0xff]
    %v9735 = vld [vmem:[%s21 + $0x28] sm:$0xff]
    %v9736 = vld [vmem:[%s21 + $0x30] sm:$0xff]
    %v9737 = vld [vmem:[%s21 + $0x38] sm:$0xff]
    %v9738 = vld [vmem:[%s21 + $0x40] sm:$0xff]
    %v9739 = vld [vmem:[%s21 + $0x48] sm:$0xff]
    %v9740 = vld [vmem:[%s21 + $0x50] sm:$0xff]
    %v9741 = vld [vmem:[%s21 + $0x58] sm:$0xff]
    %v9742 = vld [vmem:[%s21 + $0x60] sm:$0xff]
    %v9743 = vld [vmem:[%s21 + $0x68] sm:$0xff]
    %v9744 = vld [vmem:[%s21 + $0x70] sm:$0xff]
    %v9745 = vld [vmem:[%s21 + $0x78] sm:$0xff]
    %v9746 = vld [vmem:[%s21 + $0x80] sm:$0xff]
    %v9747 = vld [vmem:[%s21 + $0x88] sm:$0xff]
    %v9748 = vld [vmem:[%s21 + $0x90] sm:$0xff]
    %v9749 = vld [vmem:[%s21 + $0x98] sm:$0xff]
    %v9750 = vld [vmem:[%s21 + $0xa0] sm:$0xff]
    %v9751 = vld [vmem:[%s21 + $0xa8] sm:$0xff]
    %v9752 = vld [vmem:[%s21 + $0xb0] sm:$0xff]
    %v9753 = vld [vmem:[%s21 + $0xb8] sm:$0xff]
    %v9754 = vld [vmem:[%s21 + $0xc0] sm:$0xff]
    %v9755 = vld [vmem:[%s21 + $0xc8] sm:$0xff]
    %v9756 = vld [vmem:[%s21 + $0xd0] sm:$0xff]
    %v9757 = vld [vmem:[%s21 + $0xd8] sm:$0xff]
    %v9758 = vld [vmem:[%s21 + $0xe0] sm:$0xff]
    %v9759 = vld [vmem:[%s21 + $0xe8] sm:$0xff]
    %v9760 = vld [vmem:[%s21 + $0xf0] sm:$0xff]
    %v9761 = vld [vmem:[%s21 + $0xf8] sm:$0xff]
    %v9762 = vld [vmem:[%s21 + $0x100] sm:$0xff]
    %v9763 = vld [vmem:[%s21 + $0x108] sm:$0xff]
    %v9764 = vld [vmem:[%s21 + $0x110] sm:$0xff]
    %v9765 = vld [vmem:[%s21 + $0x118] sm:$0xff]
    %v9766 = vld [vmem:[%s21 + $0x120] sm:$0xff]
    %v9767 = vld [vmem:[%s21 + $0x128] sm:$0xff]
    %v9768 = vld [vmem:[%s21 + $0x130] sm:$0xff]
    %v9769 = vld [vmem:[%s21 + $0x138] sm:$0xff]
    %v9770 = vld [vmem:[%s21 + $0x140] sm:$0xff]
    %v9771 = vld [vmem:[%s21 + $0x148] sm:$0xff]
    %v9772 = vld [vmem:[%s21 + $0x150] sm:$0xff]
    %v9773 = vld [vmem:[%s21 + $0x158] sm:$0xff]
    %v9774 = vld [vmem:[%s21 + $0x160] sm:$0xff]
    %v9775 = vld [vmem:[%s21 + $0x168] sm:$0xff]
    %v9776 = vld [vmem:[%s21 + $0x170] sm:$0xff]
    %v9777 = vld [vmem:[%s21 + $0x178] sm:$0xff]
    %v9778 = vld [vmem:[%s21 + $0x180] sm:$0xff]
    %v9779 = vld [vmem:[%s21 + $0x188] sm:$0xff]
    %v9780 = vld [vmem:[%s21 + $0x190] sm:$0xff]
    %v9781 = vld [vmem:[%s21 + $0x198] sm:$0xff]
    %v9782 = vld [vmem:[%s21 + $0x1a0] sm:$0xff]
    %v9783 = vld [vmem:[%s21 + $0x1a8] sm:$0xff]
    %v9784 = vld [vmem:[%s21 + $0x1b0] sm:$0xff]
    %v9785 = vld [vmem:[%s21 + $0x1b8] sm:$0xff]
    %v9786 = vld [vmem:[%s21 + $0x1c0] sm:$0xff]
    %v9787 = vld [vmem:[%s21 + $0x1c8] sm:$0xff]
    %v9788 = vld [vmem:[%s21 + $0x1d0] sm:$0xff]
    %v9789 = vld [vmem:[%s21 + $0x1d8] sm:$0xff]
    %v9790 = vld [vmem:[%s21 + $0x1e0] sm:$0xff]
    %v9791 = vld [vmem:[%s21 + $0x1e8] sm:$0xff]
    %v9792 = vld [vmem:[%s21 + $0x1f0] sm:$0xff]
    %v9793 = vld [vmem:[%s21 + $0x1f8] sm:$0xff]
    %v9794 = vld [vmem:[%s22] sm:$0x1]
    %v9796 = vlaneseq
    %v9797 = vshrl.u32 %v9796, 7
    %v9798 = vsub.s32 0, %v9797
    %v9799 = vrot.slane %v9794, %v9798
    %v9802 = vcombine.high %v9729, %v9729
    %v9804 = vunpack.c.l.s4 1983009808
    %v9805 = vunpack.c.0.s8 %v9804
    %v9806 = vlaneseq
    %v9807 = vshrl.u32 %v9806, 7
    %v9808 = vsub.s32 %v9805, %v9807
    %v9809 = vrot.slane %v9729, %v9808
    %v9811 = vunpack.c.l.s4 1983009808
    %v9812 = vunpack.c.0.s8 %v9811
    %v9813 = vlaneseq
    %v9814 = vshrl.u32 %v9813, 7
    %v9815 = vsub.s32 %v9812, %v9814
    %v9816 = vrot.slane %v9802, %v9815
    %v9817 = vcombine.high %v9809, %v9809
    %v9818 = vcombine.high %v9816, %v9816
    %9823 = vmatprep.subr.mxu0 0.0
    %9824 = vmatpush1.msra.mxu0 %v9730
    %9825 = vmatprep.subr.mxu0 0.0
    %9826 = vmatpush1.msra.mxu0 %v9731
    %9827 = vmatprep.subr.mxu0 0.0
    %9828 = vmatpush1.msra.mxu0 %v9732
    %9829 = vmatprep.subr.mxu0 0.0
    %9830 = vmatpush1.msra.mxu0 %v9733
    %9831 = vmatprep.subr.mxu0 0.0
    %9832 = vmatpush1.msra.mxu0 %v9734
    %9833 = vmatprep.subr.mxu0 0.0
    %9834 = vmatpush1.msra.mxu0 %v9735
    %9835 = vmatprep.subr.mxu0 0.0
    %9836 = vmatpush1.msra.mxu0 %v9736
    %9837 = vmatprep.subr.mxu0 0.0
    %9838 = vmatpush1.msra.mxu0 %v9737
    %9839 = vmatprep.subr.mxu0 0.0
    %9840 = vmatpush1.msra.mxu0 %v9738
    %9841 = vmatprep.subr.mxu0 0.0
    %9842 = vmatpush1.msra.mxu0 %v9739
    %9843 = vmatprep.subr.mxu0 0.0
    %9844 = vmatpush1.msra.mxu0 %v9740
    %9845 = vmatprep.subr.mxu0 0.0
    %9846 = vmatpush1.msra.mxu0 %v9741
    %9847 = vmatprep.subr.mxu0 0.0
    %9848 = vmatpush1.msra.mxu0 %v9742
    %9849 = vmatprep.subr.mxu0 0.0
    %9850 = vmatpush1.msra.mxu0 %v9743
    %9851 = vmatprep.subr.mxu0 0.0
    %9852 = vmatpush1.msra.mxu0 %v9744
    %9853 = vmatprep.subr.mxu0 0.0
    %9854 = vmatpush1.msra.mxu0 %v9745
    %9855 = vmatprep.subr.mxu0 0.0
    %9856 = vmatpush1.msra.mxu0 %v9746
    %9857 = vmatprep.subr.mxu0 0.0
    %9858 = vmatpush1.msra.mxu0 %v9747
    %9859 = vmatprep.subr.mxu0 0.0
    %9860 = vmatpush1.msra.mxu0 %v9748
    %9861 = vmatprep.subr.mxu0 0.0
    %9862 = vmatpush1.msra.mxu0 %v9749
    %9863 = vmatprep.subr.mxu0 0.0
    %9864 = vmatpush1.msra.mxu0 %v9750
    %9865 = vmatprep.subr.mxu0 0.0
    %9866 = vmatpush1.msra.mxu0 %v9751
    %9867 = vmatprep.subr.mxu0 0.0
    %9868 = vmatpush1.msra.mxu0 %v9752
    %9869 = vmatprep.subr.mxu0 0.0
    %9870 = vmatpush1.msra.mxu0 %v9753
    %9871 = vmatprep.subr.mxu0 0.0
    %9872 = vmatpush1.msra.mxu0 %v9754
    %9873 = vmatprep.subr.mxu0 0.0
    %9874 = vmatpush1.msra.mxu0 %v9755
    %9875 = vmatprep.subr.mxu0 0.0
    %9876 = vmatpush1.msra.mxu0 %v9756
    %9877 = vmatprep.subr.mxu0 0.0
    %9878 = vmatpush1.msra.mxu0 %v9757
    %9879 = vmatprep.subr.mxu0 0.0
    %9880 = vmatpush1.msra.mxu0 %v9758
    %9881 = vmatprep.subr.mxu0 0.0
    %9882 = vmatpush1.msra.mxu0 %v9759
    %9883 = vmatprep.subr.mxu0 0.0
    %9884 = vmatpush1.msra.mxu0 %v9760
    %9885 = vmatprep.subr.mxu0 0.0
    %9886 = vmatpush1.msra.mxu0 %v9761
    %9887 = vmatprep.mubr.f32.mxu0 %v9817
    %9888 = vmatmul.mubr.f32.gmra.mrb[0].mxu0 %v9809
    %v9889 = vpop.f32.mrb[0].mxu0
    %v9890 = vadd.f32 %v9799, %v9889
    %v9891 = vpop.f32.mrb[0].mxu0
    %9892 = vdwg.mxu0
    %9893 = vmatprep.subr.mxu0 0.0
    %9894 = vmatpush1.msra.mxu0 %v9762
    %9895 = vmatprep.subr.mxu0 0.0
    %9896 = vmatpush1.msra.mxu0 %v9763
    %9897 = vmatprep.subr.mxu0 0.0
    %9898 = vmatpush1.msra.mxu0 %v9764
    %9899 = vmatprep.subr.mxu0 0.0
    %9900 = vmatpush1.msra.mxu0 %v9765
    %9901 = vmatprep.subr.mxu0 0.0
    %9902 = vmatpush1.msra.mxu0 %v9766
    %9903 = vmatprep.subr.mxu0 0.0
    %9904 = vmatpush1.msra.mxu0 %v9767
    %9905 = vmatprep.subr.mxu0 0.0
    %9906 = vmatpush1.msra.mxu0 %v9768
    %9907 = vmatprep.subr.mxu0 0.0
    %9908 = vmatpush1.msra.mxu0 %v9769
    %9909 = vmatprep.subr.mxu0 0.0
    %9910 = vmatpush1.msra.mxu0 %v9770
    %9911 = vmatprep.subr.mxu0 0.0
    %9912 = vmatpush1.msra.mxu0 %v9771
    %9913 = vmatprep.subr.mxu0 0.0
    %9914 = vmatpush1.msra.mxu0 %v9772
    %9915 = vmatprep.subr.mxu0 0.0
    %9916 = vmatpush1.msra.mxu0 %v9773
    %9917 = vmatprep.subr.mxu0 0.0
    %9918 = vmatpush1.msra.mxu0 %v9774
    %9919 = vmatprep.subr.mxu0 0.0
    %9920 = vmatpush1.msra.mxu0 %v9775
    %9921 = vmatprep.subr.mxu0 0.0
    %9922 = vmatpush1.msra.mxu0 %v9776
    %9923 = vmatprep.subr.mxu0 0.0
    %9924 = vmatpush1.msra.mxu0 %v9777
    %9925 = vmatprep.subr.mxu0 0.0
    %9926 = vmatpush1.msra.mxu0 %v9778
    %9927 = vmatprep.subr.mxu0 0.0
    %9928 = vmatpush1.msra.mxu0 %v9779
    %9929 = vmatprep.subr.mxu0 0.0
    %9930 = vmatpush1.msra.mxu0 %v9780
    %9931 = vmatprep.subr.mxu0 0.0
    %9932 = vmatpush1.msra.mxu0 %v9781
    %9933 = vmatprep.subr.mxu0 0.0
    %9934 = vmatpush1.msra.mxu0 %v9782
    %9935 = vmatprep.subr.mxu0 0.0
    %9936 = vmatpush1.msra.mxu0 %v9783
    %9937 = vmatprep.subr.mxu0 0.0
    %9938 = vmatpush1.msra.mxu0 %v9784
    %9939 = vmatprep.subr.mxu0 0.0
    %9940 = vmatpush1.msra.mxu0 %v9785
    %9941 = vmatprep.subr.mxu0 0.0
    %9942 = vmatpush1.msra.mxu0 %v9786
    %9943 = vmatprep.subr.mxu0 0.0
    %9944 = vmatpush1.msra.mxu0 %v9787
    %9945 = vmatprep.subr.mxu0 0.0
    %9946 = vmatpush1.msra.mxu0 %v9788
    %9947 = vmatprep.subr.mxu0 0.0
    %9948 = vmatpush1.msra.mxu0 %v9789
    %9949 = vmatprep.subr.mxu0 0.0
    %9950 = vmatpush1.msra.mxu0 %v9790
    %9951 = vmatprep.subr.mxu0 0.0
    %9952 = vmatpush1.msra.mxu0 %v9791
    %9953 = vmatprep.subr.mxu0 0.0
    %9954 = vmatpush1.msra.mxu0 %v9792
    %9955 = vmatprep.subr.mxu0 0.0
    %9956 = vmatpush1.msra.mxu0 %v9793
    %9957 = vmatprep.mubr.f32.mxu0 %v9818
    %9958 = vmatmul.mubr.f32.gmra.mrb[0].mxu0 %v9816
    %v9959 = vpop.f32.mrb[0].mxu0
    %v9960 = vadd.f32 %v9890, %v9959
    %v9961 = vpop.f32.mrb[0].mxu0
    %9962 = vdwg.mxu0
    %vm9963 = vcmask 74752
    %9964 = vst.msk [vmem:[#allocation4] sm:$0x3] %vm9963, %v9960
    // Predicated region
    $region94: #{forward.1} parent=1 // pred_check
      _
    $region95: #{forward.1} parent=1 // pred_check_branch
      %9966 = sbr.rel (0) target = $region97
    $region96: #{forward.1} parent=1 // pred_region
      %s9968 = ssub.s32 32, 32
      %9969 = vsyncadd [#allocation5], %s9968
      %s9971 = sshll.u32 [#allocation4], 4
      %s9972 = int_to_ptr.vmem [resolvable:$true] %s9971
      %9974 = dma.vmem_to_hbm [thread:$0]  %s9972, 32, %s23, [#allocation5]
    $region97: #{forward.1} parent=1 // pred_fallthru
      _
    // Predicated region
    $region98: #{forward.1} parent=1 // pred_check
      _
    $region99: #{forward.1} parent=1 // pred_check_branch
      %9976 = sbr.rel (0) target = $region101
    $region100: #{forward.1} parent=1 // pred_region
      %9977 = dma.done [#allocation5], 32
    $region101: #{forward.1} parent=1 // pred_fallthru
      _
    %9978 = vsyncpa [#allocation5], 1

</llo_original>
